<compile_context>
chip_gen: v7x
topology: tpu7x:2x2x1
jax: 0.10.0
libtpu: 0.0.40
codegen_flags: <defaults>
</compile_context>

<pallas_src>
import jax
import jax.numpy as jnp
from jax import lax
from jax.experimental import pallas as pl
from jax.experimental.pallas import tpu as pltpu

B, H, W = 2, 16, 16          # batch / spatial (input is single-channel NCHW)
C = 64                       # feature channels after the stem conv
NUM_CLASSES = 128
EPS = 1e-5                   # nn.BatchNorm2d default eps
KSTEM = 16                   # 9 stem taps zero-padded to 16 for the MXU


# ---------------------------------------------------------------------------
# Kernel helpers (traced inside the kernel body)
# ---------------------------------------------------------------------------
def _bn_scale_shift(x2, g_ref, b_ref):
    """Training-mode BatchNorm2d folded to per-channel (scale, shift).

    One pass computes sum and sum-of-squares (f32); variance is clamped at 0
    before rsqrt (EUP).  x2: (B*H*W, C);  g_ref/b_ref: (1, C).
    """
    n = float(x2.shape[0])
    s1 = jnp.sum(x2, axis=0, keepdims=True)
    s2 = jnp.sum(x2 * x2, axis=0, keepdims=True)
    mean = s1 * (1.0 / n)
    var = jnp.maximum(s2 * (1.0 / n) - mean * mean, 0.0)   # biased batch var
    scale = g_ref[...] * lax.rsqrt(var + EPS)
    shift = b_ref[...] - mean * scale
    return scale, shift


def _conv3x3(x2, w_ref, pad_ref, patch_ref):
    """3x3 'same' conv, 64 -> 64 channels, as ONE bf16 im2col matmul.

    x2: (B*H*W, C) f32 activation.  w_ref: (9*C, C) bf16, rows = (tap, cin).
    pad_ref: (B,H+2,W+2,C) f32 scratch whose 1-pixel halo is already zero;
    only the interior is fully overwritten here, so the halo stays zero.
    patch_ref: (B*H*W, 9*C) bf16 scratch; each tap slab is stored directly
    into its column range (no concatenate copy pass).
    """
    pad_ref[:, 1:H + 1, 1:W + 1, :] = x2.reshape(B, H, W, C)
    xp = pad_ref[...]
    for t in range(9):
        dy, dx = t // 3, t % 3
        patch_ref[:, t * C:(t + 1) * C] = (
            xp[:, dy:dy + H, dx:dx + W, :]
            .reshape(B * H * W, C).astype(jnp.bfloat16))
    return jnp.dot(patch_ref[...], w_ref[...],
                   preferred_element_type=jnp.float32)


# ---------------------------------------------------------------------------
# Fused forward kernel
# ---------------------------------------------------------------------------
def resnet_kernel(xs_ref,
                  w1_ref, g1_ref, b1_ref,
                  w11_ref, g11_ref, b11_ref,
                  w12_ref, g12_ref, b12_ref,
                  fcw_ref, fcb_ref,
                  out_ref,
                  pad_ref, patch_ref):
    # Zero ONLY the 1-pixel halo of the shared pad scratch, once; both convs
    # fully overwrite the interior.  (Fragile if spatial tiling is added.)
    zrow = jnp.zeros((B, 1, W + 2, C), jnp.float32)
    zcol = jnp.zeros((B, H + 2, 1, C), jnp.float32)
    pad_ref[:, 0:1, :, :] = zrow
    pad_ref[:, H + 1:H + 2, :, :] = zrow
    pad_ref[:, :, 0:1, :] = zcol
    pad_ref[:, :, W + 1:W + 2, :] = zcol

    # stem: conv1 as ONE (BHW,16)@(16,64) MXU matmul -> bn1 -> relu
    y = jnp.dot(xs_ref[...], w1_ref[...], preferred_element_type=jnp.float32)
    sc, sh = _bn_scale_shift(y, g1_ref, b1_ref)
    y = jnp.maximum(y * sc + sh, 0.0)

    # BasicBlock(64, 64): conv-bn-relu, conv-bn, +identity, relu
    identity = y
    z = _conv3x3(y, w11_ref, pad_ref, patch_ref)
    sc, sh = _bn_scale_shift(z, g11_ref, b11_ref)
    z = jnp.maximum(z * sc + sh, 0.0)

    z = _conv3x3(z, w12_ref, pad_ref, patch_ref)
    sc, sh = _bn_scale_shift(z, g12_ref, b12_ref)
    y = jnp.maximum(z * sc + sh + identity, 0.0)    # bn + residual + relu fused

    # AdaptiveAvgPool2d((1,1)) + flatten: global mean over H*W -> (B, C)
    feat = jnp.mean(y.reshape(B, H * W, C), axis=1)

    # fc (lane-dense 128-wide output); bf16 at the MXU boundary, f32 accum.
    out_ref[...] = (jnp.dot(feat.astype(jnp.bfloat16), fcw_ref[...],
                            preferred_element_type=jnp.float32)
                    + fcb_ref[...])


# ---------------------------------------------------------------------------
# Wrapper / glue
# ---------------------------------------------------------------------------
@jax.jit
def my_resnet_forward(x_nchw, params):
    # Layout plumbing outside the kernel: NCHW (B,1,H,W) -> single-channel
    # im2col patch matrix (B*H*W, 16) for the stem conv (no in-kernel
    # 1-lane broadcasts).
    x = x_nchw[:, 0, :, :]                                   # (B,H,W)
    xp = jnp.pad(x, ((0, 0), (1, 1), (1, 1)))                # (B,H+2,W+2)
    taps = [xp[:, dy:dy + H, dx:dx + W]
            for dy in range(3) for dx in range(3)]
    stem = jnp.stack(taps, axis=-1).reshape(B * H * W, 9)
    stem = jnp.pad(stem, ((0, 0), (0, KSTEM - 9)))           # (BHW, 16) f32

    w1 = jnp.pad(params['w1'], ((0, KSTEM - 9), (0, 0)))     # (16, C) f32
    bf = jnp.bfloat16
    args = [stem,
            w1, params['g1'], params['b1'],
            params['w11'].astype(bf), params['g11'], params['b11'],
            params['w12'].astype(bf), params['g12'], params['b12'],
            params['fcw'].astype(bf), params['fcb']]
    return pl.pallas_call(
        resnet_kernel,
        out_shape=jax.ShapeDtypeStruct((B, NUM_CLASSES), jnp.float32),
        scratch_shapes=[
            pltpu.VMEM((B, H + 2, W + 2, C), jnp.float32),   # shared pad buffer
            pltpu.VMEM((B * H * W, 9 * C), jnp.bfloat16),    # shared im2col buf
        ],
        # footprint ~2.5 MiB: default scoped VMEM is ample on v5e/v6e/v7x.
    )(*args)


def init_params(key):
    """Canonical f32 parameters (the reference uses these; the wrapper casts
    the conv/fc weights to bf16 at the MXU boundary)."""
    ks = jax.random.split(key, 11)
    it = iter(ks)

    def hwio(w_oihw):
        return jnp.transpose(w_oihw, (2, 3, 1, 0))           # OIHW -> HWIO

    def bn_params(kg, kb):
        g = (1.0 + 0.1 * jax.random.normal(kg, (C,), jnp.float32)).reshape(1, C)
        b = (0.1 * jax.random.normal(kb, (C,), jnp.float32)).reshape(1, C)
        return g, b

    P = {}
    # stem conv: PyTorch (64,1,3,3) -> HWIO (3,3,1,64) -> (9, 64), row = tap
    w1 = jax.random.normal(next(it), (C, 1, 3, 3), jnp.float32) * 0.05
    P['w1'] = hwio(w1).reshape(9, C)
    P['g1'], P['b1'] = bn_params(next(it), next(it))
    # BasicBlock convs: (64,64,3,3) -> HWIO (3,3,64,64) -> (576,64), row=(tap,cin)
    for name in ('11', '12'):
        w = jax.random.normal(next(it), (C, C, 3, 3), jnp.float32) * 0.05
        P['w' + name] = hwio(w).reshape(9 * C, C)
        P['g' + name], P['b' + name] = bn_params(next(it), next(it))
    # fc: PyTorch (num_classes, 64) -> (64, num_classes)
    fcw = jax.random.normal(next(it), (NUM_CLASSES, C), jnp.float32) * 0.1
    P['fcw'] = fcw.T
    P['fcb'] = (0.1 * jax.random.normal(next(it), (NUM_CLASSES,), jnp.float32)
                ).reshape(1, NUM_CLASSES)
    return P


# Pure-JAX f32 reference (same parameterization) for a correctness check.
def reference_forward(x_nhwc, P):
    hi = lax.Precision.HIGHEST

    def conv(x, w_hwio):
        return lax.conv_general_dilated(
            x, w_hwio, (1, 1), ((1, 1), (1, 1)),
            dimension_numbers=("NHWC", "HWIO", "NHWC"), precision=hi)

    def bn(x, g, b):
        m = jnp.mean(x, axis=(0, 1, 2), keepdims=True)
        v = jnp.mean((x - m) ** 2, axis=(0, 1, 2), keepdims=True)
        return ((x - m) * lax.rsqrt(v + EPS) * g.reshape(1, 1, 1, C)
                + b.reshape(1, 1, 1, C))

    y = jax.nn.relu(bn(conv(x_nhwc, P['w1'].reshape(3, 3, 1, C)), P['g1'], P['b1']))
    idn = y
    z = jax.nn.relu(bn(conv(y, P['w11'].reshape(3, 3, C, C)), P['g11'], P['b11']))
    z = bn(conv(z, P['w12'].reshape(3, 3, C, C)), P['g12'], P['b12'])
    y = jax.nn.relu(z + idn)
    feat = jnp.mean(y, axis=(1, 2))                          # global average pool
    return jnp.dot(feat, P['fcw'], precision=hi) + P['fcb']


if __name__ == "__main__":
    key = jax.random.PRNGKey(0)
    kx, kp = jax.random.split(key)
    x_nchw = jax.random.normal(kx, (B, 1, H, W), jnp.float32)   # PyTorch-style NCHW
    params = init_params(kp)

    out = my_resnet_forward(x_nchw, params)
    out = jax.block_until_ready(out)
    assert out.shape == (B, NUM_CLASSES)

    # sanity check against an f32 pure-JAX reference of the same math
    # (tolerance slightly loosened vs. pure-f32 kernel: convs/fc feed the MXU
    #  bf16; accumulation and BN stats remain f32).
    x_nhwc = jnp.transpose(x_nchw, (0, 2, 3, 1))
    ref = reference_forward(x_nhwc, params)
    max_err = float(jnp.max(jnp.abs(out - ref)))
    assert jnp.allclose(out, ref, atol=2e-2, rtol=2e-2), f"max abs err {max_err}"

    print("KERNEL_OK")
</pallas_src>

<mosaic_0001>
module attributes {stable_mosaic.version = 11 : i64} {
  func.func @resnet_kernel(%arg0: memref<512x16xf32, #tpu.memory_space<vmem>>, %arg1: memref<16x64xf32, #tpu.memory_space<vmem>>, %arg2: memref<1x64xf32, #tpu.memory_space<vmem>>, %arg3: memref<1x64xf32, #tpu.memory_space<vmem>>, %arg4: memref<576x64xbf16, #tpu.memory_space<vmem>>, %arg5: memref<1x64xf32, #tpu.memory_space<vmem>>, %arg6: memref<1x64xf32, #tpu.memory_space<vmem>>, %arg7: memref<576x64xbf16, #tpu.memory_space<vmem>>, %arg8: memref<1x64xf32, #tpu.memory_space<vmem>>, %arg9: memref<1x64xf32, #tpu.memory_space<vmem>>, %arg10: memref<64x128xbf16, #tpu.memory_space<vmem>>, %arg11: memref<1x128xf32, #tpu.memory_space<vmem>>, %arg12: memref<2x128xf32, #tpu.memory_space<vmem>>, %arg13: memref<2x18x18x64xf32, #tpu.memory_space<vmem>>, %arg14: memref<512x576xbf16, #tpu.memory_space<vmem>>) attributes {dimension_semantics = [], scalar_prefetch = 0 : i64, scratch_operands = 2 : i64, tpu.core_type = #tpu.core_type<tc>} {
    %cst = arith.constant 0.000000e+00 : f32
    %0 = vector.broadcast %cst : f32 to vector<2x1x18x64xf32>
    %cst_0 = arith.constant 0.000000e+00 : f32
    %1 = vector.broadcast %cst_0 : f32 to vector<2x18x1x64xf32>
    %c0 = arith.constant 0 : index
    %c0_1 = arith.constant 0 : index
    %c0_2 = arith.constant 0 : index
    %c0_3 = arith.constant 0 : index
    %2 = vector.load %arg13[%c0, %c0_1, %c0_2, %c0_3] : memref<2x18x18x64xf32, #tpu.memory_space<vmem>>, vector<2x1x18x64xf32>
    tpu.vector_store %arg13[%c0, %c0_1, %c0_2, %c0_3], %0 {strides = array<i32>} : memref<2x18x18x64xf32, #tpu.memory_space<vmem>>, vector<2x1x18x64xf32>,
    %c0_4 = arith.constant 0 : index
    %c17 = arith.constant 17 : index
    %c0_5 = arith.constant 0 : index
    %c0_6 = arith.constant 0 : index
    %3 = vector.load %arg13[%c0_4, %c17, %c0_5, %c0_6] : memref<2x18x18x64xf32, #tpu.memory_space<vmem>>, vector<2x1x18x64xf32>
    tpu.vector_store %arg13[%c0_4, %c17, %c0_5, %c0_6], %0 {strides = array<i32>} : memref<2x18x18x64xf32, #tpu.memory_space<vmem>>, vector<2x1x18x64xf32>,
    %c0_7 = arith.constant 0 : index
    %c0_8 = arith.constant 0 : index
    %c0_9 = arith.constant 0 : index
    %c0_10 = arith.constant 0 : index
    %4 = vector.load %arg13[%c0_7, %c0_8, %c0_9, %c0_10] : memref<2x18x18x64xf32, #tpu.memory_space<vmem>>, vector<2x18x1x64xf32>
    tpu.vector_store %arg13[%c0_7, %c0_8, %c0_9, %c0_10], %1 {strides = array<i32>} : memref<2x18x18x64xf32, #tpu.memory_space<vmem>>, vector<2x18x1x64xf32>,
    %c0_11 = arith.constant 0 : index
    %c0_12 = arith.constant 0 : index
    %c17_13 = arith.constant 17 : index
    %c0_14 = arith.constant 0 : index
    %5 = vector.load %arg13[%c0_11, %c0_12, %c17_13, %c0_14] : memref<2x18x18x64xf32, #tpu.memory_space<vmem>>, vector<2x18x1x64xf32>
    tpu.vector_store %arg13[%c0_11, %c0_12, %c17_13, %c0_14], %1 {strides = array<i32>} : memref<2x18x18x64xf32, #tpu.memory_space<vmem>>, vector<2x18x1x64xf32>,
    %c0_15 = arith.constant 0 : index
    %c0_16 = arith.constant 0 : index
    %6 = vector.load %arg0[%c0_15, %c0_16] : memref<512x16xf32, #tpu.memory_space<vmem>>, vector<512x16xf32>
    %c0_17 = arith.constant 0 : index
    %c0_18 = arith.constant 0 : index
    %7 = vector.load %arg1[%c0_17, %c0_18] : memref<16x64xf32, #tpu.memory_space<vmem>>, vector<16x64xf32>
    %cst_19 = arith.constant dense<0.000000e+00> : vector<512x64xf32>
    %8 = tpu.matmul %6, %7, %cst_19 {dimension_numbers = #tpu.dot_dimension_numbers<[1], [0], [0], [1], [0, 0, 1, 1], [], []>} : vector<512x16xf32>, vector<16x64xf32>, vector<512x64xf32> -> vector<512x64xf32>
    %cst_20 = arith.constant dense<0.000000e+00> : vector<64xf32>
    %9 = vector.multi_reduction <add>, %8, %cst_20 [0] : vector<512x64xf32> to vector<64xf32>
    %10 = vector.shape_cast %9 : vector<64xf32> to vector<1x64xf32>
    %11 = arith.mulf %8, %8 : vector<512x64xf32>
    %cst_21 = arith.constant dense<0.000000e+00> : vector<64xf32>
    %12 = vector.multi_reduction <add>, %11, %cst_21 [0] : vector<512x64xf32> to vector<64xf32>
    %13 = vector.shape_cast %12 : vector<64xf32> to vector<1x64xf32>
    %cst_22 = arith.constant 0.001953125 : f32
    %14 = vector.broadcast %cst_22 : f32 to vector<1x64xf32>
    %15 = arith.mulf %10, %14 : vector<1x64xf32>
    %cst_23 = arith.constant 0.001953125 : f32
    %16 = vector.broadcast %cst_23 : f32 to vector<1x64xf32>
    %17 = arith.mulf %13, %16 : vector<1x64xf32>
    %18 = arith.mulf %15, %15 : vector<1x64xf32>
    %19 = arith.subf %17, %18 : vector<1x64xf32>
    %cst_24 = arith.constant 0.000000e+00 : f32
    %20 = vector.broadcast %cst_24 : f32 to vector<1x64xf32>
    %21 = arith.maximumf %19, %20 : vector<1x64xf32>
    %c0_25 = arith.constant 0 : index
    %c0_26 = arith.constant 0 : index
    %22 = vector.load %arg2[%c0_25, %c0_26] : memref<1x64xf32, #tpu.memory_space<vmem>>, vector<1x64xf32>
    %cst_27 = arith.constant 9.99999974E-6 : f32
    %23 = vector.broadcast %cst_27 : f32 to vector<1x64xf32>
    %24 = arith.addf %21, %23 : vector<1x64xf32>
    %25 = math.rsqrt %24 : vector<1x64xf32>
    %26 = arith.mulf %22, %25 : vector<1x64xf32>
    %c0_28 = arith.constant 0 : index
    %c0_29 = arith.constant 0 : index
    %27 = vector.load %arg3[%c0_28, %c0_29] : memref<1x64xf32, #tpu.memory_space<vmem>>, vector<1x64xf32>
    %28 = arith.mulf %15, %26 : vector<1x64xf32>
    %29 = arith.subf %27, %28 : vector<1x64xf32>
    %30 = vector.broadcast %26 : vector<1x64xf32> to vector<512x64xf32>
    %31 = arith.mulf %8, %30 : vector<512x64xf32>
    %32 = vector.broadcast %29 : vector<1x64xf32> to vector<512x64xf32>
    %33 = arith.addf %31, %32 : vector<512x64xf32>
    %cst_30 = arith.constant 0.000000e+00 : f32
    %34 = vector.broadcast %cst_30 : f32 to vector<512x64xf32>
    %35 = arith.maximumf %33, %34 : vector<512x64xf32>
    %36 = vector.shape_cast %35 : vector<512x64xf32> to vector<2x16x16x64xf32>
    %c0_31 = arith.constant 0 : index
    %c1 = arith.constant 1 : index
    %c1_32 = arith.constant 1 : index
    %c0_33 = arith.constant 0 : index
    %37 = vector.load %arg13[%c0_31, %c1, %c1_32, %c0_33] : memref<2x18x18x64xf32, #tpu.memory_space<vmem>>, vector<2x16x16x64xf32>
    tpu.vector_store %arg13[%c0_31, %c1, %c1_32, %c0_33], %36 {strides = array<i32>} : memref<2x18x18x64xf32, #tpu.memory_space<vmem>>, vector<2x16x16x64xf32>,
    %c0_34 = arith.constant 0 : index
    %c0_35 = arith.constant 0 : index
    %c0_36 = arith.constant 0 : index
    %c0_37 = arith.constant 0 : index
    %38 = vector.load %arg13[%c0_34, %c0_35, %c0_36, %c0_37] : memref<2x18x18x64xf32, #tpu.memory_space<vmem>>, vector<2x18x18x64xf32>
    %39 = vector.extract_strided_slice %38 {offsets = [0, 0, 0, 0], sizes = [2, 16, 16, 64], strides = [1, 1, 1, 1]} : vector<2x18x18x64xf32> to vector<2x16x16x64xf32>
    %40 = vector.shape_cast %39 : vector<2x16x16x64xf32> to vector<512x64xf32>
    %41 = arith.truncf %40 : vector<512x64xf32> to vector<512x64xbf16>
    %c0_38 = arith.constant 0 : index
    %c0_39 = arith.constant 0 : index
    %42 = vector.load %arg14[%c0_38, %c0_39] : memref<512x576xbf16, #tpu.memory_space<vmem>>, vector<512x64xbf16>
    tpu.vector_store %arg14[%c0_38, %c0_39], %41 {strides = array<i32>} : memref<512x576xbf16, #tpu.memory_space<vmem>>, vector<512x64xbf16>,
    %43 = vector.extract_strided_slice %38 {offsets = [0, 0, 1, 0], sizes = [2, 16, 16, 64], strides = [1, 1, 1, 1]} : vector<2x18x18x64xf32> to vector<2x16x16x64xf32>
    %44 = vector.shape_cast %43 : vector<2x16x16x64xf32> to vector<512x64xf32>
    %45 = arith.truncf %44 : vector<512x64xf32> to vector<512x64xbf16>
    %c0_40 = arith.constant 0 : index
    %c64 = arith.constant 64 : index
    %46 = vector.load %arg14[%c0_40, %c64] : memref<512x576xbf16, #tpu.memory_space<vmem>>, vector<512x64xbf16>
    tpu.vector_store %arg14[%c0_40, %c64], %45 {strides = array<i32>} : memref<512x576xbf16, #tpu.memory_space<vmem>>, vector<512x64xbf16>,
    %47 = vector.extract_strided_slice %38 {offsets = [0, 0, 2, 0], sizes = [2, 16, 16, 64], strides = [1, 1, 1, 1]} : vector<2x18x18x64xf32> to vector<2x16x16x64xf32>
    %48 = vector.shape_cast %47 : vector<2x16x16x64xf32> to vector<512x64xf32>
    %49 = arith.truncf %48 : vector<512x64xf32> to vector<512x64xbf16>
    %c0_41 = arith.constant 0 : index
    %c128 = arith.constant 128 : index
    %50 = vector.load %arg14[%c0_41, %c128] : memref<512x576xbf16, #tpu.memory_space<vmem>>, vector<512x64xbf16>
    tpu.vector_store %arg14[%c0_41, %c128], %49 {strides = array<i32>} : memref<512x576xbf16, #tpu.memory_space<vmem>>, vector<512x64xbf16>,
    %51 = vector.extract_strided_slice %38 {offsets = [0, 1, 0, 0], sizes = [2, 16, 16, 64], strides = [1, 1, 1, 1]} : vector<2x18x18x64xf32> to vector<2x16x16x64xf32>
    %52 = vector.shape_cast %51 : vector<2x16x16x64xf32> to vector<512x64xf32>
    %53 = arith.truncf %52 : vector<512x64xf32> to vector<512x64xbf16>
    %c0_42 = arith.constant 0 : index
    %c192 = arith.constant 192 : index
    %54 = vector.load %arg14[%c0_42, %c192] : memref<512x576xbf16, #tpu.memory_space<vmem>>, vector<512x64xbf16>
    tpu.vector_store %arg14[%c0_42, %c192], %53 {strides = array<i32>} : memref<512x576xbf16, #tpu.memory_space<vmem>>, vector<512x64xbf16>,
    %55 = vector.extract_strided_slice %38 {offsets = [0, 1, 1, 0], sizes = [2, 16, 16, 64], strides = [1, 1, 1, 1]} : vector<2x18x18x64xf32> to vector<2x16x16x64xf32>
    %56 = vector.shape_cast %55 : vector<2x16x16x64xf32> to vector<512x64xf32>
    %57 = arith.truncf %56 : vector<512x64xf32> to vector<512x64xbf16>
    %c0_43 = arith.constant 0 : index
    %c256 = arith.constant 256 : index
    %58 = vector.load %arg14[%c0_43, %c256] : memref<512x576xbf16, #tpu.memory_space<vmem>>, vector<512x64xbf16>
    tpu.vector_store %arg14[%c0_43, %c256], %57 {strides = array<i32>} : memref<512x576xbf16, #tpu.memory_space<vmem>>, vector<512x64xbf16>,
    %59 = vector.extract_strided_slice %38 {offsets = [0, 1, 2, 0], sizes = [2, 16, 16, 64], strides = [1, 1, 1, 1]} : vector<2x18x18x64xf32> to vector<2x16x16x64xf32>
    %60 = vector.shape_cast %59 : vector<2x16x16x64xf32> to vector<512x64xf32>
    %61 = arith.truncf %60 : vector<512x64xf32> to vector<512x64xbf16>
    %c0_44 = arith.constant 0 : index
    %c320 = arith.constant 320 : index
    %62 = vector.load %arg14[%c0_44, %c320] : memref<512x576xbf16, #tpu.memory_space<vmem>>, vector<512x64xbf16>
    tpu.vector_store %arg14[%c0_44, %c320], %61 {strides = array<i32>} : memref<512x576xbf16, #tpu.memory_space<vmem>>, vector<512x64xbf16>,
    %63 = vector.extract_strided_slice %38 {offsets = [0, 2, 0, 0], sizes = [2, 16, 16, 64], strides = [1, 1, 1, 1]} : vector<2x18x18x64xf32> to vector<2x16x16x64xf32>
    %64 = vector.shape_cast %63 : vector<2x16x16x64xf32> to vector<512x64xf32>
    %65 = arith.truncf %64 : vector<512x64xf32> to vector<512x64xbf16>
    %c0_45 = arith.constant 0 : index
    %c384 = arith.constant 384 : index
    %66 = vector.load %arg14[%c0_45, %c384] : memref<512x576xbf16, #tpu.memory_space<vmem>>, vector<512x64xbf16>
    tpu.vector_store %arg14[%c0_45, %c384], %65 {strides = array<i32>} : memref<512x576xbf16, #tpu.memory_space<vmem>>, vector<512x64xbf16>,
    %67 = vector.extract_strided_slice %38 {offsets = [0, 2, 1, 0], sizes = [2, 16, 16, 64], strides = [1, 1, 1, 1]} : vector<2x18x18x64xf32> to vector<2x16x16x64xf32>
    %68 = vector.shape_cast %67 : vector<2x16x16x64xf32> to vector<512x64xf32>
    %69 = arith.truncf %68 : vector<512x64xf32> to vector<512x64xbf16>
    %c0_46 = arith.constant 0 : index
    %c448 = arith.constant 448 : index
    %70 = vector.load %arg14[%c0_46, %c448] : memref<512x576xbf16, #tpu.memory_space<vmem>>, vector<512x64xbf16>
    tpu.vector_store %arg14[%c0_46, %c448], %69 {strides = array<i32>} : memref<512x576xbf16, #tpu.memory_space<vmem>>, vector<512x64xbf16>,
    %71 = vector.extract_strided_slice %38 {offsets = [0, 2, 2, 0], sizes = [2, 16, 16, 64], strides = [1, 1, 1, 1]} : vector<2x18x18x64xf32> to vector<2x16x16x64xf32>
    %72 = vector.shape_cast %71 : vector<2x16x16x64xf32> to vector<512x64xf32>
    %73 = arith.truncf %72 : vector<512x64xf32> to vector<512x64xbf16>
    %c0_47 = arith.constant 0 : index
    %c512 = arith.constant 512 : index
    %74 = vector.load %arg14[%c0_47, %c512] : memref<512x576xbf16, #tpu.memory_space<vmem>>, vector<512x64xbf16>
    tpu.vector_store %arg14[%c0_47, %c512], %73 {strides = array<i32>} : memref<512x576xbf16, #tpu.memory_space<vmem>>, vector<512x64xbf16>,
    %c0_48 = arith.constant 0 : index
    %c0_49 = arith.constant 0 : index
    %75 = vector.load %arg14[%c0_48, %c0_49] : memref<512x576xbf16, #tpu.memory_space<vmem>>, vector<512x576xbf16>
    %c0_50 = arith.constant 0 : index
    %c0_51 = arith.constant 0 : index
    %76 = vector.load %arg4[%c0_50, %c0_51] : memref<576x64xbf16, #tpu.memory_space<vmem>>, vector<576x64xbf16>
    %cst_52 = arith.constant dense<0.000000e+00> : vector<512x64xf32>
    %77 = tpu.matmul %75, %76, %cst_52 {dimension_numbers = #tpu.dot_dimension_numbers<[1], [0], [0], [1], [0, 0, 1, 1], [], []>} : vector<512x576xbf16>, vector<576x64xbf16>, vector<512x64xf32> -> vector<512x64xf32>
    %cst_53 = arith.constant dense<0.000000e+00> : vector<64xf32>
    %78 = vector.multi_reduction <add>, %77, %cst_53 [0] : vector<512x64xf32> to vector<64xf32>
    %79 = vector.shape_cast %78 : vector<64xf32> to vector<1x64xf32>
    %80 = arith.mulf %77, %77 : vector<512x64xf32>
    %cst_54 = arith.constant dense<0.000000e+00> : vector<64xf32>
    %81 = vector.multi_reduction <add>, %80, %cst_54 [0] : vector<512x64xf32> to vector<64xf32>
    %82 = vector.shape_cast %81 : vector<64xf32> to vector<1x64xf32>
    %cst_55 = arith.constant 0.001953125 : f32
    %83 = vector.broadcast %cst_55 : f32 to vector<1x64xf32>
    %84 = arith.mulf %79, %83 : vector<1x64xf32>
    %cst_56 = arith.constant 0.001953125 : f32
    %85 = vector.broadcast %cst_56 : f32 to vector<1x64xf32>
    %86 = arith.mulf %82, %85 : vector<1x64xf32>
    %87 = arith.mulf %84, %84 : vector<1x64xf32>
    %88 = arith.subf %86, %87 : vector<1x64xf32>
    %cst_57 = arith.constant 0.000000e+00 : f32
    %89 = vector.broadcast %cst_57 : f32 to vector<1x64xf32>
    %90 = arith.maximumf %88, %89 : vector<1x64xf32>
    %c0_58 = arith.constant 0 : index
    %c0_59 = arith.constant 0 : index
    %91 = vector.load %arg5[%c0_58, %c0_59] : memref<1x64xf32, #tpu.memory_space<vmem>>, vector<1x64xf32>
    %cst_60 = arith.constant 9.99999974E-6 : f32
    %92 = vector.broadcast %cst_60 : f32 to vector<1x64xf32>
    %93 = arith.addf %90, %92 : vector<1x64xf32>
    %94 = math.rsqrt %93 : vector<1x64xf32>
    %95 = arith.mulf %91, %94 : vector<1x64xf32>
    %c0_61 = arith.constant 0 : index
    %c0_62 = arith.constant 0 : index
    %96 = vector.load %arg6[%c0_61, %c0_62] : memref<1x64xf32, #tpu.memory_space<vmem>>, vector<1x64xf32>
    %97 = arith.mulf %84, %95 : vector<1x64xf32>
    %98 = arith.subf %96, %97 : vector<1x64xf32>
    %99 = vector.broadcast %95 : vector<1x64xf32> to vector<512x64xf32>
    %100 = arith.mulf %77, %99 : vector<512x64xf32>
    %101 = vector.broadcast %98 : vector<1x64xf32> to vector<512x64xf32>
    %102 = arith.addf %100, %101 : vector<512x64xf32>
    %cst_63 = arith.constant 0.000000e+00 : f32
    %103 = vector.broadcast %cst_63 : f32 to vector<512x64xf32>
    %104 = arith.maximumf %102, %103 : vector<512x64xf32>
    %105 = vector.shape_cast %104 : vector<512x64xf32> to vector<2x16x16x64xf32>
    %c0_64 = arith.constant 0 : index
    %c1_65 = arith.constant 1 : index
    %c1_66 = arith.constant 1 : index
    %c0_67 = arith.constant 0 : index
    %106 = vector.load %arg13[%c0_64, %c1_65, %c1_66, %c0_67] : memref<2x18x18x64xf32, #tpu.memory_space<vmem>>, vector<2x16x16x64xf32>
    tpu.vector_store %arg13[%c0_64, %c1_65, %c1_66, %c0_67], %105 {strides = array<i32>} : memref<2x18x18x64xf32, #tpu.memory_space<vmem>>, vector<2x16x16x64xf32>,
    %c0_68 = arith.constant 0 : index
    %c0_69 = arith.constant 0 : index
    %c0_70 = arith.constant 0 : index
    %c0_71 = arith.constant 0 : index
    %107 = vector.load %arg13[%c0_68, %c0_69, %c0_70, %c0_71] : memref<2x18x18x64xf32, #tpu.memory_space<vmem>>, vector<2x18x18x64xf32>
    %108 = vector.extract_strided_slice %107 {offsets = [0, 0, 0, 0], sizes = [2, 16, 16, 64], strides = [1, 1, 1, 1]} : vector<2x18x18x64xf32> to vector<2x16x16x64xf32>
    %109 = vector.shape_cast %108 : vector<2x16x16x64xf32> to vector<512x64xf32>
    %110 = arith.truncf %109 : vector<512x64xf32> to vector<512x64xbf16>
    %c0_72 = arith.constant 0 : index
    %c0_73 = arith.constant 0 : index
    %111 = vector.load %arg14[%c0_72, %c0_73] : memref<512x576xbf16, #tpu.memory_space<vmem>>, vector<512x64xbf16>
    tpu.vector_store %arg14[%c0_72, %c0_73], %110 {strides = array<i32>} : memref<512x576xbf16, #tpu.memory_space<vmem>>, vector<512x64xbf16>,
    %112 = vector.extract_strided_slice %107 {offsets = [0, 0, 1, 0], sizes = [2, 16, 16, 64], strides = [1, 1, 1, 1]} : vector<2x18x18x64xf32> to vector<2x16x16x64xf32>
    %113 = vector.shape_cast %112 : vector<2x16x16x64xf32> to vector<512x64xf32>
    %114 = arith.truncf %113 : vector<512x64xf32> to vector<512x64xbf16>
    %c0_74 = arith.constant 0 : index
    %c64_75 = arith.constant 64 : index
    %115 = vector.load %arg14[%c0_74, %c64_75] : memref<512x576xbf16, #tpu.memory_space<vmem>>, vector<512x64xbf16>
    tpu.vector_store %arg14[%c0_74, %c64_75], %114 {strides = array<i32>} : memref<512x576xbf16, #tpu.memory_space<vmem>>, vector<512x64xbf16>,
    %116 = vector.extract_strided_slice %107 {offsets = [0, 0, 2, 0], sizes = [2, 16, 16, 64], strides = [1, 1, 1, 1]} : vector<2x18x18x64xf32> to vector<2x16x16x64xf32>
    %117 = vector.shape_cast %116 : vector<2x16x16x64xf32> to vector<512x64xf32>
    %118 = arith.truncf %117 : vector<512x64xf32> to vector<512x64xbf16>
    %c0_76 = arith.constant 0 : index
    %c128_77 = arith.constant 128 : index
    %119 = vector.load %arg14[%c0_76, %c128_77] : memref<512x576xbf16, #tpu.memory_space<vmem>>, vector<512x64xbf16>
    tpu.vector_store %arg14[%c0_76, %c128_77], %118 {strides = array<i32>} : memref<512x576xbf16, #tpu.memory_space<vmem>>, vector<512x64xbf16>,
    %120 = vector.extract_strided_slice %107 {offsets = [0, 1, 0, 0], sizes = [2, 16, 16, 64], strides = [1, 1, 1, 1]} : vector<2x18x18x64xf32> to vector<2x16x16x64xf32>
    %121 = vector.shape_cast %120 : vector<2x16x16x64xf32> to vector<512x64xf32>
    %122 = arith.truncf %121 : vector<512x64xf32> to vector<512x64xbf16>
    %c0_78 = arith.constant 0 : index
    %c192_79 = arith.constant 192 : index
    %123 = vector.load %arg14[%c0_78, %c192_79] : memref<512x576xbf16, #tpu.memory_space<vmem>>, vector<512x64xbf16>
    tpu.vector_store %arg14[%c0_78, %c192_79], %122 {strides = array<i32>} : memref<512x576xbf16, #tpu.memory_space<vmem>>, vector<512x64xbf16>,
    %124 = vector.extract_strided_slice %107 {offsets = [0, 1, 1, 0], sizes = [2, 16, 16, 64], strides = [1, 1, 1, 1]} : vector<2x18x18x64xf32> to vector<2x16x16x64xf32>
    %125 = vector.shape_cast %124 : vector<2x16x16x64xf32> to vector<512x64xf32>
    %126 = arith.truncf %125 : vector<512x64xf32> to vector<512x64xbf16>
    %c0_80 = arith.constant 0 : index
    %c256_81 = arith.constant 256 : index
    %127 = vector.load %arg14[%c0_80, %c256_81] : memref<512x576xbf16, #tpu.memory_space<vmem>>, vector<512x64xbf16>
    tpu.vector_store %arg14[%c0_80, %c256_81], %126 {strides = array<i32>} : memref<512x576xbf16, #tpu.memory_space<vmem>>, vector<512x64xbf16>,
    %128 = vector.extract_strided_slice %107 {offsets = [0, 1, 2, 0], sizes = [2, 16, 16, 64], strides = [1, 1, 1, 1]} : vector<2x18x18x64xf32> to vector<2x16x16x64xf32>
    %129 = vector.shape_cast %128 : vector<2x16x16x64xf32> to vector<512x64xf32>
    %130 = arith.truncf %129 : vector<512x64xf32> to vector<512x64xbf16>
    %c0_82 = arith.constant 0 : index
    %c320_83 = arith.constant 320 : index
    %131 = vector.load %arg14[%c0_82, %c320_83] : memref<512x576xbf16, #tpu.memory_space<vmem>>, vector<512x64xbf16>
    tpu.vector_store %arg14[%c0_82, %c320_83], %130 {strides = array<i32>} : memref<512x576xbf16, #tpu.memory_space<vmem>>, vector<512x64xbf16>,
    %132 = vector.extract_strided_slice %107 {offsets = [0, 2, 0, 0], sizes = [2, 16, 16, 64], strides = [1, 1, 1, 1]} : vector<2x18x18x64xf32> to vector<2x16x16x64xf32>
    %133 = vector.shape_cast %132 : vector<2x16x16x64xf32> to vector<512x64xf32>
    %134 = arith.truncf %133 : vector<512x64xf32> to vector<512x64xbf16>
    %c0_84 = arith.constant 0 : index
    %c384_85 = arith.constant 384 : index
    %135 = vector.load %arg14[%c0_84, %c384_85] : memref<512x576xbf16, #tpu.memory_space<vmem>>, vector<512x64xbf16>
    tpu.vector_store %arg14[%c0_84, %c384_85], %134 {strides = array<i32>} : memref<512x576xbf16, #tpu.memory_space<vmem>>, vector<512x64xbf16>,
    %136 = vector.extract_strided_slice %107 {offsets = [0, 2, 1, 0], sizes = [2, 16, 16, 64], strides = [1, 1, 1, 1]} : vector<2x18x18x64xf32> to vector<2x16x16x64xf32>
    %137 = vector.shape_cast %136 : vector<2x16x16x64xf32> to vector<512x64xf32>
    %138 = arith.truncf %137 : vector<512x64xf32> to vector<512x64xbf16>
    %c0_86 = arith.constant 0 : index
    %c448_87 = arith.constant 448 : index
    %139 = vector.load %arg14[%c0_86, %c448_87] : memref<512x576xbf16, #tpu.memory_space<vmem>>, vector<512x64xbf16>
    tpu.vector_store %arg14[%c0_86, %c448_87], %138 {strides = array<i32>} : memref<512x576xbf16, #tpu.memory_space<vmem>>, vector<512x64xbf16>,
    %140 = vector.extract_strided_slice %107 {offsets = [0, 2, 2, 0], sizes = [2, 16, 16, 64], strides = [1, 1, 1, 1]} : vector<2x18x18x64xf32> to vector<2x16x16x64xf32>
    %141 = vector.shape_cast %140 : vector<2x16x16x64xf32> to vector<512x64xf32>
    %142 = arith.truncf %141 : vector<512x64xf32> to vector<512x64xbf16>
    %c0_88 = arith.constant 0 : index
    %c512_89 = arith.constant 512 : index
    %143 = vector.load %arg14[%c0_88, %c512_89] : memref<512x576xbf16, #tpu.memory_space<vmem>>, vector<512x64xbf16>
    tpu.vector_store %arg14[%c0_88, %c512_89], %142 {strides = array<i32>} : memref<512x576xbf16, #tpu.memory_space<vmem>>, vector<512x64xbf16>,
    %c0_90 = arith.constant 0 : index
    %c0_91 = arith.constant 0 : index
    %144 = vector.load %arg14[%c0_90, %c0_91] : memref<512x576xbf16, #tpu.memory_space<vmem>>, vector<512x576xbf16>
    %c0_92 = arith.constant 0 : index
    %c0_93 = arith.constant 0 : index
    %145 = vector.load %arg7[%c0_92, %c0_93] : memref<576x64xbf16, #tpu.memory_space<vmem>>, vector<576x64xbf16>
    %cst_94 = arith.constant dense<0.000000e+00> : vector<512x64xf32>
    %146 = tpu.matmul %144, %145, %cst_94 {dimension_numbers = #tpu.dot_dimension_numbers<[1], [0], [0], [1], [0, 0, 1, 1], [], []>} : vector<512x576xbf16>, vector<576x64xbf16>, vector<512x64xf32> -> vector<512x64xf32>
    %cst_95 = arith.constant dense<0.000000e+00> : vector<64xf32>
    %147 = vector.multi_reduction <add>, %146, %cst_95 [0] : vector<512x64xf32> to vector<64xf32>
    %148 = vector.shape_cast %147 : vector<64xf32> to vector<1x64xf32>
    %149 = arith.mulf %146, %146 : vector<512x64xf32>
    %cst_96 = arith.constant dense<0.000000e+00> : vector<64xf32>
    %150 = vector.multi_reduction <add>, %149, %cst_96 [0] : vector<512x64xf32> to vector<64xf32>
    %151 = vector.shape_cast %150 : vector<64xf32> to vector<1x64xf32>
    %cst_97 = arith.constant 0.001953125 : f32
    %152 = vector.broadcast %cst_97 : f32 to vector<1x64xf32>
    %153 = arith.mulf %148, %152 : vector<1x64xf32>
    %cst_98 = arith.constant 0.001953125 : f32
    %154 = vector.broadcast %cst_98 : f32 to vector<1x64xf32>
    %155 = arith.mulf %151, %154 : vector<1x64xf32>
    %156 = arith.mulf %153, %153 : vector<1x64xf32>
    %157 = arith.subf %155, %156 : vector<1x64xf32>
    %cst_99 = arith.constant 0.000000e+00 : f32
    %158 = vector.broadcast %cst_99 : f32 to vector<1x64xf32>
    %159 = arith.maximumf %157, %158 : vector<1x64xf32>
    %c0_100 = arith.constant 0 : index
    %c0_101 = arith.constant 0 : index
    %160 = vector.load %arg8[%c0_100, %c0_101] : memref<1x64xf32, #tpu.memory_space<vmem>>, vector<1x64xf32>
    %cst_102 = arith.constant 9.99999974E-6 : f32
    %161 = vector.broadcast %cst_102 : f32 to vector<1x64xf32>
    %162 = arith.addf %159, %161 : vector<1x64xf32>
    %163 = math.rsqrt %162 : vector<1x64xf32>
    %164 = arith.mulf %160, %163 : vector<1x64xf32>
    %c0_103 = arith.constant 0 : index
    %c0_104 = arith.constant 0 : index
    %165 = vector.load %arg9[%c0_103, %c0_104] : memref<1x64xf32, #tpu.memory_space<vmem>>, vector<1x64xf32>
    %166 = arith.mulf %153, %164 : vector<1x64xf32>
    %167 = arith.subf %165, %166 : vector<1x64xf32>
    %168 = vector.broadcast %164 : vector<1x64xf32> to vector<512x64xf32>
    %169 = arith.mulf %146, %168 : vector<512x64xf32>
    %170 = vector.broadcast %167 : vector<1x64xf32> to vector<512x64xf32>
    %171 = arith.addf %169, %170 : vector<512x64xf32>
    %172 = arith.addf %171, %35 : vector<512x64xf32>
    %cst_105 = arith.constant 0.000000e+00 : f32
    %173 = vector.broadcast %cst_105 : f32 to vector<512x64xf32>
    %174 = arith.maximumf %172, %173 : vector<512x64xf32>
    %175 = vector.shape_cast %174 : vector<512x64xf32> to vector<2x256x64xf32>
    %cst_106 = arith.constant dense<0.000000e+00> : vector<2x64xf32>
    %176 = vector.multi_reduction <add>, %175, %cst_106 [1] : vector<2x256x64xf32> to vector<2x64xf32>
    %cst_107 = arith.constant 2.560000e+02 : f32
    %177 = vector.broadcast %cst_107 : f32 to vector<2x64xf32>
    %178 = arith.divf %176, %177 : vector<2x64xf32>
    %179 = arith.truncf %178 : vector<2x64xf32> to vector<2x64xbf16>
    %c0_108 = arith.constant 0 : index
    %c0_109 = arith.constant 0 : index
    %180 = vector.load %arg10[%c0_108, %c0_109] : memref<64x128xbf16, #tpu.memory_space<vmem>>, vector<64x128xbf16>
    %cst_110 = arith.constant dense<0.000000e+00> : vector<2x128xf32>
    %181 = tpu.matmul %179, %180, %cst_110 {dimension_numbers = #tpu.dot_dimension_numbers<[1], [0], [0], [1], [0, 0, 1, 1], [], []>} : vector<2x64xbf16>, vector<64x128xbf16>, vector<2x128xf32> -> vector<2x128xf32>
    %c0_111 = arith.constant 0 : index
    %c0_112 = arith.constant 0 : index
    %182 = vector.load %arg11[%c0_111, %c0_112] : memref<1x128xf32, #tpu.memory_space<vmem>>, vector<1x128xf32>
    %183 = vector.broadcast %182 : vector<1x128xf32> to vector<2x128xf32>
    %184 = arith.addf %181, %183 : vector<2x128xf32>
    %c0_113 = arith.constant 0 : index
    %c0_114 = arith.constant 0 : index
    %185 = vector.load %arg12[%c0_113, %c0_114] : memref<2x128xf32, #tpu.memory_space<vmem>>, vector<2x128xf32>
    tpu.vector_store %arg12[%c0_113, %c0_114], %184 {strides = array<i32>} : memref<2x128xf32, #tpu.memory_space<vmem>>, vector<2x128xf32>,
    return
  }
}

</mosaic_0001>

<llo_original>
// kernel: my_resnet_forward.1
$region0: #{my_resnet_forward.1}
  #allocation0 [shape = 'u32[]', space=smem, size = 0x4, offset = 0x4, fixed_abs, tag = 'smem constant byte address 0x4 - core index']
  #allocation1 [shape = 'u32[144,128]{1,0:T(1,128)}', space=vmem, size = 0x12000, scoped, tag = 'internal scratch']
  #allocation2 [shape = 'f32[2,18,18,64]{3,2,1,0:T(8,128)}', space=vmem, size = 0x6c000, scoped, tag = 'scratch operand']
  #allocation3 [shape = 'bf16[512,576]{1,0:T(16,128)(2,1)}', space=vmem, size = 0xa0000, scoped, tag = 'scratch operand']
  %s0 = inlined_call_operand.vmem [shape: f32[512,16], index: 0, kind: input, shape index: {}]
  %s1 = inlined_call_operand.vmem [shape: f32[16,64], index: 1, kind: input, shape index: {}]
  %s2 = inlined_call_operand.vmem [shape: f32[1,64], index: 2, kind: input, shape index: {}]
  %s3 = inlined_call_operand.vmem [shape: f32[1,64], index: 3, kind: input, shape index: {}]
  %s4 = inlined_call_operand.vmem [shape: bf16[576,64], index: 4, kind: input, shape index: {}]
  %s5 = inlined_call_operand.vmem [shape: f32[1,64], index: 5, kind: input, shape index: {}]
  %s6 = inlined_call_operand.vmem [shape: f32[1,64], index: 6, kind: input, shape index: {}]
  %s7 = inlined_call_operand.vmem [shape: bf16[576,64], index: 7, kind: input, shape index: {}]
  %s8 = inlined_call_operand.vmem [shape: f32[1,64], index: 8, kind: input, shape index: {}]
  %s9 = inlined_call_operand.vmem [shape: f32[1,64], index: 9, kind: input, shape index: {}]
  %s10 = inlined_call_operand.vmem [shape: bf16[64,128], index: 10, kind: input, shape index: {}]
  %s11 = inlined_call_operand.vmem [shape: f32[1,128], index: 11, kind: input, shape index: {}]
  %s12 = inlined_call_operand.hbm [shape: f32[2,128], index: 12, kind: output, shape index: {}]
  %s13 = sld [smem:[#allocation0]]
  $region58: #{my_resnet_forward.1} parent=0
    _
  %s15 = ssub.s32 1, %s13
  %s16 = scalar_select 0, %s15, %s13
  $region1: #{my_resnet_forward.1} parent=0
    #allocation4 [shape = 'u8[1024]{0}', space=vmem, size = 0x400, scoped, tag = 'output window, operand 0, single buffered']
    #allocation5 [shape = 's32[1]{0}', space=sflag, size = 0x4, scoped, tag = 'scoped memory for my_resnet_forward.1']
    %17 = vsyncpa [#allocation5], 0
    // Predicated region
    $region2: #{my_resnet_forward.1} parent=1 // pred_check
      _
    $region3: #{my_resnet_forward.1} parent=1 // pred_check_branch
      %19 = sbr.rel (0) target = $region5
    $region4: #{my_resnet_forward.1} parent=1 // pred_region
      _
    $region5: #{my_resnet_forward.1} parent=1 // pred_fallthru
      _
    // Predicated region
    $region6: #{my_resnet_forward.1} parent=1 // pred_check
      _
    $region7: #{my_resnet_forward.1} parent=1 // pred_check_branch
      %21 = sbr.rel (0) target = $region9
    $region8: #{my_resnet_forward.1} parent=1 // pred_region
      _
    $region9: #{my_resnet_forward.1} parent=1 // pred_fallthru
      _
    // Predicated region
    $region10: #{my_resnet_forward.1} parent=1 // pred_check
      _
    $region11: #{my_resnet_forward.1} parent=1 // pred_check_branch
      %23 = sbr.rel (0) target = $region13
    $region12: #{my_resnet_forward.1} parent=1 // pred_region
      _
    $region13: #{my_resnet_forward.1} parent=1 // pred_fallthru
      _
    // Predicated region
    $region14: #{my_resnet_forward.1} parent=1 // pred_check
      _
    $region15: #{my_resnet_forward.1} parent=1 // pred_check_branch
      %25 = sbr.rel (0) target = $region17
    $region16: #{my_resnet_forward.1} parent=1 // pred_region
      _
    $region17: #{my_resnet_forward.1} parent=1 // pred_fallthru
      _
    // Predicated region
    $region18: #{my_resnet_forward.1} parent=1 // pred_check
      _
    $region19: #{my_resnet_forward.1} parent=1 // pred_check_branch
      %27 = sbr.rel (0) target = $region21
    $region20: #{my_resnet_forward.1} parent=1 // pred_region
      _
    $region21: #{my_resnet_forward.1} parent=1 // pred_fallthru
      _
    // Predicated region
    $region22: #{my_resnet_forward.1} parent=1 // pred_check
      _
    $region23: #{my_resnet_forward.1} parent=1 // pred_check_branch
      %29 = sbr.rel (0) target = $region25
    $region24: #{my_resnet_forward.1} parent=1 // pred_region
      _
    $region25: #{my_resnet_forward.1} parent=1 // pred_fallthru
      _
    // Predicated region
    $region26: #{my_resnet_forward.1} parent=1 // pred_check
      _
    $region27: #{my_resnet_forward.1} parent=1 // pred_check_branch
      %31 = sbr.rel (0) target = $region29
    $region28: #{my_resnet_forward.1} parent=1 // pred_region
      _
    $region29: #{my_resnet_forward.1} parent=1 // pred_fallthru
      _
    // Predicated region
    $region30: #{my_resnet_forward.1} parent=1 // pred_check
      _
    $region31: #{my_resnet_forward.1} parent=1 // pred_check_branch
      %33 = sbr.rel (0) target = $region33
    $region32: #{my_resnet_forward.1} parent=1 // pred_region
      _
    $region33: #{my_resnet_forward.1} parent=1 // pred_fallthru
      _
    // Predicated region
    $region34: #{my_resnet_forward.1} parent=1 // pred_check
      _
    $region35: #{my_resnet_forward.1} parent=1 // pred_check_branch
      %35 = sbr.rel (0) target = $region37
    $region36: #{my_resnet_forward.1} parent=1 // pred_region
      _
    $region37: #{my_resnet_forward.1} parent=1 // pred_fallthru
      _
    // Predicated region
    $region38: #{my_resnet_forward.1} parent=1 // pred_check
      _
    $region39: #{my_resnet_forward.1} parent=1 // pred_check_branch
      %37 = sbr.rel (0) target = $region41
    $region40: #{my_resnet_forward.1} parent=1 // pred_region
      _
    $region41: #{my_resnet_forward.1} parent=1 // pred_fallthru
      _
    // Predicated region
    $region42: #{my_resnet_forward.1} parent=1 // pred_check
      _
    $region43: #{my_resnet_forward.1} parent=1 // pred_check_branch
      %39 = sbr.rel (0) target = $region45
    $region44: #{my_resnet_forward.1} parent=1 // pred_region
      _
    $region45: #{my_resnet_forward.1} parent=1 // pred_fallthru
      _
    // Predicated region
    $region46: #{my_resnet_forward.1} parent=1 // pred_check
      _
    $region47: #{my_resnet_forward.1} parent=1 // pred_check_branch
      %41 = sbr.rel (0) target = $region49
    $region48: #{my_resnet_forward.1} parent=1 // pred_region
      _
    $region49: #{my_resnet_forward.1} parent=1 // pred_fallthru
      _
    %vm43 = vcmask 523264
    %44 = vst.msk [vmem:[#allocation2] sm:$0xff] %vm43, 0.0
    %45 = vst.msk [vmem:[#allocation2 + $0x8] sm:$0xff] %vm43, 0.0
    %vm46 = vcmask 517120
    %47 = vst.msk [vmem:[#allocation2 + $0x10] sm:$0x3] %vm46, 0.0
    %48 = vst.msk [vmem:[#allocation2 + $0x1b0] sm:$0xff] %vm43, 0.0
    %49 = vst.msk [vmem:[#allocation2 + $0x1b8] sm:$0xff] %vm43, 0.0
    %50 = vst.msk [vmem:[#allocation2 + $0x1c0] sm:$0x3] %vm46, 0.0
    %s51 = scalar_lea.vmem [#allocation2], 408
    %52 = vst.msk [vmem:[%s51] sm:$0xff] %vm43, 0.0
    %53 = vst.msk [vmem:[%s51 + $0x8] sm:$0xff] %vm43, 0.0
    %54 = vst.msk [vmem:[%s51 + $0x10] sm:$0x3] %vm46, 0.0
    %55 = vst.msk [vmem:[%s51 + $0x1b0] sm:$0xff] %vm43, 0.0
    %56 = vst.msk [vmem:[%s51 + $0x1b8] sm:$0xff] %vm43, 0.0
    %57 = vst.msk [vmem:[%s51 + $0x1c0] sm:$0x3] %vm46, 0.0
    %vm58 = vcmask 516096
    %59 = vst.msk [vmem:[#allocation2] sm:$0x1] %vm58, 0.0
    %60 = vst.msk [vmem:[#allocation2 + $0x18] sm:$0x1] %vm58, 0.0
    %61 = vst.msk [vmem:[#allocation2 + $0x30] sm:$0x1] %vm58, 0.0
    %62 = vst.msk [vmem:[#allocation2 + $0x48] sm:$0x1] %vm58, 0.0
    %63 = vst.msk [vmem:[#allocation2 + $0x60] sm:$0x1] %vm58, 0.0
    %64 = vst.msk [vmem:[#allocation2 + $0x78] sm:$0x1] %vm58, 0.0
    %65 = vst.msk [vmem:[#allocation2 + $0x90] sm:$0x1] %vm58, 0.0
    %66 = vst.msk [vmem:[#allocation2 + $0xa8] sm:$0x1] %vm58, 0.0
    %67 = vst.msk [vmem:[#allocation2 + $0xc0] sm:$0x1] %vm58, 0.0
    %68 = vst.msk [vmem:[#allocation2 + $0xd8] sm:$0x1] %vm58, 0.0
    %69 = vst.msk [vmem:[#allocation2 + $0xf0] sm:$0x1] %vm58, 0.0
    %70 = vst.msk [vmem:[#allocation2 + $0x108] sm:$0x1] %vm58, 0.0
    %71 = vst.msk [vmem:[#allocation2 + $0x120] sm:$0x1] %vm58, 0.0
    %72 = vst.msk [vmem:[#allocation2 + $0x138] sm:$0x1] %vm58, 0.0
    %73 = vst.msk [vmem:[#allocation2 + $0x150] sm:$0x1] %vm58, 0.0
    %74 = vst.msk [vmem:[#allocation2 + $0x168] sm:$0x1] %vm58, 0.0
    %75 = vst.msk [vmem:[#allocation2 + $0x180] sm:$0x1] %vm58, 0.0
    %76 = vst.msk [vmem:[#allocation2 + $0x198] sm:$0x1] %vm58, 0.0
    %77 = vst.msk [vmem:[#allocation2 + $0x1b0] sm:$0x1] %vm58, 0.0
    %78 = vst.msk [vmem:[#allocation2 + $0x1c8] sm:$0x1] %vm58, 0.0
    %79 = vst.msk [vmem:[#allocation2 + $0x1e0] sm:$0x1] %vm58, 0.0
    %80 = vst.msk [vmem:[#allocation2 + $0x1f8] sm:$0x1] %vm58, 0.0
    %81 = vst.msk [vmem:[#allocation2 + $0x210] sm:$0x1] %vm58, 0.0
    %82 = vst.msk [vmem:[#allocation2 + $0x228] sm:$0x1] %vm58, 0.0
    %83 = vst.msk [vmem:[#allocation2 + $0x240] sm:$0x1] %vm58, 0.0
    %84 = vst.msk [vmem:[#allocation2 + $0x258] sm:$0x1] %vm58, 0.0
    %85 = vst.msk [vmem:[#allocation2 + $0x270] sm:$0x1] %vm58, 0.0
    %86 = vst.msk [vmem:[#allocation2 + $0x288] sm:$0x1] %vm58, 0.0
    %87 = vst.msk [vmem:[#allocation2 + $0x2a0] sm:$0x1] %vm58, 0.0
    %88 = vst.msk [vmem:[#allocation2 + $0x2b8] sm:$0x1] %vm58, 0.0
    %89 = vst.msk [vmem:[#allocation2 + $0x2d0] sm:$0x1] %vm58, 0.0
    %90 = vst.msk [vmem:[#allocation2 + $0x2e8] sm:$0x1] %vm58, 0.0
    %91 = vst.msk [vmem:[#allocation2 + $0x300] sm:$0x1] %vm58, 0.0
    %92 = vst.msk [vmem:[#allocation2 + $0x318] sm:$0x1] %vm58, 0.0
    %93 = vst.msk [vmem:[#allocation2 + $0x330] sm:$0x1] %vm58, 0.0
    %94 = vst.msk [vmem:[#allocation2 + $0x348] sm:$0x1] %vm58, 0.0
    %95 = vst.msk [vmem:[#allocation2 + $0x11] sm:$0x1] %vm58, 0.0
    %96 = vst.msk [vmem:[#allocation2 + $0x29] sm:$0x1] %vm58, 0.0
    %97 = vst.msk [vmem:[#allocation2 + $0x41] sm:$0x1] %vm58, 0.0
    %98 = vst.msk [vmem:[#allocation2 + $0x59] sm:$0x1] %vm58, 0.0
    %99 = vst.msk [vmem:[#allocation2 + $0x71] sm:$0x1] %vm58, 0.0
    %100 = vst.msk [vmem:[#allocation2 + $0x89] sm:$0x1] %vm58, 0.0
    %101 = vst.msk [vmem:[#allocation2 + $0xa1] sm:$0x1] %vm58, 0.0
    %102 = vst.msk [vmem:[#allocation2 + $0xb9] sm:$0x1] %vm58, 0.0
    %103 = vst.msk [vmem:[#allocation2 + $0xd1] sm:$0x1] %vm58, 0.0
    %104 = vst.msk [vmem:[#allocation2 + $0xe9] sm:$0x1] %vm58, 0.0
    %105 = vst.msk [vmem:[#allocation2 + $0x101] sm:$0x1] %vm58, 0.0
    %106 = vst.msk [vmem:[#allocation2 + $0x119] sm:$0x1] %vm58, 0.0
    %107 = vst.msk [vmem:[#allocation2 + $0x131] sm:$0x1] %vm58, 0.0
    %108 = vst.msk [vmem:[#allocation2 + $0x149] sm:$0x1] %vm58, 0.0
    %109 = vst.msk [vmem:[#allocation2 + $0x161] sm:$0x1] %vm58, 0.0
    %110 = vst.msk [vmem:[#allocation2 + $0x179] sm:$0x1] %vm58, 0.0
    %111 = vst.msk [vmem:[#allocation2 + $0x191] sm:$0x1] %vm58, 0.0
    %112 = vst.msk [vmem:[#allocation2 + $0x1a9] sm:$0x1] %vm58, 0.0
    %113 = vst.msk [vmem:[#allocation2 + $0x1c1] sm:$0x1] %vm58, 0.0
    %114 = vst.msk [vmem:[#allocation2 + $0x1d9] sm:$0x1] %vm58, 0.0
    %115 = vst.msk [vmem:[#allocation2 + $0x1f1] sm:$0x1] %vm58, 0.0
    %116 = vst.msk [vmem:[#allocation2 + $0x209] sm:$0x1] %vm58, 0.0
    %117 = vst.msk [vmem:[#allocation2 + $0x221] sm:$0x1] %vm58, 0.0
    %118 = vst.msk [vmem:[#allocation2 + $0x239] sm:$0x1] %vm58, 0.0
    %119 = vst.msk [vmem:[#allocation2 + $0x251] sm:$0x1] %vm58, 0.0
    %120 = vst.msk [vmem:[#allocation2 + $0x269] sm:$0x1] %vm58, 0.0
    %121 = vst.msk [vmem:[#allocation2 + $0x281] sm:$0x1] %vm58, 0.0
    %122 = vst.msk [vmem:[#allocation2 + $0x299] sm:$0x1] %vm58, 0.0
    %123 = vst.msk [vmem:[#allocation2 + $0x2b1] sm:$0x1] %vm58, 0.0
    %124 = vst.msk [vmem:[#allocation2 + $0x2c9] sm:$0x1] %vm58, 0.0
    %125 = vst.msk [vmem:[#allocation2 + $0x2e1] sm:$0x1] %vm58, 0.0
    %126 = vst.msk [vmem:[#allocation2 + $0x2f9] sm:$0x1] %vm58, 0.0
    %127 = vst.msk [vmem:[#allocation2 + $0x311] sm:$0x1] %vm58, 0.0
    %128 = vst.msk [vmem:[#allocation2 + $0x329] sm:$0x1] %vm58, 0.0
    %129 = vst.msk [vmem:[#allocation2 + $0x341] sm:$0x1] %vm58, 0.0
    %130 = vst.msk [vmem:[#allocation2 + $0x359] sm:$0x1] %vm58, 0.0
    %v131 = vld [vmem:[%s0] sm:$0xff]
    %v132 = vld [vmem:[%s0 + $0x8] sm:$0xff]
    %v133 = vld [vmem:[%s0 + $0x10] sm:$0xff]
    %v134 = vld [vmem:[%s0 + $0x18] sm:$0xff]
    %v135 = vld [vmem:[%s0 + $0x20] sm:$0xff]
    %v136 = vld [vmem:[%s0 + $0x28] sm:$0xff]
    %v137 = vld [vmem:[%s0 + $0x30] sm:$0xff]
    %v138 = vld [vmem:[%s0 + $0x38] sm:$0xff]
    %v139 = vld [vmem:[%s0 + $0x40] sm:$0xff]
    %v140 = vld [vmem:[%s0 + $0x48] sm:$0xff]
    %v141 = vld [vmem:[%s0 + $0x50] sm:$0xff]
    %v142 = vld [vmem:[%s0 + $0x58] sm:$0xff]
    %v143 = vld [vmem:[%s0 + $0x60] sm:$0xff]
    %v144 = vld [vmem:[%s0 + $0x68] sm:$0xff]
    %v145 = vld [vmem:[%s0 + $0x70] sm:$0xff]
    %v146 = vld [vmem:[%s0 + $0x78] sm:$0xff]
    %v147 = vld [vmem:[%s0 + $0x80] sm:$0xff]
    %v148 = vld [vmem:[%s0 + $0x88] sm:$0xff]
    %v149 = vld [vmem:[%s0 + $0x90] sm:$0xff]
    %v150 = vld [vmem:[%s0 + $0x98] sm:$0xff]
    %v151 = vld [vmem:[%s0 + $0xa0] sm:$0xff]
    %v152 = vld [vmem:[%s0 + $0xa8] sm:$0xff]
    %v153 = vld [vmem:[%s0 + $0xb0] sm:$0xff]
    %v154 = vld [vmem:[%s0 + $0xb8] sm:$0xff]
    %v155 = vld [vmem:[%s0 + $0xc0] sm:$0xff]
    %v156 = vld [vmem:[%s0 + $0xc8] sm:$0xff]
    %v157 = vld [vmem:[%s0 + $0xd0] sm:$0xff]
    %v158 = vld [vmem:[%s0 + $0xd8] sm:$0xff]
    %v159 = vld [vmem:[%s0 + $0xe0] sm:$0xff]
    %v160 = vld [vmem:[%s0 + $0xe8] sm:$0xff]
    %v161 = vld [vmem:[%s0 + $0xf0] sm:$0xff]
    %v162 = vld [vmem:[%s0 + $0xf8] sm:$0xff]
    %v163 = vld [vmem:[%s0 + $0x100] sm:$0xff]
    %v164 = vld [vmem:[%s0 + $0x108] sm:$0xff]
    %v165 = vld [vmem:[%s0 + $0x110] sm:$0xff]
    %v166 = vld [vmem:[%s0 + $0x118] sm:$0xff]
    %v167 = vld [vmem:[%s0 + $0x120] sm:$0xff]
    %v168 = vld [vmem:[%s0 + $0x128] sm:$0xff]
    %v169 = vld [vmem:[%s0 + $0x130] sm:$0xff]
    %v170 = vld [vmem:[%s0 + $0x138] sm:$0xff]
    %v171 = vld [vmem:[%s0 + $0x140] sm:$0xff]
    %v172 = vld [vmem:[%s0 + $0x148] sm:$0xff]
    %v173 = vld [vmem:[%s0 + $0x150] sm:$0xff]
    %v174 = vld [vmem:[%s0 + $0x158] sm:$0xff]
    %v175 = vld [vmem:[%s0 + $0x160] sm:$0xff]
    %v176 = vld [vmem:[%s0 + $0x168] sm:$0xff]
    %v177 = vld [vmem:[%s0 + $0x170] sm:$0xff]
    %v178 = vld [vmem:[%s0 + $0x178] sm:$0xff]
    %v179 = vld [vmem:[%s0 + $0x180] sm:$0xff]
    %v180 = vld [vmem:[%s0 + $0x188] sm:$0xff]
    %v181 = vld [vmem:[%s0 + $0x190] sm:$0xff]
    %v182 = vld [vmem:[%s0 + $0x198] sm:$0xff]
    %v183 = vld [vmem:[%s0 + $0x1a0] sm:$0xff]
    %v184 = vld [vmem:[%s0 + $0x1a8] sm:$0xff]
    %v185 = vld [vmem:[%s0 + $0x1b0] sm:$0xff]
    %v186 = vld [vmem:[%s0 + $0x1b8] sm:$0xff]
    %v187 = vld [vmem:[%s0 + $0x1c0] sm:$0xff]
    %v188 = vld [vmem:[%s0 + $0x1c8] sm:$0xff]
    %v189 = vld [vmem:[%s0 + $0x1d0] sm:$0xff]
    %v190 = vld [vmem:[%s0 + $0x1d8] sm:$0xff]
    %v191 = vld [vmem:[%s0 + $0x1e0] sm:$0xff]
    %v192 = vld [vmem:[%s0 + $0x1e8] sm:$0xff]
    %v193 = vld [vmem:[%s0 + $0x1f0] sm:$0xff]
    %v194 = vld [vmem:[%s0 + $0x1f8] sm:$0xff]
    %v195 = vld [vmem:[%s1] sm:$0xff]
    %v196 = vld [vmem:[%s1 + $0x8] sm:$0xff]
    %vm197 = vcmask 130048
    %v199 = vsel %vm197, %v131, 0
    %v202 = vsel %vm197, %v132, 0
    %v205 = vsel %vm197, %v133, 0
    %v208 = vsel %vm197, %v134, 0
    %v211 = vsel %vm197, %v135, 0
    %v214 = vsel %vm197, %v136, 0
    %v217 = vsel %vm197, %v137, 0
    %v220 = vsel %vm197, %v138, 0
    %v223 = vsel %vm197, %v139, 0
    %v226 = vsel %vm197, %v140, 0
    %v229 = vsel %vm197, %v141, 0
    %v232 = vsel %vm197, %v142, 0
    %v235 = vsel %vm197, %v143, 0
    %v238 = vsel %vm197, %v144, 0
    %v241 = vsel %vm197, %v145, 0
    %v244 = vsel %vm197, %v146, 0
    %v247 = vsel %vm197, %v147, 0
    %v250 = vsel %vm197, %v148, 0
    %v253 = vsel %vm197, %v149, 0
    %v256 = vsel %vm197, %v150, 0
    %v259 = vsel %vm197, %v151, 0
    %v262 = vsel %vm197, %v152, 0
    %v265 = vsel %vm197, %v153, 0
    %v268 = vsel %vm197, %v154, 0
    %v271 = vsel %vm197, %v155, 0
    %v274 = vsel %vm197, %v156, 0
    %v277 = vsel %vm197, %v157, 0
    %v280 = vsel %vm197, %v158, 0
    %v283 = vsel %vm197, %v159, 0
    %v286 = vsel %vm197, %v160, 0
    %v289 = vsel %vm197, %v161, 0
    %v292 = vsel %vm197, %v162, 0
    %v295 = vsel %vm197, %v163, 0
    %v298 = vsel %vm197, %v164, 0
    %v301 = vsel %vm197, %v165, 0
    %v304 = vsel %vm197, %v166, 0
    %v307 = vsel %vm197, %v167, 0
    %v310 = vsel %vm197, %v168, 0
    %v313 = vsel %vm197, %v169, 0
    %v316 = vsel %vm197, %v170, 0
    %v319 = vsel %vm197, %v171, 0
    %v322 = vsel %vm197, %v172, 0
    %v325 = vsel %vm197, %v173, 0
    %v328 = vsel %vm197, %v174, 0
    %v331 = vsel %vm197, %v175, 0
    %v334 = vsel %vm197, %v176, 0
    %v337 = vsel %vm197, %v177, 0
    %v340 = vsel %vm197, %v178, 0
    %v343 = vsel %vm197, %v179, 0
    %v346 = vsel %vm197, %v180, 0
    %v349 = vsel %vm197, %v181, 0
    %v352 = vsel %vm197, %v182, 0
    %v355 = vsel %vm197, %v183, 0
    %v358 = vsel %vm197, %v184, 0
    %v361 = vsel %vm197, %v185, 0
    %v364 = vsel %vm197, %v186, 0
    %v367 = vsel %vm197, %v187, 0
    %v370 = vsel %vm197, %v188, 0
    %v373 = vsel %vm197, %v189, 0
    %v376 = vsel %vm197, %v190, 0
    %v379 = vsel %vm197, %v191, 0
    %v382 = vsel %vm197, %v192, 0
    %v385 = vsel %vm197, %v193, 0
    %v388 = vsel %vm197, %v194, 0
    %390 = vmatprep.subr.mxu0 0.0
    %391 = vmatpush1.msra.mxu0 %v195
    %392 = vmatprep.subr.mxu0 0.0
    %393 = vmatpush1.msra.mxu0 %v196
    %394 = vmatprep.subr.mxu0 0.0
    %395 = vmatpush1.msra.mxu0 0.0
    %396 = vmatprep.subr.mxu0 0.0
    %397 = vmatpush1.msra.mxu0 0.0
    %398 = vmatprep.subr.mxu0 0.0
    %399 = vmatpush1.msra.mxu0 0.0
    %400 = vmatprep.subr.mxu0 0.0
    %401 = vmatpush1.msra.mxu0 0.0
    %402 = vmatprep.subr.mxu0 0.0
    %403 = vmatpush1.msra.mxu0 0.0
    %404 = vmatprep.subr.mxu0 0.0
    %405 = vmatpush1.msra.mxu0 0.0
    %406 = vmatprep.subr.mxu0 0.0
    %407 = vmatpush1.msra.mxu0 0.0
    %408 = vmatprep.subr.mxu0 0.0
    %409 = vmatpush1.msra.mxu0 0.0
    %410 = vmatprep.subr.mxu0 0.0
    %411 = vmatpush1.msra.mxu0 0.0
    %412 = vmatprep.subr.mxu0 0.0
    %413 = vmatpush1.msra.mxu0 0.0
    %414 = vmatprep.subr.mxu0 0.0
    %415 = vmatpush1.msra.mxu0 0.0
    %416 = vmatprep.subr.mxu0 0.0
    %417 = vmatpush1.msra.mxu0 0.0
    %418 = vmatprep.subr.mxu0 0.0
    %419 = vmatpush1.msra.mxu0 0.0
    %420 = vmatprep.subr.mxu0 0.0
    %421 = vmatpush1.msra.mxu0 0.0
    %422 = vmatprep.subr.mxu0 0.0
    %423 = vmatpush1.msra.mxu0 0.0
    %424 = vmatprep.subr.mxu0 0.0
    %425 = vmatpush1.msra.mxu0 0.0
    %426 = vmatprep.subr.mxu0 0.0
    %427 = vmatpush1.msra.mxu0 0.0
    %428 = vmatprep.subr.mxu0 0.0
    %429 = vmatpush1.msra.mxu0 0.0
    %430 = vmatprep.subr.mxu0 0.0
    %431 = vmatpush1.msra.mxu0 0.0
    %432 = vmatprep.subr.mxu0 0.0
    %433 = vmatpush1.msra.mxu0 0.0
    %434 = vmatprep.subr.mxu0 0.0
    %435 = vmatpush1.msra.mxu0 0.0
    %436 = vmatprep.subr.mxu0 0.0
    %437 = vmatpush1.msra.mxu0 0.0
    %438 = vmatprep.subr.mxu0 0.0
    %439 = vmatpush1.msra.mxu0 0.0
    %440 = vmatprep.subr.mxu0 0.0
    %441 = vmatpush1.msra.mxu0 0.0
    %442 = vmatprep.subr.mxu0 0.0
    %443 = vmatpush1.msra.mxu0 0.0
    %444 = vmatprep.subr.mxu0 0.0
    %445 = vmatpush1.msra.mxu0 0.0
    %446 = vmatprep.subr.mxu0 0.0
    %447 = vmatpush1.msra.mxu0 0.0
    %448 = vmatprep.subr.mxu0 0.0
    %449 = vmatpush1.msra.mxu0 0.0
    %450 = vmatprep.subr.mxu0 0.0
    %451 = vmatpush1.msra.mxu0 0.0
    %452 = vmatprep.subr.mxu0 0.0
    %453 = vmatpush1.msra.mxu0 0.0
    %454 = vmatprep.mubr.f32.mxu0 0.0
    %455 = vmatmul.mubr.f32.gmra.mrb[0].mxu0 %v199
    %v456 = vpop.f32.mrb[0].mxu0
    %v457 = vadd.f32 0.0, %v456
    %v458 = vpop.f32.mrb[0].mxu0
    %459 = vmatprep.mubr.f32.mxu0 0.0
    %460 = vmatmul.mubr.f32.gmra.mrb[0].mxu0 %v202
    %v461 = vpop.f32.mrb[0].mxu0
    %v462 = vadd.f32 0.0, %v461
    %v463 = vpop.f32.mrb[0].mxu0
    %464 = vmatprep.mubr.f32.mxu0 0.0
    %465 = vmatmul.mubr.f32.gmra.mrb[0].mxu0 %v205
    %v466 = vpop.f32.mrb[0].mxu0
    %v467 = vadd.f32 0.0, %v466
    %v468 = vpop.f32.mrb[0].mxu0
    %469 = vmatprep.mubr.f32.mxu0 0.0
    %470 = vmatmul.mubr.f32.gmra.mrb[0].mxu0 %v208
    %v471 = vpop.f32.mrb[0].mxu0
    %v472 = vadd.f32 0.0, %v471
    %v473 = vpop.f32.mrb[0].mxu0
    %474 = vmatprep.mubr.f32.mxu0 0.0
    %475 = vmatmul.mubr.f32.gmra.mrb[0].mxu0 %v211
    %v476 = vpop.f32.mrb[0].mxu0
    %v477 = vadd.f32 0.0, %v476
    %v478 = vpop.f32.mrb[0].mxu0
    %479 = vmatprep.mubr.f32.mxu0 0.0
    %480 = vmatmul.mubr.f32.gmra.mrb[0].mxu0 %v214
    %v481 = vpop.f32.mrb[0].mxu0
    %v482 = vadd.f32 0.0, %v481
    %v483 = vpop.f32.mrb[0].mxu0
    %484 = vmatprep.mubr.f32.mxu0 0.0
    %485 = vmatmul.mubr.f32.gmra.mrb[0].mxu0 %v217
    %v486 = vpop.f32.mrb[0].mxu0
    %v487 = vadd.f32 0.0, %v486
    %v488 = vpop.f32.mrb[0].mxu0
    %489 = vmatprep.mubr.f32.mxu0 0.0
    %490 = vmatmul.mubr.f32.gmra.mrb[0].mxu0 %v220
    %v491 = vpop.f32.mrb[0].mxu0
    %v492 = vadd.f32 0.0, %v491
    %v493 = vpop.f32.mrb[0].mxu0
    %494 = vmatprep.mubr.f32.mxu0 0.0
    %495 = vmatmul.mubr.f32.gmra.mrb[0].mxu0 %v223
    %v496 = vpop.f32.mrb[0].mxu0
    %v497 = vadd.f32 0.0, %v496
    %v498 = vpop.f32.mrb[0].mxu0
    %499 = vmatprep.mubr.f32.mxu0 0.0
    %500 = vmatmul.mubr.f32.gmra.mrb[0].mxu0 %v226
    %v501 = vpop.f32.mrb[0].mxu0
    %v502 = vadd.f32 0.0, %v501
    %v503 = vpop.f32.mrb[0].mxu0
    %504 = vmatprep.mubr.f32.mxu0 0.0
    %505 = vmatmul.mubr.f32.gmra.mrb[0].mxu0 %v229
    %v506 = vpop.f32.mrb[0].mxu0
    %v507 = vadd.f32 0.0, %v506
    %v508 = vpop.f32.mrb[0].mxu0
    %509 = vmatprep.mubr.f32.mxu0 0.0
    %510 = vmatmul.mubr.f32.gmra.mrb[0].mxu0 %v232
    %v511 = vpop.f32.mrb[0].mxu0
    %v512 = vadd.f32 0.0, %v511
    %v513 = vpop.f32.mrb[0].mxu0
    %514 = vmatprep.mubr.f32.mxu0 0.0
    %515 = vmatmul.mubr.f32.gmra.mrb[0].mxu0 %v235
    %v516 = vpop.f32.mrb[0].mxu0
    %v517 = vadd.f32 0.0, %v516
    %v518 = vpop.f32.mrb[0].mxu0
    %519 = vmatprep.mubr.f32.mxu0 0.0
    %520 = vmatmul.mubr.f32.gmra.mrb[0].mxu0 %v238
    %v521 = vpop.f32.mrb[0].mxu0
    %v522 = vadd.f32 0.0, %v521
    %v523 = vpop.f32.mrb[0].mxu0
    %524 = vmatprep.mubr.f32.mxu0 0.0
    %525 = vmatmul.mubr.f32.gmra.mrb[0].mxu0 %v241
    %v526 = vpop.f32.mrb[0].mxu0
    %v527 = vadd.f32 0.0, %v526
    %v528 = vpop.f32.mrb[0].mxu0
    %529 = vmatprep.mubr.f32.mxu0 0.0
    %530 = vmatmul.mubr.f32.gmra.mrb[0].mxu0 %v244
    %v531 = vpop.f32.mrb[0].mxu0
    %v532 = vadd.f32 0.0, %v531
    %v533 = vpop.f32.mrb[0].mxu0
    %534 = vmatprep.mubr.f32.mxu0 0.0
    %535 = vmatmul.mubr.f32.gmra.mrb[0].mxu0 %v247
    %v536 = vpop.f32.mrb[0].mxu0
    %v537 = vadd.f32 0.0, %v536
    %v538 = vpop.f32.mrb[0].mxu0
    %539 = vmatprep.mubr.f32.mxu0 0.0
    %540 = vmatmul.mubr.f32.gmra.mrb[0].mxu0 %v250
    %v541 = vpop.f32.mrb[0].mxu0
    %v542 = vadd.f32 0.0, %v541
    %v543 = vpop.f32.mrb[0].mxu0
    %544 = vmatprep.mubr.f32.mxu0 0.0
    %545 = vmatmul.mubr.f32.gmra.mrb[0].mxu0 %v253
    %v546 = vpop.f32.mrb[0].mxu0
    %v547 = vadd.f32 0.0, %v546
    %v548 = vpop.f32.mrb[0].mxu0
    %549 = vmatprep.mubr.f32.mxu0 0.0
    %550 = vmatmul.mubr.f32.gmra.mrb[0].mxu0 %v256
    %v551 = vpop.f32.mrb[0].mxu0
    %v552 = vadd.f32 0.0, %v551
    %v553 = vpop.f32.mrb[0].mxu0
    %554 = vmatprep.mubr.f32.mxu0 0.0
    %555 = vmatmul.mubr.f32.gmra.mrb[0].mxu0 %v259
    %v556 = vpop.f32.mrb[0].mxu0
    %v557 = vadd.f32 0.0, %v556
    %v558 = vpop.f32.mrb[0].mxu0
    %559 = vmatprep.mubr.f32.mxu0 0.0
    %560 = vmatmul.mubr.f32.gmra.mrb[0].mxu0 %v262
    %v561 = vpop.f32.mrb[0].mxu0
    %v562 = vadd.f32 0.0, %v561
    %v563 = vpop.f32.mrb[0].mxu0
    %564 = vmatprep.mubr.f32.mxu0 0.0
    %565 = vmatmul.mubr.f32.gmra.mrb[0].mxu0 %v265
    %v566 = vpop.f32.mrb[0].mxu0
    %v567 = vadd.f32 0.0, %v566
    %v568 = vpop.f32.mrb[0].mxu0
    %569 = vmatprep.mubr.f32.mxu0 0.0
    %570 = vmatmul.mubr.f32.gmra.mrb[0].mxu0 %v268
    %v571 = vpop.f32.mrb[0].mxu0
    %v572 = vadd.f32 0.0, %v571
    %v573 = vpop.f32.mrb[0].mxu0
    %574 = vmatprep.mubr.f32.mxu0 0.0
    %575 = vmatmul.mubr.f32.gmra.mrb[0].mxu0 %v271
    %v576 = vpop.f32.mrb[0].mxu0
    %v577 = vadd.f32 0.0, %v576
    %v578 = vpop.f32.mrb[0].mxu0
    %579 = vmatprep.mubr.f32.mxu0 0.0
    %580 = vmatmul.mubr.f32.gmra.mrb[0].mxu0 %v274
    %v581 = vpop.f32.mrb[0].mxu0
    %v582 = vadd.f32 0.0, %v581
    %v583 = vpop.f32.mrb[0].mxu0
    %584 = vmatprep.mubr.f32.mxu0 0.0
    %585 = vmatmul.mubr.f32.gmra.mrb[0].mxu0 %v277
    %v586 = vpop.f32.mrb[0].mxu0
    %v587 = vadd.f32 0.0, %v586
    %v588 = vpop.f32.mrb[0].mxu0
    %589 = vmatprep.mubr.f32.mxu0 0.0
    %590 = vmatmul.mubr.f32.gmra.mrb[0].mxu0 %v280
    %v591 = vpop.f32.mrb[0].mxu0
    %v592 = vadd.f32 0.0, %v591
    %v593 = vpop.f32.mrb[0].mxu0
    %594 = vmatprep.mubr.f32.mxu0 0.0
    %595 = vmatmul.mubr.f32.gmra.mrb[0].mxu0 %v283
    %v596 = vpop.f32.mrb[0].mxu0
    %v597 = vadd.f32 0.0, %v596
    %v598 = vpop.f32.mrb[0].mxu0
    %599 = vmatprep.mubr.f32.mxu0 0.0
    %600 = vmatmul.mubr.f32.gmra.mrb[0].mxu0 %v286
    %v601 = vpop.f32.mrb[0].mxu0
    %v602 = vadd.f32 0.0, %v601
    %v603 = vpop.f32.mrb[0].mxu0
    %604 = vmatprep.mubr.f32.mxu0 0.0
    %605 = vmatmul.mubr.f32.gmra.mrb[0].mxu0 %v289
    %v606 = vpop.f32.mrb[0].mxu0
    %v607 = vadd.f32 0.0, %v606
    %v608 = vpop.f32.mrb[0].mxu0
    %609 = vmatprep.mubr.f32.mxu0 0.0
    %610 = vmatmul.mubr.f32.gmra.mrb[0].mxu0 %v292
    %v611 = vpop.f32.mrb[0].mxu0
    %v612 = vadd.f32 0.0, %v611
    %v613 = vpop.f32.mrb[0].mxu0
    %614 = vmatprep.mubr.f32.mxu0 0.0
    %615 = vmatmul.mubr.f32.gmra.mrb[0].mxu0 %v295
    %v616 = vpop.f32.mrb[0].mxu0
    %v617 = vadd.f32 0.0, %v616
    %v618 = vpop.f32.mrb[0].mxu0
    %619 = vmatprep.mubr.f32.mxu0 0.0
    %620 = vmatmul.mubr.f32.gmra.mrb[0].mxu0 %v298
    %v621 = vpop.f32.mrb[0].mxu0
    %v622 = vadd.f32 0.0, %v621
    %v623 = vpop.f32.mrb[0].mxu0
    %624 = vmatprep.mubr.f32.mxu0 0.0
    %625 = vmatmul.mubr.f32.gmra.mrb[0].mxu0 %v301
    %v626 = vpop.f32.mrb[0].mxu0
    %v627 = vadd.f32 0.0, %v626
    %v628 = vpop.f32.mrb[0].mxu0
    %629 = vmatprep.mubr.f32.mxu0 0.0
    %630 = vmatmul.mubr.f32.gmra.mrb[0].mxu0 %v304
    %v631 = vpop.f32.mrb[0].mxu0
    %v632 = vadd.f32 0.0, %v631
    %v633 = vpop.f32.mrb[0].mxu0
    %634 = vmatprep.mubr.f32.mxu0 0.0
    %635 = vmatmul.mubr.f32.gmra.mrb[0].mxu0 %v307
    %v636 = vpop.f32.mrb[0].mxu0
    %v637 = vadd.f32 0.0, %v636
    %v638 = vpop.f32.mrb[0].mxu0
    %639 = vmatprep.mubr.f32.mxu0 0.0
    %640 = vmatmul.mubr.f32.gmra.mrb[0].mxu0 %v310
    %v641 = vpop.f32.mrb[0].mxu0
    %v642 = vadd.f32 0.0, %v641
    %v643 = vpop.f32.mrb[0].mxu0
    %644 = vmatprep.mubr.f32.mxu0 0.0
    %645 = vmatmul.mubr.f32.gmra.mrb[0].mxu0 %v313
    %v646 = vpop.f32.mrb[0].mxu0
    %v647 = vadd.f32 0.0, %v646
    %v648 = vpop.f32.mrb[0].mxu0
    %649 = vmatprep.mubr.f32.mxu0 0.0
    %650 = vmatmul.mubr.f32.gmra.mrb[0].mxu0 %v316
    %v651 = vpop.f32.mrb[0].mxu0
    %v652 = vadd.f32 0.0, %v651
    %v653 = vpop.f32.mrb[0].mxu0
    %654 = vmatprep.mubr.f32.mxu0 0.0
    %655 = vmatmul.mubr.f32.gmra.mrb[0].mxu0 %v319
    %v656 = vpop.f32.mrb[0].mxu0
    %v657 = vadd.f32 0.0, %v656
    %v658 = vpop.f32.mrb[0].mxu0
    %659 = vmatprep.mubr.f32.mxu0 0.0
    %660 = vmatmul.mubr.f32.gmra.mrb[0].mxu0 %v322
    %v661 = vpop.f32.mrb[0].mxu0
    %v662 = vadd.f32 0.0, %v661
    %v663 = vpop.f32.mrb[0].mxu0
    %664 = vmatprep.mubr.f32.mxu0 0.0
    %665 = vmatmul.mubr.f32.gmra.mrb[0].mxu0 %v325
    %v666 = vpop.f32.mrb[0].mxu0
    %v667 = vadd.f32 0.0, %v666
    %v668 = vpop.f32.mrb[0].mxu0
    %669 = vmatprep.mubr.f32.mxu0 0.0
    %670 = vmatmul.mubr.f32.gmra.mrb[0].mxu0 %v328
    %v671 = vpop.f32.mrb[0].mxu0
    %v672 = vadd.f32 0.0, %v671
    %v673 = vpop.f32.mrb[0].mxu0
    %674 = vmatprep.mubr.f32.mxu0 0.0
    %675 = vmatmul.mubr.f32.gmra.mrb[0].mxu0 %v331
    %v676 = vpop.f32.mrb[0].mxu0
    %v677 = vadd.f32 0.0, %v676
    %v678 = vpop.f32.mrb[0].mxu0
    %679 = vmatprep.mubr.f32.mxu0 0.0
    %680 = vmatmul.mubr.f32.gmra.mrb[0].mxu0 %v334
    %v681 = vpop.f32.mrb[0].mxu0
    %v682 = vadd.f32 0.0, %v681
    %v683 = vpop.f32.mrb[0].mxu0
    %684 = vmatprep.mubr.f32.mxu0 0.0
    %685 = vmatmul.mubr.f32.gmra.mrb[0].mxu0 %v337
    %v686 = vpop.f32.mrb[0].mxu0
    %v687 = vadd.f32 0.0, %v686
    %v688 = vpop.f32.mrb[0].mxu0
    %689 = vmatprep.mubr.f32.mxu0 0.0
    %690 = vmatmul.mubr.f32.gmra.mrb[0].mxu0 %v340
    %v691 = vpop.f32.mrb[0].mxu0
    %v692 = vadd.f32 0.0, %v691
    %v693 = vpop.f32.mrb[0].mxu0
    %694 = vmatprep.mubr.f32.mxu0 0.0
    %695 = vmatmul.mubr.f32.gmra.mrb[0].mxu0 %v343
    %v696 = vpop.f32.mrb[0].mxu0
    %v697 = vadd.f32 0.0, %v696
    %v698 = vpop.f32.mrb[0].mxu0
    %699 = vmatprep.mubr.f32.mxu0 0.0
    %700 = vmatmul.mubr.f32.gmra.mrb[0].mxu0 %v346
    %v701 = vpop.f32.mrb[0].mxu0
    %v702 = vadd.f32 0.0, %v701
    %v703 = vpop.f32.mrb[0].mxu0
    %704 = vmatprep.mubr.f32.mxu0 0.0
    %705 = vmatmul.mubr.f32.gmra.mrb[0].mxu0 %v349
    %v706 = vpop.f32.mrb[0].mxu0
    %v707 = vadd.f32 0.0, %v706
    %v708 = vpop.f32.mrb[0].mxu0
    %709 = vmatprep.mubr.f32.mxu0 0.0
    %710 = vmatmul.mubr.f32.gmra.mrb[0].mxu0 %v352
    %v711 = vpop.f32.mrb[0].mxu0
    %v712 = vadd.f32 0.0, %v711
    %v713 = vpop.f32.mrb[0].mxu0
    %714 = vmatprep.mubr.f32.mxu0 0.0
    %715 = vmatmul.mubr.f32.gmra.mrb[0].mxu0 %v355
    %v716 = vpop.f32.mrb[0].mxu0
    %v717 = vadd.f32 0.0, %v716
    %v718 = vpop.f32.mrb[0].mxu0
    %719 = vmatprep.mubr.f32.mxu0 0.0
    %720 = vmatmul.mubr.f32.gmra.mrb[0].mxu0 %v358
    %v721 = vpop.f32.mrb[0].mxu0
    %v722 = vadd.f32 0.0, %v721
    %v723 = vpop.f32.mrb[0].mxu0
    %724 = vmatprep.mubr.f32.mxu0 0.0
    %725 = vmatmul.mubr.f32.gmra.mrb[0].mxu0 %v361
    %v726 = vpop.f32.mrb[0].mxu0
    %v727 = vadd.f32 0.0, %v726
    %v728 = vpop.f32.mrb[0].mxu0
    %729 = vmatprep.mubr.f32.mxu0 0.0
    %730 = vmatmul.mubr.f32.gmra.mrb[0].mxu0 %v364
    %v731 = vpop.f32.mrb[0].mxu0
    %v732 = vadd.f32 0.0, %v731
    %v733 = vpop.f32.mrb[0].mxu0
    %734 = vmatprep.mubr.f32.mxu0 0.0
    %735 = vmatmul.mubr.f32.gmra.mrb[0].mxu0 %v367
    %v736 = vpop.f32.mrb[0].mxu0
    %v737 = vadd.f32 0.0, %v736
    %v738 = vpop.f32.mrb[0].mxu0
    %739 = vmatprep.mubr.f32.mxu0 0.0
    %740 = vmatmul.mubr.f32.gmra.mrb[0].mxu0 %v370
    %v741 = vpop.f32.mrb[0].mxu0
    %v742 = vadd.f32 0.0, %v741
    %v743 = vpop.f32.mrb[0].mxu0
    %744 = vmatprep.mubr.f32.mxu0 0.0
    %745 = vmatmul.mubr.f32.gmra.mrb[0].mxu0 %v373
    %v746 = vpop.f32.mrb[0].mxu0
    %v747 = vadd.f32 0.0, %v746
    %v748 = vpop.f32.mrb[0].mxu0
    %749 = vmatprep.mubr.f32.mxu0 0.0
    %750 = vmatmul.mubr.f32.gmra.mrb[0].mxu0 %v376
    %v751 = vpop.f32.mrb[0].mxu0
    %v752 = vadd.f32 0.0, %v751
    %v753 = vpop.f32.mrb[0].mxu0
    %754 = vmatprep.mubr.f32.mxu0 0.0
    %755 = vmatmul.mubr.f32.gmra.mrb[0].mxu0 %v379
    %v756 = vpop.f32.mrb[0].mxu0
    %v757 = vadd.f32 0.0, %v756
    %v758 = vpop.f32.mrb[0].mxu0
    %759 = vmatprep.mubr.f32.mxu0 0.0
    %760 = vmatmul.mubr.f32.gmra.mrb[0].mxu0 %v382
    %v761 = vpop.f32.mrb[0].mxu0
    %v762 = vadd.f32 0.0, %v761
    %v763 = vpop.f32.mrb[0].mxu0
    %764 = vmatprep.mubr.f32.mxu0 0.0
    %765 = vmatmul.mubr.f32.gmra.mrb[0].mxu0 %v385
    %v766 = vpop.f32.mrb[0].mxu0
    %v767 = vadd.f32 0.0, %v766
    %v768 = vpop.f32.mrb[0].mxu0
    %769 = vmatprep.mubr.f32.mxu0 0.0
    %770 = vmatmul.mubr.f32.gmra.mrb[0].mxu0 %v388
    %v771 = vpop.f32.mrb[0].mxu0
    %v772 = vadd.f32 0.0, %v771
    %v773 = vpop.f32.mrb[0].mxu0
    %774 = vdwg.mxu0
    %v775 = vsel %vm43, %v457, 0.0
    %v776 = vsel %vm43, %v462, 0.0
    %v777 = vadd.f32 %v775, %v776
    %v778 = vsel %vm43, %v467, 0.0
    %v779 = vadd.f32 %v777, %v778
    %v780 = vsel %vm43, %v472, 0.0
    %v781 = vadd.f32 %v779, %v780
    %v782 = vsel %vm43, %v477, 0.0
    %v783 = vadd.f32 %v781, %v782
    %v784 = vsel %vm43, %v482, 0.0
    %v785 = vadd.f32 %v783, %v784
    %v786 = vsel %vm43, %v487, 0.0
    %v787 = vadd.f32 %v785, %v786
    %v788 = vsel %vm43, %v492, 0.0
    %v789 = vadd.f32 %v787, %v788
    %v790 = vsel %vm43, %v497, 0.0
    %v791 = vadd.f32 %v789, %v790
    %v792 = vsel %vm43, %v502, 0.0
    %v793 = vadd.f32 %v791, %v792
    %v794 = vsel %vm43, %v507, 0.0
    %v795 = vadd.f32 %v793, %v794
    %v796 = vsel %vm43, %v512, 0.0
    %v797 = vadd.f32 %v795, %v796
    %v798 = vsel %vm43, %v517, 0.0
    %v799 = vadd.f32 %v797, %v798
    %v800 = vsel %vm43, %v522, 0.0
    %v801 = vadd.f32 %v799, %v800
    %v802 = vsel %vm43, %v527, 0.0
    %v803 = vadd.f32 %v801, %v802
    %v804 = vsel %vm43, %v532, 0.0
    %v805 = vadd.f32 %v803, %v804
    %v806 = vsel %vm43, %v537, 0.0
    %v807 = vadd.f32 %v805, %v806
    %v808 = vsel %vm43, %v542, 0.0
    %v809 = vadd.f32 %v807, %v808
    %v810 = vsel %vm43, %v547, 0.0
    %v811 = vadd.f32 %v809, %v810
    %v812 = vsel %vm43, %v552, 0.0
    %v813 = vadd.f32 %v811, %v812
    %v814 = vsel %vm43, %v557, 0.0
    %v815 = vadd.f32 %v813, %v814
    %v816 = vsel %vm43, %v562, 0.0
    %v817 = vadd.f32 %v815, %v816
    %v818 = vsel %vm43, %v567, 0.0
    %v819 = vadd.f32 %v817, %v818
    %v820 = vsel %vm43, %v572, 0.0
    %v821 = vadd.f32 %v819, %v820
    %v822 = vsel %vm43, %v577, 0.0
    %v823 = vadd.f32 %v821, %v822
    %v824 = vsel %vm43, %v582, 0.0
    %v825 = vadd.f32 %v823, %v824
    %v826 = vsel %vm43, %v587, 0.0
    %v827 = vadd.f32 %v825, %v826
    %v828 = vsel %vm43, %v592, 0.0
    %v829 = vadd.f32 %v827, %v828
    %v830 = vsel %vm43, %v597, 0.0
    %v831 = vadd.f32 %v829, %v830
    %v832 = vsel %vm43, %v602, 0.0
    %v833 = vadd.f32 %v831, %v832
    %v834 = vsel %vm43, %v607, 0.0
    %v835 = vadd.f32 %v833, %v834
    %v836 = vsel %vm43, %v612, 0.0
    %v837 = vadd.f32 %v835, %v836
    %v838 = vsel %vm43, %v617, 0.0
    %v839 = vadd.f32 %v837, %v838
    %v840 = vsel %vm43, %v622, 0.0
    %v841 = vadd.f32 %v839, %v840
    %v842 = vsel %vm43, %v627, 0.0
    %v843 = vadd.f32 %v841, %v842
    %v844 = vsel %vm43, %v632, 0.0
    %v845 = vadd.f32 %v843, %v844
    %v846 = vsel %vm43, %v637, 0.0
    %v847 = vadd.f32 %v845, %v846
    %v848 = vsel %vm43, %v642, 0.0
    %v849 = vadd.f32 %v847, %v848
    %v850 = vsel %vm43, %v647, 0.0
    %v851 = vadd.f32 %v849, %v850
    %v852 = vsel %vm43, %v652, 0.0
    %v853 = vadd.f32 %v851, %v852
    %v854 = vsel %vm43, %v657, 0.0
    %v855 = vadd.f32 %v853, %v854
    %v856 = vsel %vm43, %v662, 0.0
    %v857 = vadd.f32 %v855, %v856
    %v858 = vsel %vm43, %v667, 0.0
    %v859 = vadd.f32 %v857, %v858
    %v860 = vsel %vm43, %v672, 0.0
    %v861 = vadd.f32 %v859, %v860
    %v862 = vsel %vm43, %v677, 0.0
    %v863 = vadd.f32 %v861, %v862
    %v864 = vsel %vm43, %v682, 0.0
    %v865 = vadd.f32 %v863, %v864
    %v866 = vsel %vm43, %v687, 0.0
    %v867 = vadd.f32 %v865, %v866
    %v868 = vsel %vm43, %v692, 0.0
    %v869 = vadd.f32 %v867, %v868
    %v870 = vsel %vm43, %v697, 0.0
    %v871 = vadd.f32 %v869, %v870
    %v872 = vsel %vm43, %v702, 0.0
    %v873 = vadd.f32 %v871, %v872
    %v874 = vsel %vm43, %v707, 0.0
    %v875 = vadd.f32 %v873, %v874
    %v876 = vsel %vm43, %v712, 0.0
    %v877 = vadd.f32 %v875, %v876
    %v878 = vsel %vm43, %v717, 0.0
    %v879 = vadd.f32 %v877, %v878
    %v880 = vsel %vm43, %v722, 0.0
    %v881 = vadd.f32 %v879, %v880
    %v882 = vsel %vm43, %v727, 0.0
    %v883 = vadd.f32 %v881, %v882
    %v884 = vsel %vm43, %v732, 0.0
    %v885 = vadd.f32 %v883, %v884
    %v886 = vsel %vm43, %v737, 0.0
    %v887 = vadd.f32 %v885, %v886
    %v888 = vsel %vm43, %v742, 0.0
    %v889 = vadd.f32 %v887, %v888
    %v890 = vsel %vm43, %v747, 0.0
    %v891 = vadd.f32 %v889, %v890
    %v892 = vsel %vm43, %v752, 0.0
    %v893 = vadd.f32 %v891, %v892
    %v894 = vsel %vm43, %v757, 0.0
    %v895 = vadd.f32 %v893, %v894
    %v896 = vsel %vm43, %v762, 0.0
    %v897 = vadd.f32 %v895, %v896
    %v898 = vsel %vm43, %v767, 0.0
    %v899 = vadd.f32 %v897, %v898
    %v900 = vsel %vm43, %v772, 0.0
    %v901 = vadd.f32 %v899, %v900
    %v902 = vrot.slane %v901, 4
    %v903 = vadd.f32 %v901, %v902
    %v904 = vrot.slane %v903, 2
    %v905 = vadd.f32 %v903, %v904
    %v906 = vrot.slane %v905, 1
    %v907 = vadd.f32 %v905, %v906
    %v908 = vmul.f32 %v457, %v457
    %v909 = vmul.f32 %v462, %v462
    %v910 = vmul.f32 %v467, %v467
    %v911 = vmul.f32 %v472, %v472
    %v912 = vmul.f32 %v477, %v477
    %v913 = vmul.f32 %v482, %v482
    %v914 = vmul.f32 %v487, %v487
    %v915 = vmul.f32 %v492, %v492
    %v916 = vmul.f32 %v497, %v497
    %v917 = vmul.f32 %v502, %v502
    %v918 = vmul.f32 %v507, %v507
    %v919 = vmul.f32 %v512, %v512
    %v920 = vmul.f32 %v517, %v517
    %v921 = vmul.f32 %v522, %v522
    %v922 = vmul.f32 %v527, %v527
    %v923 = vmul.f32 %v532, %v532
    %v924 = vmul.f32 %v537, %v537
    %v925 = vmul.f32 %v542, %v542
    %v926 = vmul.f32 %v547, %v547
    %v927 = vmul.f32 %v552, %v552
    %v928 = vmul.f32 %v557, %v557
    %v929 = vmul.f32 %v562, %v562
    %v930 = vmul.f32 %v567, %v567
    %v931 = vmul.f32 %v572, %v572
    %v932 = vmul.f32 %v577, %v577
    %v933 = vmul.f32 %v582, %v582
    %v934 = vmul.f32 %v587, %v587
    %v935 = vmul.f32 %v592, %v592
    %v936 = vmul.f32 %v597, %v597
    %v937 = vmul.f32 %v602, %v602
    %v938 = vmul.f32 %v607, %v607
    %v939 = vmul.f32 %v612, %v612
    %v940 = vmul.f32 %v617, %v617
    %v941 = vmul.f32 %v622, %v622
    %v942 = vmul.f32 %v627, %v627
    %v943 = vmul.f32 %v632, %v632
    %v944 = vmul.f32 %v637, %v637
    %v945 = vmul.f32 %v642, %v642
    %v946 = vmul.f32 %v647, %v647
    %v947 = vmul.f32 %v652, %v652
    %v948 = vmul.f32 %v657, %v657
    %v949 = vmul.f32 %v662, %v662
    %v950 = vmul.f32 %v667, %v667
    %v951 = vmul.f32 %v672, %v672
    %v952 = vmul.f32 %v677, %v677
    %v953 = vmul.f32 %v682, %v682
    %v954 = vmul.f32 %v687, %v687
    %v955 = vmul.f32 %v692, %v692
    %v956 = vmul.f32 %v697, %v697
    %v957 = vmul.f32 %v702, %v702
    %v958 = vmul.f32 %v707, %v707
    %v959 = vmul.f32 %v712, %v712
    %v960 = vmul.f32 %v717, %v717
    %v961 = vmul.f32 %v722, %v722
    %v962 = vmul.f32 %v727, %v727
    %v963 = vmul.f32 %v732, %v732
    %v964 = vmul.f32 %v737, %v737
    %v965 = vmul.f32 %v742, %v742
    %v966 = vmul.f32 %v747, %v747
    %v967 = vmul.f32 %v752, %v752
    %v968 = vmul.f32 %v757, %v757
    %v969 = vmul.f32 %v762, %v762
    %v970 = vmul.f32 %v767, %v767
    %v971 = vmul.f32 %v772, %v772
    %v972 = vsel %vm43, %v908, 0.0
    %v973 = vsel %vm43, %v909, 0.0
    %v974 = vadd.f32 %v972, %v973
    %v975 = vsel %vm43, %v910, 0.0
    %v976 = vadd.f32 %v974, %v975
    %v977 = vsel %vm43, %v911, 0.0
    %v978 = vadd.f32 %v976, %v977
    %v979 = vsel %vm43, %v912, 0.0
    %v980 = vadd.f32 %v978, %v979
    %v981 = vsel %vm43, %v913, 0.0
    %v982 = vadd.f32 %v980, %v981
    %v983 = vsel %vm43, %v914, 0.0
    %v984 = vadd.f32 %v982, %v983
    %v985 = vsel %vm43, %v915, 0.0
    %v986 = vadd.f32 %v984, %v985
    %v987 = vsel %vm43, %v916, 0.0
    %v988 = vadd.f32 %v986, %v987
    %v989 = vsel %vm43, %v917, 0.0
    %v990 = vadd.f32 %v988, %v989
    %v991 = vsel %vm43, %v918, 0.0
    %v992 = vadd.f32 %v990, %v991
    %v993 = vsel %vm43, %v919, 0.0
    %v994 = vadd.f32 %v992, %v993
    %v995 = vsel %vm43, %v920, 0.0
    %v996 = vadd.f32 %v994, %v995
    %v997 = vsel %vm43, %v921, 0.0
    %v998 = vadd.f32 %v996, %v997
    %v999 = vsel %vm43, %v922, 0.0
    %v1000 = vadd.f32 %v998, %v999
    %v1001 = vsel %vm43, %v923, 0.0
    %v1002 = vadd.f32 %v1000, %v1001
    %v1003 = vsel %vm43, %v924, 0.0
    %v1004 = vadd.f32 %v1002, %v1003
    %v1005 = vsel %vm43, %v925, 0.0
    %v1006 = vadd.f32 %v1004, %v1005
    %v1007 = vsel %vm43, %v926, 0.0
    %v1008 = vadd.f32 %v1006, %v1007
    %v1009 = vsel %vm43, %v927, 0.0
    %v1010 = vadd.f32 %v1008, %v1009
    %v1011 = vsel %vm43, %v928, 0.0
    %v1012 = vadd.f32 %v1010, %v1011
    %v1013 = vsel %vm43, %v929, 0.0
    %v1014 = vadd.f32 %v1012, %v1013
    %v1015 = vsel %vm43, %v930, 0.0
    %v1016 = vadd.f32 %v1014, %v1015
    %v1017 = vsel %vm43, %v931, 0.0
    %v1018 = vadd.f32 %v1016, %v1017
    %v1019 = vsel %vm43, %v932, 0.0
    %v1020 = vadd.f32 %v1018, %v1019
    %v1021 = vsel %vm43, %v933, 0.0
    %v1022 = vadd.f32 %v1020, %v1021
    %v1023 = vsel %vm43, %v934, 0.0
    %v1024 = vadd.f32 %v1022, %v1023
    %v1025 = vsel %vm43, %v935, 0.0
    %v1026 = vadd.f32 %v1024, %v1025
    %v1027 = vsel %vm43, %v936, 0.0
    %v1028 = vadd.f32 %v1026, %v1027
    %v1029 = vsel %vm43, %v937, 0.0
    %v1030 = vadd.f32 %v1028, %v1029
    %v1031 = vsel %vm43, %v938, 0.0
    %v1032 = vadd.f32 %v1030, %v1031
    %v1033 = vsel %vm43, %v939, 0.0
    %v1034 = vadd.f32 %v1032, %v1033
    %v1035 = vsel %vm43, %v940, 0.0
    %v1036 = vadd.f32 %v1034, %v1035
    %v1037 = vsel %vm43, %v941, 0.0
    %v1038 = vadd.f32 %v1036, %v1037
    %v1039 = vsel %vm43, %v942, 0.0
    %v1040 = vadd.f32 %v1038, %v1039
    %v1041 = vsel %vm43, %v943, 0.0
    %v1042 = vadd.f32 %v1040, %v1041
    %v1043 = vsel %vm43, %v944, 0.0
    %v1044 = vadd.f32 %v1042, %v1043
    %v1045 = vsel %vm43, %v945, 0.0
    %v1046 = vadd.f32 %v1044, %v1045
    %v1047 = vsel %vm43, %v946, 0.0
    %v1048 = vadd.f32 %v1046, %v1047
    %v1049 = vsel %vm43, %v947, 0.0
    %v1050 = vadd.f32 %v1048, %v1049
    %v1051 = vsel %vm43, %v948, 0.0
    %v1052 = vadd.f32 %v1050, %v1051
    %v1053 = vsel %vm43, %v949, 0.0
    %v1054 = vadd.f32 %v1052, %v1053
    %v1055 = vsel %vm43, %v950, 0.0
    %v1056 = vadd.f32 %v1054, %v1055
    %v1057 = vsel %vm43, %v951, 0.0
    %v1058 = vadd.f32 %v1056, %v1057
    %v1059 = vsel %vm43, %v952, 0.0
    %v1060 = vadd.f32 %v1058, %v1059
    %v1061 = vsel %vm43, %v953, 0.0
    %v1062 = vadd.f32 %v1060, %v1061
    %v1063 = vsel %vm43, %v954, 0.0
    %v1064 = vadd.f32 %v1062, %v1063
    %v1065 = vsel %vm43, %v955, 0.0
    %v1066 = vadd.f32 %v1064, %v1065
    %v1067 = vsel %vm43, %v956, 0.0
    %v1068 = vadd.f32 %v1066, %v1067
    %v1069 = vsel %vm43, %v957, 0.0
    %v1070 = vadd.f32 %v1068, %v1069
    %v1071 = vsel %vm43, %v958, 0.0
    %v1072 = vadd.f32 %v1070, %v1071
    %v1073 = vsel %vm43, %v959, 0.0
    %v1074 = vadd.f32 %v1072, %v1073
    %v1075 = vsel %vm43, %v960, 0.0
    %v1076 = vadd.f32 %v1074, %v1075
    %v1077 = vsel %vm43, %v961, 0.0
    %v1078 = vadd.f32 %v1076, %v1077
    %v1079 = vsel %vm43, %v962, 0.0
    %v1080 = vadd.f32 %v1078, %v1079
    %v1081 = vsel %vm43, %v963, 0.0
    %v1082 = vadd.f32 %v1080, %v1081
    %v1083 = vsel %vm43, %v964, 0.0
    %v1084 = vadd.f32 %v1082, %v1083
    %v1085 = vsel %vm43, %v965, 0.0
    %v1086 = vadd.f32 %v1084, %v1085
    %v1087 = vsel %vm43, %v966, 0.0
    %v1088 = vadd.f32 %v1086, %v1087
    %v1089 = vsel %vm43, %v967, 0.0
    %v1090 = vadd.f32 %v1088, %v1089
    %v1091 = vsel %vm43, %v968, 0.0
    %v1092 = vadd.f32 %v1090, %v1091
    %v1093 = vsel %vm43, %v969, 0.0
    %v1094 = vadd.f32 %v1092, %v1093
    %v1095 = vsel %vm43, %v970, 0.0
    %v1096 = vadd.f32 %v1094, %v1095
    %v1097 = vsel %vm43, %v971, 0.0
    %v1098 = vadd.f32 %v1096, %v1097
    %v1099 = vrot.slane %v1098, 4
    %v1100 = vadd.f32 %v1098, %v1099
    %v1101 = vrot.slane %v1100, 2
    %v1102 = vadd.f32 %v1100, %v1101
    %v1103 = vrot.slane %v1102, 1
    %v1104 = vadd.f32 %v1102, %v1103
    %v1105 = vmul.f32 %v907, 0.001953125
    %v1106 = vmul.f32 %v1104, 0.001953125
    %v1107 = vmul.f32 %v1105, %v1105
    %v1108 = vsub.f32 %v1106, %v1107
    %v1109 = vmax.f32 %v1108, 0.0
    %v1110 = vld [vmem:[%s2] sm:$0x1]
    %v1111 = vadd.f32 %v1109, 1e-05
    %v1112 = vrsqrt.pop %v1111
    %v1113 = vmul.f32 %v1110, %v1112
    %v1114 = vld [vmem:[%s3] sm:$0x1]
    %v1115 = vmul.f32 %v1105, %v1113
    %v1116 = vsub.f32 %v1114, %v1115
    %v1118 = vlaneseq
    %v1119 = vshrl.u32 %v1118, 7
    %v1120 = vsub.s32 0, %v1119
    %v1121 = vrot.slane %v1113, %v1120
    %v1123 = vmul.f32 %v457, %v1121
    %v1124 = vmul.f32 %v462, %v1121
    %v1125 = vmul.f32 %v467, %v1121
    %v1126 = vmul.f32 %v472, %v1121
    %v1127 = vmul.f32 %v477, %v1121
    %v1128 = vmul.f32 %v482, %v1121
    %v1129 = vmul.f32 %v487, %v1121
    %v1130 = vmul.f32 %v492, %v1121
    %v1131 = vmul.f32 %v497, %v1121
    %v1132 = vmul.f32 %v502, %v1121
    %v1133 = vmul.f32 %v507, %v1121
    %v1134 = vmul.f32 %v512, %v1121
    %v1135 = vmul.f32 %v517, %v1121
    %v1136 = vmul.f32 %v522, %v1121
    %v1137 = vmul.f32 %v527, %v1121
    %v1138 = vmul.f32 %v532, %v1121
    %v1139 = vmul.f32 %v537, %v1121
    %v1140 = vmul.f32 %v542, %v1121
    %v1141 = vmul.f32 %v547, %v1121
    %v1142 = vmul.f32 %v552, %v1121
    %v1143 = vmul.f32 %v557, %v1121
    %v1144 = vmul.f32 %v562, %v1121
    %v1145 = vmul.f32 %v567, %v1121
    %v1146 = vmul.f32 %v572, %v1121
    %v1147 = vmul.f32 %v577, %v1121
    %v1148 = vmul.f32 %v582, %v1121
    %v1149 = vmul.f32 %v587, %v1121
    %v1150 = vmul.f32 %v592, %v1121
    %v1151 = vmul.f32 %v597, %v1121
    %v1152 = vmul.f32 %v602, %v1121
    %v1153 = vmul.f32 %v607, %v1121
    %v1154 = vmul.f32 %v612, %v1121
    %v1155 = vmul.f32 %v617, %v1121
    %v1156 = vmul.f32 %v622, %v1121
    %v1157 = vmul.f32 %v627, %v1121
    %v1158 = vmul.f32 %v632, %v1121
    %v1159 = vmul.f32 %v637, %v1121
    %v1160 = vmul.f32 %v642, %v1121
    %v1161 = vmul.f32 %v647, %v1121
    %v1162 = vmul.f32 %v652, %v1121
    %v1163 = vmul.f32 %v657, %v1121
    %v1164 = vmul.f32 %v662, %v1121
    %v1165 = vmul.f32 %v667, %v1121
    %v1166 = vmul.f32 %v672, %v1121
    %v1167 = vmul.f32 %v677, %v1121
    %v1168 = vmul.f32 %v682, %v1121
    %v1169 = vmul.f32 %v687, %v1121
    %v1170 = vmul.f32 %v692, %v1121
    %v1171 = vmul.f32 %v697, %v1121
    %v1172 = vmul.f32 %v702, %v1121
    %v1173 = vmul.f32 %v707, %v1121
    %v1174 = vmul.f32 %v712, %v1121
    %v1175 = vmul.f32 %v717, %v1121
    %v1176 = vmul.f32 %v722, %v1121
    %v1177 = vmul.f32 %v727, %v1121
    %v1178 = vmul.f32 %v732, %v1121
    %v1179 = vmul.f32 %v737, %v1121
    %v1180 = vmul.f32 %v742, %v1121
    %v1181 = vmul.f32 %v747, %v1121
    %v1182 = vmul.f32 %v752, %v1121
    %v1183 = vmul.f32 %v757, %v1121
    %v1184 = vmul.f32 %v762, %v1121
    %v1185 = vmul.f32 %v767, %v1121
    %v1186 = vmul.f32 %v772, %v1121
    %v1188 = vlaneseq
    %v1189 = vshrl.u32 %v1188, 7
    %v1190 = vsub.s32 0, %v1189
    %v1191 = vrot.slane %v1116, %v1190
    %v1193 = vadd.f32 %v1123, %v1191
    %v1194 = vadd.f32 %v1124, %v1191
    %v1195 = vadd.f32 %v1125, %v1191
    %v1196 = vadd.f32 %v1126, %v1191
    %v1197 = vadd.f32 %v1127, %v1191
    %v1198 = vadd.f32 %v1128, %v1191
    %v1199 = vadd.f32 %v1129, %v1191
    %v1200 = vadd.f32 %v1130, %v1191
    %v1201 = vadd.f32 %v1131, %v1191
    %v1202 = vadd.f32 %v1132, %v1191
    %v1203 = vadd.f32 %v1133, %v1191
    %v1204 = vadd.f32 %v1134, %v1191
    %v1205 = vadd.f32 %v1135, %v1191
    %v1206 = vadd.f32 %v1136, %v1191
    %v1207 = vadd.f32 %v1137, %v1191
    %v1208 = vadd.f32 %v1138, %v1191
    %v1209 = vadd.f32 %v1139, %v1191
    %v1210 = vadd.f32 %v1140, %v1191
    %v1211 = vadd.f32 %v1141, %v1191
    %v1212 = vadd.f32 %v1142, %v1191
    %v1213 = vadd.f32 %v1143, %v1191
    %v1214 = vadd.f32 %v1144, %v1191
    %v1215 = vadd.f32 %v1145, %v1191
    %v1216 = vadd.f32 %v1146, %v1191
    %v1217 = vadd.f32 %v1147, %v1191
    %v1218 = vadd.f32 %v1148, %v1191
    %v1219 = vadd.f32 %v1149, %v1191
    %v1220 = vadd.f32 %v1150, %v1191
    %v1221 = vadd.f32 %v1151, %v1191
    %v1222 = vadd.f32 %v1152, %v1191
    %v1223 = vadd.f32 %v1153, %v1191
    %v1224 = vadd.f32 %v1154, %v1191
    %v1225 = vadd.f32 %v1155, %v1191
    %v1226 = vadd.f32 %v1156, %v1191
    %v1227 = vadd.f32 %v1157, %v1191
    %v1228 = vadd.f32 %v1158, %v1191
    %v1229 = vadd.f32 %v1159, %v1191
    %v1230 = vadd.f32 %v1160, %v1191
    %v1231 = vadd.f32 %v1161, %v1191
    %v1232 = vadd.f32 %v1162, %v1191
    %v1233 = vadd.f32 %v1163, %v1191
    %v1234 = vadd.f32 %v1164, %v1191
    %v1235 = vadd.f32 %v1165, %v1191
    %v1236 = vadd.f32 %v1166, %v1191
    %v1237 = vadd.f32 %v1167, %v1191
    %v1238 = vadd.f32 %v1168, %v1191
    %v1239 = vadd.f32 %v1169, %v1191
    %v1240 = vadd.f32 %v1170, %v1191
    %v1241 = vadd.f32 %v1171, %v1191
    %v1242 = vadd.f32 %v1172, %v1191
    %v1243 = vadd.f32 %v1173, %v1191
    %v1244 = vadd.f32 %v1174, %v1191
    %v1245 = vadd.f32 %v1175, %v1191
    %v1246 = vadd.f32 %v1176, %v1191
    %v1247 = vadd.f32 %v1177, %v1191
    %v1248 = vadd.f32 %v1178, %v1191
    %v1249 = vadd.f32 %v1179, %v1191
    %v1250 = vadd.f32 %v1180, %v1191
    %v1251 = vadd.f32 %v1181, %v1191
    %v1252 = vadd.f32 %v1182, %v1191
    %v1253 = vadd.f32 %v1183, %v1191
    %v1254 = vadd.f32 %v1184, %v1191
    %v1255 = vadd.f32 %v1185, %v1191
    %v1256 = vadd.f32 %v1186, %v1191
    %v1257 = vmax.f32 %v1193, 0.0
    %v1258 = vmax.f32 %v1194, 0.0
    %v1259 = vmax.f32 %v1195, 0.0
    %v1260 = vmax.f32 %v1196, 0.0
    %v1261 = vmax.f32 %v1197, 0.0
    %v1262 = vmax.f32 %v1198, 0.0
    %v1263 = vmax.f32 %v1199, 0.0
    %v1264 = vmax.f32 %v1200, 0.0
    %v1265 = vmax.f32 %v1201, 0.0
    %v1266 = vmax.f32 %v1202, 0.0
    %v1267 = vmax.f32 %v1203, 0.0
    %v1268 = vmax.f32 %v1204, 0.0
    %v1269 = vmax.f32 %v1205, 0.0
    %v1270 = vmax.f32 %v1206, 0.0
    %v1271 = vmax.f32 %v1207, 0.0
    %v1272 = vmax.f32 %v1208, 0.0
    %v1273 = vmax.f32 %v1209, 0.0
    %v1274 = vmax.f32 %v1210, 0.0
    %v1275 = vmax.f32 %v1211, 0.0
    %v1276 = vmax.f32 %v1212, 0.0
    %v1277 = vmax.f32 %v1213, 0.0
    %v1278 = vmax.f32 %v1214, 0.0
    %v1279 = vmax.f32 %v1215, 0.0
    %v1280 = vmax.f32 %v1216, 0.0
    %v1281 = vmax.f32 %v1217, 0.0
    %v1282 = vmax.f32 %v1218, 0.0
    %v1283 = vmax.f32 %v1219, 0.0
    %v1284 = vmax.f32 %v1220, 0.0
    %v1285 = vmax.f32 %v1221, 0.0
    %v1286 = vmax.f32 %v1222, 0.0
    %v1287 = vmax.f32 %v1223, 0.0
    %v1288 = vmax.f32 %v1224, 0.0
    %v1289 = vmax.f32 %v1225, 0.0
    %v1290 = vmax.f32 %v1226, 0.0
    %v1291 = vmax.f32 %v1227, 0.0
    %v1292 = vmax.f32 %v1228, 0.0
    %v1293 = vmax.f32 %v1229, 0.0
    %v1294 = vmax.f32 %v1230, 0.0
    %v1295 = vmax.f32 %v1231, 0.0
    %v1296 = vmax.f32 %v1232, 0.0
    %v1297 = vmax.f32 %v1233, 0.0
    %v1298 = vmax.f32 %v1234, 0.0
    %v1299 = vmax.f32 %v1235, 0.0
    %v1300 = vmax.f32 %v1236, 0.0
    %v1301 = vmax.f32 %v1237, 0.0
    %v1302 = vmax.f32 %v1238, 0.0
    %v1303 = vmax.f32 %v1239, 0.0
    %v1304 = vmax.f32 %v1240, 0.0
    %v1305 = vmax.f32 %v1241, 0.0
    %v1306 = vmax.f32 %v1242, 0.0
    %v1307 = vmax.f32 %v1243, 0.0
    %v1308 = vmax.f32 %v1244, 0.0
    %v1309 = vmax.f32 %v1245, 0.0
    %v1310 = vmax.f32 %v1246, 0.0
    %v1311 = vmax.f32 %v1247, 0.0
    %v1312 = vmax.f32 %v1248, 0.0
    %v1313 = vmax.f32 %v1249, 0.0
    %v1314 = vmax.f32 %v1250, 0.0
    %v1315 = vmax.f32 %v1251, 0.0
    %v1316 = vmax.f32 %v1252, 0.0
    %v1317 = vmax.f32 %v1253, 0.0
    %v1318 = vmax.f32 %v1254, 0.0
    %v1319 = vmax.f32 %v1255, 0.0
    %v1320 = vmax.f32 %v1256, 0.0
    %s1321 = scalar_lea.vmem [#allocation2], 24
    %1322 = vst.msk [vmem:[%s1321 + $0x1] sm:$0xff] %vm43, %v1257
    %1323 = vst.msk [vmem:[%s1321 + $0x9] sm:$0xff] %vm43, %v1258
    %1324 = vst.msk [vmem:[%s1321 + $0x19] sm:$0xff] %vm43, %v1259
    %1325 = vst.msk [vmem:[%s1321 + $0x21] sm:$0xff] %vm43, %v1260
    %1326 = vst.msk [vmem:[%s1321 + $0x31] sm:$0xff] %vm43, %v1261
    %1327 = vst.msk [vmem:[%s1321 + $0x39] sm:$0xff] %vm43, %v1262
    %1328 = vst.msk [vmem:[%s1321 + $0x49] sm:$0xff] %vm43, %v1263
    %1329 = vst.msk [vmem:[%s1321 + $0x51] sm:$0xff] %vm43, %v1264
    %1330 = vst.msk [vmem:[%s1321 + $0x61] sm:$0xff] %vm43, %v1265
    %1331 = vst.msk [vmem:[%s1321 + $0x69] sm:$0xff] %vm43, %v1266
    %1332 = vst.msk [vmem:[%s1321 + $0x79] sm:$0xff] %vm43, %v1267
    %1333 = vst.msk [vmem:[%s1321 + $0x81] sm:$0xff] %vm43, %v1268
    %1334 = vst.msk [vmem:[%s1321 + $0x91] sm:$0xff] %vm43, %v1269
    %1335 = vst.msk [vmem:[%s1321 + $0x99] sm:$0xff] %vm43, %v1270
    %1336 = vst.msk [vmem:[%s1321 + $0xa9] sm:$0xff] %vm43, %v1271
    %1337 = vst.msk [vmem:[%s1321 + $0xb1] sm:$0xff] %vm43, %v1272
    %1338 = vst.msk [vmem:[%s1321 + $0xc1] sm:$0xff] %vm43, %v1273
    %1339 = vst.msk [vmem:[%s1321 + $0xc9] sm:$0xff] %vm43, %v1274
    %1340 = vst.msk [vmem:[%s1321 + $0xd9] sm:$0xff] %vm43, %v1275
    %1341 = vst.msk [vmem:[%s1321 + $0xe1] sm:$0xff] %vm43, %v1276
    %1342 = vst.msk [vmem:[%s1321 + $0xf1] sm:$0xff] %vm43, %v1277
    %1343 = vst.msk [vmem:[%s1321 + $0xf9] sm:$0xff] %vm43, %v1278
    %1344 = vst.msk [vmem:[%s1321 + $0x109] sm:$0xff] %vm43, %v1279
    %1345 = vst.msk [vmem:[%s1321 + $0x111] sm:$0xff] %vm43, %v1280
    %1346 = vst.msk [vmem:[%s1321 + $0x121] sm:$0xff] %vm43, %v1281
    %1347 = vst.msk [vmem:[%s1321 + $0x129] sm:$0xff] %vm43, %v1282
    %1348 = vst.msk [vmem:[%s1321 + $0x139] sm:$0xff] %vm43, %v1283
    %1349 = vst.msk [vmem:[%s1321 + $0x141] sm:$0xff] %vm43, %v1284
    %1350 = vst.msk [vmem:[%s1321 + $0x151] sm:$0xff] %vm43, %v1285
    %1351 = vst.msk [vmem:[%s1321 + $0x159] sm:$0xff] %vm43, %v1286
    %1352 = vst.msk [vmem:[%s1321 + $0x169] sm:$0xff] %vm43, %v1287
    %1353 = vst.msk [vmem:[%s1321 + $0x171] sm:$0xff] %vm43, %v1288
    %1354 = vst.msk [vmem:[%s1321 + $0x1b1] sm:$0xff] %vm43, %v1289
    %1355 = vst.msk [vmem:[%s1321 + $0x1b9] sm:$0xff] %vm43, %v1290
    %1356 = vst.msk [vmem:[%s1321 + $0x1c9] sm:$0xff] %vm43, %v1291
    %1357 = vst.msk [vmem:[%s1321 + $0x1d1] sm:$0xff] %vm43, %v1292
    %1358 = vst.msk [vmem:[%s1321 + $0x1e1] sm:$0xff] %vm43, %v1293
    %1359 = vst.msk [vmem:[%s1321 + $0x1e9] sm:$0xff] %vm43, %v1294
    %1360 = vst.msk [vmem:[%s1321 + $0x1f9] sm:$0xff] %vm43, %v1295
    %1361 = vst.msk [vmem:[%s1321 + $0x201] sm:$0xff] %vm43, %v1296
    %1362 = vst.msk [vmem:[%s1321 + $0x211] sm:$0xff] %vm43, %v1297
    %1363 = vst.msk [vmem:[%s1321 + $0x219] sm:$0xff] %vm43, %v1298
    %1364 = vst.msk [vmem:[%s1321 + $0x229] sm:$0xff] %vm43, %v1299
    %1365 = vst.msk [vmem:[%s1321 + $0x231] sm:$0xff] %vm43, %v1300
    %1366 = vst.msk [vmem:[%s1321 + $0x241] sm:$0xff] %vm43, %v1301
    %1367 = vst.msk [vmem:[%s1321 + $0x249] sm:$0xff] %vm43, %v1302
    %1368 = vst.msk [vmem:[%s1321 + $0x259] sm:$0xff] %vm43, %v1303
    %1369 = vst.msk [vmem:[%s1321 + $0x261] sm:$0xff] %vm43, %v1304
    %1370 = vst.msk [vmem:[%s1321 + $0x271] sm:$0xff] %vm43, %v1305
    %1371 = vst.msk [vmem:[%s1321 + $0x279] sm:$0xff] %vm43, %v1306
    %1372 = vst.msk [vmem:[%s1321 + $0x289] sm:$0xff] %vm43, %v1307
    %1373 = vst.msk [vmem:[%s1321 + $0x291] sm:$0xff] %vm43, %v1308
    %1374 = vst.msk [vmem:[%s1321 + $0x2a1] sm:$0xff] %vm43, %v1309
    %1375 = vst.msk [vmem:[%s1321 + $0x2a9] sm:$0xff] %vm43, %v1310
    %1376 = vst.msk [vmem:[%s1321 + $0x2b9] sm:$0xff] %vm43, %v1311
    %1377 = vst.msk [vmem:[%s1321 + $0x2c1] sm:$0xff] %vm43, %v1312
    %1378 = vst.msk [vmem:[%s1321 + $0x2d1] sm:$0xff] %vm43, %v1313
    %1379 = vst.msk [vmem:[%s1321 + $0x2d9] sm:$0xff] %vm43, %v1314
    %1380 = vst.msk [vmem:[%s1321 + $0x2e9] sm:$0xff] %vm43, %v1315
    %1381 = vst.msk [vmem:[%s1321 + $0x2f1] sm:$0xff] %vm43, %v1316
    %1382 = vst.msk [vmem:[%s1321 + $0x301] sm:$0xff] %vm43, %v1317
    %1383 = vst.msk [vmem:[%s1321 + $0x309] sm:$0xff] %vm43, %v1318
    %1384 = vst.msk [vmem:[%s1321 + $0x319] sm:$0xff] %vm43, %v1319
    %1385 = vst.msk [vmem:[%s1321 + $0x321] sm:$0xff] %vm43, %v1320
    %v1386 = vld [vmem:[#allocation2] sm:$0xff]
    %v1387 = vld [vmem:[#allocation2 + $0x8] sm:$0xff]
    %v1388 = vld [vmem:[#allocation2 + $0x10] sm:$0x3]
    %v1389 = vld [vmem:[#allocation2 + $0x18] sm:$0xff]
    %v1390 = vld [vmem:[#allocation2 + $0x20] sm:$0xff]
    %v1391 = vld [vmem:[#allocation2 + $0x28] sm:$0x3]
    %v1392 = vld [vmem:[#allocation2 + $0x30] sm:$0xff]
    %v1393 = vld [vmem:[#allocation2 + $0x38] sm:$0xff]
    %v1394 = vld [vmem:[#allocation2 + $0x40] sm:$0x3]
    %v1395 = vld [vmem:[#allocation2 + $0x48] sm:$0xff]
    %v1396 = vld [vmem:[#allocation2 + $0x50] sm:$0xff]
    %v1397 = vld [vmem:[#allocation2 + $0x58] sm:$0x3]
    %v1398 = vld [vmem:[#allocation2 + $0x60] sm:$0xff]
    %v1399 = vld [vmem:[#allocation2 + $0x68] sm:$0xff]
    %v1400 = vld [vmem:[#allocation2 + $0x70] sm:$0x3]
    %v1401 = vld [vmem:[#allocation2 + $0x78] sm:$0xff]
    %v1402 = vld [vmem:[#allocation2 + $0x80] sm:$0xff]
    %v1403 = vld [vmem:[#allocation2 + $0x88] sm:$0x3]
    %v1404 = vld [vmem:[#allocation2 + $0x90] sm:$0xff]
    %v1405 = vld [vmem:[#allocation2 + $0x98] sm:$0xff]
    %v1406 = vld [vmem:[#allocation2 + $0xa0] sm:$0x3]
    %v1407 = vld [vmem:[#allocation2 + $0xa8] sm:$0xff]
    %v1408 = vld [vmem:[#allocation2 + $0xb0] sm:$0xff]
    %v1409 = vld [vmem:[#allocation2 + $0xb8] sm:$0x3]
    %v1410 = vld [vmem:[#allocation2 + $0xc0] sm:$0xff]
    %v1411 = vld [vmem:[#allocation2 + $0xc8] sm:$0xff]
    %v1412 = vld [vmem:[#allocation2 + $0xd0] sm:$0x3]
    %v1413 = vld [vmem:[#allocation2 + $0xd8] sm:$0xff]
    %v1414 = vld [vmem:[#allocation2 + $0xe0] sm:$0xff]
    %v1415 = vld [vmem:[#allocation2 + $0xe8] sm:$0x3]
    %v1416 = vld [vmem:[#allocation2 + $0xf0] sm:$0xff]
    %v1417 = vld [vmem:[#allocation2 + $0xf8] sm:$0xff]
    %v1418 = vld [vmem:[#allocation2 + $0x100] sm:$0x3]
    %v1419 = vld [vmem:[#allocation2 + $0x108] sm:$0xff]
    %v1420 = vld [vmem:[#allocation2 + $0x110] sm:$0xff]
    %v1421 = vld [vmem:[#allocation2 + $0x118] sm:$0x3]
    %v1422 = vld [vmem:[#allocation2 + $0x120] sm:$0xff]
    %v1423 = vld [vmem:[#allocation2 + $0x128] sm:$0xff]
    %v1424 = vld [vmem:[#allocation2 + $0x130] sm:$0x3]
    %v1425 = vld [vmem:[#allocation2 + $0x138] sm:$0xff]
    %v1426 = vld [vmem:[#allocation2 + $0x140] sm:$0xff]
    %v1427 = vld [vmem:[#allocation2 + $0x148] sm:$0x3]
    %v1428 = vld [vmem:[#allocation2 + $0x150] sm:$0xff]
    %v1429 = vld [vmem:[#allocation2 + $0x158] sm:$0xff]
    %v1430 = vld [vmem:[#allocation2 + $0x160] sm:$0x3]
    %v1431 = vld [vmem:[#allocation2 + $0x168] sm:$0xff]
    %v1432 = vld [vmem:[#allocation2 + $0x170] sm:$0xff]
    %v1433 = vld [vmem:[#allocation2 + $0x178] sm:$0x3]
    %v1434 = vld [vmem:[#allocation2 + $0x180] sm:$0xff]
    %v1435 = vld [vmem:[#allocation2 + $0x188] sm:$0xff]
    %v1436 = vld [vmem:[#allocation2 + $0x190] sm:$0x3]
    %v1437 = vld [vmem:[#allocation2 + $0x198] sm:$0xff]
    %v1438 = vld [vmem:[#allocation2 + $0x1a0] sm:$0xff]
    %v1439 = vld [vmem:[#allocation2 + $0x1a8] sm:$0x3]
    %v1440 = vld [vmem:[#allocation2 + $0x1b0] sm:$0xff]
    %v1441 = vld [vmem:[#allocation2 + $0x1b8] sm:$0xff]
    %v1442 = vld [vmem:[#allocation2 + $0x1c0] sm:$0x3]
    %v1443 = vld [vmem:[#allocation2 + $0x1c8] sm:$0xff]
    %v1444 = vld [vmem:[#allocation2 + $0x1d0] sm:$0xff]
    %v1445 = vld [vmem:[#allocation2 + $0x1d8] sm:$0x3]
    %v1446 = vld [vmem:[#allocation2 + $0x1e0] sm:$0xff]
    %v1447 = vld [vmem:[#allocation2 + $0x1e8] sm:$0xff]
    %v1448 = vld [vmem:[#allocation2 + $0x1f0] sm:$0x3]
    %v1449 = vld [vmem:[#allocation2 + $0x1f8] sm:$0xff]
    %v1450 = vld [vmem:[#allocation2 + $0x200] sm:$0xff]
    %v1451 = vld [vmem:[#allocation2 + $0x208] sm:$0x3]
    %v1452 = vld [vmem:[#allocation2 + $0x210] sm:$0xff]
    %v1453 = vld [vmem:[#allocation2 + $0x218] sm:$0xff]
    %v1454 = vld [vmem:[#allocation2 + $0x220] sm:$0x3]
    %v1455 = vld [vmem:[#allocation2 + $0x228] sm:$0xff]
    %v1456 = vld [vmem:[#allocation2 + $0x230] sm:$0xff]
    %v1457 = vld [vmem:[#allocation2 + $0x238] sm:$0x3]
    %v1458 = vld [vmem:[#allocation2 + $0x240] sm:$0xff]
    %v1459 = vld [vmem:[#allocation2 + $0x248] sm:$0xff]
    %v1460 = vld [vmem:[#allocation2 + $0x250] sm:$0x3]
    %v1461 = vld [vmem:[#allocation2 + $0x258] sm:$0xff]
    %v1462 = vld [vmem:[#allocation2 + $0x260] sm:$0xff]
    %v1463 = vld [vmem:[#allocation2 + $0x268] sm:$0x3]
    %v1464 = vld [vmem:[#allocation2 + $0x270] sm:$0xff]
    %v1465 = vld [vmem:[#allocation2 + $0x278] sm:$0xff]
    %v1466 = vld [vmem:[#allocation2 + $0x280] sm:$0x3]
    %v1467 = vld [vmem:[#allocation2 + $0x288] sm:$0xff]
    %v1468 = vld [vmem:[#allocation2 + $0x290] sm:$0xff]
    %v1469 = vld [vmem:[#allocation2 + $0x298] sm:$0x3]
    %v1470 = vld [vmem:[#allocation2 + $0x2a0] sm:$0xff]
    %v1471 = vld [vmem:[#allocation2 + $0x2a8] sm:$0xff]
    %v1472 = vld [vmem:[#allocation2 + $0x2b0] sm:$0x3]
    %v1473 = vld [vmem:[#allocation2 + $0x2b8] sm:$0xff]
    %v1474 = vld [vmem:[#allocation2 + $0x2c0] sm:$0xff]
    %v1475 = vld [vmem:[#allocation2 + $0x2c8] sm:$0x3]
    %v1476 = vld [vmem:[#allocation2 + $0x2d0] sm:$0xff]
    %v1477 = vld [vmem:[#allocation2 + $0x2d8] sm:$0xff]
    %v1478 = vld [vmem:[#allocation2 + $0x2e0] sm:$0x3]
    %v1479 = vld [vmem:[#allocation2 + $0x2e8] sm:$0xff]
    %v1480 = vld [vmem:[#allocation2 + $0x2f0] sm:$0xff]
    %v1481 = vld [vmem:[#allocation2 + $0x2f8] sm:$0x3]
    %v1482 = vld [vmem:[#allocation2 + $0x300] sm:$0xff]
    %v1483 = vld [vmem:[#allocation2 + $0x308] sm:$0xff]
    %v1484 = vld [vmem:[#allocation2 + $0x310] sm:$0x3]
    %v1485 = vld [vmem:[#allocation2 + $0x318] sm:$0xff]
    %v1486 = vld [vmem:[#allocation2 + $0x320] sm:$0xff]
    %v1487 = vld [vmem:[#allocation2 + $0x328] sm:$0x3]
    %v1488 = vld [vmem:[#allocation2 + $0x330] sm:$0xff]
    %v1489 = vld [vmem:[#allocation2 + $0x338] sm:$0xff]
    %v1490 = vld [vmem:[#allocation2 + $0x340] sm:$0x3]
    %v1491 = vld [vmem:[#allocation2 + $0x348] sm:$0xff]
    %v1492 = vld [vmem:[#allocation2 + $0x350] sm:$0xff]
    %v1493 = vld [vmem:[#allocation2 + $0x358] sm:$0x3]
    %v1494 = vpack.c.bf16 %v1387, %v1386
    %v1495 = vpack.c.bf16 %v1390, %v1389
    %v1496 = vpack.c.bf16 %v1393, %v1392
    %v1497 = vpack.c.bf16 %v1396, %v1395
    %v1498 = vpack.c.bf16 %v1399, %v1398
    %v1499 = vpack.c.bf16 %v1402, %v1401
    %v1500 = vpack.c.bf16 %v1405, %v1404
    %v1501 = vpack.c.bf16 %v1408, %v1407
    %v1502 = vpack.c.bf16 %v1411, %v1410
    %v1503 = vpack.c.bf16 %v1414, %v1413
    %v1504 = vpack.c.bf16 %v1417, %v1416
    %v1505 = vpack.c.bf16 %v1420, %v1419
    %v1506 = vpack.c.bf16 %v1423, %v1422
    %v1507 = vpack.c.bf16 %v1426, %v1425
    %v1508 = vpack.c.bf16 %v1429, %v1428
    %v1509 = vpack.c.bf16 %v1432, %v1431
    %v1510 = vpack.c.bf16 %v1441, %v1440
    %v1511 = vpack.c.bf16 %v1444, %v1443
    %v1512 = vpack.c.bf16 %v1447, %v1446
    %v1513 = vpack.c.bf16 %v1450, %v1449
    %v1514 = vpack.c.bf16 %v1453, %v1452
    %v1515 = vpack.c.bf16 %v1456, %v1455
    %v1516 = vpack.c.bf16 %v1459, %v1458
    %v1517 = vpack.c.bf16 %v1462, %v1461
    %v1518 = vpack.c.bf16 %v1465, %v1464
    %v1519 = vpack.c.bf16 %v1468, %v1467
    %v1520 = vpack.c.bf16 %v1471, %v1470
    %v1521 = vpack.c.bf16 %v1474, %v1473
    %v1522 = vpack.c.bf16 %v1477, %v1476
    %v1523 = vpack.c.bf16 %v1480, %v1479
    %v1524 = vpack.c.bf16 %v1483, %v1482
    %v1525 = vpack.c.bf16 %v1486, %v1485
    %1526 = vst.msk [vmem:[#allocation3] sm:$0xff] %vm43, %v1494
    %1527 = vst.msk [vmem:[#allocation3 + $0x28] sm:$0xff] %vm43, %v1495
    %1528 = vst.msk [vmem:[#allocation3 + $0x50] sm:$0xff] %vm43, %v1496
    %1529 = vst.msk [vmem:[#allocation3 + $0x78] sm:$0xff] %vm43, %v1497
    %1530 = vst.msk [vmem:[#allocation3 + $0xa0] sm:$0xff] %vm43, %v1498
    %1531 = vst.msk [vmem:[#allocation3 + $0xc8] sm:$0xff] %vm43, %v1499
    %1532 = vst.msk [vmem:[#allocation3 + $0xf0] sm:$0xff] %vm43, %v1500
    %1533 = vst.msk [vmem:[#allocation3 + $0x118] sm:$0xff] %vm43, %v1501
    %1534 = vst.msk [vmem:[#allocation3 + $0x140] sm:$0xff] %vm43, %v1502
    %1535 = vst.msk [vmem:[#allocation3 + $0x168] sm:$0xff] %vm43, %v1503
    %1536 = vst.msk [vmem:[#allocation3 + $0x190] sm:$0xff] %vm43, %v1504
    %1537 = vst.msk [vmem:[#allocation3 + $0x1b8] sm:$0xff] %vm43, %v1505
    %1538 = vst.msk [vmem:[#allocation3 + $0x1e0] sm:$0xff] %vm43, %v1506
    %1539 = vst.msk [vmem:[#allocation3 + $0x208] sm:$0xff] %vm43, %v1507
    %1540 = vst.msk [vmem:[#allocation3 + $0x230] sm:$0xff] %vm43, %v1508
    %1541 = vst.msk [vmem:[#allocation3 + $0x258] sm:$0xff] %vm43, %v1509
    %1542 = vst.msk [vmem:[#allocation3 + $0x280] sm:$0xff] %vm43, %v1510
    %1543 = vst.msk [vmem:[#allocation3 + $0x2a8] sm:$0xff] %vm43, %v1511
    %1544 = vst.msk [vmem:[#allocation3 + $0x2d0] sm:$0xff] %vm43, %v1512
    %1545 = vst.msk [vmem:[#allocation3 + $0x2f8] sm:$0xff] %vm43, %v1513
    %1546 = vst.msk [vmem:[#allocation3 + $0x320] sm:$0xff] %vm43, %v1514
    %1547 = vst.msk [vmem:[#allocation3 + $0x348] sm:$0xff] %vm43, %v1515
    %1548 = vst.msk [vmem:[#allocation3 + $0x370] sm:$0xff] %vm43, %v1516
    %1549 = vst.msk [vmem:[#allocation3 + $0x398] sm:$0xff] %vm43, %v1517
    %1550 = vst.msk [vmem:[#allocation3 + $0x3c0] sm:$0xff] %vm43, %v1518
    %1551 = vst.msk [vmem:[#allocation3 + $0x3e8] sm:$0xff] %vm43, %v1519
    %1552 = vst.msk [vmem:[#allocation3 + $0x410] sm:$0xff] %vm43, %v1520
    %1553 = vst.msk [vmem:[#allocation3 + $0x438] sm:$0xff] %vm43, %v1521
    %1554 = vst.msk [vmem:[#allocation3 + $0x460] sm:$0xff] %vm43, %v1522
    %1555 = vst.msk [vmem:[#allocation3 + $0x488] sm:$0xff] %vm43, %v1523
    %1556 = vst.msk [vmem:[#allocation3 + $0x4b0] sm:$0xff] %vm43, %v1524
    %1557 = vst.msk [vmem:[#allocation3 + $0x4d8] sm:$0xff] %vm43, %v1525
    %vm1654 = vcmask 1046528
    %v1655 = vrot.slane %v1386, 1
    %v1656 = vrot.slane %v1387, 1
    %v1657 = vsel %vm1654, %v1655, %v1656
    %v1658 = vrot.slane %v1388, 1
    %v1659 = vsel %vm1654, %v1656, %v1658
    %v1660 = vrot.slane %v1389, 1
    %v1661 = vrot.slane %v1390, 1
    %v1662 = vsel %vm1654, %v1660, %v1661
    %v1663 = vrot.slane %v1391, 1
    %v1664 = vsel %vm1654, %v1661, %v1663
    %v1665 = vrot.slane %v1392, 1
    %v1666 = vrot.slane %v1393, 1
    %v1667 = vsel %vm1654, %v1665, %v1666
    %v1668 = vrot.slane %v1394, 1
    %v1669 = vsel %vm1654, %v1666, %v1668
    %v1670 = vrot.slane %v1395, 1
    %v1671 = vrot.slane %v1396, 1
    %v1672 = vsel %vm1654, %v1670, %v1671
    %v1673 = vrot.slane %v1397, 1
    %v1674 = vsel %vm1654, %v1671, %v1673
    %v1675 = vrot.slane %v1398, 1
    %v1676 = vrot.slane %v1399, 1
    %v1677 = vsel %vm1654, %v1675, %v1676
    %v1678 = vrot.slane %v1400, 1
    %v1679 = vsel %vm1654, %v1676, %v1678
    %v1680 = vrot.slane %v1401, 1
    %v1681 = vrot.slane %v1402, 1
    %v1682 = vsel %vm1654, %v1680, %v1681
    %v1683 = vrot.slane %v1403, 1
    %v1684 = vsel %vm1654, %v1681, %v1683
    %v1685 = vrot.slane %v1404, 1
    %v1686 = vrot.slane %v1405, 1
    %v1687 = vsel %vm1654, %v1685, %v1686
    %v1688 = vrot.slane %v1406, 1
    %v1689 = vsel %vm1654, %v1686, %v1688
    %v1690 = vrot.slane %v1407, 1
    %v1691 = vrot.slane %v1408, 1
    %v1692 = vsel %vm1654, %v1690, %v1691
    %v1693 = vrot.slane %v1409, 1
    %v1694 = vsel %vm1654, %v1691, %v1693
    %v1695 = vrot.slane %v1410, 1
    %v1696 = vrot.slane %v1411, 1
    %v1697 = vsel %vm1654, %v1695, %v1696
    %v1698 = vrot.slane %v1412, 1
    %v1699 = vsel %vm1654, %v1696, %v1698
    %v1700 = vrot.slane %v1413, 1
    %v1701 = vrot.slane %v1414, 1
    %v1702 = vsel %vm1654, %v1700, %v1701
    %v1703 = vrot.slane %v1415, 1
    %v1704 = vsel %vm1654, %v1701, %v1703
    %v1705 = vrot.slane %v1416, 1
    %v1706 = vrot.slane %v1417, 1
    %v1707 = vsel %vm1654, %v1705, %v1706
    %v1708 = vrot.slane %v1418, 1
    %v1709 = vsel %vm1654, %v1706, %v1708
    %v1710 = vrot.slane %v1419, 1
    %v1711 = vrot.slane %v1420, 1
    %v1712 = vsel %vm1654, %v1710, %v1711
    %v1713 = vrot.slane %v1421, 1
    %v1714 = vsel %vm1654, %v1711, %v1713
    %v1715 = vrot.slane %v1422, 1
    %v1716 = vrot.slane %v1423, 1
    %v1717 = vsel %vm1654, %v1715, %v1716
    %v1718 = vrot.slane %v1424, 1
    %v1719 = vsel %vm1654, %v1716, %v1718
    %v1720 = vrot.slane %v1425, 1
    %v1721 = vrot.slane %v1426, 1
    %v1722 = vsel %vm1654, %v1720, %v1721
    %v1723 = vrot.slane %v1427, 1
    %v1724 = vsel %vm1654, %v1721, %v1723
    %v1725 = vrot.slane %v1428, 1
    %v1726 = vrot.slane %v1429, 1
    %v1727 = vsel %vm1654, %v1725, %v1726
    %v1728 = vrot.slane %v1430, 1
    %v1729 = vsel %vm1654, %v1726, %v1728
    %v1730 = vrot.slane %v1431, 1
    %v1731 = vrot.slane %v1432, 1
    %v1732 = vsel %vm1654, %v1730, %v1731
    %v1733 = vrot.slane %v1433, 1
    %v1734 = vsel %vm1654, %v1731, %v1733
    %v1735 = vrot.slane %v1440, 1
    %v1736 = vrot.slane %v1441, 1
    %v1737 = vsel %vm1654, %v1735, %v1736
    %v1738 = vrot.slane %v1442, 1
    %v1739 = vsel %vm1654, %v1736, %v1738
    %v1740 = vrot.slane %v1443, 1
    %v1741 = vrot.slane %v1444, 1
    %v1742 = vsel %vm1654, %v1740, %v1741
    %v1743 = vrot.slane %v1445, 1
    %v1744 = vsel %vm1654, %v1741, %v1743
    %v1745 = vrot.slane %v1446, 1
    %v1746 = vrot.slane %v1447, 1
    %v1747 = vsel %vm1654, %v1745, %v1746
    %v1748 = vrot.slane %v1448, 1
    %v1749 = vsel %vm1654, %v1746, %v1748
    %v1750 = vrot.slane %v1449, 1
    %v1751 = vrot.slane %v1450, 1
    %v1752 = vsel %vm1654, %v1750, %v1751
    %v1753 = vrot.slane %v1451, 1
    %v1754 = vsel %vm1654, %v1751, %v1753
    %v1755 = vrot.slane %v1452, 1
    %v1756 = vrot.slane %v1453, 1
    %v1757 = vsel %vm1654, %v1755, %v1756
    %v1758 = vrot.slane %v1454, 1
    %v1759 = vsel %vm1654, %v1756, %v1758
    %v1760 = vrot.slane %v1455, 1
    %v1761 = vrot.slane %v1456, 1
    %v1762 = vsel %vm1654, %v1760, %v1761
    %v1763 = vrot.slane %v1457, 1
    %v1764 = vsel %vm1654, %v1761, %v1763
    %v1765 = vrot.slane %v1458, 1
    %v1766 = vrot.slane %v1459, 1
    %v1767 = vsel %vm1654, %v1765, %v1766
    %v1768 = vrot.slane %v1460, 1
    %v1769 = vsel %vm1654, %v1766, %v1768
    %v1770 = vrot.slane %v1461, 1
    %v1771 = vrot.slane %v1462, 1
    %v1772 = vsel %vm1654, %v1770, %v1771
    %v1773 = vrot.slane %v1463, 1
    %v1774 = vsel %vm1654, %v1771, %v1773
    %v1775 = vrot.slane %v1464, 1
    %v1776 = vrot.slane %v1465, 1
    %v1777 = vsel %vm1654, %v1775, %v1776
    %v1778 = vrot.slane %v1466, 1
    %v1779 = vsel %vm1654, %v1776, %v1778
    %v1780 = vrot.slane %v1467, 1
    %v1781 = vrot.slane %v1468, 1
    %v1782 = vsel %vm1654, %v1780, %v1781
    %v1783 = vrot.slane %v1469, 1
    %v1784 = vsel %vm1654, %v1781, %v1783
    %v1785 = vrot.slane %v1470, 1
    %v1786 = vrot.slane %v1471, 1
    %v1787 = vsel %vm1654, %v1785, %v1786
    %v1788 = vrot.slane %v1472, 1
    %v1789 = vsel %vm1654, %v1786, %v1788
    %v1790 = vrot.slane %v1473, 1
    %v1791 = vrot.slane %v1474, 1
    %v1792 = vsel %vm1654, %v1790, %v1791
    %v1793 = vrot.slane %v1475, 1
    %v1794 = vsel %vm1654, %v1791, %v1793
    %v1795 = vrot.slane %v1476, 1
    %v1796 = vrot.slane %v1477, 1
    %v1797 = vsel %vm1654, %v1795, %v1796
    %v1798 = vrot.slane %v1478, 1
    %v1799 = vsel %vm1654, %v1796, %v1798
    %v1800 = vrot.slane %v1479, 1
    %v1801 = vrot.slane %v1480, 1
    %v1802 = vsel %vm1654, %v1800, %v1801
    %v1803 = vrot.slane %v1481, 1
    %v1804 = vsel %vm1654, %v1801, %v1803
    %v1805 = vrot.slane %v1482, 1
    %v1806 = vrot.slane %v1483, 1
    %v1807 = vsel %vm1654, %v1805, %v1806
    %v1808 = vrot.slane %v1484, 1
    %v1809 = vsel %vm1654, %v1806, %v1808
    %v1810 = vrot.slane %v1485, 1
    %v1811 = vrot.slane %v1486, 1
    %v1812 = vsel %vm1654, %v1810, %v1811
    %v1813 = vrot.slane %v1487, 1
    %v1814 = vsel %vm1654, %v1811, %v1813
    %v1879 = vpack.c.bf16 %v1659, %v1657
    %v1880 = vpack.c.bf16 %v1664, %v1662
    %v1881 = vpack.c.bf16 %v1669, %v1667
    %v1882 = vpack.c.bf16 %v1674, %v1672
    %v1883 = vpack.c.bf16 %v1679, %v1677
    %v1884 = vpack.c.bf16 %v1684, %v1682
    %v1885 = vpack.c.bf16 %v1689, %v1687
    %v1886 = vpack.c.bf16 %v1694, %v1692
    %v1887 = vpack.c.bf16 %v1699, %v1697
    %v1888 = vpack.c.bf16 %v1704, %v1702
    %v1889 = vpack.c.bf16 %v1709, %v1707
    %v1890 = vpack.c.bf16 %v1714, %v1712
    %v1891 = vpack.c.bf16 %v1719, %v1717
    %v1892 = vpack.c.bf16 %v1724, %v1722
    %v1893 = vpack.c.bf16 %v1729, %v1727
    %v1894 = vpack.c.bf16 %v1734, %v1732
    %v1895 = vpack.c.bf16 %v1739, %v1737
    %v1896 = vpack.c.bf16 %v1744, %v1742
    %v1897 = vpack.c.bf16 %v1749, %v1747
    %v1898 = vpack.c.bf16 %v1754, %v1752
    %v1899 = vpack.c.bf16 %v1759, %v1757
    %v1900 = vpack.c.bf16 %v1764, %v1762
    %v1901 = vpack.c.bf16 %v1769, %v1767
    %v1902 = vpack.c.bf16 %v1774, %v1772
    %v1903 = vpack.c.bf16 %v1779, %v1777
    %v1904 = vpack.c.bf16 %v1784, %v1782
    %v1905 = vpack.c.bf16 %v1789, %v1787
    %v1906 = vpack.c.bf16 %v1794, %v1792
    %v1907 = vpack.c.bf16 %v1799, %v1797
    %v1908 = vpack.c.bf16 %v1804, %v1802
    %v1909 = vpack.c.bf16 %v1809, %v1807
    %v1910 = vpack.c.bf16 %v1814, %v1812
    %1943 = vrot.lane.b32.xlu0 %v1879, 64
    %v1944 = vpop.permute.xlu0 %1943
    %1945 = vrot.lane.b32.xlu0 %v1880, 64
    %v1946 = vpop.permute.xlu0 %1945
    %1947 = vrot.lane.b32.xlu0 %v1881, 64
    %v1948 = vpop.permute.xlu0 %1947
    %1949 = vrot.lane.b32.xlu0 %v1882, 64
    %v1950 = vpop.permute.xlu0 %1949
    %1951 = vrot.lane.b32.xlu0 %v1883, 64
    %v1952 = vpop.permute.xlu0 %1951
    %1953 = vrot.lane.b32.xlu0 %v1884, 64
    %v1954 = vpop.permute.xlu0 %1953
    %1955 = vrot.lane.b32.xlu0 %v1885, 64
    %v1956 = vpop.permute.xlu0 %1955
    %1957 = vrot.lane.b32.xlu0 %v1886, 64
    %v1958 = vpop.permute.xlu0 %1957
    %1959 = vrot.lane.b32.xlu0 %v1887, 64
    %v1960 = vpop.permute.xlu0 %1959
    %1961 = vrot.lane.b32.xlu0 %v1888, 64
    %v1962 = vpop.permute.xlu0 %1961
    %1963 = vrot.lane.b32.xlu0 %v1889, 64
    %v1964 = vpop.permute.xlu0 %1963
    %1965 = vrot.lane.b32.xlu0 %v1890, 64
    %v1966 = vpop.permute.xlu0 %1965
    %1967 = vrot.lane.b32.xlu0 %v1891, 64
    %v1968 = vpop.permute.xlu0 %1967
    %1969 = vrot.lane.b32.xlu0 %v1892, 64
    %v1970 = vpop.permute.xlu0 %1969
    %1971 = vrot.lane.b32.xlu0 %v1893, 64
    %v1972 = vpop.permute.xlu0 %1971
    %1973 = vrot.lane.b32.xlu0 %v1894, 64
    %v1974 = vpop.permute.xlu0 %1973
    %1975 = vrot.lane.b32.xlu0 %v1895, 64
    %v1976 = vpop.permute.xlu0 %1975
    %1977 = vrot.lane.b32.xlu0 %v1896, 64
    %v1978 = vpop.permute.xlu0 %1977
    %1979 = vrot.lane.b32.xlu0 %v1897, 64
    %v1980 = vpop.permute.xlu0 %1979
    %1981 = vrot.lane.b32.xlu0 %v1898, 64
    %v1982 = vpop.permute.xlu0 %1981
    %1983 = vrot.lane.b32.xlu0 %v1899, 64
    %v1984 = vpop.permute.xlu0 %1983
    %1985 = vrot.lane.b32.xlu0 %v1900, 64
    %v1986 = vpop.permute.xlu0 %1985
    %1987 = vrot.lane.b32.xlu0 %v1901, 64
    %v1988 = vpop.permute.xlu0 %1987
    %1989 = vrot.lane.b32.xlu0 %v1902, 64
    %v1990 = vpop.permute.xlu0 %1989
    %1991 = vrot.lane.b32.xlu0 %v1903, 64
    %v1992 = vpop.permute.xlu0 %1991
    %1993 = vrot.lane.b32.xlu0 %v1904, 64
    %v1994 = vpop.permute.xlu0 %1993
    %1995 = vrot.lane.b32.xlu0 %v1905, 64
    %v1996 = vpop.permute.xlu0 %1995
    %1997 = vrot.lane.b32.xlu0 %v1906, 64
    %v1998 = vpop.permute.xlu0 %1997
    %1999 = vrot.lane.b32.xlu0 %v1907, 64
    %v2000 = vpop.permute.xlu0 %1999
    %2001 = vrot.lane.b32.xlu0 %v1908, 64
    %v2002 = vpop.permute.xlu0 %2001
    %2003 = vrot.lane.b32.xlu0 %v1909, 64
    %v2004 = vpop.permute.xlu0 %2003
    %2005 = vrot.lane.b32.xlu0 %v1910, 64
    %v2006 = vpop.permute.xlu0 %2005
    %vm2039 = vcmask 1048064
    %2040 = vst.msk [vmem:[#allocation3] sm:$0xff] %vm2039, %v1944
    %2041 = vst.msk [vmem:[#allocation3 + $0x28] sm:$0xff] %vm2039, %v1946
    %2042 = vst.msk [vmem:[#allocation3 + $0x50] sm:$0xff] %vm2039, %v1948
    %2043 = vst.msk [vmem:[#allocation3 + $0x78] sm:$0xff] %vm2039, %v1950
    %2044 = vst.msk [vmem:[#allocation3 + $0xa0] sm:$0xff] %vm2039, %v1952
    %2045 = vst.msk [vmem:[#allocation3 + $0xc8] sm:$0xff] %vm2039, %v1954
    %2046 = vst.msk [vmem:[#allocation3 + $0xf0] sm:$0xff] %vm2039, %v1956
    %2047 = vst.msk [vmem:[#allocation3 + $0x118] sm:$0xff] %vm2039, %v1958
    %2048 = vst.msk [vmem:[#allocation3 + $0x140] sm:$0xff] %vm2039, %v1960
    %2049 = vst.msk [vmem:[#allocation3 + $0x168] sm:$0xff] %vm2039, %v1962
    %2050 = vst.msk [vmem:[#allocation3 + $0x190] sm:$0xff] %vm2039, %v1964
    %2051 = vst.msk [vmem:[#allocation3 + $0x1b8] sm:$0xff] %vm2039, %v1966
    %2052 = vst.msk [vmem:[#allocation3 + $0x1e0] sm:$0xff] %vm2039, %v1968
    %2053 = vst.msk [vmem:[#allocation3 + $0x208] sm:$0xff] %vm2039, %v1970
    %2054 = vst.msk [vmem:[#allocation3 + $0x230] sm:$0xff] %vm2039, %v1972
    %2055 = vst.msk [vmem:[#allocation3 + $0x258] sm:$0xff] %vm2039, %v1974
    %2056 = vst.msk [vmem:[#allocation3 + $0x280] sm:$0xff] %vm2039, %v1976
    %2057 = vst.msk [vmem:[#allocation3 + $0x2a8] sm:$0xff] %vm2039, %v1978
    %2058 = vst.msk [vmem:[#allocation3 + $0x2d0] sm:$0xff] %vm2039, %v1980
    %2059 = vst.msk [vmem:[#allocation3 + $0x2f8] sm:$0xff] %vm2039, %v1982
    %2060 = vst.msk [vmem:[#allocation3 + $0x320] sm:$0xff] %vm2039, %v1984
    %2061 = vst.msk [vmem:[#allocation3 + $0x348] sm:$0xff] %vm2039, %v1986
    %2062 = vst.msk [vmem:[#allocation3 + $0x370] sm:$0xff] %vm2039, %v1988
    %2063 = vst.msk [vmem:[#allocation3 + $0x398] sm:$0xff] %vm2039, %v1990
    %2064 = vst.msk [vmem:[#allocation3 + $0x3c0] sm:$0xff] %vm2039, %v1992
    %2065 = vst.msk [vmem:[#allocation3 + $0x3e8] sm:$0xff] %vm2039, %v1994
    %2066 = vst.msk [vmem:[#allocation3 + $0x410] sm:$0xff] %vm2039, %v1996
    %2067 = vst.msk [vmem:[#allocation3 + $0x438] sm:$0xff] %vm2039, %v1998
    %2068 = vst.msk [vmem:[#allocation3 + $0x460] sm:$0xff] %vm2039, %v2000
    %2069 = vst.msk [vmem:[#allocation3 + $0x488] sm:$0xff] %vm2039, %v2002
    %2070 = vst.msk [vmem:[#allocation3 + $0x4b0] sm:$0xff] %vm2039, %v2004
    %2071 = vst.msk [vmem:[#allocation3 + $0x4d8] sm:$0xff] %vm2039, %v2006
    %vm2072 = vcmask 1045504
    %v2073 = vrot.slane %v1386, 2
    %v2074 = vrot.slane %v1387, 2
    %v2075 = vsel %vm2072, %v2073, %v2074
    %v2076 = vrot.slane %v1388, 2
    %v2077 = vsel %vm2072, %v2074, %v2076
    %v2078 = vrot.slane %v1389, 2
    %v2079 = vrot.slane %v1390, 2
    %v2080 = vsel %vm2072, %v2078, %v2079
    %v2081 = vrot.slane %v1391, 2
    %v2082 = vsel %vm2072, %v2079, %v2081
    %v2083 = vrot.slane %v1392, 2
    %v2084 = vrot.slane %v1393, 2
    %v2085 = vsel %vm2072, %v2083, %v2084
    %v2086 = vrot.slane %v1394, 2
    %v2087 = vsel %vm2072, %v2084, %v2086
    %v2088 = vrot.slane %v1395, 2
    %v2089 = vrot.slane %v1396, 2
    %v2090 = vsel %vm2072, %v2088, %v2089
    %v2091 = vrot.slane %v1397, 2
    %v2092 = vsel %vm2072, %v2089, %v2091
    %v2093 = vrot.slane %v1398, 2
    %v2094 = vrot.slane %v1399, 2
    %v2095 = vsel %vm2072, %v2093, %v2094
    %v2096 = vrot.slane %v1400, 2
    %v2097 = vsel %vm2072, %v2094, %v2096
    %v2098 = vrot.slane %v1401, 2
    %v2099 = vrot.slane %v1402, 2
    %v2100 = vsel %vm2072, %v2098, %v2099
    %v2101 = vrot.slane %v1403, 2
    %v2102 = vsel %vm2072, %v2099, %v2101
    %v2103 = vrot.slane %v1404, 2
    %v2104 = vrot.slane %v1405, 2
    %v2105 = vsel %vm2072, %v2103, %v2104
    %v2106 = vrot.slane %v1406, 2
    %v2107 = vsel %vm2072, %v2104, %v2106
    %v2108 = vrot.slane %v1407, 2
    %v2109 = vrot.slane %v1408, 2
    %v2110 = vsel %vm2072, %v2108, %v2109
    %v2111 = vrot.slane %v1409, 2
    %v2112 = vsel %vm2072, %v2109, %v2111
    %v2113 = vrot.slane %v1410, 2
    %v2114 = vrot.slane %v1411, 2
    %v2115 = vsel %vm2072, %v2113, %v2114
    %v2116 = vrot.slane %v1412, 2
    %v2117 = vsel %vm2072, %v2114, %v2116
    %v2118 = vrot.slane %v1413, 2
    %v2119 = vrot.slane %v1414, 2
    %v2120 = vsel %vm2072, %v2118, %v2119
    %v2121 = vrot.slane %v1415, 2
    %v2122 = vsel %vm2072, %v2119, %v2121
    %v2123 = vrot.slane %v1416, 2
    %v2124 = vrot.slane %v1417, 2
    %v2125 = vsel %vm2072, %v2123, %v2124
    %v2126 = vrot.slane %v1418, 2
    %v2127 = vsel %vm2072, %v2124, %v2126
    %v2128 = vrot.slane %v1419, 2
    %v2129 = vrot.slane %v1420, 2
    %v2130 = vsel %vm2072, %v2128, %v2129
    %v2131 = vrot.slane %v1421, 2
    %v2132 = vsel %vm2072, %v2129, %v2131
    %v2133 = vrot.slane %v1422, 2
    %v2134 = vrot.slane %v1423, 2
    %v2135 = vsel %vm2072, %v2133, %v2134
    %v2136 = vrot.slane %v1424, 2
    %v2137 = vsel %vm2072, %v2134, %v2136
    %v2138 = vrot.slane %v1425, 2
    %v2139 = vrot.slane %v1426, 2
    %v2140 = vsel %vm2072, %v2138, %v2139
    %v2141 = vrot.slane %v1427, 2
    %v2142 = vsel %vm2072, %v2139, %v2141
    %v2143 = vrot.slane %v1428, 2
    %v2144 = vrot.slane %v1429, 2
    %v2145 = vsel %vm2072, %v2143, %v2144
    %v2146 = vrot.slane %v1430, 2
    %v2147 = vsel %vm2072, %v2144, %v2146
    %v2148 = vrot.slane %v1431, 2
    %v2149 = vrot.slane %v1432, 2
    %v2150 = vsel %vm2072, %v2148, %v2149
    %v2151 = vrot.slane %v1433, 2
    %v2152 = vsel %vm2072, %v2149, %v2151
    %v2153 = vrot.slane %v1440, 2
    %v2154 = vrot.slane %v1441, 2
    %v2155 = vsel %vm2072, %v2153, %v2154
    %v2156 = vrot.slane %v1442, 2
    %v2157 = vsel %vm2072, %v2154, %v2156
    %v2158 = vrot.slane %v1443, 2
    %v2159 = vrot.slane %v1444, 2
    %v2160 = vsel %vm2072, %v2158, %v2159
    %v2161 = vrot.slane %v1445, 2
    %v2162 = vsel %vm2072, %v2159, %v2161
    %v2163 = vrot.slane %v1446, 2
    %v2164 = vrot.slane %v1447, 2
    %v2165 = vsel %vm2072, %v2163, %v2164
    %v2166 = vrot.slane %v1448, 2
    %v2167 = vsel %vm2072, %v2164, %v2166
    %v2168 = vrot.slane %v1449, 2
    %v2169 = vrot.slane %v1450, 2
    %v2170 = vsel %vm2072, %v2168, %v2169
    %v2171 = vrot.slane %v1451, 2
    %v2172 = vsel %vm2072, %v2169, %v2171
    %v2173 = vrot.slane %v1452, 2
    %v2174 = vrot.slane %v1453, 2
    %v2175 = vsel %vm2072, %v2173, %v2174
    %v2176 = vrot.slane %v1454, 2
    %v2177 = vsel %vm2072, %v2174, %v2176
    %v2178 = vrot.slane %v1455, 2
    %v2179 = vrot.slane %v1456, 2
    %v2180 = vsel %vm2072, %v2178, %v2179
    %v2181 = vrot.slane %v1457, 2
    %v2182 = vsel %vm2072, %v2179, %v2181
    %v2183 = vrot.slane %v1458, 2
    %v2184 = vrot.slane %v1459, 2
    %v2185 = vsel %vm2072, %v2183, %v2184
    %v2186 = vrot.slane %v1460, 2
    %v2187 = vsel %vm2072, %v2184, %v2186
    %v2188 = vrot.slane %v1461, 2
    %v2189 = vrot.slane %v1462, 2
    %v2190 = vsel %vm2072, %v2188, %v2189
    %v2191 = vrot.slane %v1463, 2
    %v2192 = vsel %vm2072, %v2189, %v2191
    %v2193 = vrot.slane %v1464, 2
    %v2194 = vrot.slane %v1465, 2
    %v2195 = vsel %vm2072, %v2193, %v2194
    %v2196 = vrot.slane %v1466, 2
    %v2197 = vsel %vm2072, %v2194, %v2196
    %v2198 = vrot.slane %v1467, 2
    %v2199 = vrot.slane %v1468, 2
    %v2200 = vsel %vm2072, %v2198, %v2199
    %v2201 = vrot.slane %v1469, 2
    %v2202 = vsel %vm2072, %v2199, %v2201
    %v2203 = vrot.slane %v1470, 2
    %v2204 = vrot.slane %v1471, 2
    %v2205 = vsel %vm2072, %v2203, %v2204
    %v2206 = vrot.slane %v1472, 2
    %v2207 = vsel %vm2072, %v2204, %v2206
    %v2208 = vrot.slane %v1473, 2
    %v2209 = vrot.slane %v1474, 2
    %v2210 = vsel %vm2072, %v2208, %v2209
    %v2211 = vrot.slane %v1475, 2
    %v2212 = vsel %vm2072, %v2209, %v2211
    %v2213 = vrot.slane %v1476, 2
    %v2214 = vrot.slane %v1477, 2
    %v2215 = vsel %vm2072, %v2213, %v2214
    %v2216 = vrot.slane %v1478, 2
    %v2217 = vsel %vm2072, %v2214, %v2216
    %v2218 = vrot.slane %v1479, 2
    %v2219 = vrot.slane %v1480, 2
    %v2220 = vsel %vm2072, %v2218, %v2219
    %v2221 = vrot.slane %v1481, 2
    %v2222 = vsel %vm2072, %v2219, %v2221
    %v2223 = vrot.slane %v1482, 2
    %v2224 = vrot.slane %v1483, 2
    %v2225 = vsel %vm2072, %v2223, %v2224
    %v2226 = vrot.slane %v1484, 2
    %v2227 = vsel %vm2072, %v2224, %v2226
    %v2228 = vrot.slane %v1485, 2
    %v2229 = vrot.slane %v1486, 2
    %v2230 = vsel %vm2072, %v2228, %v2229
    %v2231 = vrot.slane %v1487, 2
    %v2232 = vsel %vm2072, %v2229, %v2231
    %v2297 = vpack.c.bf16 %v2077, %v2075
    %v2298 = vpack.c.bf16 %v2082, %v2080
    %v2299 = vpack.c.bf16 %v2087, %v2085
    %v2300 = vpack.c.bf16 %v2092, %v2090
    %v2301 = vpack.c.bf16 %v2097, %v2095
    %v2302 = vpack.c.bf16 %v2102, %v2100
    %v2303 = vpack.c.bf16 %v2107, %v2105
    %v2304 = vpack.c.bf16 %v2112, %v2110
    %v2305 = vpack.c.bf16 %v2117, %v2115
    %v2306 = vpack.c.bf16 %v2122, %v2120
    %v2307 = vpack.c.bf16 %v2127, %v2125
    %v2308 = vpack.c.bf16 %v2132, %v2130
    %v2309 = vpack.c.bf16 %v2137, %v2135
    %v2310 = vpack.c.bf16 %v2142, %v2140
    %v2311 = vpack.c.bf16 %v2147, %v2145
    %v2312 = vpack.c.bf16 %v2152, %v2150
    %v2313 = vpack.c.bf16 %v2157, %v2155
    %v2314 = vpack.c.bf16 %v2162, %v2160
    %v2315 = vpack.c.bf16 %v2167, %v2165
    %v2316 = vpack.c.bf16 %v2172, %v2170
    %v2317 = vpack.c.bf16 %v2177, %v2175
    %v2318 = vpack.c.bf16 %v2182, %v2180
    %v2319 = vpack.c.bf16 %v2187, %v2185
    %v2320 = vpack.c.bf16 %v2192, %v2190
    %v2321 = vpack.c.bf16 %v2197, %v2195
    %v2322 = vpack.c.bf16 %v2202, %v2200
    %v2323 = vpack.c.bf16 %v2207, %v2205
    %v2324 = vpack.c.bf16 %v2212, %v2210
    %v2325 = vpack.c.bf16 %v2217, %v2215
    %v2326 = vpack.c.bf16 %v2222, %v2220
    %v2327 = vpack.c.bf16 %v2227, %v2225
    %v2328 = vpack.c.bf16 %v2232, %v2230
    %2329 = vst.msk [vmem:[#allocation3 + $0x8] sm:$0xff] %vm43, %v2297
    %2330 = vst.msk [vmem:[#allocation3 + $0x30] sm:$0xff] %vm43, %v2298
    %2331 = vst.msk [vmem:[#allocation3 + $0x58] sm:$0xff] %vm43, %v2299
    %2332 = vst.msk [vmem:[#allocation3 + $0x80] sm:$0xff] %vm43, %v2300
    %2333 = vst.msk [vmem:[#allocation3 + $0xa8] sm:$0xff] %vm43, %v2301
    %2334 = vst.msk [vmem:[#allocation3 + $0xd0] sm:$0xff] %vm43, %v2302
    %2335 = vst.msk [vmem:[#allocation3 + $0xf8] sm:$0xff] %vm43, %v2303
    %2336 = vst.msk [vmem:[#allocation3 + $0x120] sm:$0xff] %vm43, %v2304
    %2337 = vst.msk [vmem:[#allocation3 + $0x148] sm:$0xff] %vm43, %v2305
    %2338 = vst.msk [vmem:[#allocation3 + $0x170] sm:$0xff] %vm43, %v2306
    %2339 = vst.msk [vmem:[#allocation3 + $0x198] sm:$0xff] %vm43, %v2307
    %2340 = vst.msk [vmem:[#allocation3 + $0x1c0] sm:$0xff] %vm43, %v2308
    %2341 = vst.msk [vmem:[#allocation3 + $0x1e8] sm:$0xff] %vm43, %v2309
    %2342 = vst.msk [vmem:[#allocation3 + $0x210] sm:$0xff] %vm43, %v2310
    %2343 = vst.msk [vmem:[#allocation3 + $0x238] sm:$0xff] %vm43, %v2311
    %2344 = vst.msk [vmem:[#allocation3 + $0x260] sm:$0xff] %vm43, %v2312
    %2345 = vst.msk [vmem:[#allocation3 + $0x288] sm:$0xff] %vm43, %v2313
    %2346 = vst.msk [vmem:[#allocation3 + $0x2b0] sm:$0xff] %vm43, %v2314
    %2347 = vst.msk [vmem:[#allocation3 + $0x2d8] sm:$0xff] %vm43, %v2315
    %2348 = vst.msk [vmem:[#allocation3 + $0x300] sm:$0xff] %vm43, %v2316
    %2349 = vst.msk [vmem:[#allocation3 + $0x328] sm:$0xff] %vm43, %v2317
    %2350 = vst.msk [vmem:[#allocation3 + $0x350] sm:$0xff] %vm43, %v2318
    %2351 = vst.msk [vmem:[#allocation3 + $0x378] sm:$0xff] %vm43, %v2319
    %2352 = vst.msk [vmem:[#allocation3 + $0x3a0] sm:$0xff] %vm43, %v2320
    %2353 = vst.msk [vmem:[#allocation3 + $0x3c8] sm:$0xff] %vm43, %v2321
    %2354 = vst.msk [vmem:[#allocation3 + $0x3f0] sm:$0xff] %vm43, %v2322
    %2355 = vst.msk [vmem:[#allocation3 + $0x418] sm:$0xff] %vm43, %v2323
    %2356 = vst.msk [vmem:[#allocation3 + $0x440] sm:$0xff] %vm43, %v2324
    %2357 = vst.msk [vmem:[#allocation3 + $0x468] sm:$0xff] %vm43, %v2325
    %2358 = vst.msk [vmem:[#allocation3 + $0x490] sm:$0xff] %vm43, %v2326
    %2359 = vst.msk [vmem:[#allocation3 + $0x4b8] sm:$0xff] %vm43, %v2327
    %2360 = vst.msk [vmem:[#allocation3 + $0x4e0] sm:$0xff] %vm43, %v2328
    %v2361 = vpack.c.bf16 %v1435, %v1434
    %v2362 = vpack.c.bf16 %v1489, %v1488
    %2395 = vrot.lane.b32.xlu0 %v1495, 64
    %v2396 = vpop.permute.xlu0 %2395
    %2397 = vrot.lane.b32.xlu0 %v1496, 64
    %v2398 = vpop.permute.xlu0 %2397
    %2399 = vrot.lane.b32.xlu0 %v1497, 64
    %v2400 = vpop.permute.xlu0 %2399
    %2401 = vrot.lane.b32.xlu0 %v1498, 64
    %v2402 = vpop.permute.xlu0 %2401
    %2403 = vrot.lane.b32.xlu0 %v1499, 64
    %v2404 = vpop.permute.xlu0 %2403
    %2405 = vrot.lane.b32.xlu0 %v1500, 64
    %v2406 = vpop.permute.xlu0 %2405
    %2407 = vrot.lane.b32.xlu0 %v1501, 64
    %v2408 = vpop.permute.xlu0 %2407
    %2409 = vrot.lane.b32.xlu0 %v1502, 64
    %v2410 = vpop.permute.xlu0 %2409
    %2411 = vrot.lane.b32.xlu0 %v1503, 64
    %v2412 = vpop.permute.xlu0 %2411
    %2413 = vrot.lane.b32.xlu0 %v1504, 64
    %v2414 = vpop.permute.xlu0 %2413
    %2415 = vrot.lane.b32.xlu0 %v1505, 64
    %v2416 = vpop.permute.xlu0 %2415
    %2417 = vrot.lane.b32.xlu0 %v1506, 64
    %v2418 = vpop.permute.xlu0 %2417
    %2419 = vrot.lane.b32.xlu0 %v1507, 64
    %v2420 = vpop.permute.xlu0 %2419
    %2421 = vrot.lane.b32.xlu0 %v1508, 64
    %v2422 = vpop.permute.xlu0 %2421
    %2423 = vrot.lane.b32.xlu0 %v1509, 64
    %v2424 = vpop.permute.xlu0 %2423
    %2425 = vrot.lane.b32.xlu0 %v2361, 64
    %v2426 = vpop.permute.xlu0 %2425
    %2427 = vrot.lane.b32.xlu0 %v1511, 64
    %v2428 = vpop.permute.xlu0 %2427
    %2429 = vrot.lane.b32.xlu0 %v1512, 64
    %v2430 = vpop.permute.xlu0 %2429
    %2431 = vrot.lane.b32.xlu0 %v1513, 64
    %v2432 = vpop.permute.xlu0 %2431
    %2433 = vrot.lane.b32.xlu0 %v1514, 64
    %v2434 = vpop.permute.xlu0 %2433
    %2435 = vrot.lane.b32.xlu0 %v1515, 64
    %v2436 = vpop.permute.xlu0 %2435
    %2437 = vrot.lane.b32.xlu0 %v1516, 64
    %v2438 = vpop.permute.xlu0 %2437
    %2439 = vrot.lane.b32.xlu0 %v1517, 64
    %v2440 = vpop.permute.xlu0 %2439
    %2441 = vrot.lane.b32.xlu0 %v1518, 64
    %v2442 = vpop.permute.xlu0 %2441
    %2443 = vrot.lane.b32.xlu0 %v1519, 64
    %v2444 = vpop.permute.xlu0 %2443
    %2445 = vrot.lane.b32.xlu0 %v1520, 64
    %v2446 = vpop.permute.xlu0 %2445
    %2447 = vrot.lane.b32.xlu0 %v1521, 64
    %v2448 = vpop.permute.xlu0 %2447
    %2449 = vrot.lane.b32.xlu0 %v1522, 64
    %v2450 = vpop.permute.xlu0 %2449
    %2451 = vrot.lane.b32.xlu0 %v1523, 64
    %v2452 = vpop.permute.xlu0 %2451
    %2453 = vrot.lane.b32.xlu0 %v1524, 64
    %v2454 = vpop.permute.xlu0 %2453
    %2455 = vrot.lane.b32.xlu0 %v1525, 64
    %v2456 = vpop.permute.xlu0 %2455
    %2457 = vrot.lane.b32.xlu0 %v2362, 64
    %v2458 = vpop.permute.xlu0 %2457
    %2491 = vst.msk [vmem:[#allocation3 + $0x8] sm:$0xff] %vm2039, %v2396
    %2492 = vst.msk [vmem:[#allocation3 + $0x30] sm:$0xff] %vm2039, %v2398
    %2493 = vst.msk [vmem:[#allocation3 + $0x58] sm:$0xff] %vm2039, %v2400
    %2494 = vst.msk [vmem:[#allocation3 + $0x80] sm:$0xff] %vm2039, %v2402
    %2495 = vst.msk [vmem:[#allocation3 + $0xa8] sm:$0xff] %vm2039, %v2404
    %2496 = vst.msk [vmem:[#allocation3 + $0xd0] sm:$0xff] %vm2039, %v2406
    %2497 = vst.msk [vmem:[#allocation3 + $0xf8] sm:$0xff] %vm2039, %v2408
    %2498 = vst.msk [vmem:[#allocation3 + $0x120] sm:$0xff] %vm2039, %v2410
    %2499 = vst.msk [vmem:[#allocation3 + $0x148] sm:$0xff] %vm2039, %v2412
    %2500 = vst.msk [vmem:[#allocation3 + $0x170] sm:$0xff] %vm2039, %v2414
    %2501 = vst.msk [vmem:[#allocation3 + $0x198] sm:$0xff] %vm2039, %v2416
    %2502 = vst.msk [vmem:[#allocation3 + $0x1c0] sm:$0xff] %vm2039, %v2418
    %2503 = vst.msk [vmem:[#allocation3 + $0x1e8] sm:$0xff] %vm2039, %v2420
    %2504 = vst.msk [vmem:[#allocation3 + $0x210] sm:$0xff] %vm2039, %v2422
    %2505 = vst.msk [vmem:[#allocation3 + $0x238] sm:$0xff] %vm2039, %v2424
    %2506 = vst.msk [vmem:[#allocation3 + $0x260] sm:$0xff] %vm2039, %v2426
    %2507 = vst.msk [vmem:[#allocation3 + $0x288] sm:$0xff] %vm2039, %v2428
    %2508 = vst.msk [vmem:[#allocation3 + $0x2b0] sm:$0xff] %vm2039, %v2430
    %2509 = vst.msk [vmem:[#allocation3 + $0x2d8] sm:$0xff] %vm2039, %v2432
    %2510 = vst.msk [vmem:[#allocation3 + $0x300] sm:$0xff] %vm2039, %v2434
    %2511 = vst.msk [vmem:[#allocation3 + $0x328] sm:$0xff] %vm2039, %v2436
    %2512 = vst.msk [vmem:[#allocation3 + $0x350] sm:$0xff] %vm2039, %v2438
    %2513 = vst.msk [vmem:[#allocation3 + $0x378] sm:$0xff] %vm2039, %v2440
    %2514 = vst.msk [vmem:[#allocation3 + $0x3a0] sm:$0xff] %vm2039, %v2442
    %2515 = vst.msk [vmem:[#allocation3 + $0x3c8] sm:$0xff] %vm2039, %v2444
    %2516 = vst.msk [vmem:[#allocation3 + $0x3f0] sm:$0xff] %vm2039, %v2446
    %2517 = vst.msk [vmem:[#allocation3 + $0x418] sm:$0xff] %vm2039, %v2448
    %2518 = vst.msk [vmem:[#allocation3 + $0x440] sm:$0xff] %vm2039, %v2450
    %2519 = vst.msk [vmem:[#allocation3 + $0x468] sm:$0xff] %vm2039, %v2452
    %2520 = vst.msk [vmem:[#allocation3 + $0x490] sm:$0xff] %vm2039, %v2454
    %2521 = vst.msk [vmem:[#allocation3 + $0x4b8] sm:$0xff] %vm2039, %v2456
    %2522 = vst.msk [vmem:[#allocation3 + $0x4e0] sm:$0xff] %vm2039, %v2458
    %v2529 = vrot.slane %v1434, 1
    %v2530 = vrot.slane %v1435, 1
    %v2531 = vsel %vm1654, %v2529, %v2530
    %v2532 = vrot.slane %v1436, 1
    %v2533 = vsel %vm1654, %v2530, %v2532
    %v2534 = vrot.slane %v1488, 1
    %v2535 = vrot.slane %v1489, 1
    %v2536 = vsel %vm1654, %v2534, %v2535
    %v2537 = vrot.slane %v1490, 1
    %v2538 = vsel %vm1654, %v2535, %v2537
    %v2543 = vpack.c.bf16 %v2533, %v2531
    %v2544 = vpack.c.bf16 %v2538, %v2536
    %2545 = vst.msk [vmem:[#allocation3 + $0x10] sm:$0xff] %vm43, %v1880
    %2546 = vst.msk [vmem:[#allocation3 + $0x38] sm:$0xff] %vm43, %v1881
    %2547 = vst.msk [vmem:[#allocation3 + $0x60] sm:$0xff] %vm43, %v1882
    %2548 = vst.msk [vmem:[#allocation3 + $0x88] sm:$0xff] %vm43, %v1883
    %2549 = vst.msk [vmem:[#allocation3 + $0xb0] sm:$0xff] %vm43, %v1884
    %2550 = vst.msk [vmem:[#allocation3 + $0xd8] sm:$0xff] %vm43, %v1885
    %2551 = vst.msk [vmem:[#allocation3 + $0x100] sm:$0xff] %vm43, %v1886
    %2552 = vst.msk [vmem:[#allocation3 + $0x128] sm:$0xff] %vm43, %v1887
    %2553 = vst.msk [vmem:[#allocation3 + $0x150] sm:$0xff] %vm43, %v1888
    %2554 = vst.msk [vmem:[#allocation3 + $0x178] sm:$0xff] %vm43, %v1889
    %2555 = vst.msk [vmem:[#allocation3 + $0x1a0] sm:$0xff] %vm43, %v1890
    %2556 = vst.msk [vmem:[#allocation3 + $0x1c8] sm:$0xff] %vm43, %v1891
    %2557 = vst.msk [vmem:[#allocation3 + $0x1f0] sm:$0xff] %vm43, %v1892
    %2558 = vst.msk [vmem:[#allocation3 + $0x218] sm:$0xff] %vm43, %v1893
    %2559 = vst.msk [vmem:[#allocation3 + $0x240] sm:$0xff] %vm43, %v1894
    %2560 = vst.msk [vmem:[#allocation3 + $0x268] sm:$0xff] %vm43, %v2543
    %2561 = vst.msk [vmem:[#allocation3 + $0x290] sm:$0xff] %vm43, %v1896
    %2562 = vst.msk [vmem:[#allocation3 + $0x2b8] sm:$0xff] %vm43, %v1897
    %2563 = vst.msk [vmem:[#allocation3 + $0x2e0] sm:$0xff] %vm43, %v1898
    %2564 = vst.msk [vmem:[#allocation3 + $0x308] sm:$0xff] %vm43, %v1899
    %2565 = vst.msk [vmem:[#allocation3 + $0x330] sm:$0xff] %vm43, %v1900
    %2566 = vst.msk [vmem:[#allocation3 + $0x358] sm:$0xff] %vm43, %v1901
    %2567 = vst.msk [vmem:[#allocation3 + $0x380] sm:$0xff] %vm43, %v1902
    %2568 = vst.msk [vmem:[#allocation3 + $0x3a8] sm:$0xff] %vm43, %v1903
    %2569 = vst.msk [vmem:[#allocation3 + $0x3d0] sm:$0xff] %vm43, %v1904
    %2570 = vst.msk [vmem:[#allocation3 + $0x3f8] sm:$0xff] %vm43, %v1905
    %2571 = vst.msk [vmem:[#allocation3 + $0x420] sm:$0xff] %vm43, %v1906
    %2572 = vst.msk [vmem:[#allocation3 + $0x448] sm:$0xff] %vm43, %v1907
    %2573 = vst.msk [vmem:[#allocation3 + $0x470] sm:$0xff] %vm43, %v1908
    %2574 = vst.msk [vmem:[#allocation3 + $0x498] sm:$0xff] %vm43, %v1909
    %2575 = vst.msk [vmem:[#allocation3 + $0x4c0] sm:$0xff] %vm43, %v1910
    %2576 = vst.msk [vmem:[#allocation3 + $0x4e8] sm:$0xff] %vm43, %v2544
    %v2577 = vrot.slane %v1434, 2
    %v2578 = vrot.slane %v1435, 2
    %v2579 = vsel %vm2072, %v2577, %v2578
    %v2580 = vrot.slane %v1436, 2
    %v2581 = vsel %vm2072, %v2578, %v2580
    %v2582 = vrot.slane %v1488, 2
    %v2583 = vrot.slane %v1489, 2
    %v2584 = vsel %vm2072, %v2582, %v2583
    %v2585 = vrot.slane %v1490, 2
    %v2586 = vsel %vm2072, %v2583, %v2585
    %v2591 = vpack.c.bf16 %v2581, %v2579
    %v2592 = vpack.c.bf16 %v2586, %v2584
    %2625 = vrot.lane.b32.xlu0 %v2298, 64
    %v2626 = vpop.permute.xlu0 %2625
    %2627 = vrot.lane.b32.xlu0 %v2299, 64
    %v2628 = vpop.permute.xlu0 %2627
    %2629 = vrot.lane.b32.xlu0 %v2300, 64
    %v2630 = vpop.permute.xlu0 %2629
    %2631 = vrot.lane.b32.xlu0 %v2301, 64
    %v2632 = vpop.permute.xlu0 %2631
    %2633 = vrot.lane.b32.xlu0 %v2302, 64
    %v2634 = vpop.permute.xlu0 %2633
    %2635 = vrot.lane.b32.xlu0 %v2303, 64
    %v2636 = vpop.permute.xlu0 %2635
    %2637 = vrot.lane.b32.xlu0 %v2304, 64
    %v2638 = vpop.permute.xlu0 %2637
    %2639 = vrot.lane.b32.xlu0 %v2305, 64
    %v2640 = vpop.permute.xlu0 %2639
    %2641 = vrot.lane.b32.xlu0 %v2306, 64
    %v2642 = vpop.permute.xlu0 %2641
    %2643 = vrot.lane.b32.xlu0 %v2307, 64
    %v2644 = vpop.permute.xlu0 %2643
    %2645 = vrot.lane.b32.xlu0 %v2308, 64
    %v2646 = vpop.permute.xlu0 %2645
    %2647 = vrot.lane.b32.xlu0 %v2309, 64
    %v2648 = vpop.permute.xlu0 %2647
    %2649 = vrot.lane.b32.xlu0 %v2310, 64
    %v2650 = vpop.permute.xlu0 %2649
    %2651 = vrot.lane.b32.xlu0 %v2311, 64
    %v2652 = vpop.permute.xlu0 %2651
    %2653 = vrot.lane.b32.xlu0 %v2312, 64
    %v2654 = vpop.permute.xlu0 %2653
    %2655 = vrot.lane.b32.xlu0 %v2591, 64
    %v2656 = vpop.permute.xlu0 %2655
    %2657 = vrot.lane.b32.xlu0 %v2314, 64
    %v2658 = vpop.permute.xlu0 %2657
    %2659 = vrot.lane.b32.xlu0 %v2315, 64
    %v2660 = vpop.permute.xlu0 %2659
    %2661 = vrot.lane.b32.xlu0 %v2316, 64
    %v2662 = vpop.permute.xlu0 %2661
    %2663 = vrot.lane.b32.xlu0 %v2317, 64
    %v2664 = vpop.permute.xlu0 %2663
    %2665 = vrot.lane.b32.xlu0 %v2318, 64
    %v2666 = vpop.permute.xlu0 %2665
    %2667 = vrot.lane.b32.xlu0 %v2319, 64
    %v2668 = vpop.permute.xlu0 %2667
    %2669 = vrot.lane.b32.xlu0 %v2320, 64
    %v2670 = vpop.permute.xlu0 %2669
    %2671 = vrot.lane.b32.xlu0 %v2321, 64
    %v2672 = vpop.permute.xlu0 %2671
    %2673 = vrot.lane.b32.xlu0 %v2322, 64
    %v2674 = vpop.permute.xlu0 %2673
    %2675 = vrot.lane.b32.xlu0 %v2323, 64
    %v2676 = vpop.permute.xlu0 %2675
    %2677 = vrot.lane.b32.xlu0 %v2324, 64
    %v2678 = vpop.permute.xlu0 %2677
    %2679 = vrot.lane.b32.xlu0 %v2325, 64
    %v2680 = vpop.permute.xlu0 %2679
    %2681 = vrot.lane.b32.xlu0 %v2326, 64
    %v2682 = vpop.permute.xlu0 %2681
    %2683 = vrot.lane.b32.xlu0 %v2327, 64
    %v2684 = vpop.permute.xlu0 %2683
    %2685 = vrot.lane.b32.xlu0 %v2328, 64
    %v2686 = vpop.permute.xlu0 %2685
    %2687 = vrot.lane.b32.xlu0 %v2592, 64
    %v2688 = vpop.permute.xlu0 %2687
    %2721 = vst.msk [vmem:[#allocation3 + $0x10] sm:$0xff] %vm2039, %v2626
    %2722 = vst.msk [vmem:[#allocation3 + $0x38] sm:$0xff] %vm2039, %v2628
    %2723 = vst.msk [vmem:[#allocation3 + $0x60] sm:$0xff] %vm2039, %v2630
    %2724 = vst.msk [vmem:[#allocation3 + $0x88] sm:$0xff] %vm2039, %v2632
    %2725 = vst.msk [vmem:[#allocation3 + $0xb0] sm:$0xff] %vm2039, %v2634
    %2726 = vst.msk [vmem:[#allocation3 + $0xd8] sm:$0xff] %vm2039, %v2636
    %2727 = vst.msk [vmem:[#allocation3 + $0x100] sm:$0xff] %vm2039, %v2638
    %2728 = vst.msk [vmem:[#allocation3 + $0x128] sm:$0xff] %vm2039, %v2640
    %2729 = vst.msk [vmem:[#allocation3 + $0x150] sm:$0xff] %vm2039, %v2642
    %2730 = vst.msk [vmem:[#allocation3 + $0x178] sm:$0xff] %vm2039, %v2644
    %2731 = vst.msk [vmem:[#allocation3 + $0x1a0] sm:$0xff] %vm2039, %v2646
    %2732 = vst.msk [vmem:[#allocation3 + $0x1c8] sm:$0xff] %vm2039, %v2648
    %2733 = vst.msk [vmem:[#allocation3 + $0x1f0] sm:$0xff] %vm2039, %v2650
    %2734 = vst.msk [vmem:[#allocation3 + $0x218] sm:$0xff] %vm2039, %v2652
    %2735 = vst.msk [vmem:[#allocation3 + $0x240] sm:$0xff] %vm2039, %v2654
    %2736 = vst.msk [vmem:[#allocation3 + $0x268] sm:$0xff] %vm2039, %v2656
    %2737 = vst.msk [vmem:[#allocation3 + $0x290] sm:$0xff] %vm2039, %v2658
    %2738 = vst.msk [vmem:[#allocation3 + $0x2b8] sm:$0xff] %vm2039, %v2660
    %2739 = vst.msk [vmem:[#allocation3 + $0x2e0] sm:$0xff] %vm2039, %v2662
    %2740 = vst.msk [vmem:[#allocation3 + $0x308] sm:$0xff] %vm2039, %v2664
    %2741 = vst.msk [vmem:[#allocation3 + $0x330] sm:$0xff] %vm2039, %v2666
    %2742 = vst.msk [vmem:[#allocation3 + $0x358] sm:$0xff] %vm2039, %v2668
    %2743 = vst.msk [vmem:[#allocation3 + $0x380] sm:$0xff] %vm2039, %v2670
    %2744 = vst.msk [vmem:[#allocation3 + $0x3a8] sm:$0xff] %vm2039, %v2672
    %2745 = vst.msk [vmem:[#allocation3 + $0x3d0] sm:$0xff] %vm2039, %v2674
    %2746 = vst.msk [vmem:[#allocation3 + $0x3f8] sm:$0xff] %vm2039, %v2676
    %2747 = vst.msk [vmem:[#allocation3 + $0x420] sm:$0xff] %vm2039, %v2678
    %2748 = vst.msk [vmem:[#allocation3 + $0x448] sm:$0xff] %vm2039, %v2680
    %2749 = vst.msk [vmem:[#allocation3 + $0x470] sm:$0xff] %vm2039, %v2682
    %2750 = vst.msk [vmem:[#allocation3 + $0x498] sm:$0xff] %vm2039, %v2684
    %2751 = vst.msk [vmem:[#allocation3 + $0x4c0] sm:$0xff] %vm2039, %v2686
    %2752 = vst.msk [vmem:[#allocation3 + $0x4e8] sm:$0xff] %vm2039, %v2688
    %v2753 = vpack.c.bf16 %v1438, %v1437
    %v2754 = vpack.c.bf16 %v1492, %v1491
    %2755 = vst.msk [vmem:[#allocation3 + $0x18] sm:$0xff] %vm43, %v1496
    %2756 = vst.msk [vmem:[#allocation3 + $0x40] sm:$0xff] %vm43, %v1497
    %2757 = vst.msk [vmem:[#allocation3 + $0x68] sm:$0xff] %vm43, %v1498
    %2758 = vst.msk [vmem:[#allocation3 + $0x90] sm:$0xff] %vm43, %v1499
    %2759 = vst.msk [vmem:[#allocation3 + $0xb8] sm:$0xff] %vm43, %v1500
    %2760 = vst.msk [vmem:[#allocation3 + $0xe0] sm:$0xff] %vm43, %v1501
    %2761 = vst.msk [vmem:[#allocation3 + $0x108] sm:$0xff] %vm43, %v1502
    %2762 = vst.msk [vmem:[#allocation3 + $0x130] sm:$0xff] %vm43, %v1503
    %2763 = vst.msk [vmem:[#allocation3 + $0x158] sm:$0xff] %vm43, %v1504
    %2764 = vst.msk [vmem:[#allocation3 + $0x180] sm:$0xff] %vm43, %v1505
    %2765 = vst.msk [vmem:[#allocation3 + $0x1a8] sm:$0xff] %vm43, %v1506
    %2766 = vst.msk [vmem:[#allocation3 + $0x1d0] sm:$0xff] %vm43, %v1507
    %2767 = vst.msk [vmem:[#allocation3 + $0x1f8] sm:$0xff] %vm43, %v1508
    %2768 = vst.msk [vmem:[#allocation3 + $0x220] sm:$0xff] %vm43, %v1509
    %2769 = vst.msk [vmem:[#allocation3 + $0x248] sm:$0xff] %vm43, %v2361
    %2770 = vst.msk [vmem:[#allocation3 + $0x270] sm:$0xff] %vm43, %v2753
    %2771 = vst.msk [vmem:[#allocation3 + $0x298] sm:$0xff] %vm43, %v1512
    %2772 = vst.msk [vmem:[#allocation3 + $0x2c0] sm:$0xff] %vm43, %v1513
    %2773 = vst.msk [vmem:[#allocation3 + $0x2e8] sm:$0xff] %vm43, %v1514
    %2774 = vst.msk [vmem:[#allocation3 + $0x310] sm:$0xff] %vm43, %v1515
    %2775 = vst.msk [vmem:[#allocation3 + $0x338] sm:$0xff] %vm43, %v1516
    %2776 = vst.msk [vmem:[#allocation3 + $0x360] sm:$0xff] %vm43, %v1517
    %2777 = vst.msk [vmem:[#allocation3 + $0x388] sm:$0xff] %vm43, %v1518
    %2778 = vst.msk [vmem:[#allocation3 + $0x3b0] sm:$0xff] %vm43, %v1519
    %2779 = vst.msk [vmem:[#allocation3 + $0x3d8] sm:$0xff] %vm43, %v1520
    %2780 = vst.msk [vmem:[#allocation3 + $0x400] sm:$0xff] %vm43, %v1521
    %2781 = vst.msk [vmem:[#allocation3 + $0x428] sm:$0xff] %vm43, %v1522
    %2782 = vst.msk [vmem:[#allocation3 + $0x450] sm:$0xff] %vm43, %v1523
    %2783 = vst.msk [vmem:[#allocation3 + $0x478] sm:$0xff] %vm43, %v1524
    %2784 = vst.msk [vmem:[#allocation3 + $0x4a0] sm:$0xff] %vm43, %v1525
    %2785 = vst.msk [vmem:[#allocation3 + $0x4c8] sm:$0xff] %vm43, %v2362
    %2786 = vst.msk [vmem:[#allocation3 + $0x4f0] sm:$0xff] %vm43, %v2754
    %v2793 = vrot.slane %v1437, 1
    %v2794 = vrot.slane %v1438, 1
    %v2795 = vsel %vm1654, %v2793, %v2794
    %v2796 = vrot.slane %v1439, 1
    %v2797 = vsel %vm1654, %v2794, %v2796
    %v2798 = vrot.slane %v1491, 1
    %v2799 = vrot.slane %v1492, 1
    %v2800 = vsel %vm1654, %v2798, %v2799
    %v2801 = vrot.slane %v1493, 1
    %v2802 = vsel %vm1654, %v2799, %v2801
    %v2807 = vpack.c.bf16 %v2797, %v2795
    %v2808 = vpack.c.bf16 %v2802, %v2800
    %2813 = vrot.lane.b32.xlu0 %v2543, 64
    %v2814 = vpop.permute.xlu0 %2813
    %2815 = vrot.lane.b32.xlu0 %v2807, 64
    %v2816 = vpop.permute.xlu0 %2815
    %2817 = vrot.lane.b32.xlu0 %v2544, 64
    %v2818 = vpop.permute.xlu0 %2817
    %2819 = vrot.lane.b32.xlu0 %v2808, 64
    %v2820 = vpop.permute.xlu0 %2819
    %2825 = vst.msk [vmem:[#allocation3 + $0x18] sm:$0xff] %vm2039, %v1948
    %2826 = vst.msk [vmem:[#allocation3 + $0x40] sm:$0xff] %vm2039, %v1950
    %2827 = vst.msk [vmem:[#allocation3 + $0x68] sm:$0xff] %vm2039, %v1952
    %2828 = vst.msk [vmem:[#allocation3 + $0x90] sm:$0xff] %vm2039, %v1954
    %2829 = vst.msk [vmem:[#allocation3 + $0xb8] sm:$0xff] %vm2039, %v1956
    %2830 = vst.msk [vmem:[#allocation3 + $0xe0] sm:$0xff] %vm2039, %v1958
    %2831 = vst.msk [vmem:[#allocation3 + $0x108] sm:$0xff] %vm2039, %v1960
    %2832 = vst.msk [vmem:[#allocation3 + $0x130] sm:$0xff] %vm2039, %v1962
    %2833 = vst.msk [vmem:[#allocation3 + $0x158] sm:$0xff] %vm2039, %v1964
    %2834 = vst.msk [vmem:[#allocation3 + $0x180] sm:$0xff] %vm2039, %v1966
    %2835 = vst.msk [vmem:[#allocation3 + $0x1a8] sm:$0xff] %vm2039, %v1968
    %2836 = vst.msk [vmem:[#allocation3 + $0x1d0] sm:$0xff] %vm2039, %v1970
    %2837 = vst.msk [vmem:[#allocation3 + $0x1f8] sm:$0xff] %vm2039, %v1972
    %2838 = vst.msk [vmem:[#allocation3 + $0x220] sm:$0xff] %vm2039, %v1974
    %2839 = vst.msk [vmem:[#allocation3 + $0x248] sm:$0xff] %vm2039, %v2814
    %2840 = vst.msk [vmem:[#allocation3 + $0x270] sm:$0xff] %vm2039, %v2816
    %2841 = vst.msk [vmem:[#allocation3 + $0x298] sm:$0xff] %vm2039, %v1980
    %2842 = vst.msk [vmem:[#allocation3 + $0x2c0] sm:$0xff] %vm2039, %v1982
    %2843 = vst.msk [vmem:[#allocation3 + $0x2e8] sm:$0xff] %vm2039, %v1984
    %2844 = vst.msk [vmem:[#allocation3 + $0x310] sm:$0xff] %vm2039, %v1986
    %2845 = vst.msk [vmem:[#allocation3 + $0x338] sm:$0xff] %vm2039, %v1988
    %2846 = vst.msk [vmem:[#allocation3 + $0x360] sm:$0xff] %vm2039, %v1990
    %2847 = vst.msk [vmem:[#allocation3 + $0x388] sm:$0xff] %vm2039, %v1992
    %2848 = vst.msk [vmem:[#allocation3 + $0x3b0] sm:$0xff] %vm2039, %v1994
    %2849 = vst.msk [vmem:[#allocation3 + $0x3d8] sm:$0xff] %vm2039, %v1996
    %2850 = vst.msk [vmem:[#allocation3 + $0x400] sm:$0xff] %vm2039, %v1998
    %2851 = vst.msk [vmem:[#allocation3 + $0x428] sm:$0xff] %vm2039, %v2000
    %2852 = vst.msk [vmem:[#allocation3 + $0x450] sm:$0xff] %vm2039, %v2002
    %2853 = vst.msk [vmem:[#allocation3 + $0x478] sm:$0xff] %vm2039, %v2004
    %2854 = vst.msk [vmem:[#allocation3 + $0x4a0] sm:$0xff] %vm2039, %v2006
    %2855 = vst.msk [vmem:[#allocation3 + $0x4c8] sm:$0xff] %vm2039, %v2818
    %2856 = vst.msk [vmem:[#allocation3 + $0x4f0] sm:$0xff] %vm2039, %v2820
    %v2857 = vrot.slane %v1437, 2
    %v2858 = vrot.slane %v1438, 2
    %v2859 = vsel %vm2072, %v2857, %v2858
    %v2860 = vrot.slane %v1439, 2
    %v2861 = vsel %vm2072, %v2858, %v2860
    %v2862 = vrot.slane %v1491, 2
    %v2863 = vrot.slane %v1492, 2
    %v2864 = vsel %vm2072, %v2862, %v2863
    %v2865 = vrot.slane %v1493, 2
    %v2866 = vsel %vm2072, %v2863, %v2865
    %v2871 = vpack.c.bf16 %v2861, %v2859
    %v2872 = vpack.c.bf16 %v2866, %v2864
    %2873 = vst.msk [vmem:[#allocation3 + $0x20] sm:$0xff] %vm43, %v2299
    %2874 = vst.msk [vmem:[#allocation3 + $0x48] sm:$0xff] %vm43, %v2300
    %2875 = vst.msk [vmem:[#allocation3 + $0x70] sm:$0xff] %vm43, %v2301
    %2876 = vst.msk [vmem:[#allocation3 + $0x98] sm:$0xff] %vm43, %v2302
    %2877 = vst.msk [vmem:[#allocation3 + $0xc0] sm:$0xff] %vm43, %v2303
    %2878 = vst.msk [vmem:[#allocation3 + $0xe8] sm:$0xff] %vm43, %v2304
    %2879 = vst.msk [vmem:[#allocation3 + $0x110] sm:$0xff] %vm43, %v2305
    %2880 = vst.msk [vmem:[#allocation3 + $0x138] sm:$0xff] %vm43, %v2306
    %2881 = vst.msk [vmem:[#allocation3 + $0x160] sm:$0xff] %vm43, %v2307
    %2882 = vst.msk [vmem:[#allocation3 + $0x188] sm:$0xff] %vm43, %v2308
    %2883 = vst.msk [vmem:[#allocation3 + $0x1b0] sm:$0xff] %vm43, %v2309
    %2884 = vst.msk [vmem:[#allocation3 + $0x1d8] sm:$0xff] %vm43, %v2310
    %2885 = vst.msk [vmem:[#allocation3 + $0x200] sm:$0xff] %vm43, %v2311
    %2886 = vst.msk [vmem:[#allocation3 + $0x228] sm:$0xff] %vm43, %v2312
    %2887 = vst.msk [vmem:[#allocation3 + $0x250] sm:$0xff] %vm43, %v2591
    %2888 = vst.msk [vmem:[#allocation3 + $0x278] sm:$0xff] %vm43, %v2871
    %2889 = vst.msk [vmem:[#allocation3 + $0x2a0] sm:$0xff] %vm43, %v2315
    %2890 = vst.msk [vmem:[#allocation3 + $0x2c8] sm:$0xff] %vm43, %v2316
    %2891 = vst.msk [vmem:[#allocation3 + $0x2f0] sm:$0xff] %vm43, %v2317
    %2892 = vst.msk [vmem:[#allocation3 + $0x318] sm:$0xff] %vm43, %v2318
    %2893 = vst.msk [vmem:[#allocation3 + $0x340] sm:$0xff] %vm43, %v2319
    %2894 = vst.msk [vmem:[#allocation3 + $0x368] sm:$0xff] %vm43, %v2320
    %2895 = vst.msk [vmem:[#allocation3 + $0x390] sm:$0xff] %vm43, %v2321
    %2896 = vst.msk [vmem:[#allocation3 + $0x3b8] sm:$0xff] %vm43, %v2322
    %2897 = vst.msk [vmem:[#allocation3 + $0x3e0] sm:$0xff] %vm43, %v2323
    %2898 = vst.msk [vmem:[#allocation3 + $0x408] sm:$0xff] %vm43, %v2324
    %2899 = vst.msk [vmem:[#allocation3 + $0x430] sm:$0xff] %vm43, %v2325
    %2900 = vst.msk [vmem:[#allocation3 + $0x458] sm:$0xff] %vm43, %v2326
    %2901 = vst.msk [vmem:[#allocation3 + $0x480] sm:$0xff] %vm43, %v2327
    %2902 = vst.msk [vmem:[#allocation3 + $0x4a8] sm:$0xff] %vm43, %v2328
    %2903 = vst.msk [vmem:[#allocation3 + $0x4d0] sm:$0xff] %vm43, %v2592
    %2904 = vst.msk [vmem:[#allocation3 + $0x4f8] sm:$0xff] %vm43, %v2872
    %v2905 = vld [vmem:[#allocation3] sm:$0xff]
    %v2906 = vld [vmem:[#allocation3 + $0x8] sm:$0xff]
    %v2907 = vld [vmem:[#allocation3 + $0x10] sm:$0xff]
    %v2908 = vld [vmem:[#allocation3 + $0x18] sm:$0xff]
    %v2909 = vld [vmem:[#allocation3 + $0x20] sm:$0xff]
    %v2910 = vld [vmem:[#allocation3 + $0x28] sm:$0xff]
    %v2911 = vld [vmem:[#allocation3 + $0x30] sm:$0xff]
    %v2912 = vld [vmem:[#allocation3 + $0x38] sm:$0xff]
    %v2913 = vld [vmem:[#allocation3 + $0x40] sm:$0xff]
    %v2914 = vld [vmem:[#allocation3 + $0x48] sm:$0xff]
    %v2915 = vld [vmem:[#allocation3 + $0x50] sm:$0xff]
    %v2916 = vld [vmem:[#allocation3 + $0x58] sm:$0xff]
    %v2917 = vld [vmem:[#allocation3 + $0x60] sm:$0xff]
    %v2918 = vld [vmem:[#allocation3 + $0x68] sm:$0xff]
    %v2919 = vld [vmem:[#allocation3 + $0x70] sm:$0xff]
    %v2920 = vld [vmem:[#allocation3 + $0x78] sm:$0xff]
    %v2921 = vld [vmem:[#allocation3 + $0x80] sm:$0xff]
    %v2922 = vld [vmem:[#allocation3 + $0x88] sm:$0xff]
    %v2923 = vld [vmem:[#allocation3 + $0x90] sm:$0xff]
    %v2924 = vld [vmem:[#allocation3 + $0x98] sm:$0xff]
    %v2925 = vld [vmem:[#allocation3 + $0xa0] sm:$0xff]
    %v2926 = vld [vmem:[#allocation3 + $0xa8] sm:$0xff]
    %v2927 = vld [vmem:[#allocation3 + $0xb0] sm:$0xff]
    %v2928 = vld [vmem:[#allocation3 + $0xb8] sm:$0xff]
    %v2929 = vld [vmem:[#allocation3 + $0xc0] sm:$0xff]
    %v2930 = vld [vmem:[#allocation3 + $0xc8] sm:$0xff]
    %v2931 = vld [vmem:[#allocation3 + $0xd0] sm:$0xff]
    %v2932 = vld [vmem:[#allocation3 + $0xd8] sm:$0xff]
    %v2933 = vld [vmem:[#allocation3 + $0xe0] sm:$0xff]
    %v2934 = vld [vmem:[#allocation3 + $0xe8] sm:$0xff]
    %v2935 = vld [vmem:[#allocation3 + $0xf0] sm:$0xff]
    %v2936 = vld [vmem:[#allocation3 + $0xf8] sm:$0xff]
    %v2937 = vld [vmem:[#allocation3 + $0x100] sm:$0xff]
    %v2938 = vld [vmem:[#allocation3 + $0x108] sm:$0xff]
    %v2939 = vld [vmem:[#allocation3 + $0x110] sm:$0xff]
    %v2940 = vld [vmem:[#allocation3 + $0x118] sm:$0xff]
    %v2941 = vld [vmem:[#allocation3 + $0x120] sm:$0xff]
    %v2942 = vld [vmem:[#allocation3 + $0x128] sm:$0xff]
    %v2943 = vld [vmem:[#allocation3 + $0x130] sm:$0xff]
    %v2944 = vld [vmem:[#allocation3 + $0x138] sm:$0xff]
    %v2945 = vld [vmem:[#allocation3 + $0x140] sm:$0xff]
    %v2946 = vld [vmem:[#allocation3 + $0x148] sm:$0xff]
    %v2947 = vld [vmem:[#allocation3 + $0x150] sm:$0xff]
    %v2948 = vld [vmem:[#allocation3 + $0x158] sm:$0xff]
    %v2949 = vld [vmem:[#allocation3 + $0x160] sm:$0xff]
    %v2950 = vld [vmem:[#allocation3 + $0x168] sm:$0xff]
    %v2951 = vld [vmem:[#allocation3 + $0x170] sm:$0xff]
    %v2952 = vld [vmem:[#allocation3 + $0x178] sm:$0xff]
    %v2953 = vld [vmem:[#allocation3 + $0x180] sm:$0xff]
    %v2954 = vld [vmem:[#allocation3 + $0x188] sm:$0xff]
    %v2955 = vld [vmem:[#allocation3 + $0x190] sm:$0xff]
    %v2956 = vld [vmem:[#allocation3 + $0x198] sm:$0xff]
    %v2957 = vld [vmem:[#allocation3 + $0x1a0] sm:$0xff]
    %v2958 = vld [vmem:[#allocation3 + $0x1a8] sm:$0xff]
    %v2959 = vld [vmem:[#allocation3 + $0x1b0] sm:$0xff]
    %v2960 = vld [vmem:[#allocation3 + $0x1b8] sm:$0xff]
    %v2961 = vld [vmem:[#allocation3 + $0x1c0] sm:$0xff]
    %v2962 = vld [vmem:[#allocation3 + $0x1c8] sm:$0xff]
    %v2963 = vld [vmem:[#allocation3 + $0x1d0] sm:$0xff]
    %v2964 = vld [vmem:[#allocation3 + $0x1d8] sm:$0xff]
    %v2965 = vld [vmem:[#allocation3 + $0x1e0] sm:$0xff]
    %v2966 = vld [vmem:[#allocation3 + $0x1e8] sm:$0xff]
    %v2967 = vld [vmem:[#allocation3 + $0x1f0] sm:$0xff]
    %v2968 = vld [vmem:[#allocation3 + $0x1f8] sm:$0xff]
    %v2969 = vld [vmem:[#allocation3 + $0x200] sm:$0xff]
    %v2970 = vld [vmem:[#allocation3 + $0x208] sm:$0xff]
    %v2971 = vld [vmem:[#allocation3 + $0x210] sm:$0xff]
    %v2972 = vld [vmem:[#allocation3 + $0x218] sm:$0xff]
    %v2973 = vld [vmem:[#allocation3 + $0x220] sm:$0xff]
    %v2974 = vld [vmem:[#allocation3 + $0x228] sm:$0xff]
    %v2975 = vld [vmem:[#allocation3 + $0x230] sm:$0xff]
    %v2976 = vld [vmem:[#allocation3 + $0x238] sm:$0xff]
    %v2977 = vld [vmem:[#allocation3 + $0x240] sm:$0xff]
    %v2978 = vld [vmem:[#allocation3 + $0x248] sm:$0xff]
    %v2979 = vld [vmem:[#allocation3 + $0x250] sm:$0xff]
    %v2980 = vld [vmem:[#allocation3 + $0x258] sm:$0xff]
    %v2981 = vld [vmem:[#allocation3 + $0x260] sm:$0xff]
    %v2982 = vld [vmem:[#allocation3 + $0x268] sm:$0xff]
    %v2983 = vld [vmem:[#allocation3 + $0x270] sm:$0xff]
    %v2984 = vld [vmem:[#allocation3 + $0x278] sm:$0xff]
    %v2985 = vld [vmem:[#allocation3 + $0x280] sm:$0xff]
    %v2986 = vld [vmem:[#allocation3 + $0x288] sm:$0xff]
    %v2987 = vld [vmem:[#allocation3 + $0x290] sm:$0xff]
    %v2988 = vld [vmem:[#allocation3 + $0x298] sm:$0xff]
    %v2989 = vld [vmem:[#allocation3 + $0x2a0] sm:$0xff]
    %v2990 = vld [vmem:[#allocation3 + $0x2a8] sm:$0xff]
    %v2991 = vld [vmem:[#allocation3 + $0x2b0] sm:$0xff]
    %v2992 = vld [vmem:[#allocation3 + $0x2b8] sm:$0xff]
    %v2993 = vld [vmem:[#allocation3 + $0x2c0] sm:$0xff]
    %v2994 = vld [vmem:[#allocation3 + $0x2c8] sm:$0xff]
    %v2995 = vld [vmem:[#allocation3 + $0x2d0] sm:$0xff]
    %v2996 = vld [vmem:[#allocation3 + $0x2d8] sm:$0xff]
    %v2997 = vld [vmem:[#allocation3 + $0x2e0] sm:$0xff]
    %v2998 = vld [vmem:[#allocation3 + $0x2e8] sm:$0xff]
    %v2999 = vld [vmem:[#allocation3 + $0x2f0] sm:$0xff]
    %v3000 = vld [vmem:[#allocation3 + $0x2f8] sm:$0xff]
    %v3001 = vld [vmem:[#allocation3 + $0x300] sm:$0xff]
    %v3002 = vld [vmem:[#allocation3 + $0x308] sm:$0xff]
    %v3003 = vld [vmem:[#allocation3 + $0x310] sm:$0xff]
    %v3004 = vld [vmem:[#allocation3 + $0x318] sm:$0xff]
    %v3005 = vld [vmem:[#allocation3 + $0x320] sm:$0xff]
    %v3006 = vld [vmem:[#allocation3 + $0x328] sm:$0xff]
    %v3007 = vld [vmem:[#allocation3 + $0x330] sm:$0xff]
    %v3008 = vld [vmem:[#allocation3 + $0x338] sm:$0xff]
    %v3009 = vld [vmem:[#allocation3 + $0x340] sm:$0xff]
    %v3010 = vld [vmem:[#allocation3 + $0x348] sm:$0xff]
    %v3011 = vld [vmem:[#allocation3 + $0x350] sm:$0xff]
    %v3012 = vld [vmem:[#allocation3 + $0x358] sm:$0xff]
    %v3013 = vld [vmem:[#allocation3 + $0x360] sm:$0xff]
    %v3014 = vld [vmem:[#allocation3 + $0x368] sm:$0xff]
    %v3015 = vld [vmem:[#allocation3 + $0x370] sm:$0xff]
    %v3016 = vld [vmem:[#allocation3 + $0x378] sm:$0xff]
    %v3017 = vld [vmem:[#allocation3 + $0x380] sm:$0xff]
    %v3018 = vld [vmem:[#allocation3 + $0x388] sm:$0xff]
    %v3019 = vld [vmem:[#allocation3 + $0x390] sm:$0xff]
    %v3020 = vld [vmem:[#allocation3 + $0x398] sm:$0xff]
    %v3021 = vld [vmem:[#allocation3 + $0x3a0] sm:$0xff]
    %v3022 = vld [vmem:[#allocation3 + $0x3a8] sm:$0xff]
    %v3023 = vld [vmem:[#allocation3 + $0x3b0] sm:$0xff]
    %v3024 = vld [vmem:[#allocation3 + $0x3b8] sm:$0xff]
    %v3025 = vld [vmem:[#allocation3 + $0x3c0] sm:$0xff]
    %v3026 = vld [vmem:[#allocation3 + $0x3c8] sm:$0xff]
    %v3027 = vld [vmem:[#allocation3 + $0x3d0] sm:$0xff]
    %v3028 = vld [vmem:[#allocation3 + $0x3d8] sm:$0xff]
    %v3029 = vld [vmem:[#allocation3 + $0x3e0] sm:$0xff]
    %v3030 = vld [vmem:[#allocation3 + $0x3e8] sm:$0xff]
    %v3031 = vld [vmem:[#allocation3 + $0x3f0] sm:$0xff]
    %v3032 = vld [vmem:[#allocation3 + $0x3f8] sm:$0xff]
    %v3033 = vld [vmem:[#allocation3 + $0x400] sm:$0xff]
    %v3034 = vld [vmem:[#allocation3 + $0x408] sm:$0xff]
    %v3035 = vld [vmem:[#allocation3 + $0x410] sm:$0xff]
    %v3036 = vld [vmem:[#allocation3 + $0x418] sm:$0xff]
    %v3037 = vld [vmem:[#allocation3 + $0x420] sm:$0xff]
    %v3038 = vld [vmem:[#allocation3 + $0x428] sm:$0xff]
    %v3039 = vld [vmem:[#allocation3 + $0x430] sm:$0xff]
    %v3040 = vld [vmem:[#allocation3 + $0x438] sm:$0xff]
    %v3041 = vld [vmem:[#allocation3 + $0x440] sm:$0xff]
    %v3042 = vld [vmem:[#allocation3 + $0x448] sm:$0xff]
    %v3043 = vld [vmem:[#allocation3 + $0x450] sm:$0xff]
    %v3044 = vld [vmem:[#allocation3 + $0x458] sm:$0xff]
    %v3045 = vld [vmem:[#allocation3 + $0x460] sm:$0xff]
    %v3046 = vld [vmem:[#allocation3 + $0x468] sm:$0xff]
    %v3047 = vld [vmem:[#allocation3 + $0x470] sm:$0xff]
    %v3048 = vld [vmem:[#allocation3 + $0x478] sm:$0xff]
    %v3049 = vld [vmem:[#allocation3 + $0x480] sm:$0xff]
    %v3050 = vld [vmem:[#allocation3 + $0x488] sm:$0xff]
    %v3051 = vld [vmem:[#allocation3 + $0x490] sm:$0xff]
    %v3052 = vld [vmem:[#allocation3 + $0x498] sm:$0xff]
    %v3053 = vld [vmem:[#allocation3 + $0x4a0] sm:$0xff]
    %v3054 = vld [vmem:[#allocation3 + $0x4a8] sm:$0xff]
    %v3055 = vld [vmem:[#allocation3 + $0x4b0] sm:$0xff]
    %v3056 = vld [vmem:[#allocation3 + $0x4b8] sm:$0xff]
    %v3057 = vld [vmem:[#allocation3 + $0x4c0] sm:$0xff]
    %v3058 = vld [vmem:[#allocation3 + $0x4c8] sm:$0xff]
    %v3059 = vld [vmem:[#allocation3 + $0x4d0] sm:$0xff]
    %v3060 = vld [vmem:[#allocation3 + $0x4d8] sm:$0xff]
    %v3061 = vld [vmem:[#allocation3 + $0x4e0] sm:$0xff]
    %v3062 = vld [vmem:[#allocation3 + $0x4e8] sm:$0xff]
    %v3063 = vld [vmem:[#allocation3 + $0x4f0] sm:$0xff]
    %v3064 = vld [vmem:[#allocation3 + $0x4f8] sm:$0xff]
    %v3065 = vld [vmem:[%s4] sm:$0xf]
    %v3066 = vld [vmem:[%s4 + $0x4] sm:$0xf]
    %v3067 = vld [vmem:[%s4 + $0x8] sm:$0xf]
    %v3068 = vld [vmem:[%s4 + $0xc] sm:$0xf]
    %v3069 = vld [vmem:[%s4 + $0x10] sm:$0xf]
    %v3070 = vld [vmem:[%s4 + $0x14] sm:$0xf]
    %v3071 = vld [vmem:[%s4 + $0x18] sm:$0xf]
    %v3072 = vld [vmem:[%s4 + $0x1c] sm:$0xf]
    %v3073 = vld [vmem:[%s4 + $0x20] sm:$0xf]
    %v3074 = vld [vmem:[%s4 + $0x24] sm:$0xf]
    %v3075 = vld [vmem:[%s4 + $0x28] sm:$0xf]
    %v3076 = vld [vmem:[%s4 + $0x2c] sm:$0xf]
    %v3077 = vld [vmem:[%s4 + $0x30] sm:$0xf]
    %v3078 = vld [vmem:[%s4 + $0x34] sm:$0xf]
    %v3079 = vld [vmem:[%s4 + $0x38] sm:$0xf]
    %v3080 = vld [vmem:[%s4 + $0x3c] sm:$0xf]
    %v3081 = vld [vmem:[%s4 + $0x40] sm:$0xf]
    %v3082 = vld [vmem:[%s4 + $0x44] sm:$0xf]
    %v3083 = vld [vmem:[%s4 + $0x48] sm:$0xf]
    %v3084 = vld [vmem:[%s4 + $0x4c] sm:$0xf]
    %v3085 = vld [vmem:[%s4 + $0x50] sm:$0xf]
    %v3086 = vld [vmem:[%s4 + $0x54] sm:$0xf]
    %v3087 = vld [vmem:[%s4 + $0x58] sm:$0xf]
    %v3088 = vld [vmem:[%s4 + $0x5c] sm:$0xf]
    %v3089 = vld [vmem:[%s4 + $0x60] sm:$0xf]
    %v3090 = vld [vmem:[%s4 + $0x64] sm:$0xf]
    %v3091 = vld [vmem:[%s4 + $0x68] sm:$0xf]
    %v3092 = vld [vmem:[%s4 + $0x6c] sm:$0xf]
    %v3093 = vld [vmem:[%s4 + $0x70] sm:$0xf]
    %v3094 = vld [vmem:[%s4 + $0x74] sm:$0xf]
    %v3095 = vld [vmem:[%s4 + $0x78] sm:$0xf]
    %v3096 = vld [vmem:[%s4 + $0x7c] sm:$0xf]
    %v3097 = vld [vmem:[%s4 + $0x80] sm:$0xf]
    %v3098 = vld [vmem:[%s4 + $0x84] sm:$0xf]
    %v3099 = vld [vmem:[%s4 + $0x88] sm:$0xf]
    %v3100 = vld [vmem:[%s4 + $0x8c] sm:$0xf]
    %v3101 = vld [vmem:[%s4 + $0x90] sm:$0xf]
    %v3102 = vld [vmem:[%s4 + $0x94] sm:$0xf]
    %v3103 = vld [vmem:[%s4 + $0x98] sm:$0xf]
    %v3104 = vld [vmem:[%s4 + $0x9c] sm:$0xf]
    %v3105 = vld [vmem:[%s4 + $0xa0] sm:$0xf]
    %v3106 = vld [vmem:[%s4 + $0xa4] sm:$0xf]
    %v3107 = vld [vmem:[%s4 + $0xa8] sm:$0xf]
    %v3108 = vld [vmem:[%s4 + $0xac] sm:$0xf]
    %v3109 = vld [vmem:[%s4 + $0xb0] sm:$0xf]
    %v3110 = vld [vmem:[%s4 + $0xb4] sm:$0xf]
    %v3111 = vld [vmem:[%s4 + $0xb8] sm:$0xf]
    %v3112 = vld [vmem:[%s4 + $0xbc] sm:$0xf]
    %v3113 = vld [vmem:[%s4 + $0xc0] sm:$0xf]
    %v3114 = vld [vmem:[%s4 + $0xc4] sm:$0xf]
    %v3115 = vld [vmem:[%s4 + $0xc8] sm:$0xf]
    %v3116 = vld [vmem:[%s4 + $0xcc] sm:$0xf]
    %v3117 = vld [vmem:[%s4 + $0xd0] sm:$0xf]
    %v3118 = vld [vmem:[%s4 + $0xd4] sm:$0xf]
    %v3119 = vld [vmem:[%s4 + $0xd8] sm:$0xf]
    %v3120 = vld [vmem:[%s4 + $0xdc] sm:$0xf]
    %v3121 = vld [vmem:[%s4 + $0xe0] sm:$0xf]
    %v3122 = vld [vmem:[%s4 + $0xe4] sm:$0xf]
    %v3123 = vld [vmem:[%s4 + $0xe8] sm:$0xf]
    %v3124 = vld [vmem:[%s4 + $0xec] sm:$0xf]
    %v3125 = vld [vmem:[%s4 + $0xf0] sm:$0xf]
    %v3126 = vld [vmem:[%s4 + $0xf4] sm:$0xf]
    %v3127 = vld [vmem:[%s4 + $0xf8] sm:$0xf]
    %v3128 = vld [vmem:[%s4 + $0xfc] sm:$0xf]
    %v3129 = vld [vmem:[%s4 + $0x100] sm:$0xf]
    %v3130 = vld [vmem:[%s4 + $0x104] sm:$0xf]
    %v3131 = vld [vmem:[%s4 + $0x108] sm:$0xf]
    %v3132 = vld [vmem:[%s4 + $0x10c] sm:$0xf]
    %v3133 = vld [vmem:[%s4 + $0x110] sm:$0xf]
    %v3134 = vld [vmem:[%s4 + $0x114] sm:$0xf]
    %v3135 = vld [vmem:[%s4 + $0x118] sm:$0xf]
    %v3136 = vld [vmem:[%s4 + $0x11c] sm:$0xf]
    %v3209 = vunpack.c.l.b16 %v3065
    %v3210 = vunpack.c.l.b16 %v3066
    %v3211 = vunpack.c.l.b16 %v3067
    %v3212 = vunpack.c.l.b16 %v3068
    %v3213 = vunpack.c.l.b16 %v3069
    %v3214 = vunpack.c.l.b16 %v3070
    %v3215 = vunpack.c.l.b16 %v3071
    %v3216 = vunpack.c.l.b16 %v3072
    %v3217 = vunpack.c.l.b16 %v3073
    %v3218 = vunpack.c.l.b16 %v3074
    %v3219 = vunpack.c.l.b16 %v3075
    %v3220 = vunpack.c.l.b16 %v3076
    %v3221 = vunpack.c.l.b16 %v3077
    %v3222 = vunpack.c.l.b16 %v3078
    %v3223 = vunpack.c.l.b16 %v3079
    %v3224 = vunpack.c.l.b16 %v3080
    %v3225 = vunpack.c.l.b16 %v3081
    %v3226 = vunpack.c.l.b16 %v3082
    %v3227 = vunpack.c.l.b16 %v3083
    %v3228 = vunpack.c.l.b16 %v3084
    %v3229 = vunpack.c.l.b16 %v3085
    %v3230 = vunpack.c.l.b16 %v3086
    %v3231 = vunpack.c.l.b16 %v3087
    %v3232 = vunpack.c.l.b16 %v3088
    %v3233 = vunpack.c.l.b16 %v3089
    %v3234 = vunpack.c.l.b16 %v3090
    %v3235 = vunpack.c.l.b16 %v3091
    %v3236 = vunpack.c.l.b16 %v3092
    %v3237 = vunpack.c.l.b16 %v3093
    %v3238 = vunpack.c.l.b16 %v3094
    %v3239 = vunpack.c.l.b16 %v3095
    %v3240 = vunpack.c.l.b16 %v3096
    %v3241 = vunpack.c.l.b16 %v3097
    %v3242 = vunpack.c.l.b16 %v3098
    %v3243 = vunpack.c.l.b16 %v3099
    %v3244 = vunpack.c.l.b16 %v3100
    %v3245 = vunpack.c.l.b16 %v3101
    %v3246 = vunpack.c.l.b16 %v3102
    %v3247 = vunpack.c.l.b16 %v3103
    %v3248 = vunpack.c.l.b16 %v3104
    %v3249 = vunpack.c.l.b16 %v3105
    %v3250 = vunpack.c.l.b16 %v3106
    %v3251 = vunpack.c.l.b16 %v3107
    %v3252 = vunpack.c.l.b16 %v3108
    %v3253 = vunpack.c.l.b16 %v3109
    %v3254 = vunpack.c.l.b16 %v3110
    %v3255 = vunpack.c.l.b16 %v3111
    %v3256 = vunpack.c.l.b16 %v3112
    %v3257 = vunpack.c.l.b16 %v3113
    %v3258 = vunpack.c.l.b16 %v3114
    %v3259 = vunpack.c.l.b16 %v3115
    %v3260 = vunpack.c.l.b16 %v3116
    %v3261 = vunpack.c.l.b16 %v3117
    %v3262 = vunpack.c.l.b16 %v3118
    %v3263 = vunpack.c.l.b16 %v3119
    %v3264 = vunpack.c.l.b16 %v3120
    %v3265 = vunpack.c.l.b16 %v3121
    %v3266 = vunpack.c.l.b16 %v3122
    %v3267 = vunpack.c.l.b16 %v3123
    %v3268 = vunpack.c.l.b16 %v3124
    %v3269 = vunpack.c.l.b16 %v3125
    %v3270 = vunpack.c.l.b16 %v3126
    %v3271 = vunpack.c.l.b16 %v3127
    %v3272 = vunpack.c.l.b16 %v3128
    %v3273 = vunpack.c.l.b16 %v3129
    %v3274 = vunpack.c.l.b16 %v3130
    %v3275 = vunpack.c.l.b16 %v3131
    %v3276 = vunpack.c.l.b16 %v3132
    %v3277 = vunpack.c.l.b16 %v3133
    %v3278 = vunpack.c.l.b16 %v3134
    %v3279 = vunpack.c.l.b16 %v3135
    %v3280 = vunpack.c.l.b16 %v3136
    %v3281 = vpack.c.b16 %v3210, %v3209
    %v3282 = vpack.c.b16 %v3212, %v3211
    %v3283 = vpack.c.b16 %v3214, %v3213
    %v3284 = vpack.c.b16 %v3216, %v3215
    %v3285 = vpack.c.b16 %v3218, %v3217
    %v3286 = vpack.c.b16 %v3220, %v3219
    %v3287 = vpack.c.b16 %v3222, %v3221
    %v3288 = vpack.c.b16 %v3224, %v3223
    %v3289 = vpack.c.b16 %v3226, %v3225
    %v3290 = vpack.c.b16 %v3228, %v3227
    %v3291 = vpack.c.b16 %v3230, %v3229
    %v3292 = vpack.c.b16 %v3232, %v3231
    %v3293 = vpack.c.b16 %v3234, %v3233
    %v3294 = vpack.c.b16 %v3236, %v3235
    %v3295 = vpack.c.b16 %v3238, %v3237
    %v3296 = vpack.c.b16 %v3240, %v3239
    %v3297 = vpack.c.b16 %v3242, %v3241
    %v3298 = vpack.c.b16 %v3244, %v3243
    %v3299 = vpack.c.b16 %v3246, %v3245
    %v3300 = vpack.c.b16 %v3248, %v3247
    %v3301 = vpack.c.b16 %v3250, %v3249
    %v3302 = vpack.c.b16 %v3252, %v3251
    %v3303 = vpack.c.b16 %v3254, %v3253
    %v3304 = vpack.c.b16 %v3256, %v3255
    %v3305 = vpack.c.b16 %v3258, %v3257
    %v3306 = vpack.c.b16 %v3260, %v3259
    %v3307 = vpack.c.b16 %v3262, %v3261
    %v3308 = vpack.c.b16 %v3264, %v3263
    %v3309 = vpack.c.b16 %v3266, %v3265
    %v3310 = vpack.c.b16 %v3268, %v3267
    %v3311 = vpack.c.b16 %v3270, %v3269
    %v3312 = vpack.c.b16 %v3272, %v3271
    %v3313 = vpack.c.b16 %v3274, %v3273
    %v3314 = vpack.c.b16 %v3276, %v3275
    %v3315 = vpack.c.b16 %v3278, %v3277
    %v3316 = vpack.c.b16 %v3280, %v3279
    %v3354 = vsel %vm43, %v2909, 0
    %v3357 = vsel %vm43, %v2914, 0
    %v3360 = vsel %vm43, %v2919, 0
    %v3363 = vsel %vm43, %v2924, 0
    %v3366 = vsel %vm43, %v2929, 0
    %v3369 = vsel %vm43, %v2934, 0
    %v3372 = vsel %vm43, %v2939, 0
    %v3375 = vsel %vm43, %v2944, 0
    %v3378 = vsel %vm43, %v2949, 0
    %v3381 = vsel %vm43, %v2954, 0
    %v3384 = vsel %vm43, %v2959, 0
    %v3387 = vsel %vm43, %v2964, 0
    %v3390 = vsel %vm43, %v2969, 0
    %v3393 = vsel %vm43, %v2974, 0
    %v3396 = vsel %vm43, %v2979, 0
    %v3399 = vsel %vm43, %v2984, 0
    %v3402 = vsel %vm43, %v2989, 0
    %v3405 = vsel %vm43, %v2994, 0
    %v3408 = vsel %vm43, %v2999, 0
    %v3411 = vsel %vm43, %v3004, 0
    %v3414 = vsel %vm43, %v3009, 0
    %v3417 = vsel %vm43, %v3014, 0
    %v3420 = vsel %vm43, %v3019, 0
    %v3423 = vsel %vm43, %v3024, 0
    %v3426 = vsel %vm43, %v3029, 0
    %v3429 = vsel %vm43, %v3034, 0
    %v3432 = vsel %vm43, %v3039, 0
    %v3435 = vsel %vm43, %v3044, 0
    %v3438 = vsel %vm43, %v3049, 0
    %v3441 = vsel %vm43, %v3054, 0
    %v3444 = vsel %vm43, %v3059, 0
    %v3447 = vsel %vm43, %v3064, 0
    %3449 = vmatprep.subr.bf16.mxu0 0
    %3450 = vmatpush1.bf16.msra.mxu0 %v3281
    %3451 = vmatprep.subr.bf16.mxu0 0
    %3452 = vmatpush1.bf16.msra.mxu0 %v3282
    %3453 = vmatprep.subr.bf16.mxu0 0
    %3454 = vmatpush1.bf16.msra.mxu0 %v3283
    %3455 = vmatprep.subr.bf16.mxu0 0
    %3456 = vmatpush1.bf16.msra.mxu0 %v3284
    %3457 = vmatprep.subr.bf16.mxu0 0
    %3458 = vmatpush1.bf16.msra.mxu0 %v3285
    %3459 = vmatprep.subr.bf16.mxu0 0
    %3460 = vmatpush1.bf16.msra.mxu0 %v3286
    %3461 = vmatprep.subr.bf16.mxu0 0
    %3462 = vmatpush1.bf16.msra.mxu0 %v3287
    %3463 = vmatprep.subr.bf16.mxu0 0
    %3464 = vmatpush1.bf16.msra.mxu0 %v3288
    %3465 = vmatprep.subr.bf16.mxu0 0
    %3466 = vmatpush1.bf16.msra.mxu0 %v3289
    %3467 = vmatprep.subr.bf16.mxu0 0
    %3468 = vmatpush1.bf16.msra.mxu0 %v3290
    %3469 = vmatprep.subr.bf16.mxu0 0
    %3470 = vmatpush1.bf16.msra.mxu0 %v3291
    %3471 = vmatprep.subr.bf16.mxu0 0
    %3472 = vmatpush1.bf16.msra.mxu0 %v3292
    %3473 = vmatprep.subr.bf16.mxu0 0
    %3474 = vmatpush1.bf16.msra.mxu0 %v3293
    %3475 = vmatprep.subr.bf16.mxu0 0
    %3476 = vmatpush1.bf16.msra.mxu0 %v3294
    %3477 = vmatprep.subr.bf16.mxu0 0
    %3478 = vmatpush1.bf16.msra.mxu0 %v3295
    %3479 = vmatprep.subr.bf16.mxu0 0
    %3480 = vmatpush1.bf16.msra.mxu0 %v3296
    %3481 = vmatprep.mubr.bf16.mxu0 %v2906
    %3482 = vmatmul.mubr.bf16.gmra.mrb[0].mxu0 %v2905
    %v3483 = vpop.f32.mrb[0].mxu0
    %v3484 = vadd.f32 0.0, %v3483
    %v3485 = vpop.f32.mrb[0].mxu0
    %v3486 = vpop.f32.mrb[0].mxu0
    %v3487 = vadd.f32 0.0, %v3486
    %v3488 = vpop.f32.mrb[0].mxu0
    %3489 = vmatprep.mubr.bf16.mxu0 %v2911
    %3490 = vmatmul.mubr.bf16.gmra.mrb[0].mxu0 %v2910
    %v3491 = vpop.f32.mrb[0].mxu0
    %v3492 = vadd.f32 0.0, %v3491
    %v3493 = vpop.f32.mrb[0].mxu0
    %v3494 = vpop.f32.mrb[0].mxu0
    %v3495 = vadd.f32 0.0, %v3494
    %v3496 = vpop.f32.mrb[0].mxu0
    %3497 = vmatprep.mubr.bf16.mxu0 %v2916
    %3498 = vmatmul.mubr.bf16.gmra.mrb[0].mxu0 %v2915
    %v3499 = vpop.f32.mrb[0].mxu0
    %v3500 = vadd.f32 0.0, %v3499
    %v3501 = vpop.f32.mrb[0].mxu0
    %v3502 = vpop.f32.mrb[0].mxu0
    %v3503 = vadd.f32 0.0, %v3502
    %v3504 = vpop.f32.mrb[0].mxu0
    %3505 = vmatprep.mubr.bf16.mxu0 %v2921
    %3506 = vmatmul.mubr.bf16.gmra.mrb[0].mxu0 %v2920
    %v3507 = vpop.f32.mrb[0].mxu0
    %v3508 = vadd.f32 0.0, %v3507
    %v3509 = vpop.f32.mrb[0].mxu0
    %v3510 = vpop.f32.mrb[0].mxu0
    %v3511 = vadd.f32 0.0, %v3510
    %v3512 = vpop.f32.mrb[0].mxu0
    %3513 = vmatprep.mubr.bf16.mxu0 %v2926
    %3514 = vmatmul.mubr.bf16.gmra.mrb[0].mxu0 %v2925
    %v3515 = vpop.f32.mrb[0].mxu0
    %v3516 = vadd.f32 0.0, %v3515
    %v3517 = vpop.f32.mrb[0].mxu0
    %v3518 = vpop.f32.mrb[0].mxu0
    %v3519 = vadd.f32 0.0, %v3518
    %v3520 = vpop.f32.mrb[0].mxu0
    %3521 = vmatprep.mubr.bf16.mxu0 %v2931
    %3522 = vmatmul.mubr.bf16.gmra.mrb[0].mxu0 %v2930
    %v3523 = vpop.f32.mrb[0].mxu0
    %v3524 = vadd.f32 0.0, %v3523
    %v3525 = vpop.f32.mrb[0].mxu0
    %v3526 = vpop.f32.mrb[0].mxu0
    %v3527 = vadd.f32 0.0, %v3526
    %v3528 = vpop.f32.mrb[0].mxu0
    %3529 = vmatprep.mubr.bf16.mxu0 %v2936
    %3530 = vmatmul.mubr.bf16.gmra.mrb[0].mxu0 %v2935
    %v3531 = vpop.f32.mrb[0].mxu0
    %v3532 = vadd.f32 0.0, %v3531
    %v3533 = vpop.f32.mrb[0].mxu0
    %v3534 = vpop.f32.mrb[0].mxu0
    %v3535 = vadd.f32 0.0, %v3534
    %v3536 = vpop.f32.mrb[0].mxu0
    %3537 = vmatprep.mubr.bf16.mxu0 %v2941
    %3538 = vmatmul.mubr.bf16.gmra.mrb[0].mxu0 %v2940
    %v3539 = vpop.f32.mrb[0].mxu0
    %v3540 = vadd.f32 0.0, %v3539
    %v3541 = vpop.f32.mrb[0].mxu0
    %v3542 = vpop.f32.mrb[0].mxu0
    %v3543 = vadd.f32 0.0, %v3542
    %v3544 = vpop.f32.mrb[0].mxu0
    %3545 = vmatprep.mubr.bf16.mxu0 %v2946
    %3546 = vmatmul.mubr.bf16.gmra.mrb[0].mxu0 %v2945
    %v3547 = vpop.f32.mrb[0].mxu0
    %v3548 = vadd.f32 0.0, %v3547
    %v3549 = vpop.f32.mrb[0].mxu0
    %v3550 = vpop.f32.mrb[0].mxu0
    %v3551 = vadd.f32 0.0, %v3550
    %v3552 = vpop.f32.mrb[0].mxu0
    %3553 = vmatprep.mubr.bf16.mxu0 %v2951
    %3554 = vmatmul.mubr.bf16.gmra.mrb[0].mxu0 %v2950
    %v3555 = vpop.f32.mrb[0].mxu0
    %v3556 = vadd.f32 0.0, %v3555
    %v3557 = vpop.f32.mrb[0].mxu0
    %v3558 = vpop.f32.mrb[0].mxu0
    %v3559 = vadd.f32 0.0, %v3558
    %v3560 = vpop.f32.mrb[0].mxu0
    %3561 = vmatprep.mubr.bf16.mxu0 %v2956
    %3562 = vmatmul.mubr.bf16.gmra.mrb[0].mxu0 %v2955
    %v3563 = vpop.f32.mrb[0].mxu0
    %v3564 = vadd.f32 0.0, %v3563
    %v3565 = vpop.f32.mrb[0].mxu0
    %v3566 = vpop.f32.mrb[0].mxu0
    %v3567 = vadd.f32 0.0, %v3566
    %v3568 = vpop.f32.mrb[0].mxu0
    %3569 = vmatprep.mubr.bf16.mxu0 %v2961
    %3570 = vmatmul.mubr.bf16.gmra.mrb[0].mxu0 %v2960
    %v3571 = vpop.f32.mrb[0].mxu0
    %v3572 = vadd.f32 0.0, %v3571
    %v3573 = vpop.f32.mrb[0].mxu0
    %v3574 = vpop.f32.mrb[0].mxu0
    %v3575 = vadd.f32 0.0, %v3574
    %v3576 = vpop.f32.mrb[0].mxu0
    %3577 = vmatprep.mubr.bf16.mxu0 %v2966
    %3578 = vmatmul.mubr.bf16.gmra.mrb[0].mxu0 %v2965
    %v3579 = vpop.f32.mrb[0].mxu0
    %v3580 = vadd.f32 0.0, %v3579
    %v3581 = vpop.f32.mrb[0].mxu0
    %v3582 = vpop.f32.mrb[0].mxu0
    %v3583 = vadd.f32 0.0, %v3582
    %v3584 = vpop.f32.mrb[0].mxu0
    %3585 = vmatprep.mubr.bf16.mxu0 %v2971
    %3586 = vmatmul.mubr.bf16.gmra.mrb[0].mxu0 %v2970
    %v3587 = vpop.f32.mrb[0].mxu0
    %v3588 = vadd.f32 0.0, %v3587
    %v3589 = vpop.f32.mrb[0].mxu0
    %v3590 = vpop.f32.mrb[0].mxu0
    %v3591 = vadd.f32 0.0, %v3590
    %v3592 = vpop.f32.mrb[0].mxu0
    %3593 = vmatprep.mubr.bf16.mxu0 %v2976
    %3594 = vmatmul.mubr.bf16.gmra.mrb[0].mxu0 %v2975
    %v3595 = vpop.f32.mrb[0].mxu0
    %v3596 = vadd.f32 0.0, %v3595
    %v3597 = vpop.f32.mrb[0].mxu0
    %v3598 = vpop.f32.mrb[0].mxu0
    %v3599 = vadd.f32 0.0, %v3598
    %v3600 = vpop.f32.mrb[0].mxu0
    %3601 = vmatprep.mubr.bf16.mxu0 %v2981
    %3602 = vmatmul.mubr.bf16.gmra.mrb[0].mxu0 %v2980
    %v3603 = vpop.f32.mrb[0].mxu0
    %v3604 = vadd.f32 0.0, %v3603
    %v3605 = vpop.f32.mrb[0].mxu0
    %v3606 = vpop.f32.mrb[0].mxu0
    %v3607 = vadd.f32 0.0, %v3606
    %v3608 = vpop.f32.mrb[0].mxu0
    %3609 = vmatprep.mubr.bf16.mxu0 %v2986
    %3610 = vmatmul.mubr.bf16.gmra.mrb[0].mxu0 %v2985
    %v3611 = vpop.f32.mrb[0].mxu0
    %v3612 = vadd.f32 0.0, %v3611
    %v3613 = vpop.f32.mrb[0].mxu0
    %v3614 = vpop.f32.mrb[0].mxu0
    %v3615 = vadd.f32 0.0, %v3614
    %v3616 = vpop.f32.mrb[0].mxu0
    %3617 = vmatprep.mubr.bf16.mxu0 %v2991
    %3618 = vmatmul.mubr.bf16.gmra.mrb[0].mxu0 %v2990
    %v3619 = vpop.f32.mrb[0].mxu0
    %v3620 = vadd.f32 0.0, %v3619
    %v3621 = vpop.f32.mrb[0].mxu0
    %v3622 = vpop.f32.mrb[0].mxu0
    %v3623 = vadd.f32 0.0, %v3622
    %v3624 = vpop.f32.mrb[0].mxu0
    %3625 = vmatprep.mubr.bf16.mxu0 %v2996
    %3626 = vmatmul.mubr.bf16.gmra.mrb[0].mxu0 %v2995
    %v3627 = vpop.f32.mrb[0].mxu0
    %v3628 = vadd.f32 0.0, %v3627
    %v3629 = vpop.f32.mrb[0].mxu0
    %v3630 = vpop.f32.mrb[0].mxu0
    %v3631 = vadd.f32 0.0, %v3630
    %v3632 = vpop.f32.mrb[0].mxu0
    %3633 = vmatprep.mubr.bf16.mxu0 %v3001
    %3634 = vmatmul.mubr.bf16.gmra.mrb[0].mxu0 %v3000
    %v3635 = vpop.f32.mrb[0].mxu0
    %v3636 = vadd.f32 0.0, %v3635
    %v3637 = vpop.f32.mrb[0].mxu0
    %v3638 = vpop.f32.mrb[0].mxu0
    %v3639 = vadd.f32 0.0, %v3638
    %v3640 = vpop.f32.mrb[0].mxu0
    %3641 = vmatprep.mubr.bf16.mxu0 %v3006
    %3642 = vmatmul.mubr.bf16.gmra.mrb[0].mxu0 %v3005
    %v3643 = vpop.f32.mrb[0].mxu0
    %v3644 = vadd.f32 0.0, %v3643
    %v3645 = vpop.f32.mrb[0].mxu0
    %v3646 = vpop.f32.mrb[0].mxu0
    %v3647 = vadd.f32 0.0, %v3646
    %v3648 = vpop.f32.mrb[0].mxu0
    %3649 = vmatprep.mubr.bf16.mxu0 %v3011
    %3650 = vmatmul.mubr.bf16.gmra.mrb[0].mxu0 %v3010
    %v3651 = vpop.f32.mrb[0].mxu0
    %v3652 = vadd.f32 0.0, %v3651
    %v3653 = vpop.f32.mrb[0].mxu0
    %v3654 = vpop.f32.mrb[0].mxu0
    %v3655 = vadd.f32 0.0, %v3654
    %v3656 = vpop.f32.mrb[0].mxu0
    %3657 = vmatprep.mubr.bf16.mxu0 %v3016
    %3658 = vmatmul.mubr.bf16.gmra.mrb[0].mxu0 %v3015
    %v3659 = vpop.f32.mrb[0].mxu0
    %v3660 = vadd.f32 0.0, %v3659
    %v3661 = vpop.f32.mrb[0].mxu0
    %v3662 = vpop.f32.mrb[0].mxu0
    %v3663 = vadd.f32 0.0, %v3662
    %v3664 = vpop.f32.mrb[0].mxu0
    %3665 = vmatprep.mubr.bf16.mxu0 %v3021
    %3666 = vmatmul.mubr.bf16.gmra.mrb[0].mxu0 %v3020
    %v3667 = vpop.f32.mrb[0].mxu0
    %v3668 = vadd.f32 0.0, %v3667
    %v3669 = vpop.f32.mrb[0].mxu0
    %v3670 = vpop.f32.mrb[0].mxu0
    %v3671 = vadd.f32 0.0, %v3670
    %v3672 = vpop.f32.mrb[0].mxu0
    %3673 = vmatprep.mubr.bf16.mxu0 %v3026
    %3674 = vmatmul.mubr.bf16.gmra.mrb[0].mxu0 %v3025
    %v3675 = vpop.f32.mrb[0].mxu0
    %v3676 = vadd.f32 0.0, %v3675
    %v3677 = vpop.f32.mrb[0].mxu0
    %v3678 = vpop.f32.mrb[0].mxu0
    %v3679 = vadd.f32 0.0, %v3678
    %v3680 = vpop.f32.mrb[0].mxu0
    %3681 = vmatprep.mubr.bf16.mxu0 %v3031
    %3682 = vmatmul.mubr.bf16.gmra.mrb[0].mxu0 %v3030
    %v3683 = vpop.f32.mrb[0].mxu0
    %v3684 = vadd.f32 0.0, %v3683
    %v3685 = vpop.f32.mrb[0].mxu0
    %v3686 = vpop.f32.mrb[0].mxu0
    %v3687 = vadd.f32 0.0, %v3686
    %v3688 = vpop.f32.mrb[0].mxu0
    %3689 = vmatprep.mubr.bf16.mxu0 %v3036
    %3690 = vmatmul.mubr.bf16.gmra.mrb[0].mxu0 %v3035
    %v3691 = vpop.f32.mrb[0].mxu0
    %v3692 = vadd.f32 0.0, %v3691
    %v3693 = vpop.f32.mrb[0].mxu0
    %v3694 = vpop.f32.mrb[0].mxu0
    %v3695 = vadd.f32 0.0, %v3694
    %v3696 = vpop.f32.mrb[0].mxu0
    %3697 = vmatprep.mubr.bf16.mxu0 %v3041
    %3698 = vmatmul.mubr.bf16.gmra.mrb[0].mxu0 %v3040
    %v3699 = vpop.f32.mrb[0].mxu0
    %v3700 = vadd.f32 0.0, %v3699
    %v3701 = vpop.f32.mrb[0].mxu0
    %v3702 = vpop.f32.mrb[0].mxu0
    %v3703 = vadd.f32 0.0, %v3702
    %v3704 = vpop.f32.mrb[0].mxu0
    %3705 = vmatprep.mubr.bf16.mxu0 %v3046
    %3706 = vmatmul.mubr.bf16.gmra.mrb[0].mxu0 %v3045
    %v3707 = vpop.f32.mrb[0].mxu0
    %v3708 = vadd.f32 0.0, %v3707
    %v3709 = vpop.f32.mrb[0].mxu0
    %v3710 = vpop.f32.mrb[0].mxu0
    %v3711 = vadd.f32 0.0, %v3710
    %v3712 = vpop.f32.mrb[0].mxu0
    %3713 = vmatprep.mubr.bf16.mxu0 %v3051
    %3714 = vmatmul.mubr.bf16.gmra.mrb[0].mxu0 %v3050
    %v3715 = vpop.f32.mrb[0].mxu0
    %v3716 = vadd.f32 0.0, %v3715
    %v3717 = vpop.f32.mrb[0].mxu0
    %v3718 = vpop.f32.mrb[0].mxu0
    %v3719 = vadd.f32 0.0, %v3718
    %v3720 = vpop.f32.mrb[0].mxu0
    %3721 = vmatprep.mubr.bf16.mxu0 %v3056
    %3722 = vmatmul.mubr.bf16.gmra.mrb[0].mxu0 %v3055
    %v3723 = vpop.f32.mrb[0].mxu0
    %v3724 = vadd.f32 0.0, %v3723
    %v3725 = vpop.f32.mrb[0].mxu0
    %v3726 = vpop.f32.mrb[0].mxu0
    %v3727 = vadd.f32 0.0, %v3726
    %v3728 = vpop.f32.mrb[0].mxu0
    %3729 = vmatprep.mubr.bf16.mxu0 %v3061
    %3730 = vmatmul.mubr.bf16.gmra.mrb[0].mxu0 %v3060
    %v3731 = vpop.f32.mrb[0].mxu0
    %v3732 = vadd.f32 0.0, %v3731
    %v3733 = vpop.f32.mrb[0].mxu0
    %v3734 = vpop.f32.mrb[0].mxu0
    %v3735 = vadd.f32 0.0, %v3734
    %v3736 = vpop.f32.mrb[0].mxu0
    %3737 = vdwg.mxu0
    %3738 = vmatprep.subr.bf16.mxu0 0
    %3739 = vmatpush1.bf16.msra.mxu0 %v3297
    %3740 = vmatprep.subr.bf16.mxu0 0
    %3741 = vmatpush1.bf16.msra.mxu0 %v3298
    %3742 = vmatprep.subr.bf16.mxu0 0
    %3743 = vmatpush1.bf16.msra.mxu0 %v3299
    %3744 = vmatprep.subr.bf16.mxu0 0
    %3745 = vmatpush1.bf16.msra.mxu0 %v3300
    %3746 = vmatprep.subr.bf16.mxu0 0
    %3747 = vmatpush1.bf16.msra.mxu0 %v3301
    %3748 = vmatprep.subr.bf16.mxu0 0
    %3749 = vmatpush1.bf16.msra.mxu0 %v3302
    %3750 = vmatprep.subr.bf16.mxu0 0
    %3751 = vmatpush1.bf16.msra.mxu0 %v3303
    %3752 = vmatprep.subr.bf16.mxu0 0
    %3753 = vmatpush1.bf16.msra.mxu0 %v3304
    %3754 = vmatprep.subr.bf16.mxu0 0
    %3755 = vmatpush1.bf16.msra.mxu0 %v3305
    %3756 = vmatprep.subr.bf16.mxu0 0
    %3757 = vmatpush1.bf16.msra.mxu0 %v3306
    %3758 = vmatprep.subr.bf16.mxu0 0
    %3759 = vmatpush1.bf16.msra.mxu0 %v3307
    %3760 = vmatprep.subr.bf16.mxu0 0
    %3761 = vmatpush1.bf16.msra.mxu0 %v3308
    %3762 = vmatprep.subr.bf16.mxu0 0
    %3763 = vmatpush1.bf16.msra.mxu0 %v3309
    %3764 = vmatprep.subr.bf16.mxu0 0
    %3765 = vmatpush1.bf16.msra.mxu0 %v3310
    %3766 = vmatprep.subr.bf16.mxu0 0
    %3767 = vmatpush1.bf16.msra.mxu0 %v3311
    %3768 = vmatprep.subr.bf16.mxu0 0
    %3769 = vmatpush1.bf16.msra.mxu0 %v3312
    %3770 = vmatprep.mubr.bf16.mxu0 %v2908
    %3771 = vmatmul.mubr.bf16.gmra.mrb[0].mxu0 %v2907
    %v3772 = vpop.f32.mrb[0].mxu0
    %v3773 = vadd.f32 %v3484, %v3772
    %v3774 = vpop.f32.mrb[0].mxu0
    %v3775 = vpop.f32.mrb[0].mxu0
    %v3776 = vadd.f32 %v3487, %v3775
    %v3777 = vpop.f32.mrb[0].mxu0
    %3778 = vmatprep.mubr.bf16.mxu0 %v2913
    %3779 = vmatmul.mubr.bf16.gmra.mrb[0].mxu0 %v2912
    %v3780 = vpop.f32.mrb[0].mxu0
    %v3781 = vadd.f32 %v3492, %v3780
    %v3782 = vpop.f32.mrb[0].mxu0
    %v3783 = vpop.f32.mrb[0].mxu0
    %v3784 = vadd.f32 %v3495, %v3783
    %v3785 = vpop.f32.mrb[0].mxu0
    %3786 = vmatprep.mubr.bf16.mxu0 %v2918
    %3787 = vmatmul.mubr.bf16.gmra.mrb[0].mxu0 %v2917
    %v3788 = vpop.f32.mrb[0].mxu0
    %v3789 = vadd.f32 %v3500, %v3788
    %v3790 = vpop.f32.mrb[0].mxu0
    %v3791 = vpop.f32.mrb[0].mxu0
    %v3792 = vadd.f32 %v3503, %v3791
    %v3793 = vpop.f32.mrb[0].mxu0
    %3794 = vmatprep.mubr.bf16.mxu0 %v2923
    %3795 = vmatmul.mubr.bf16.gmra.mrb[0].mxu0 %v2922
    %v3796 = vpop.f32.mrb[0].mxu0
    %v3797 = vadd.f32 %v3508, %v3796
    %v3798 = vpop.f32.mrb[0].mxu0
    %v3799 = vpop.f32.mrb[0].mxu0
    %v3800 = vadd.f32 %v3511, %v3799
    %v3801 = vpop.f32.mrb[0].mxu0
    %3802 = vmatprep.mubr.bf16.mxu0 %v2928
    %3803 = vmatmul.mubr.bf16.gmra.mrb[0].mxu0 %v2927
    %v3804 = vpop.f32.mrb[0].mxu0
    %v3805 = vadd.f32 %v3516, %v3804
    %v3806 = vpop.f32.mrb[0].mxu0
    %v3807 = vpop.f32.mrb[0].mxu0
    %v3808 = vadd.f32 %v3519, %v3807
    %v3809 = vpop.f32.mrb[0].mxu0
    %3810 = vmatprep.mubr.bf16.mxu0 %v2933
    %3811 = vmatmul.mubr.bf16.gmra.mrb[0].mxu0 %v2932
    %v3812 = vpop.f32.mrb[0].mxu0
    %v3813 = vadd.f32 %v3524, %v3812
    %v3814 = vpop.f32.mrb[0].mxu0
    %v3815 = vpop.f32.mrb[0].mxu0
    %v3816 = vadd.f32 %v3527, %v3815
    %v3817 = vpop.f32.mrb[0].mxu0
    %3818 = vmatprep.mubr.bf16.mxu0 %v2938
    %3819 = vmatmul.mubr.bf16.gmra.mrb[0].mxu0 %v2937
    %v3820 = vpop.f32.mrb[0].mxu0
    %v3821 = vadd.f32 %v3532, %v3820
    %v3822 = vpop.f32.mrb[0].mxu0
    %v3823 = vpop.f32.mrb[0].mxu0
    %v3824 = vadd.f32 %v3535, %v3823
    %v3825 = vpop.f32.mrb[0].mxu0
    %3826 = vmatprep.mubr.bf16.mxu0 %v2943
    %3827 = vmatmul.mubr.bf16.gmra.mrb[0].mxu0 %v2942
    %v3828 = vpop.f32.mrb[0].mxu0
    %v3829 = vadd.f32 %v3540, %v3828
    %v3830 = vpop.f32.mrb[0].mxu0
    %v3831 = vpop.f32.mrb[0].mxu0
    %v3832 = vadd.f32 %v3543, %v3831
    %v3833 = vpop.f32.mrb[0].mxu0
    %3834 = vmatprep.mubr.bf16.mxu0 %v2948
    %3835 = vmatmul.mubr.bf16.gmra.mrb[0].mxu0 %v2947
    %v3836 = vpop.f32.mrb[0].mxu0
    %v3837 = vadd.f32 %v3548, %v3836
    %v3838 = vpop.f32.mrb[0].mxu0
    %v3839 = vpop.f32.mrb[0].mxu0
    %v3840 = vadd.f32 %v3551, %v3839
    %v3841 = vpop.f32.mrb[0].mxu0
    %3842 = vmatprep.mubr.bf16.mxu0 %v2953
    %3843 = vmatmul.mubr.bf16.gmra.mrb[0].mxu0 %v2952
    %v3844 = vpop.f32.mrb[0].mxu0
    %v3845 = vadd.f32 %v3556, %v3844
    %v3846 = vpop.f32.mrb[0].mxu0
    %v3847 = vpop.f32.mrb[0].mxu0
    %v3848 = vadd.f32 %v3559, %v3847
    %v3849 = vpop.f32.mrb[0].mxu0
    %3850 = vmatprep.mubr.bf16.mxu0 %v2958
    %3851 = vmatmul.mubr.bf16.gmra.mrb[0].mxu0 %v2957
    %v3852 = vpop.f32.mrb[0].mxu0
    %v3853 = vadd.f32 %v3564, %v3852
    %v3854 = vpop.f32.mrb[0].mxu0
    %v3855 = vpop.f32.mrb[0].mxu0
    %v3856 = vadd.f32 %v3567, %v3855
    %v3857 = vpop.f32.mrb[0].mxu0
    %3858 = vmatprep.mubr.bf16.mxu0 %v2963
    %3859 = vmatmul.mubr.bf16.gmra.mrb[0].mxu0 %v2962
    %v3860 = vpop.f32.mrb[0].mxu0
    %v3861 = vadd.f32 %v3572, %v3860
    %v3862 = vpop.f32.mrb[0].mxu0
    %v3863 = vpop.f32.mrb[0].mxu0
    %v3864 = vadd.f32 %v3575, %v3863
    %v3865 = vpop.f32.mrb[0].mxu0
    %3866 = vmatprep.mubr.bf16.mxu0 %v2968
    %3867 = vmatmul.mubr.bf16.gmra.mrb[0].mxu0 %v2967
    %v3868 = vpop.f32.mrb[0].mxu0
    %v3869 = vadd.f32 %v3580, %v3868
    %v3870 = vpop.f32.mrb[0].mxu0
    %v3871 = vpop.f32.mrb[0].mxu0
    %v3872 = vadd.f32 %v3583, %v3871
    %v3873 = vpop.f32.mrb[0].mxu0
    %3874 = vmatprep.mubr.bf16.mxu0 %v2973
    %3875 = vmatmul.mubr.bf16.gmra.mrb[0].mxu0 %v2972
    %v3876 = vpop.f32.mrb[0].mxu0
    %v3877 = vadd.f32 %v3588, %v3876
    %v3878 = vpop.f32.mrb[0].mxu0
    %v3879 = vpop.f32.mrb[0].mxu0
    %v3880 = vadd.f32 %v3591, %v3879
    %v3881 = vpop.f32.mrb[0].mxu0
    %3882 = vmatprep.mubr.bf16.mxu0 %v2978
    %3883 = vmatmul.mubr.bf16.gmra.mrb[0].mxu0 %v2977
    %v3884 = vpop.f32.mrb[0].mxu0
    %v3885 = vadd.f32 %v3596, %v3884
    %v3886 = vpop.f32.mrb[0].mxu0
    %v3887 = vpop.f32.mrb[0].mxu0
    %v3888 = vadd.f32 %v3599, %v3887
    %v3889 = vpop.f32.mrb[0].mxu0
    %3890 = vmatprep.mubr.bf16.mxu0 %v2983
    %3891 = vmatmul.mubr.bf16.gmra.mrb[0].mxu0 %v2982
    %v3892 = vpop.f32.mrb[0].mxu0
    %v3893 = vadd.f32 %v3604, %v3892
    %v3894 = vpop.f32.mrb[0].mxu0
    %v3895 = vpop.f32.mrb[0].mxu0
    %v3896 = vadd.f32 %v3607, %v3895
    %v3897 = vpop.f32.mrb[0].mxu0
    %3898 = vmatprep.mubr.bf16.mxu0 %v2988
    %3899 = vmatmul.mubr.bf16.gmra.mrb[0].mxu0 %v2987
    %v3900 = vpop.f32.mrb[0].mxu0
    %v3901 = vadd.f32 %v3612, %v3900
    %v3902 = vpop.f32.mrb[0].mxu0
    %v3903 = vpop.f32.mrb[0].mxu0
    %v3904 = vadd.f32 %v3615, %v3903
    %v3905 = vpop.f32.mrb[0].mxu0
    %3906 = vmatprep.mubr.bf16.mxu0 %v2993
    %3907 = vmatmul.mubr.bf16.gmra.mrb[0].mxu0 %v2992
    %v3908 = vpop.f32.mrb[0].mxu0
    %v3909 = vadd.f32 %v3620, %v3908
    %v3910 = vpop.f32.mrb[0].mxu0
    %v3911 = vpop.f32.mrb[0].mxu0
    %v3912 = vadd.f32 %v3623, %v3911
    %v3913 = vpop.f32.mrb[0].mxu0
    %3914 = vmatprep.mubr.bf16.mxu0 %v2998
    %3915 = vmatmul.mubr.bf16.gmra.mrb[0].mxu0 %v2997
    %v3916 = vpop.f32.mrb[0].mxu0
    %v3917 = vadd.f32 %v3628, %v3916
    %v3918 = vpop.f32.mrb[0].mxu0
    %v3919 = vpop.f32.mrb[0].mxu0
    %v3920 = vadd.f32 %v3631, %v3919
    %v3921 = vpop.f32.mrb[0].mxu0
    %3922 = vmatprep.mubr.bf16.mxu0 %v3003
    %3923 = vmatmul.mubr.bf16.gmra.mrb[0].mxu0 %v3002
    %v3924 = vpop.f32.mrb[0].mxu0
    %v3925 = vadd.f32 %v3636, %v3924
    %v3926 = vpop.f32.mrb[0].mxu0
    %v3927 = vpop.f32.mrb[0].mxu0
    %v3928 = vadd.f32 %v3639, %v3927
    %v3929 = vpop.f32.mrb[0].mxu0
    %3930 = vmatprep.mubr.bf16.mxu0 %v3008
    %3931 = vmatmul.mubr.bf16.gmra.mrb[0].mxu0 %v3007
    %v3932 = vpop.f32.mrb[0].mxu0
    %v3933 = vadd.f32 %v3644, %v3932
    %v3934 = vpop.f32.mrb[0].mxu0
    %v3935 = vpop.f32.mrb[0].mxu0
    %v3936 = vadd.f32 %v3647, %v3935
    %v3937 = vpop.f32.mrb[0].mxu0
    %3938 = vmatprep.mubr.bf16.mxu0 %v3013
    %3939 = vmatmul.mubr.bf16.gmra.mrb[0].mxu0 %v3012
    %v3940 = vpop.f32.mrb[0].mxu0
    %v3941 = vadd.f32 %v3652, %v3940
    %v3942 = vpop.f32.mrb[0].mxu0
    %v3943 = vpop.f32.mrb[0].mxu0
    %v3944 = vadd.f32 %v3655, %v3943
    %v3945 = vpop.f32.mrb[0].mxu0
    %3946 = vmatprep.mubr.bf16.mxu0 %v3018
    %3947 = vmatmul.mubr.bf16.gmra.mrb[0].mxu0 %v3017
    %v3948 = vpop.f32.mrb[0].mxu0
    %v3949 = vadd.f32 %v3660, %v3948
    %v3950 = vpop.f32.mrb[0].mxu0
    %v3951 = vpop.f32.mrb[0].mxu0
    %v3952 = vadd.f32 %v3663, %v3951
    %v3953 = vpop.f32.mrb[0].mxu0
    %3954 = vmatprep.mubr.bf16.mxu0 %v3023
    %3955 = vmatmul.mubr.bf16.gmra.mrb[0].mxu0 %v3022
    %v3956 = vpop.f32.mrb[0].mxu0
    %v3957 = vadd.f32 %v3668, %v3956
    %v3958 = vpop.f32.mrb[0].mxu0
    %v3959 = vpop.f32.mrb[0].mxu0
    %v3960 = vadd.f32 %v3671, %v3959
    %v3961 = vpop.f32.mrb[0].mxu0
    %3962 = vmatprep.mubr.bf16.mxu0 %v3028
    %3963 = vmatmul.mubr.bf16.gmra.mrb[0].mxu0 %v3027
    %v3964 = vpop.f32.mrb[0].mxu0
    %v3965 = vadd.f32 %v3676, %v3964
    %v3966 = vpop.f32.mrb[0].mxu0
    %v3967 = vpop.f32.mrb[0].mxu0
    %v3968 = vadd.f32 %v3679, %v3967
    %v3969 = vpop.f32.mrb[0].mxu0
    %3970 = vmatprep.mubr.bf16.mxu0 %v3033
    %3971 = vmatmul.mubr.bf16.gmra.mrb[0].mxu0 %v3032
    %v3972 = vpop.f32.mrb[0].mxu0
    %v3973 = vadd.f32 %v3684, %v3972
    %v3974 = vpop.f32.mrb[0].mxu0
    %v3975 = vpop.f32.mrb[0].mxu0
    %v3976 = vadd.f32 %v3687, %v3975
    %v3977 = vpop.f32.mrb[0].mxu0
    %3978 = vmatprep.mubr.bf16.mxu0 %v3038
    %3979 = vmatmul.mubr.bf16.gmra.mrb[0].mxu0 %v3037
    %v3980 = vpop.f32.mrb[0].mxu0
    %v3981 = vadd.f32 %v3692, %v3980
    %v3982 = vpop.f32.mrb[0].mxu0
    %v3983 = vpop.f32.mrb[0].mxu0
    %v3984 = vadd.f32 %v3695, %v3983
    %v3985 = vpop.f32.mrb[0].mxu0
    %3986 = vmatprep.mubr.bf16.mxu0 %v3043
    %3987 = vmatmul.mubr.bf16.gmra.mrb[0].mxu0 %v3042
    %v3988 = vpop.f32.mrb[0].mxu0
    %v3989 = vadd.f32 %v3700, %v3988
    %v3990 = vpop.f32.mrb[0].mxu0
    %v3991 = vpop.f32.mrb[0].mxu0
    %v3992 = vadd.f32 %v3703, %v3991
    %v3993 = vpop.f32.mrb[0].mxu0
    %3994 = vmatprep.mubr.bf16.mxu0 %v3048
    %3995 = vmatmul.mubr.bf16.gmra.mrb[0].mxu0 %v3047
    %v3996 = vpop.f32.mrb[0].mxu0
    %v3997 = vadd.f32 %v3708, %v3996
    %v3998 = vpop.f32.mrb[0].mxu0
    %v3999 = vpop.f32.mrb[0].mxu0
    %v4000 = vadd.f32 %v3711, %v3999
    %v4001 = vpop.f32.mrb[0].mxu0
    %4002 = vmatprep.mubr.bf16.mxu0 %v3053
    %4003 = vmatmul.mubr.bf16.gmra.mrb[0].mxu0 %v3052
    %v4004 = vpop.f32.mrb[0].mxu0
    %v4005 = vadd.f32 %v3716, %v4004
    %v4006 = vpop.f32.mrb[0].mxu0
    %v4007 = vpop.f32.mrb[0].mxu0
    %v4008 = vadd.f32 %v3719, %v4007
    %v4009 = vpop.f32.mrb[0].mxu0
    %4010 = vmatprep.mubr.bf16.mxu0 %v3058
    %4011 = vmatmul.mubr.bf16.gmra.mrb[0].mxu0 %v3057
    %v4012 = vpop.f32.mrb[0].mxu0
    %v4013 = vadd.f32 %v3724, %v4012
    %v4014 = vpop.f32.mrb[0].mxu0
    %v4015 = vpop.f32.mrb[0].mxu0
    %v4016 = vadd.f32 %v3727, %v4015
    %v4017 = vpop.f32.mrb[0].mxu0
    %4018 = vmatprep.mubr.bf16.mxu0 %v3063
    %4019 = vmatmul.mubr.bf16.gmra.mrb[0].mxu0 %v3062
    %v4020 = vpop.f32.mrb[0].mxu0
    %v4021 = vadd.f32 %v3732, %v4020
    %v4022 = vpop.f32.mrb[0].mxu0
    %v4023 = vpop.f32.mrb[0].mxu0
    %v4024 = vadd.f32 %v3735, %v4023
    %v4025 = vpop.f32.mrb[0].mxu0
    %4026 = vdwg.mxu0
    %4027 = vmatprep.subr.bf16.mxu0 0
    %4028 = vmatpush1.bf16.msra.mxu0 %v3313
    %4029 = vmatprep.subr.bf16.mxu0 0
    %4030 = vmatpush1.bf16.msra.mxu0 %v3314
    %4031 = vmatprep.subr.bf16.mxu0 0
    %4032 = vmatpush1.bf16.msra.mxu0 %v3315
    %4033 = vmatprep.subr.bf16.mxu0 0
    %4034 = vmatpush1.bf16.msra.mxu0 %v3316
    %4035 = vmatprep.subr.bf16.mxu0 0
    %4036 = vmatpush1.bf16.msra.mxu0 0
    %4037 = vmatprep.subr.bf16.mxu0 0
    %4038 = vmatpush1.bf16.msra.mxu0 0
    %4039 = vmatprep.subr.bf16.mxu0 0
    %4040 = vmatpush1.bf16.msra.mxu0 0
    %4041 = vmatprep.subr.bf16.mxu0 0
    %4042 = vmatpush1.bf16.msra.mxu0 0
    %4043 = vmatprep.subr.bf16.mxu0 0
    %4044 = vmatpush1.bf16.msra.mxu0 0
    %4045 = vmatprep.subr.bf16.mxu0 0
    %4046 = vmatpush1.bf16.msra.mxu0 0
    %4047 = vmatprep.subr.bf16.mxu0 0
    %4048 = vmatpush1.bf16.msra.mxu0 0
    %4049 = vmatprep.subr.bf16.mxu0 0
    %4050 = vmatpush1.bf16.msra.mxu0 0
    %4051 = vmatprep.subr.bf16.mxu0 0
    %4052 = vmatpush1.bf16.msra.mxu0 0
    %4053 = vmatprep.subr.bf16.mxu0 0
    %4054 = vmatpush1.bf16.msra.mxu0 0
    %4055 = vmatprep.subr.bf16.mxu0 0
    %4056 = vmatpush1.bf16.msra.mxu0 0
    %4057 = vmatprep.subr.bf16.mxu0 0
    %4058 = vmatpush1.bf16.msra.mxu0 0
    %4059 = vmatprep.mubr.bf16.mxu0 0
    %4060 = vmatmul.mubr.bf16.gmra.mrb[0].mxu0 %v3354
    %v4061 = vpop.f32.mrb[0].mxu0
    %v4062 = vadd.f32 %v3773, %v4061
    %v4063 = vpop.f32.mrb[0].mxu0
    %v4064 = vpop.f32.mrb[0].mxu0
    %v4065 = vadd.f32 %v3776, %v4064
    %v4066 = vpop.f32.mrb[0].mxu0
    %4067 = vmatprep.mubr.bf16.mxu0 0
    %4068 = vmatmul.mubr.bf16.gmra.mrb[0].mxu0 %v3357
    %v4069 = vpop.f32.mrb[0].mxu0
    %v4070 = vadd.f32 %v3781, %v4069
    %v4071 = vpop.f32.mrb[0].mxu0
    %v4072 = vpop.f32.mrb[0].mxu0
    %v4073 = vadd.f32 %v3784, %v4072
    %v4074 = vpop.f32.mrb[0].mxu0
    %4075 = vmatprep.mubr.bf16.mxu0 0
    %4076 = vmatmul.mubr.bf16.gmra.mrb[0].mxu0 %v3360
    %v4077 = vpop.f32.mrb[0].mxu0
    %v4078 = vadd.f32 %v3789, %v4077
    %v4079 = vpop.f32.mrb[0].mxu0
    %v4080 = vpop.f32.mrb[0].mxu0
    %v4081 = vadd.f32 %v3792, %v4080
    %v4082 = vpop.f32.mrb[0].mxu0
    %4083 = vmatprep.mubr.bf16.mxu0 0
    %4084 = vmatmul.mubr.bf16.gmra.mrb[0].mxu0 %v3363
    %v4085 = vpop.f32.mrb[0].mxu0
    %v4086 = vadd.f32 %v3797, %v4085
    %v4087 = vpop.f32.mrb[0].mxu0
    %v4088 = vpop.f32.mrb[0].mxu0
    %v4089 = vadd.f32 %v3800, %v4088
    %v4090 = vpop.f32.mrb[0].mxu0
    %4091 = vmatprep.mubr.bf16.mxu0 0
    %4092 = vmatmul.mubr.bf16.gmra.mrb[0].mxu0 %v3366
    %v4093 = vpop.f32.mrb[0].mxu0
    %v4094 = vadd.f32 %v3805, %v4093
    %v4095 = vpop.f32.mrb[0].mxu0
    %v4096 = vpop.f32.mrb[0].mxu0
    %v4097 = vadd.f32 %v3808, %v4096
    %v4098 = vpop.f32.mrb[0].mxu0
    %4099 = vmatprep.mubr.bf16.mxu0 0
    %4100 = vmatmul.mubr.bf16.gmra.mrb[0].mxu0 %v3369
    %v4101 = vpop.f32.mrb[0].mxu0
    %v4102 = vadd.f32 %v3813, %v4101
    %v4103 = vpop.f32.mrb[0].mxu0
    %v4104 = vpop.f32.mrb[0].mxu0
    %v4105 = vadd.f32 %v3816, %v4104
    %v4106 = vpop.f32.mrb[0].mxu0
    %4107 = vmatprep.mubr.bf16.mxu0 0
    %4108 = vmatmul.mubr.bf16.gmra.mrb[0].mxu0 %v3372
    %v4109 = vpop.f32.mrb[0].mxu0
    %v4110 = vadd.f32 %v3821, %v4109
    %v4111 = vpop.f32.mrb[0].mxu0
    %v4112 = vpop.f32.mrb[0].mxu0
    %v4113 = vadd.f32 %v3824, %v4112
    %v4114 = vpop.f32.mrb[0].mxu0
    %4115 = vmatprep.mubr.bf16.mxu0 0
    %4116 = vmatmul.mubr.bf16.gmra.mrb[0].mxu0 %v3375
    %v4117 = vpop.f32.mrb[0].mxu0
    %v4118 = vadd.f32 %v3829, %v4117
    %v4119 = vpop.f32.mrb[0].mxu0
    %v4120 = vpop.f32.mrb[0].mxu0
    %v4121 = vadd.f32 %v3832, %v4120
    %v4122 = vpop.f32.mrb[0].mxu0
    %4123 = vmatprep.mubr.bf16.mxu0 0
    %4124 = vmatmul.mubr.bf16.gmra.mrb[0].mxu0 %v3378
    %v4125 = vpop.f32.mrb[0].mxu0
    %v4126 = vadd.f32 %v3837, %v4125
    %v4127 = vpop.f32.mrb[0].mxu0
    %v4128 = vpop.f32.mrb[0].mxu0
    %v4129 = vadd.f32 %v3840, %v4128
    %v4130 = vpop.f32.mrb[0].mxu0
    %4131 = vmatprep.mubr.bf16.mxu0 0
    %4132 = vmatmul.mubr.bf16.gmra.mrb[0].mxu0 %v3381
    %v4133 = vpop.f32.mrb[0].mxu0
    %v4134 = vadd.f32 %v3845, %v4133
    %v4135 = vpop.f32.mrb[0].mxu0
    %v4136 = vpop.f32.mrb[0].mxu0
    %v4137 = vadd.f32 %v3848, %v4136
    %v4138 = vpop.f32.mrb[0].mxu0
    %4139 = vmatprep.mubr.bf16.mxu0 0
    %4140 = vmatmul.mubr.bf16.gmra.mrb[0].mxu0 %v3384
    %v4141 = vpop.f32.mrb[0].mxu0
    %v4142 = vadd.f32 %v3853, %v4141
    %v4143 = vpop.f32.mrb[0].mxu0
    %v4144 = vpop.f32.mrb[0].mxu0
    %v4145 = vadd.f32 %v3856, %v4144
    %v4146 = vpop.f32.mrb[0].mxu0
    %4147 = vmatprep.mubr.bf16.mxu0 0
    %4148 = vmatmul.mubr.bf16.gmra.mrb[0].mxu0 %v3387
    %v4149 = vpop.f32.mrb[0].mxu0
    %v4150 = vadd.f32 %v3861, %v4149
    %v4151 = vpop.f32.mrb[0].mxu0
    %v4152 = vpop.f32.mrb[0].mxu0
    %v4153 = vadd.f32 %v3864, %v4152
    %v4154 = vpop.f32.mrb[0].mxu0
    %4155 = vmatprep.mubr.bf16.mxu0 0
    %4156 = vmatmul.mubr.bf16.gmra.mrb[0].mxu0 %v3390
    %v4157 = vpop.f32.mrb[0].mxu0
    %v4158 = vadd.f32 %v3869, %v4157
    %v4159 = vpop.f32.mrb[0].mxu0
    %v4160 = vpop.f32.mrb[0].mxu0
    %v4161 = vadd.f32 %v3872, %v4160
    %v4162 = vpop.f32.mrb[0].mxu0
    %4163 = vmatprep.mubr.bf16.mxu0 0
    %4164 = vmatmul.mubr.bf16.gmra.mrb[0].mxu0 %v3393
    %v4165 = vpop.f32.mrb[0].mxu0
    %v4166 = vadd.f32 %v3877, %v4165
    %v4167 = vpop.f32.mrb[0].mxu0
    %v4168 = vpop.f32.mrb[0].mxu0
    %v4169 = vadd.f32 %v3880, %v4168
    %v4170 = vpop.f32.mrb[0].mxu0
    %4171 = vmatprep.mubr.bf16.mxu0 0
    %4172 = vmatmul.mubr.bf16.gmra.mrb[0].mxu0 %v3396
    %v4173 = vpop.f32.mrb[0].mxu0
    %v4174 = vadd.f32 %v3885, %v4173
    %v4175 = vpop.f32.mrb[0].mxu0
    %v4176 = vpop.f32.mrb[0].mxu0
    %v4177 = vadd.f32 %v3888, %v4176
    %v4178 = vpop.f32.mrb[0].mxu0
    %4179 = vmatprep.mubr.bf16.mxu0 0
    %4180 = vmatmul.mubr.bf16.gmra.mrb[0].mxu0 %v3399
    %v4181 = vpop.f32.mrb[0].mxu0
    %v4182 = vadd.f32 %v3893, %v4181
    %v4183 = vpop.f32.mrb[0].mxu0
    %v4184 = vpop.f32.mrb[0].mxu0
    %v4185 = vadd.f32 %v3896, %v4184
    %v4186 = vpop.f32.mrb[0].mxu0
    %4187 = vmatprep.mubr.bf16.mxu0 0
    %4188 = vmatmul.mubr.bf16.gmra.mrb[0].mxu0 %v3402
    %v4189 = vpop.f32.mrb[0].mxu0
    %v4190 = vadd.f32 %v3901, %v4189
    %v4191 = vpop.f32.mrb[0].mxu0
    %v4192 = vpop.f32.mrb[0].mxu0
    %v4193 = vadd.f32 %v3904, %v4192
    %v4194 = vpop.f32.mrb[0].mxu0
    %4195 = vmatprep.mubr.bf16.mxu0 0
    %4196 = vmatmul.mubr.bf16.gmra.mrb[0].mxu0 %v3405
    %v4197 = vpop.f32.mrb[0].mxu0
    %v4198 = vadd.f32 %v3909, %v4197
    %v4199 = vpop.f32.mrb[0].mxu0
    %v4200 = vpop.f32.mrb[0].mxu0
    %v4201 = vadd.f32 %v3912, %v4200
    %v4202 = vpop.f32.mrb[0].mxu0
    %4203 = vmatprep.mubr.bf16.mxu0 0
    %4204 = vmatmul.mubr.bf16.gmra.mrb[0].mxu0 %v3408
    %v4205 = vpop.f32.mrb[0].mxu0
    %v4206 = vadd.f32 %v3917, %v4205
    %v4207 = vpop.f32.mrb[0].mxu0
    %v4208 = vpop.f32.mrb[0].mxu0
    %v4209 = vadd.f32 %v3920, %v4208
    %v4210 = vpop.f32.mrb[0].mxu0
    %4211 = vmatprep.mubr.bf16.mxu0 0
    %4212 = vmatmul.mubr.bf16.gmra.mrb[0].mxu0 %v3411
    %v4213 = vpop.f32.mrb[0].mxu0
    %v4214 = vadd.f32 %v3925, %v4213
    %v4215 = vpop.f32.mrb[0].mxu0
    %v4216 = vpop.f32.mrb[0].mxu0
    %v4217 = vadd.f32 %v3928, %v4216
    %v4218 = vpop.f32.mrb[0].mxu0
    %4219 = vmatprep.mubr.bf16.mxu0 0
    %4220 = vmatmul.mubr.bf16.gmra.mrb[0].mxu0 %v3414
    %v4221 = vpop.f32.mrb[0].mxu0
    %v4222 = vadd.f32 %v3933, %v4221
    %v4223 = vpop.f32.mrb[0].mxu0
    %v4224 = vpop.f32.mrb[0].mxu0
    %v4225 = vadd.f32 %v3936, %v4224
    %v4226 = vpop.f32.mrb[0].mxu0
    %4227 = vmatprep.mubr.bf16.mxu0 0
    %4228 = vmatmul.mubr.bf16.gmra.mrb[0].mxu0 %v3417
    %v4229 = vpop.f32.mrb[0].mxu0
    %v4230 = vadd.f32 %v3941, %v4229
    %v4231 = vpop.f32.mrb[0].mxu0
    %v4232 = vpop.f32.mrb[0].mxu0
    %v4233 = vadd.f32 %v3944, %v4232
    %v4234 = vpop.f32.mrb[0].mxu0
    %4235 = vmatprep.mubr.bf16.mxu0 0
    %4236 = vmatmul.mubr.bf16.gmra.mrb[0].mxu0 %v3420
    %v4237 = vpop.f32.mrb[0].mxu0
    %v4238 = vadd.f32 %v3949, %v4237
    %v4239 = vpop.f32.mrb[0].mxu0
    %v4240 = vpop.f32.mrb[0].mxu0
    %v4241 = vadd.f32 %v3952, %v4240
    %v4242 = vpop.f32.mrb[0].mxu0
    %4243 = vmatprep.mubr.bf16.mxu0 0
    %4244 = vmatmul.mubr.bf16.gmra.mrb[0].mxu0 %v3423
    %v4245 = vpop.f32.mrb[0].mxu0
    %v4246 = vadd.f32 %v3957, %v4245
    %v4247 = vpop.f32.mrb[0].mxu0
    %v4248 = vpop.f32.mrb[0].mxu0
    %v4249 = vadd.f32 %v3960, %v4248
    %v4250 = vpop.f32.mrb[0].mxu0
    %4251 = vmatprep.mubr.bf16.mxu0 0
    %4252 = vmatmul.mubr.bf16.gmra.mrb[0].mxu0 %v3426
    %v4253 = vpop.f32.mrb[0].mxu0
    %v4254 = vadd.f32 %v3965, %v4253
    %v4255 = vpop.f32.mrb[0].mxu0
    %v4256 = vpop.f32.mrb[0].mxu0
    %v4257 = vadd.f32 %v3968, %v4256
    %v4258 = vpop.f32.mrb[0].mxu0
    %4259 = vmatprep.mubr.bf16.mxu0 0
    %4260 = vmatmul.mubr.bf16.gmra.mrb[0].mxu0 %v3429
    %v4261 = vpop.f32.mrb[0].mxu0
    %v4262 = vadd.f32 %v3973, %v4261
    %v4263 = vpop.f32.mrb[0].mxu0
    %v4264 = vpop.f32.mrb[0].mxu0
    %v4265 = vadd.f32 %v3976, %v4264
    %v4266 = vpop.f32.mrb[0].mxu0
    %4267 = vmatprep.mubr.bf16.mxu0 0
    %4268 = vmatmul.mubr.bf16.gmra.mrb[0].mxu0 %v3432
    %v4269 = vpop.f32.mrb[0].mxu0
    %v4270 = vadd.f32 %v3981, %v4269
    %v4271 = vpop.f32.mrb[0].mxu0
    %v4272 = vpop.f32.mrb[0].mxu0
    %v4273 = vadd.f32 %v3984, %v4272
    %v4274 = vpop.f32.mrb[0].mxu0
    %4275 = vmatprep.mubr.bf16.mxu0 0
    %4276 = vmatmul.mubr.bf16.gmra.mrb[0].mxu0 %v3435
    %v4277 = vpop.f32.mrb[0].mxu0
    %v4278 = vadd.f32 %v3989, %v4277
    %v4279 = vpop.f32.mrb[0].mxu0
    %v4280 = vpop.f32.mrb[0].mxu0
    %v4281 = vadd.f32 %v3992, %v4280
    %v4282 = vpop.f32.mrb[0].mxu0
    %4283 = vmatprep.mubr.bf16.mxu0 0
    %4284 = vmatmul.mubr.bf16.gmra.mrb[0].mxu0 %v3438
    %v4285 = vpop.f32.mrb[0].mxu0
    %v4286 = vadd.f32 %v3997, %v4285
    %v4287 = vpop.f32.mrb[0].mxu0
    %v4288 = vpop.f32.mrb[0].mxu0
    %v4289 = vadd.f32 %v4000, %v4288
    %v4290 = vpop.f32.mrb[0].mxu0
    %4291 = vmatprep.mubr.bf16.mxu0 0
    %4292 = vmatmul.mubr.bf16.gmra.mrb[0].mxu0 %v3441
    %v4293 = vpop.f32.mrb[0].mxu0
    %v4294 = vadd.f32 %v4005, %v4293
    %v4295 = vpop.f32.mrb[0].mxu0
    %v4296 = vpop.f32.mrb[0].mxu0
    %v4297 = vadd.f32 %v4008, %v4296
    %v4298 = vpop.f32.mrb[0].mxu0
    %4299 = vmatprep.mubr.bf16.mxu0 0
    %4300 = vmatmul.mubr.bf16.gmra.mrb[0].mxu0 %v3444
    %v4301 = vpop.f32.mrb[0].mxu0
    %v4302 = vadd.f32 %v4013, %v4301
    %v4303 = vpop.f32.mrb[0].mxu0
    %v4304 = vpop.f32.mrb[0].mxu0
    %v4305 = vadd.f32 %v4016, %v4304
    %v4306 = vpop.f32.mrb[0].mxu0
    %4307 = vmatprep.mubr.bf16.mxu0 0
    %4308 = vmatmul.mubr.bf16.gmra.mrb[0].mxu0 %v3447
    %v4309 = vpop.f32.mrb[0].mxu0
    %v4310 = vadd.f32 %v4021, %v4309
    %v4311 = vpop.f32.mrb[0].mxu0
    %v4312 = vpop.f32.mrb[0].mxu0
    %v4313 = vadd.f32 %v4024, %v4312
    %v4314 = vpop.f32.mrb[0].mxu0
    %4315 = vdwg.mxu0
    %v4316 = vsel %vm43, %v4062, 0.0
    %v4317 = vsel %vm43, %v4065, 0.0
    %v4318 = vadd.f32 %v4316, %v4317
    %v4319 = vsel %vm43, %v4070, 0.0
    %v4320 = vadd.f32 %v4318, %v4319
    %v4321 = vsel %vm43, %v4073, 0.0
    %v4322 = vadd.f32 %v4320, %v4321
    %v4323 = vsel %vm43, %v4078, 0.0
    %v4324 = vadd.f32 %v4322, %v4323
    %v4325 = vsel %vm43, %v4081, 0.0
    %v4326 = vadd.f32 %v4324, %v4325
    %v4327 = vsel %vm43, %v4086, 0.0
    %v4328 = vadd.f32 %v4326, %v4327
    %v4329 = vsel %vm43, %v4089, 0.0
    %v4330 = vadd.f32 %v4328, %v4329
    %v4331 = vsel %vm43, %v4094, 0.0
    %v4332 = vadd.f32 %v4330, %v4331
    %v4333 = vsel %vm43, %v4097, 0.0
    %v4334 = vadd.f32 %v4332, %v4333
    %v4335 = vsel %vm43, %v4102, 0.0
    %v4336 = vadd.f32 %v4334, %v4335
    %v4337 = vsel %vm43, %v4105, 0.0
    %v4338 = vadd.f32 %v4336, %v4337
    %v4339 = vsel %vm43, %v4110, 0.0
    %v4340 = vadd.f32 %v4338, %v4339
    %v4341 = vsel %vm43, %v4113, 0.0
    %v4342 = vadd.f32 %v4340, %v4341
    %v4343 = vsel %vm43, %v4118, 0.0
    %v4344 = vadd.f32 %v4342, %v4343
    %v4345 = vsel %vm43, %v4121, 0.0
    %v4346 = vadd.f32 %v4344, %v4345
    %v4347 = vsel %vm43, %v4126, 0.0
    %v4348 = vadd.f32 %v4346, %v4347
    %v4349 = vsel %vm43, %v4129, 0.0
    %v4350 = vadd.f32 %v4348, %v4349
    %v4351 = vsel %vm43, %v4134, 0.0
    %v4352 = vadd.f32 %v4350, %v4351
    %v4353 = vsel %vm43, %v4137, 0.0
    %v4354 = vadd.f32 %v4352, %v4353
    %v4355 = vsel %vm43, %v4142, 0.0
    %v4356 = vadd.f32 %v4354, %v4355
    %v4357 = vsel %vm43, %v4145, 0.0
    %v4358 = vadd.f32 %v4356, %v4357
    %v4359 = vsel %vm43, %v4150, 0.0
    %v4360 = vadd.f32 %v4358, %v4359
    %v4361 = vsel %vm43, %v4153, 0.0
    %v4362 = vadd.f32 %v4360, %v4361
    %v4363 = vsel %vm43, %v4158, 0.0
    %v4364 = vadd.f32 %v4362, %v4363
    %v4365 = vsel %vm43, %v4161, 0.0
    %v4366 = vadd.f32 %v4364, %v4365
    %v4367 = vsel %vm43, %v4166, 0.0
    %v4368 = vadd.f32 %v4366, %v4367
    %v4369 = vsel %vm43, %v4169, 0.0
    %v4370 = vadd.f32 %v4368, %v4369
    %v4371 = vsel %vm43, %v4174, 0.0
    %v4372 = vadd.f32 %v4370, %v4371
    %v4373 = vsel %vm43, %v4177, 0.0
    %v4374 = vadd.f32 %v4372, %v4373
    %v4375 = vsel %vm43, %v4182, 0.0
    %v4376 = vadd.f32 %v4374, %v4375
    %v4377 = vsel %vm43, %v4185, 0.0
    %v4378 = vadd.f32 %v4376, %v4377
    %v4379 = vsel %vm43, %v4190, 0.0
    %v4380 = vadd.f32 %v4378, %v4379
    %v4381 = vsel %vm43, %v4193, 0.0
    %v4382 = vadd.f32 %v4380, %v4381
    %v4383 = vsel %vm43, %v4198, 0.0
    %v4384 = vadd.f32 %v4382, %v4383
    %v4385 = vsel %vm43, %v4201, 0.0
    %v4386 = vadd.f32 %v4384, %v4385
    %v4387 = vsel %vm43, %v4206, 0.0
    %v4388 = vadd.f32 %v4386, %v4387
    %v4389 = vsel %vm43, %v4209, 0.0
    %v4390 = vadd.f32 %v4388, %v4389
    %v4391 = vsel %vm43, %v4214, 0.0
    %v4392 = vadd.f32 %v4390, %v4391
    %v4393 = vsel %vm43, %v4217, 0.0
    %v4394 = vadd.f32 %v4392, %v4393
    %v4395 = vsel %vm43, %v4222, 0.0
    %v4396 = vadd.f32 %v4394, %v4395
    %v4397 = vsel %vm43, %v4225, 0.0
    %v4398 = vadd.f32 %v4396, %v4397
    %v4399 = vsel %vm43, %v4230, 0.0
    %v4400 = vadd.f32 %v4398, %v4399
    %v4401 = vsel %vm43, %v4233, 0.0
    %v4402 = vadd.f32 %v4400, %v4401
    %v4403 = vsel %vm43, %v4238, 0.0
    %v4404 = vadd.f32 %v4402, %v4403
    %v4405 = vsel %vm43, %v4241, 0.0
    %v4406 = vadd.f32 %v4404, %v4405
    %v4407 = vsel %vm43, %v4246, 0.0
    %v4408 = vadd.f32 %v4406, %v4407
    %v4409 = vsel %vm43, %v4249, 0.0
    %v4410 = vadd.f32 %v4408, %v4409
    %v4411 = vsel %vm43, %v4254, 0.0
    %v4412 = vadd.f32 %v4410, %v4411
    %v4413 = vsel %vm43, %v4257, 0.0
    %v4414 = vadd.f32 %v4412, %v4413
    %v4415 = vsel %vm43, %v4262, 0.0
    %v4416 = vadd.f32 %v4414, %v4415
    %v4417 = vsel %vm43, %v4265, 0.0
    %v4418 = vadd.f32 %v4416, %v4417
    %v4419 = vsel %vm43, %v4270, 0.0
    %v4420 = vadd.f32 %v4418, %v4419
    %v4421 = vsel %vm43, %v4273, 0.0
    %v4422 = vadd.f32 %v4420, %v4421
    %v4423 = vsel %vm43, %v4278, 0.0
    %v4424 = vadd.f32 %v4422, %v4423
    %v4425 = vsel %vm43, %v4281, 0.0
    %v4426 = vadd.f32 %v4424, %v4425
    %v4427 = vsel %vm43, %v4286, 0.0
    %v4428 = vadd.f32 %v4426, %v4427
    %v4429 = vsel %vm43, %v4289, 0.0
    %v4430 = vadd.f32 %v4428, %v4429
    %v4431 = vsel %vm43, %v4294, 0.0
    %v4432 = vadd.f32 %v4430, %v4431
    %v4433 = vsel %vm43, %v4297, 0.0
    %v4434 = vadd.f32 %v4432, %v4433
    %v4435 = vsel %vm43, %v4302, 0.0
    %v4436 = vadd.f32 %v4434, %v4435
    %v4437 = vsel %vm43, %v4305, 0.0
    %v4438 = vadd.f32 %v4436, %v4437
    %v4439 = vsel %vm43, %v4310, 0.0
    %v4440 = vadd.f32 %v4438, %v4439
    %v4441 = vsel %vm43, %v4313, 0.0
    %v4442 = vadd.f32 %v4440, %v4441
    %v4443 = vrot.slane %v4442, 4
    %v4444 = vadd.f32 %v4442, %v4443
    %v4445 = vrot.slane %v4444, 2
    %v4446 = vadd.f32 %v4444, %v4445
    %v4447 = vrot.slane %v4446, 1
    %v4448 = vadd.f32 %v4446, %v4447
    %v4449 = vmul.f32 %v4062, %v4062
    %v4450 = vmul.f32 %v4065, %v4065
    %v4451 = vmul.f32 %v4070, %v4070
    %v4452 = vmul.f32 %v4073, %v4073
    %v4453 = vmul.f32 %v4078, %v4078
    %v4454 = vmul.f32 %v4081, %v4081
    %v4455 = vmul.f32 %v4086, %v4086
    %v4456 = vmul.f32 %v4089, %v4089
    %v4457 = vmul.f32 %v4094, %v4094
    %v4458 = vmul.f32 %v4097, %v4097
    %v4459 = vmul.f32 %v4102, %v4102
    %v4460 = vmul.f32 %v4105, %v4105
    %v4461 = vmul.f32 %v4110, %v4110
    %v4462 = vmul.f32 %v4113, %v4113
    %v4463 = vmul.f32 %v4118, %v4118
    %v4464 = vmul.f32 %v4121, %v4121
    %v4465 = vmul.f32 %v4126, %v4126
    %v4466 = vmul.f32 %v4129, %v4129
    %v4467 = vmul.f32 %v4134, %v4134
    %v4468 = vmul.f32 %v4137, %v4137
    %v4469 = vmul.f32 %v4142, %v4142
    %v4470 = vmul.f32 %v4145, %v4145
    %v4471 = vmul.f32 %v4150, %v4150
    %v4472 = vmul.f32 %v4153, %v4153
    %v4473 = vmul.f32 %v4158, %v4158
    %v4474 = vmul.f32 %v4161, %v4161
    %v4475 = vmul.f32 %v4166, %v4166
    %v4476 = vmul.f32 %v4169, %v4169
    %v4477 = vmul.f32 %v4174, %v4174
    %v4478 = vmul.f32 %v4177, %v4177
    %v4479 = vmul.f32 %v4182, %v4182
    %v4480 = vmul.f32 %v4185, %v4185
    %v4481 = vmul.f32 %v4190, %v4190
    %v4482 = vmul.f32 %v4193, %v4193
    %v4483 = vmul.f32 %v4198, %v4198
    %v4484 = vmul.f32 %v4201, %v4201
    %v4485 = vmul.f32 %v4206, %v4206
    %v4486 = vmul.f32 %v4209, %v4209
    %v4487 = vmul.f32 %v4214, %v4214
    %v4488 = vmul.f32 %v4217, %v4217
    %v4489 = vmul.f32 %v4222, %v4222
    %v4490 = vmul.f32 %v4225, %v4225
    %v4491 = vmul.f32 %v4230, %v4230
    %v4492 = vmul.f32 %v4233, %v4233
    %v4493 = vmul.f32 %v4238, %v4238
    %v4494 = vmul.f32 %v4241, %v4241
    %v4495 = vmul.f32 %v4246, %v4246
    %v4496 = vmul.f32 %v4249, %v4249
    %v4497 = vmul.f32 %v4254, %v4254
    %v4498 = vmul.f32 %v4257, %v4257
    %v4499 = vmul.f32 %v4262, %v4262
    %v4500 = vmul.f32 %v4265, %v4265
    %v4501 = vmul.f32 %v4270, %v4270
    %v4502 = vmul.f32 %v4273, %v4273
    %v4503 = vmul.f32 %v4278, %v4278
    %v4504 = vmul.f32 %v4281, %v4281
    %v4505 = vmul.f32 %v4286, %v4286
    %v4506 = vmul.f32 %v4289, %v4289
    %v4507 = vmul.f32 %v4294, %v4294
    %v4508 = vmul.f32 %v4297, %v4297
    %v4509 = vmul.f32 %v4302, %v4302
    %v4510 = vmul.f32 %v4305, %v4305
    %v4511 = vmul.f32 %v4310, %v4310
    %v4512 = vmul.f32 %v4313, %v4313
    %v4513 = vsel %vm43, %v4449, 0.0
    %v4514 = vsel %vm43, %v4450, 0.0
    %v4515 = vadd.f32 %v4513, %v4514
    %v4516 = vsel %vm43, %v4451, 0.0
    %v4517 = vadd.f32 %v4515, %v4516
    %v4518 = vsel %vm43, %v4452, 0.0
    %v4519 = vadd.f32 %v4517, %v4518
    %v4520 = vsel %vm43, %v4453, 0.0
    %v4521 = vadd.f32 %v4519, %v4520
    %v4522 = vsel %vm43, %v4454, 0.0
    %v4523 = vadd.f32 %v4521, %v4522
    %v4524 = vsel %vm43, %v4455, 0.0
    %v4525 = vadd.f32 %v4523, %v4524
    %v4526 = vsel %vm43, %v4456, 0.0
    %v4527 = vadd.f32 %v4525, %v4526
    %v4528 = vsel %vm43, %v4457, 0.0
    %v4529 = vadd.f32 %v4527, %v4528
    %v4530 = vsel %vm43, %v4458, 0.0
    %v4531 = vadd.f32 %v4529, %v4530
    %v4532 = vsel %vm43, %v4459, 0.0
    %v4533 = vadd.f32 %v4531, %v4532
    %v4534 = vsel %vm43, %v4460, 0.0
    %v4535 = vadd.f32 %v4533, %v4534
    %v4536 = vsel %vm43, %v4461, 0.0
    %v4537 = vadd.f32 %v4535, %v4536
    %v4538 = vsel %vm43, %v4462, 0.0
    %v4539 = vadd.f32 %v4537, %v4538
    %v4540 = vsel %vm43, %v4463, 0.0
    %v4541 = vadd.f32 %v4539, %v4540
    %v4542 = vsel %vm43, %v4464, 0.0
    %v4543 = vadd.f32 %v4541, %v4542
    %v4544 = vsel %vm43, %v4465, 0.0
    %v4545 = vadd.f32 %v4543, %v4544
    %v4546 = vsel %vm43, %v4466, 0.0
    %v4547 = vadd.f32 %v4545, %v4546
    %v4548 = vsel %vm43, %v4467, 0.0
    %v4549 = vadd.f32 %v4547, %v4548
    %v4550 = vsel %vm43, %v4468, 0.0
    %v4551 = vadd.f32 %v4549, %v4550
    %v4552 = vsel %vm43, %v4469, 0.0
    %v4553 = vadd.f32 %v4551, %v4552
    %v4554 = vsel %vm43, %v4470, 0.0
    %v4555 = vadd.f32 %v4553, %v4554
    %v4556 = vsel %vm43, %v4471, 0.0
    %v4557 = vadd.f32 %v4555, %v4556
    %v4558 = vsel %vm43, %v4472, 0.0
    %v4559 = vadd.f32 %v4557, %v4558
    %v4560 = vsel %vm43, %v4473, 0.0
    %v4561 = vadd.f32 %v4559, %v4560
    %v4562 = vsel %vm43, %v4474, 0.0
    %v4563 = vadd.f32 %v4561, %v4562
    %v4564 = vsel %vm43, %v4475, 0.0
    %v4565 = vadd.f32 %v4563, %v4564
    %v4566 = vsel %vm43, %v4476, 0.0
    %v4567 = vadd.f32 %v4565, %v4566
    %v4568 = vsel %vm43, %v4477, 0.0
    %v4569 = vadd.f32 %v4567, %v4568
    %v4570 = vsel %vm43, %v4478, 0.0
    %v4571 = vadd.f32 %v4569, %v4570
    %v4572 = vsel %vm43, %v4479, 0.0
    %v4573 = vadd.f32 %v4571, %v4572
    %v4574 = vsel %vm43, %v4480, 0.0
    %v4575 = vadd.f32 %v4573, %v4574
    %v4576 = vsel %vm43, %v4481, 0.0
    %v4577 = vadd.f32 %v4575, %v4576
    %v4578 = vsel %vm43, %v4482, 0.0
    %v4579 = vadd.f32 %v4577, %v4578
    %v4580 = vsel %vm43, %v4483, 0.0
    %v4581 = vadd.f32 %v4579, %v4580
    %v4582 = vsel %vm43, %v4484, 0.0
    %v4583 = vadd.f32 %v4581, %v4582
    %v4584 = vsel %vm43, %v4485, 0.0
    %v4585 = vadd.f32 %v4583, %v4584
    %v4586 = vsel %vm43, %v4486, 0.0
    %v4587 = vadd.f32 %v4585, %v4586
    %v4588 = vsel %vm43, %v4487, 0.0
    %v4589 = vadd.f32 %v4587, %v4588
    %v4590 = vsel %vm43, %v4488, 0.0
    %v4591 = vadd.f32 %v4589, %v4590
    %v4592 = vsel %vm43, %v4489, 0.0
    %v4593 = vadd.f32 %v4591, %v4592
    %v4594 = vsel %vm43, %v4490, 0.0
    %v4595 = vadd.f32 %v4593, %v4594
    %v4596 = vsel %vm43, %v4491, 0.0
    %v4597 = vadd.f32 %v4595, %v4596
    %v4598 = vsel %vm43, %v4492, 0.0
    %v4599 = vadd.f32 %v4597, %v4598
    %v4600 = vsel %vm43, %v4493, 0.0
    %v4601 = vadd.f32 %v4599, %v4600
    %v4602 = vsel %vm43, %v4494, 0.0
    %v4603 = vadd.f32 %v4601, %v4602
    %v4604 = vsel %vm43, %v4495, 0.0
    %v4605 = vadd.f32 %v4603, %v4604
    %v4606 = vsel %vm43, %v4496, 0.0
    %v4607 = vadd.f32 %v4605, %v4606
    %v4608 = vsel %vm43, %v4497, 0.0
    %v4609 = vadd.f32 %v4607, %v4608
    %v4610 = vsel %vm43, %v4498, 0.0
    %v4611 = vadd.f32 %v4609, %v4610
    %v4612 = vsel %vm43, %v4499, 0.0
    %v4613 = vadd.f32 %v4611, %v4612
    %v4614 = vsel %vm43, %v4500, 0.0
    %v4615 = vadd.f32 %v4613, %v4614
    %v4616 = vsel %vm43, %v4501, 0.0
    %v4617 = vadd.f32 %v4615, %v4616
    %v4618 = vsel %vm43, %v4502, 0.0
    %v4619 = vadd.f32 %v4617, %v4618
    %v4620 = vsel %vm43, %v4503, 0.0
    %v4621 = vadd.f32 %v4619, %v4620
    %v4622 = vsel %vm43, %v4504, 0.0
    %v4623 = vadd.f32 %v4621, %v4622
    %v4624 = vsel %vm43, %v4505, 0.0
    %v4625 = vadd.f32 %v4623, %v4624
    %v4626 = vsel %vm43, %v4506, 0.0
    %v4627 = vadd.f32 %v4625, %v4626
    %v4628 = vsel %vm43, %v4507, 0.0
    %v4629 = vadd.f32 %v4627, %v4628
    %v4630 = vsel %vm43, %v4508, 0.0
    %v4631 = vadd.f32 %v4629, %v4630
    %v4632 = vsel %vm43, %v4509, 0.0
    %v4633 = vadd.f32 %v4631, %v4632
    %v4634 = vsel %vm43, %v4510, 0.0
    %v4635 = vadd.f32 %v4633, %v4634
    %v4636 = vsel %vm43, %v4511, 0.0
    %v4637 = vadd.f32 %v4635, %v4636
    %v4638 = vsel %vm43, %v4512, 0.0
    %v4639 = vadd.f32 %v4637, %v4638
    %v4640 = vrot.slane %v4639, 4
    %v4641 = vadd.f32 %v4639, %v4640
    %v4642 = vrot.slane %v4641, 2
    %v4643 = vadd.f32 %v4641, %v4642
    %v4644 = vrot.slane %v4643, 1
    %v4645 = vadd.f32 %v4643, %v4644
    %v4646 = vmul.f32 %v4448, 0.001953125
    %v4647 = vmul.f32 %v4645, 0.001953125
    %v4648 = vmul.f32 %v4646, %v4646
    %v4649 = vsub.f32 %v4647, %v4648
    %v4650 = vmax.f32 %v4649, 0.0
    %v4651 = vld [vmem:[%s5] sm:$0x1]
    %v4652 = vadd.f32 %v4650, 1e-05
    %v4653 = vrsqrt.pop %v4652
    %v4654 = vmul.f32 %v4651, %v4653
    %v4655 = vld [vmem:[%s6] sm:$0x1]
    %v4656 = vmul.f32 %v4646, %v4654
    %v4657 = vsub.f32 %v4655, %v4656
    %v4659 = vlaneseq
    %v4660 = vshrl.u32 %v4659, 7
    %v4661 = vsub.s32 0, %v4660
    %v4662 = vrot.slane %v4654, %v4661
    %v4664 = vmul.f32 %v4062, %v4662
    %v4665 = vmul.f32 %v4065, %v4662
    %v4666 = vmul.f32 %v4070, %v4662
    %v4667 = vmul.f32 %v4073, %v4662
    %v4668 = vmul.f32 %v4078, %v4662
    %v4669 = vmul.f32 %v4081, %v4662
    %v4670 = vmul.f32 %v4086, %v4662
    %v4671 = vmul.f32 %v4089, %v4662
    %v4672 = vmul.f32 %v4094, %v4662
    %v4673 = vmul.f32 %v4097, %v4662
    %v4674 = vmul.f32 %v4102, %v4662
    %v4675 = vmul.f32 %v4105, %v4662
    %v4676 = vmul.f32 %v4110, %v4662
    %v4677 = vmul.f32 %v4113, %v4662
    %v4678 = vmul.f32 %v4118, %v4662
    %v4679 = vmul.f32 %v4121, %v4662
    %v4680 = vmul.f32 %v4126, %v4662
    %v4681 = vmul.f32 %v4129, %v4662
    %v4682 = vmul.f32 %v4134, %v4662
    %v4683 = vmul.f32 %v4137, %v4662
    %v4684 = vmul.f32 %v4142, %v4662
    %v4685 = vmul.f32 %v4145, %v4662
    %v4686 = vmul.f32 %v4150, %v4662
    %v4687 = vmul.f32 %v4153, %v4662
    %v4688 = vmul.f32 %v4158, %v4662
    %v4689 = vmul.f32 %v4161, %v4662
    %v4690 = vmul.f32 %v4166, %v4662
    %v4691 = vmul.f32 %v4169, %v4662
    %v4692 = vmul.f32 %v4174, %v4662
    %v4693 = vmul.f32 %v4177, %v4662
    %v4694 = vmul.f32 %v4182, %v4662
    %v4695 = vmul.f32 %v4185, %v4662
    %v4696 = vmul.f32 %v4190, %v4662
    %v4697 = vmul.f32 %v4193, %v4662
    %v4698 = vmul.f32 %v4198, %v4662
    %v4699 = vmul.f32 %v4201, %v4662
    %v4700 = vmul.f32 %v4206, %v4662
    %v4701 = vmul.f32 %v4209, %v4662
    %v4702 = vmul.f32 %v4214, %v4662
    %v4703 = vmul.f32 %v4217, %v4662
    %v4704 = vmul.f32 %v4222, %v4662
    %v4705 = vmul.f32 %v4225, %v4662
    %v4706 = vmul.f32 %v4230, %v4662
    %v4707 = vmul.f32 %v4233, %v4662
    %v4708 = vmul.f32 %v4238, %v4662
    %v4709 = vmul.f32 %v4241, %v4662
    %v4710 = vmul.f32 %v4246, %v4662
    %v4711 = vmul.f32 %v4249, %v4662
    %v4712 = vmul.f32 %v4254, %v4662
    %v4713 = vmul.f32 %v4257, %v4662
    %v4714 = vmul.f32 %v4262, %v4662
    %v4715 = vmul.f32 %v4265, %v4662
    %v4716 = vmul.f32 %v4270, %v4662
    %v4717 = vmul.f32 %v4273, %v4662
    %v4718 = vmul.f32 %v4278, %v4662
    %v4719 = vmul.f32 %v4281, %v4662
    %v4720 = vmul.f32 %v4286, %v4662
    %v4721 = vmul.f32 %v4289, %v4662
    %v4722 = vmul.f32 %v4294, %v4662
    %v4723 = vmul.f32 %v4297, %v4662
    %v4724 = vmul.f32 %v4302, %v4662
    %v4725 = vmul.f32 %v4305, %v4662
    %v4726 = vmul.f32 %v4310, %v4662
    %v4727 = vmul.f32 %v4313, %v4662
    %v4729 = vlaneseq
    %v4730 = vshrl.u32 %v4729, 7
    %v4731 = vsub.s32 0, %v4730
    %v4732 = vrot.slane %v4657, %v4731
    %v4734 = vadd.f32 %v4664, %v4732
    %v4735 = vadd.f32 %v4665, %v4732
    %v4736 = vadd.f32 %v4666, %v4732
    %v4737 = vadd.f32 %v4667, %v4732
    %v4738 = vadd.f32 %v4668, %v4732
    %v4739 = vadd.f32 %v4669, %v4732
    %v4740 = vadd.f32 %v4670, %v4732
    %v4741 = vadd.f32 %v4671, %v4732
    %v4742 = vadd.f32 %v4672, %v4732
    %v4743 = vadd.f32 %v4673, %v4732
    %v4744 = vadd.f32 %v4674, %v4732
    %v4745 = vadd.f32 %v4675, %v4732
    %v4746 = vadd.f32 %v4676, %v4732
    %v4747 = vadd.f32 %v4677, %v4732
    %v4748 = vadd.f32 %v4678, %v4732
    %v4749 = vadd.f32 %v4679, %v4732
    %v4750 = vadd.f32 %v4680, %v4732
    %v4751 = vadd.f32 %v4681, %v4732
    %v4752 = vadd.f32 %v4682, %v4732
    %v4753 = vadd.f32 %v4683, %v4732
    %v4754 = vadd.f32 %v4684, %v4732
    %v4755 = vadd.f32 %v4685, %v4732
    %v4756 = vadd.f32 %v4686, %v4732
    %v4757 = vadd.f32 %v4687, %v4732
    %v4758 = vadd.f32 %v4688, %v4732
    %v4759 = vadd.f32 %v4689, %v4732
    %v4760 = vadd.f32 %v4690, %v4732
    %v4761 = vadd.f32 %v4691, %v4732
    %v4762 = vadd.f32 %v4692, %v4732
    %v4763 = vadd.f32 %v4693, %v4732
    %v4764 = vadd.f32 %v4694, %v4732
    %v4765 = vadd.f32 %v4695, %v4732
    %v4766 = vadd.f32 %v4696, %v4732
    %v4767 = vadd.f32 %v4697, %v4732
    %v4768 = vadd.f32 %v4698, %v4732
    %v4769 = vadd.f32 %v4699, %v4732
    %v4770 = vadd.f32 %v4700, %v4732
    %v4771 = vadd.f32 %v4701, %v4732
    %v4772 = vadd.f32 %v4702, %v4732
    %v4773 = vadd.f32 %v4703, %v4732
    %v4774 = vadd.f32 %v4704, %v4732
    %v4775 = vadd.f32 %v4705, %v4732
    %v4776 = vadd.f32 %v4706, %v4732
    %v4777 = vadd.f32 %v4707, %v4732
    %v4778 = vadd.f32 %v4708, %v4732
    %v4779 = vadd.f32 %v4709, %v4732
    %v4780 = vadd.f32 %v4710, %v4732
    %v4781 = vadd.f32 %v4711, %v4732
    %v4782 = vadd.f32 %v4712, %v4732
    %v4783 = vadd.f32 %v4713, %v4732
    %v4784 = vadd.f32 %v4714, %v4732
    %v4785 = vadd.f32 %v4715, %v4732
    %v4786 = vadd.f32 %v4716, %v4732
    %v4787 = vadd.f32 %v4717, %v4732
    %v4788 = vadd.f32 %v4718, %v4732
    %v4789 = vadd.f32 %v4719, %v4732
    %v4790 = vadd.f32 %v4720, %v4732
    %v4791 = vadd.f32 %v4721, %v4732
    %v4792 = vadd.f32 %v4722, %v4732
    %v4793 = vadd.f32 %v4723, %v4732
    %v4794 = vadd.f32 %v4724, %v4732
    %v4795 = vadd.f32 %v4725, %v4732
    %v4796 = vadd.f32 %v4726, %v4732
    %v4797 = vadd.f32 %v4727, %v4732
    %v4798 = vmax.f32 %v4734, 0.0
    %v4799 = vmax.f32 %v4735, 0.0
    %v4800 = vmax.f32 %v4736, 0.0
    %v4801 = vmax.f32 %v4737, 0.0
    %v4802 = vmax.f32 %v4738, 0.0
    %v4803 = vmax.f32 %v4739, 0.0
    %v4804 = vmax.f32 %v4740, 0.0
    %v4805 = vmax.f32 %v4741, 0.0
    %v4806 = vmax.f32 %v4742, 0.0
    %v4807 = vmax.f32 %v4743, 0.0
    %v4808 = vmax.f32 %v4744, 0.0
    %v4809 = vmax.f32 %v4745, 0.0
    %v4810 = vmax.f32 %v4746, 0.0
    %v4811 = vmax.f32 %v4747, 0.0
    %v4812 = vmax.f32 %v4748, 0.0
    %v4813 = vmax.f32 %v4749, 0.0
    %v4814 = vmax.f32 %v4750, 0.0
    %v4815 = vmax.f32 %v4751, 0.0
    %v4816 = vmax.f32 %v4752, 0.0
    %v4817 = vmax.f32 %v4753, 0.0
    %v4818 = vmax.f32 %v4754, 0.0
    %v4819 = vmax.f32 %v4755, 0.0
    %v4820 = vmax.f32 %v4756, 0.0
    %v4821 = vmax.f32 %v4757, 0.0
    %v4822 = vmax.f32 %v4758, 0.0
    %v4823 = vmax.f32 %v4759, 0.0
    %v4824 = vmax.f32 %v4760, 0.0
    %v4825 = vmax.f32 %v4761, 0.0
    %v4826 = vmax.f32 %v4762, 0.0
    %v4827 = vmax.f32 %v4763, 0.0
    %v4828 = vmax.f32 %v4764, 0.0
    %v4829 = vmax.f32 %v4765, 0.0
    %v4830 = vmax.f32 %v4766, 0.0
    %v4831 = vmax.f32 %v4767, 0.0
    %v4832 = vmax.f32 %v4768, 0.0
    %v4833 = vmax.f32 %v4769, 0.0
    %v4834 = vmax.f32 %v4770, 0.0
    %v4835 = vmax.f32 %v4771, 0.0
    %v4836 = vmax.f32 %v4772, 0.0
    %v4837 = vmax.f32 %v4773, 0.0
    %v4838 = vmax.f32 %v4774, 0.0
    %v4839 = vmax.f32 %v4775, 0.0
    %v4840 = vmax.f32 %v4776, 0.0
    %v4841 = vmax.f32 %v4777, 0.0
    %v4842 = vmax.f32 %v4778, 0.0
    %v4843 = vmax.f32 %v4779, 0.0
    %v4844 = vmax.f32 %v4780, 0.0
    %v4845 = vmax.f32 %v4781, 0.0
    %v4846 = vmax.f32 %v4782, 0.0
    %v4847 = vmax.f32 %v4783, 0.0
    %v4848 = vmax.f32 %v4784, 0.0
    %v4849 = vmax.f32 %v4785, 0.0
    %v4850 = vmax.f32 %v4786, 0.0
    %v4851 = vmax.f32 %v4787, 0.0
    %v4852 = vmax.f32 %v4788, 0.0
    %v4853 = vmax.f32 %v4789, 0.0
    %v4854 = vmax.f32 %v4790, 0.0
    %v4855 = vmax.f32 %v4791, 0.0
    %v4856 = vmax.f32 %v4792, 0.0
    %v4857 = vmax.f32 %v4793, 0.0
    %v4858 = vmax.f32 %v4794, 0.0
    %v4859 = vmax.f32 %v4795, 0.0
    %v4860 = vmax.f32 %v4796, 0.0
    %v4861 = vmax.f32 %v4797, 0.0
    %4862 = vst.msk [vmem:[%s1321 + $0x1] sm:$0xff] %vm43, %v4798
    %4863 = vst.msk [vmem:[%s1321 + $0x9] sm:$0xff] %vm43, %v4799
    %4864 = vst.msk [vmem:[%s1321 + $0x19] sm:$0xff] %vm43, %v4800
    %4865 = vst.msk [vmem:[%s1321 + $0x21] sm:$0xff] %vm43, %v4801
    %4866 = vst.msk [vmem:[%s1321 + $0x31] sm:$0xff] %vm43, %v4802
    %4867 = vst.msk [vmem:[%s1321 + $0x39] sm:$0xff] %vm43, %v4803
    %4868 = vst.msk [vmem:[%s1321 + $0x49] sm:$0xff] %vm43, %v4804
    %4869 = vst.msk [vmem:[%s1321 + $0x51] sm:$0xff] %vm43, %v4805
    %4870 = vst.msk [vmem:[%s1321 + $0x61] sm:$0xff] %vm43, %v4806
    %4871 = vst.msk [vmem:[%s1321 + $0x69] sm:$0xff] %vm43, %v4807
    %4872 = vst.msk [vmem:[%s1321 + $0x79] sm:$0xff] %vm43, %v4808
    %4873 = vst.msk [vmem:[%s1321 + $0x81] sm:$0xff] %vm43, %v4809
    %4874 = vst.msk [vmem:[%s1321 + $0x91] sm:$0xff] %vm43, %v4810
    %4875 = vst.msk [vmem:[%s1321 + $0x99] sm:$0xff] %vm43, %v4811
    %4876 = vst.msk [vmem:[%s1321 + $0xa9] sm:$0xff] %vm43, %v4812
    %4877 = vst.msk [vmem:[%s1321 + $0xb1] sm:$0xff] %vm43, %v4813
    %4878 = vst.msk [vmem:[%s1321 + $0xc1] sm:$0xff] %vm43, %v4814
    %4879 = vst.msk [vmem:[%s1321 + $0xc9] sm:$0xff] %vm43, %v4815
    %4880 = vst.msk [vmem:[%s1321 + $0xd9] sm:$0xff] %vm43, %v4816
    %4881 = vst.msk [vmem:[%s1321 + $0xe1] sm:$0xff] %vm43, %v4817
    %4882 = vst.msk [vmem:[%s1321 + $0xf1] sm:$0xff] %vm43, %v4818
    %4883 = vst.msk [vmem:[%s1321 + $0xf9] sm:$0xff] %vm43, %v4819
    %4884 = vst.msk [vmem:[%s1321 + $0x109] sm:$0xff] %vm43, %v4820
    %4885 = vst.msk [vmem:[%s1321 + $0x111] sm:$0xff] %vm43, %v4821
    %4886 = vst.msk [vmem:[%s1321 + $0x121] sm:$0xff] %vm43, %v4822
    %4887 = vst.msk [vmem:[%s1321 + $0x129] sm:$0xff] %vm43, %v4823
    %4888 = vst.msk [vmem:[%s1321 + $0x139] sm:$0xff] %vm43, %v4824
    %4889 = vst.msk [vmem:[%s1321 + $0x141] sm:$0xff] %vm43, %v4825
    %4890 = vst.msk [vmem:[%s1321 + $0x151] sm:$0xff] %vm43, %v4826
    %4891 = vst.msk [vmem:[%s1321 + $0x159] sm:$0xff] %vm43, %v4827
    %4892 = vst.msk [vmem:[%s1321 + $0x169] sm:$0xff] %vm43, %v4828
    %4893 = vst.msk [vmem:[%s1321 + $0x171] sm:$0xff] %vm43, %v4829
    %4894 = vst.msk [vmem:[%s1321 + $0x1b1] sm:$0xff] %vm43, %v4830
    %4895 = vst.msk [vmem:[%s1321 + $0x1b9] sm:$0xff] %vm43, %v4831
    %4896 = vst.msk [vmem:[%s1321 + $0x1c9] sm:$0xff] %vm43, %v4832
    %4897 = vst.msk [vmem:[%s1321 + $0x1d1] sm:$0xff] %vm43, %v4833
    %4898 = vst.msk [vmem:[%s1321 + $0x1e1] sm:$0xff] %vm43, %v4834
    %4899 = vst.msk [vmem:[%s1321 + $0x1e9] sm:$0xff] %vm43, %v4835
    %4900 = vst.msk [vmem:[%s1321 + $0x1f9] sm:$0xff] %vm43, %v4836
    %4901 = vst.msk [vmem:[%s1321 + $0x201] sm:$0xff] %vm43, %v4837
    %4902 = vst.msk [vmem:[%s1321 + $0x211] sm:$0xff] %vm43, %v4838
    %4903 = vst.msk [vmem:[%s1321 + $0x219] sm:$0xff] %vm43, %v4839
    %4904 = vst.msk [vmem:[%s1321 + $0x229] sm:$0xff] %vm43, %v4840
    %4905 = vst.msk [vmem:[%s1321 + $0x231] sm:$0xff] %vm43, %v4841
    %4906 = vst.msk [vmem:[%s1321 + $0x241] sm:$0xff] %vm43, %v4842
    %4907 = vst.msk [vmem:[%s1321 + $0x249] sm:$0xff] %vm43, %v4843
    %4908 = vst.msk [vmem:[%s1321 + $0x259] sm:$0xff] %vm43, %v4844
    %4909 = vst.msk [vmem:[%s1321 + $0x261] sm:$0xff] %vm43, %v4845
    %4910 = vst.msk [vmem:[%s1321 + $0x271] sm:$0xff] %vm43, %v4846
    %4911 = vst.msk [vmem:[%s1321 + $0x279] sm:$0xff] %vm43, %v4847
    %4912 = vst.msk [vmem:[%s1321 + $0x289] sm:$0xff] %vm43, %v4848
    %4913 = vst.msk [vmem:[%s1321 + $0x291] sm:$0xff] %vm43, %v4849
    %4914 = vst.msk [vmem:[%s1321 + $0x2a1] sm:$0xff] %vm43, %v4850
    %4915 = vst.msk [vmem:[%s1321 + $0x2a9] sm:$0xff] %vm43, %v4851
    %4916 = vst.msk [vmem:[%s1321 + $0x2b9] sm:$0xff] %vm43, %v4852
    %4917 = vst.msk [vmem:[%s1321 + $0x2c1] sm:$0xff] %vm43, %v4853
    %4918 = vst.msk [vmem:[%s1321 + $0x2d1] sm:$0xff] %vm43, %v4854
    %4919 = vst.msk [vmem:[%s1321 + $0x2d9] sm:$0xff] %vm43, %v4855
    %4920 = vst.msk [vmem:[%s1321 + $0x2e9] sm:$0xff] %vm43, %v4856
    %4921 = vst.msk [vmem:[%s1321 + $0x2f1] sm:$0xff] %vm43, %v4857
    %4922 = vst.msk [vmem:[%s1321 + $0x301] sm:$0xff] %vm43, %v4858
    %4923 = vst.msk [vmem:[%s1321 + $0x309] sm:$0xff] %vm43, %v4859
    %4924 = vst.msk [vmem:[%s1321 + $0x319] sm:$0xff] %vm43, %v4860
    %4925 = vst.msk [vmem:[%s1321 + $0x321] sm:$0xff] %vm43, %v4861
    %v4926 = vld [vmem:[#allocation2] sm:$0xff]
    %v4927 = vld [vmem:[#allocation2 + $0x8] sm:$0xff]
    %v4928 = vld [vmem:[#allocation2 + $0x10] sm:$0x3]
    %v4929 = vld [vmem:[#allocation2 + $0x18] sm:$0xff]
    %v4930 = vld [vmem:[#allocation2 + $0x20] sm:$0xff]
    %v4931 = vld [vmem:[#allocation2 + $0x28] sm:$0x3]
    %v4932 = vld [vmem:[#allocation2 + $0x30] sm:$0xff]
    %v4933 = vld [vmem:[#allocation2 + $0x38] sm:$0xff]
    %v4934 = vld [vmem:[#allocation2 + $0x40] sm:$0x3]
    %v4935 = vld [vmem:[#allocation2 + $0x48] sm:$0xff]
    %v4936 = vld [vmem:[#allocation2 + $0x50] sm:$0xff]
    %v4937 = vld [vmem:[#allocation2 + $0x58] sm:$0x3]
    %v4938 = vld [vmem:[#allocation2 + $0x60] sm:$0xff]
    %v4939 = vld [vmem:[#allocation2 + $0x68] sm:$0xff]
    %v4940 = vld [vmem:[#allocation2 + $0x70] sm:$0x3]
    %v4941 = vld [vmem:[#allocation2 + $0x78] sm:$0xff]
    %v4942 = vld [vmem:[#allocation2 + $0x80] sm:$0xff]
    %v4943 = vld [vmem:[#allocation2 + $0x88] sm:$0x3]
    %v4944 = vld [vmem:[#allocation2 + $0x90] sm:$0xff]
    %v4945 = vld [vmem:[#allocation2 + $0x98] sm:$0xff]
    %v4946 = vld [vmem:[#allocation2 + $0xa0] sm:$0x3]
    %v4947 = vld [vmem:[#allocation2 + $0xa8] sm:$0xff]
    %v4948 = vld [vmem:[#allocation2 + $0xb0] sm:$0xff]
    %v4949 = vld [vmem:[#allocation2 + $0xb8] sm:$0x3]
    %v4950 = vld [vmem:[#allocation2 + $0xc0] sm:$0xff]
    %v4951 = vld [vmem:[#allocation2 + $0xc8] sm:$0xff]
    %v4952 = vld [vmem:[#allocation2 + $0xd0] sm:$0x3]
    %v4953 = vld [vmem:[#allocation2 + $0xd8] sm:$0xff]
    %v4954 = vld [vmem:[#allocation2 + $0xe0] sm:$0xff]
    %v4955 = vld [vmem:[#allocation2 + $0xe8] sm:$0x3]
    %v4956 = vld [vmem:[#allocation2 + $0xf0] sm:$0xff]
    %v4957 = vld [vmem:[#allocation2 + $0xf8] sm:$0xff]
    %v4958 = vld [vmem:[#allocation2 + $0x100] sm:$0x3]
    %v4959 = vld [vmem:[#allocation2 + $0x108] sm:$0xff]
    %v4960 = vld [vmem:[#allocation2 + $0x110] sm:$0xff]
    %v4961 = vld [vmem:[#allocation2 + $0x118] sm:$0x3]
    %v4962 = vld [vmem:[#allocation2 + $0x120] sm:$0xff]
    %v4963 = vld [vmem:[#allocation2 + $0x128] sm:$0xff]
    %v4964 = vld [vmem:[#allocation2 + $0x130] sm:$0x3]
    %v4965 = vld [vmem:[#allocation2 + $0x138] sm:$0xff]
    %v4966 = vld [vmem:[#allocation2 + $0x140] sm:$0xff]
    %v4967 = vld [vmem:[#allocation2 + $0x148] sm:$0x3]
    %v4968 = vld [vmem:[#allocation2 + $0x150] sm:$0xff]
    %v4969 = vld [vmem:[#allocation2 + $0x158] sm:$0xff]
    %v4970 = vld [vmem:[#allocation2 + $0x160] sm:$0x3]
    %v4971 = vld [vmem:[#allocation2 + $0x168] sm:$0xff]
    %v4972 = vld [vmem:[#allocation2 + $0x170] sm:$0xff]
    %v4973 = vld [vmem:[#allocation2 + $0x178] sm:$0x3]
    %v4974 = vld [vmem:[#allocation2 + $0x180] sm:$0xff]
    %v4975 = vld [vmem:[#allocation2 + $0x188] sm:$0xff]
    %v4976 = vld [vmem:[#allocation2 + $0x190] sm:$0x3]
    %v4977 = vld [vmem:[#allocation2 + $0x198] sm:$0xff]
    %v4978 = vld [vmem:[#allocation2 + $0x1a0] sm:$0xff]
    %v4979 = vld [vmem:[#allocation2 + $0x1a8] sm:$0x3]
    %v4980 = vld [vmem:[#allocation2 + $0x1b0] sm:$0xff]
    %v4981 = vld [vmem:[#allocation2 + $0x1b8] sm:$0xff]
    %v4982 = vld [vmem:[#allocation2 + $0x1c0] sm:$0x3]
    %v4983 = vld [vmem:[#allocation2 + $0x1c8] sm:$0xff]
    %v4984 = vld [vmem:[#allocation2 + $0x1d0] sm:$0xff]
    %v4985 = vld [vmem:[#allocation2 + $0x1d8] sm:$0x3]
    %v4986 = vld [vmem:[#allocation2 + $0x1e0] sm:$0xff]
    %v4987 = vld [vmem:[#allocation2 + $0x1e8] sm:$0xff]
    %v4988 = vld [vmem:[#allocation2 + $0x1f0] sm:$0x3]
    %v4989 = vld [vmem:[#allocation2 + $0x1f8] sm:$0xff]
    %v4990 = vld [vmem:[#allocation2 + $0x200] sm:$0xff]
    %v4991 = vld [vmem:[#allocation2 + $0x208] sm:$0x3]
    %v4992 = vld [vmem:[#allocation2 + $0x210] sm:$0xff]
    %v4993 = vld [vmem:[#allocation2 + $0x218] sm:$0xff]
    %v4994 = vld [vmem:[#allocation2 + $0x220] sm:$0x3]
    %v4995 = vld [vmem:[#allocation2 + $0x228] sm:$0xff]
    %v4996 = vld [vmem:[#allocation2 + $0x230] sm:$0xff]
    %v4997 = vld [vmem:[#allocation2 + $0x238] sm:$0x3]
    %v4998 = vld [vmem:[#allocation2 + $0x240] sm:$0xff]
    %v4999 = vld [vmem:[#allocation2 + $0x248] sm:$0xff]
    %v5000 = vld [vmem:[#allocation2 + $0x250] sm:$0x3]
    %v5001 = vld [vmem:[#allocation2 + $0x258] sm:$0xff]
    %v5002 = vld [vmem:[#allocation2 + $0x260] sm:$0xff]
    %v5003 = vld [vmem:[#allocation2 + $0x268] sm:$0x3]
    %v5004 = vld [vmem:[#allocation2 + $0x270] sm:$0xff]
    %v5005 = vld [vmem:[#allocation2 + $0x278] sm:$0xff]
    %v5006 = vld [vmem:[#allocation2 + $0x280] sm:$0x3]
    %v5007 = vld [vmem:[#allocation2 + $0x288] sm:$0xff]
    %v5008 = vld [vmem:[#allocation2 + $0x290] sm:$0xff]
    %v5009 = vld [vmem:[#allocation2 + $0x298] sm:$0x3]
    %v5010 = vld [vmem:[#allocation2 + $0x2a0] sm:$0xff]
    %v5011 = vld [vmem:[#allocation2 + $0x2a8] sm:$0xff]
    %v5012 = vld [vmem:[#allocation2 + $0x2b0] sm:$0x3]
    %v5013 = vld [vmem:[#allocation2 + $0x2b8] sm:$0xff]
    %v5014 = vld [vmem:[#allocation2 + $0x2c0] sm:$0xff]
    %v5015 = vld [vmem:[#allocation2 + $0x2c8] sm:$0x3]
    %v5016 = vld [vmem:[#allocation2 + $0x2d0] sm:$0xff]
    %v5017 = vld [vmem:[#allocation2 + $0x2d8] sm:$0xff]
    %v5018 = vld [vmem:[#allocation2 + $0x2e0] sm:$0x3]
    %v5019 = vld [vmem:[#allocation2 + $0x2e8] sm:$0xff]
    %v5020 = vld [vmem:[#allocation2 + $0x2f0] sm:$0xff]
    %v5021 = vld [vmem:[#allocation2 + $0x2f8] sm:$0x3]
    %v5022 = vld [vmem:[#allocation2 + $0x300] sm:$0xff]
    %v5023 = vld [vmem:[#allocation2 + $0x308] sm:$0xff]
    %v5024 = vld [vmem:[#allocation2 + $0x310] sm:$0x3]
    %v5025 = vld [vmem:[#allocation2 + $0x318] sm:$0xff]
    %v5026 = vld [vmem:[#allocation2 + $0x320] sm:$0xff]
    %v5027 = vld [vmem:[#allocation2 + $0x328] sm:$0x3]
    %v5028 = vld [vmem:[#allocation2 + $0x330] sm:$0xff]
    %v5029 = vld [vmem:[#allocation2 + $0x338] sm:$0xff]
    %v5030 = vld [vmem:[#allocation2 + $0x340] sm:$0x3]
    %v5031 = vld [vmem:[#allocation2 + $0x348] sm:$0xff]
    %v5032 = vld [vmem:[#allocation2 + $0x350] sm:$0xff]
    %v5033 = vld [vmem:[#allocation2 + $0x358] sm:$0x3]
    %v5034 = vpack.c.bf16 %v4927, %v4926
    %v5035 = vpack.c.bf16 %v4930, %v4929
    %v5036 = vpack.c.bf16 %v4933, %v4932
    %v5037 = vpack.c.bf16 %v4936, %v4935
    %v5038 = vpack.c.bf16 %v4939, %v4938
    %v5039 = vpack.c.bf16 %v4942, %v4941
    %v5040 = vpack.c.bf16 %v4945, %v4944
    %v5041 = vpack.c.bf16 %v4948, %v4947
    %v5042 = vpack.c.bf16 %v4951, %v4950
    %v5043 = vpack.c.bf16 %v4954, %v4953
    %v5044 = vpack.c.bf16 %v4957, %v4956
    %v5045 = vpack.c.bf16 %v4960, %v4959
    %v5046 = vpack.c.bf16 %v4963, %v4962
    %v5047 = vpack.c.bf16 %v4966, %v4965
    %v5048 = vpack.c.bf16 %v4969, %v4968
    %v5049 = vpack.c.bf16 %v4972, %v4971
    %v5050 = vpack.c.bf16 %v4981, %v4980
    %v5051 = vpack.c.bf16 %v4984, %v4983
    %v5052 = vpack.c.bf16 %v4987, %v4986
    %v5053 = vpack.c.bf16 %v4990, %v4989
    %v5054 = vpack.c.bf16 %v4993, %v4992
    %v5055 = vpack.c.bf16 %v4996, %v4995
    %v5056 = vpack.c.bf16 %v4999, %v4998
    %v5057 = vpack.c.bf16 %v5002, %v5001
    %v5058 = vpack.c.bf16 %v5005, %v5004
    %v5059 = vpack.c.bf16 %v5008, %v5007
    %v5060 = vpack.c.bf16 %v5011, %v5010
    %v5061 = vpack.c.bf16 %v5014, %v5013
    %v5062 = vpack.c.bf16 %v5017, %v5016
    %v5063 = vpack.c.bf16 %v5020, %v5019
    %v5064 = vpack.c.bf16 %v5023, %v5022
    %v5065 = vpack.c.bf16 %v5026, %v5025
    %5066 = vst.msk [vmem:[#allocation3] sm:$0xff] %vm43, %v5034
    %5067 = vst.msk [vmem:[#allocation3 + $0x28] sm:$0xff] %vm43, %v5035
    %5068 = vst.msk [vmem:[#allocation3 + $0x50] sm:$0xff] %vm43, %v5036
    %5069 = vst.msk [vmem:[#allocation3 + $0x78] sm:$0xff] %vm43, %v5037
    %5070 = vst.msk [vmem:[#allocation3 + $0xa0] sm:$0xff] %vm43, %v5038
    %5071 = vst.msk [vmem:[#allocation3 + $0xc8] sm:$0xff] %vm43, %v5039
    %5072 = vst.msk [vmem:[#allocation3 + $0xf0] sm:$0xff] %vm43, %v5040
    %5073 = vst.msk [vmem:[#allocation3 + $0x118] sm:$0xff] %vm43, %v5041
    %5074 = vst.msk [vmem:[#allocation3 + $0x140] sm:$0xff] %vm43, %v5042
    %5075 = vst.msk [vmem:[#allocation3 + $0x168] sm:$0xff] %vm43, %v5043
    %5076 = vst.msk [vmem:[#allocation3 + $0x190] sm:$0xff] %vm43, %v5044
    %5077 = vst.msk [vmem:[#allocation3 + $0x1b8] sm:$0xff] %vm43, %v5045
    %5078 = vst.msk [vmem:[#allocation3 + $0x1e0] sm:$0xff] %vm43, %v5046
    %5079 = vst.msk [vmem:[#allocation3 + $0x208] sm:$0xff] %vm43, %v5047
    %5080 = vst.msk [vmem:[#allocation3 + $0x230] sm:$0xff] %vm43, %v5048
    %5081 = vst.msk [vmem:[#allocation3 + $0x258] sm:$0xff] %vm43, %v5049
    %5082 = vst.msk [vmem:[#allocation3 + $0x280] sm:$0xff] %vm43, %v5050
    %5083 = vst.msk [vmem:[#allocation3 + $0x2a8] sm:$0xff] %vm43, %v5051
    %5084 = vst.msk [vmem:[#allocation3 + $0x2d0] sm:$0xff] %vm43, %v5052
    %5085 = vst.msk [vmem:[#allocation3 + $0x2f8] sm:$0xff] %vm43, %v5053
    %5086 = vst.msk [vmem:[#allocation3 + $0x320] sm:$0xff] %vm43, %v5054
    %5087 = vst.msk [vmem:[#allocation3 + $0x348] sm:$0xff] %vm43, %v5055
    %5088 = vst.msk [vmem:[#allocation3 + $0x370] sm:$0xff] %vm43, %v5056
    %5089 = vst.msk [vmem:[#allocation3 + $0x398] sm:$0xff] %vm43, %v5057
    %5090 = vst.msk [vmem:[#allocation3 + $0x3c0] sm:$0xff] %vm43, %v5058
    %5091 = vst.msk [vmem:[#allocation3 + $0x3e8] sm:$0xff] %vm43, %v5059
    %5092 = vst.msk [vmem:[#allocation3 + $0x410] sm:$0xff] %vm43, %v5060
    %5093 = vst.msk [vmem:[#allocation3 + $0x438] sm:$0xff] %vm43, %v5061
    %5094 = vst.msk [vmem:[#allocation3 + $0x460] sm:$0xff] %vm43, %v5062
    %5095 = vst.msk [vmem:[#allocation3 + $0x488] sm:$0xff] %vm43, %v5063
    %5096 = vst.msk [vmem:[#allocation3 + $0x4b0] sm:$0xff] %vm43, %v5064
    %5097 = vst.msk [vmem:[#allocation3 + $0x4d8] sm:$0xff] %vm43, %v5065
    %v5194 = vrot.slane %v4926, 1
    %v5195 = vrot.slane %v4927, 1
    %v5196 = vsel %vm1654, %v5194, %v5195
    %v5197 = vrot.slane %v4928, 1
    %v5198 = vsel %vm1654, %v5195, %v5197
    %v5199 = vrot.slane %v4929, 1
    %v5200 = vrot.slane %v4930, 1
    %v5201 = vsel %vm1654, %v5199, %v5200
    %v5202 = vrot.slane %v4931, 1
    %v5203 = vsel %vm1654, %v5200, %v5202
    %v5204 = vrot.slane %v4932, 1
    %v5205 = vrot.slane %v4933, 1
    %v5206 = vsel %vm1654, %v5204, %v5205
    %v5207 = vrot.slane %v4934, 1
    %v5208 = vsel %vm1654, %v5205, %v5207
    %v5209 = vrot.slane %v4935, 1
    %v5210 = vrot.slane %v4936, 1
    %v5211 = vsel %vm1654, %v5209, %v5210
    %v5212 = vrot.slane %v4937, 1
    %v5213 = vsel %vm1654, %v5210, %v5212
    %v5214 = vrot.slane %v4938, 1
    %v5215 = vrot.slane %v4939, 1
    %v5216 = vsel %vm1654, %v5214, %v5215
    %v5217 = vrot.slane %v4940, 1
    %v5218 = vsel %vm1654, %v5215, %v5217
    %v5219 = vrot.slane %v4941, 1
    %v5220 = vrot.slane %v4942, 1
    %v5221 = vsel %vm1654, %v5219, %v5220
    %v5222 = vrot.slane %v4943, 1
    %v5223 = vsel %vm1654, %v5220, %v5222
    %v5224 = vrot.slane %v4944, 1
    %v5225 = vrot.slane %v4945, 1
    %v5226 = vsel %vm1654, %v5224, %v5225
    %v5227 = vrot.slane %v4946, 1
    %v5228 = vsel %vm1654, %v5225, %v5227
    %v5229 = vrot.slane %v4947, 1
    %v5230 = vrot.slane %v4948, 1
    %v5231 = vsel %vm1654, %v5229, %v5230
    %v5232 = vrot.slane %v4949, 1
    %v5233 = vsel %vm1654, %v5230, %v5232
    %v5234 = vrot.slane %v4950, 1
    %v5235 = vrot.slane %v4951, 1
    %v5236 = vsel %vm1654, %v5234, %v5235
    %v5237 = vrot.slane %v4952, 1
    %v5238 = vsel %vm1654, %v5235, %v5237
    %v5239 = vrot.slane %v4953, 1
    %v5240 = vrot.slane %v4954, 1
    %v5241 = vsel %vm1654, %v5239, %v5240
    %v5242 = vrot.slane %v4955, 1
    %v5243 = vsel %vm1654, %v5240, %v5242
    %v5244 = vrot.slane %v4956, 1
    %v5245 = vrot.slane %v4957, 1
    %v5246 = vsel %vm1654, %v5244, %v5245
    %v5247 = vrot.slane %v4958, 1
    %v5248 = vsel %vm1654, %v5245, %v5247
    %v5249 = vrot.slane %v4959, 1
    %v5250 = vrot.slane %v4960, 1
    %v5251 = vsel %vm1654, %v5249, %v5250
    %v5252 = vrot.slane %v4961, 1
    %v5253 = vsel %vm1654, %v5250, %v5252
    %v5254 = vrot.slane %v4962, 1
    %v5255 = vrot.slane %v4963, 1
    %v5256 = vsel %vm1654, %v5254, %v5255
    %v5257 = vrot.slane %v4964, 1
    %v5258 = vsel %vm1654, %v5255, %v5257
    %v5259 = vrot.slane %v4965, 1
    %v5260 = vrot.slane %v4966, 1
    %v5261 = vsel %vm1654, %v5259, %v5260
    %v5262 = vrot.slane %v4967, 1
    %v5263 = vsel %vm1654, %v5260, %v5262
    %v5264 = vrot.slane %v4968, 1
    %v5265 = vrot.slane %v4969, 1
    %v5266 = vsel %vm1654, %v5264, %v5265
    %v5267 = vrot.slane %v4970, 1
    %v5268 = vsel %vm1654, %v5265, %v5267
    %v5269 = vrot.slane %v4971, 1
    %v5270 = vrot.slane %v4972, 1
    %v5271 = vsel %vm1654, %v5269, %v5270
    %v5272 = vrot.slane %v4973, 1
    %v5273 = vsel %vm1654, %v5270, %v5272
    %v5274 = vrot.slane %v4980, 1
    %v5275 = vrot.slane %v4981, 1
    %v5276 = vsel %vm1654, %v5274, %v5275
    %v5277 = vrot.slane %v4982, 1
    %v5278 = vsel %vm1654, %v5275, %v5277
    %v5279 = vrot.slane %v4983, 1
    %v5280 = vrot.slane %v4984, 1
    %v5281 = vsel %vm1654, %v5279, %v5280
    %v5282 = vrot.slane %v4985, 1
    %v5283 = vsel %vm1654, %v5280, %v5282
    %v5284 = vrot.slane %v4986, 1
    %v5285 = vrot.slane %v4987, 1
    %v5286 = vsel %vm1654, %v5284, %v5285
    %v5287 = vrot.slane %v4988, 1
    %v5288 = vsel %vm1654, %v5285, %v5287
    %v5289 = vrot.slane %v4989, 1
    %v5290 = vrot.slane %v4990, 1
    %v5291 = vsel %vm1654, %v5289, %v5290
    %v5292 = vrot.slane %v4991, 1
    %v5293 = vsel %vm1654, %v5290, %v5292
    %v5294 = vrot.slane %v4992, 1
    %v5295 = vrot.slane %v4993, 1
    %v5296 = vsel %vm1654, %v5294, %v5295
    %v5297 = vrot.slane %v4994, 1
    %v5298 = vsel %vm1654, %v5295, %v5297
    %v5299 = vrot.slane %v4995, 1
    %v5300 = vrot.slane %v4996, 1
    %v5301 = vsel %vm1654, %v5299, %v5300
    %v5302 = vrot.slane %v4997, 1
    %v5303 = vsel %vm1654, %v5300, %v5302
    %v5304 = vrot.slane %v4998, 1
    %v5305 = vrot.slane %v4999, 1
    %v5306 = vsel %vm1654, %v5304, %v5305
    %v5307 = vrot.slane %v5000, 1
    %v5308 = vsel %vm1654, %v5305, %v5307
    %v5309 = vrot.slane %v5001, 1
    %v5310 = vrot.slane %v5002, 1
    %v5311 = vsel %vm1654, %v5309, %v5310
    %v5312 = vrot.slane %v5003, 1
    %v5313 = vsel %vm1654, %v5310, %v5312
    %v5314 = vrot.slane %v5004, 1
    %v5315 = vrot.slane %v5005, 1
    %v5316 = vsel %vm1654, %v5314, %v5315
    %v5317 = vrot.slane %v5006, 1
    %v5318 = vsel %vm1654, %v5315, %v5317
    %v5319 = vrot.slane %v5007, 1
    %v5320 = vrot.slane %v5008, 1
    %v5321 = vsel %vm1654, %v5319, %v5320
    %v5322 = vrot.slane %v5009, 1
    %v5323 = vsel %vm1654, %v5320, %v5322
    %v5324 = vrot.slane %v5010, 1
    %v5325 = vrot.slane %v5011, 1
    %v5326 = vsel %vm1654, %v5324, %v5325
    %v5327 = vrot.slane %v5012, 1
    %v5328 = vsel %vm1654, %v5325, %v5327
    %v5329 = vrot.slane %v5013, 1
    %v5330 = vrot.slane %v5014, 1
    %v5331 = vsel %vm1654, %v5329, %v5330
    %v5332 = vrot.slane %v5015, 1
    %v5333 = vsel %vm1654, %v5330, %v5332
    %v5334 = vrot.slane %v5016, 1
    %v5335 = vrot.slane %v5017, 1
    %v5336 = vsel %vm1654, %v5334, %v5335
    %v5337 = vrot.slane %v5018, 1
    %v5338 = vsel %vm1654, %v5335, %v5337
    %v5339 = vrot.slane %v5019, 1
    %v5340 = vrot.slane %v5020, 1
    %v5341 = vsel %vm1654, %v5339, %v5340
    %v5342 = vrot.slane %v5021, 1
    %v5343 = vsel %vm1654, %v5340, %v5342
    %v5344 = vrot.slane %v5022, 1
    %v5345 = vrot.slane %v5023, 1
    %v5346 = vsel %vm1654, %v5344, %v5345
    %v5347 = vrot.slane %v5024, 1
    %v5348 = vsel %vm1654, %v5345, %v5347
    %v5349 = vrot.slane %v5025, 1
    %v5350 = vrot.slane %v5026, 1
    %v5351 = vsel %vm1654, %v5349, %v5350
    %v5352 = vrot.slane %v5027, 1
    %v5353 = vsel %vm1654, %v5350, %v5352
    %v5418 = vpack.c.bf16 %v5198, %v5196
    %v5419 = vpack.c.bf16 %v5203, %v5201
    %v5420 = vpack.c.bf16 %v5208, %v5206
    %v5421 = vpack.c.bf16 %v5213, %v5211
    %v5422 = vpack.c.bf16 %v5218, %v5216
    %v5423 = vpack.c.bf16 %v5223, %v5221
    %v5424 = vpack.c.bf16 %v5228, %v5226
    %v5425 = vpack.c.bf16 %v5233, %v5231
    %v5426 = vpack.c.bf16 %v5238, %v5236
    %v5427 = vpack.c.bf16 %v5243, %v5241
    %v5428 = vpack.c.bf16 %v5248, %v5246
    %v5429 = vpack.c.bf16 %v5253, %v5251
    %v5430 = vpack.c.bf16 %v5258, %v5256
    %v5431 = vpack.c.bf16 %v5263, %v5261
    %v5432 = vpack.c.bf16 %v5268, %v5266
    %v5433 = vpack.c.bf16 %v5273, %v5271
    %v5434 = vpack.c.bf16 %v5278, %v5276
    %v5435 = vpack.c.bf16 %v5283, %v5281
    %v5436 = vpack.c.bf16 %v5288, %v5286
    %v5437 = vpack.c.bf16 %v5293, %v5291
    %v5438 = vpack.c.bf16 %v5298, %v5296
    %v5439 = vpack.c.bf16 %v5303, %v5301
    %v5440 = vpack.c.bf16 %v5308, %v5306
    %v5441 = vpack.c.bf16 %v5313, %v5311
    %v5442 = vpack.c.bf16 %v5318, %v5316
    %v5443 = vpack.c.bf16 %v5323, %v5321
    %v5444 = vpack.c.bf16 %v5328, %v5326
    %v5445 = vpack.c.bf16 %v5333, %v5331
    %v5446 = vpack.c.bf16 %v5338, %v5336
    %v5447 = vpack.c.bf16 %v5343, %v5341
    %v5448 = vpack.c.bf16 %v5348, %v5346
    %v5449 = vpack.c.bf16 %v5353, %v5351
    %5482 = vrot.lane.b32.xlu0 %v5418, 64
    %v5483 = vpop.permute.xlu0 %5482
    %5484 = vrot.lane.b32.xlu0 %v5419, 64
    %v5485 = vpop.permute.xlu0 %5484
    %5486 = vrot.lane.b32.xlu0 %v5420, 64
    %v5487 = vpop.permute.xlu0 %5486
    %5488 = vrot.lane.b32.xlu0 %v5421, 64
    %v5489 = vpop.permute.xlu0 %5488
    %5490 = vrot.lane.b32.xlu0 %v5422, 64
    %v5491 = vpop.permute.xlu0 %5490
    %5492 = vrot.lane.b32.xlu0 %v5423, 64
    %v5493 = vpop.permute.xlu0 %5492
    %5494 = vrot.lane.b32.xlu0 %v5424, 64
    %v5495 = vpop.permute.xlu0 %5494
    %5496 = vrot.lane.b32.xlu0 %v5425, 64
    %v5497 = vpop.permute.xlu0 %5496
    %5498 = vrot.lane.b32.xlu0 %v5426, 64
    %v5499 = vpop.permute.xlu0 %5498
    %5500 = vrot.lane.b32.xlu0 %v5427, 64
    %v5501 = vpop.permute.xlu0 %5500
    %5502 = vrot.lane.b32.xlu0 %v5428, 64
    %v5503 = vpop.permute.xlu0 %5502
    %5504 = vrot.lane.b32.xlu0 %v5429, 64
    %v5505 = vpop.permute.xlu0 %5504
    %5506 = vrot.lane.b32.xlu0 %v5430, 64
    %v5507 = vpop.permute.xlu0 %5506
    %5508 = vrot.lane.b32.xlu0 %v5431, 64
    %v5509 = vpop.permute.xlu0 %5508
    %5510 = vrot.lane.b32.xlu0 %v5432, 64
    %v5511 = vpop.permute.xlu0 %5510
    %5512 = vrot.lane.b32.xlu0 %v5433, 64
    %v5513 = vpop.permute.xlu0 %5512
    %5514 = vrot.lane.b32.xlu0 %v5434, 64
    %v5515 = vpop.permute.xlu0 %5514
    %5516 = vrot.lane.b32.xlu0 %v5435, 64
    %v5517 = vpop.permute.xlu0 %5516
    %5518 = vrot.lane.b32.xlu0 %v5436, 64
    %v5519 = vpop.permute.xlu0 %5518
    %5520 = vrot.lane.b32.xlu0 %v5437, 64
    %v5521 = vpop.permute.xlu0 %5520
    %5522 = vrot.lane.b32.xlu0 %v5438, 64
    %v5523 = vpop.permute.xlu0 %5522
    %5524 = vrot.lane.b32.xlu0 %v5439, 64
    %v5525 = vpop.permute.xlu0 %5524
    %5526 = vrot.lane.b32.xlu0 %v5440, 64
    %v5527 = vpop.permute.xlu0 %5526
    %5528 = vrot.lane.b32.xlu0 %v5441, 64
    %v5529 = vpop.permute.xlu0 %5528
    %5530 = vrot.lane.b32.xlu0 %v5442, 64
    %v5531 = vpop.permute.xlu0 %5530
    %5532 = vrot.lane.b32.xlu0 %v5443, 64
    %v5533 = vpop.permute.xlu0 %5532
    %5534 = vrot.lane.b32.xlu0 %v5444, 64
    %v5535 = vpop.permute.xlu0 %5534
    %5536 = vrot.lane.b32.xlu0 %v5445, 64
    %v5537 = vpop.permute.xlu0 %5536
    %5538 = vrot.lane.b32.xlu0 %v5446, 64
    %v5539 = vpop.permute.xlu0 %5538
    %5540 = vrot.lane.b32.xlu0 %v5447, 64
    %v5541 = vpop.permute.xlu0 %5540
    %5542 = vrot.lane.b32.xlu0 %v5448, 64
    %v5543 = vpop.permute.xlu0 %5542
    %5544 = vrot.lane.b32.xlu0 %v5449, 64
    %v5545 = vpop.permute.xlu0 %5544
    %5578 = vst.msk [vmem:[#allocation3] sm:$0xff] %vm2039, %v5483
    %5579 = vst.msk [vmem:[#allocation3 + $0x28] sm:$0xff] %vm2039, %v5485
    %5580 = vst.msk [vmem:[#allocation3 + $0x50] sm:$0xff] %vm2039, %v5487
    %5581 = vst.msk [vmem:[#allocation3 + $0x78] sm:$0xff] %vm2039, %v5489
    %5582 = vst.msk [vmem:[#allocation3 + $0xa0] sm:$0xff] %vm2039, %v5491
    %5583 = vst.msk [vmem:[#allocation3 + $0xc8] sm:$0xff] %vm2039, %v5493
    %5584 = vst.msk [vmem:[#allocation3 + $0xf0] sm:$0xff] %vm2039, %v5495
    %5585 = vst.msk [vmem:[#allocation3 + $0x118] sm:$0xff] %vm2039, %v5497
    %5586 = vst.msk [vmem:[#allocation3 + $0x140] sm:$0xff] %vm2039, %v5499
    %5587 = vst.msk [vmem:[#allocation3 + $0x168] sm:$0xff] %vm2039, %v5501
    %5588 = vst.msk [vmem:[#allocation3 + $0x190] sm:$0xff] %vm2039, %v5503
    %5589 = vst.msk [vmem:[#allocation3 + $0x1b8] sm:$0xff] %vm2039, %v5505
    %5590 = vst.msk [vmem:[#allocation3 + $0x1e0] sm:$0xff] %vm2039, %v5507
    %5591 = vst.msk [vmem:[#allocation3 + $0x208] sm:$0xff] %vm2039, %v5509
    %5592 = vst.msk [vmem:[#allocation3 + $0x230] sm:$0xff] %vm2039, %v5511
    %5593 = vst.msk [vmem:[#allocation3 + $0x258] sm:$0xff] %vm2039, %v5513
    %5594 = vst.msk [vmem:[#allocation3 + $0x280] sm:$0xff] %vm2039, %v5515
    %5595 = vst.msk [vmem:[#allocation3 + $0x2a8] sm:$0xff] %vm2039, %v5517
    %5596 = vst.msk [vmem:[#allocation3 + $0x2d0] sm:$0xff] %vm2039, %v5519
    %5597 = vst.msk [vmem:[#allocation3 + $0x2f8] sm:$0xff] %vm2039, %v5521
    %5598 = vst.msk [vmem:[#allocation3 + $0x320] sm:$0xff] %vm2039, %v5523
    %5599 = vst.msk [vmem:[#allocation3 + $0x348] sm:$0xff] %vm2039, %v5525
    %5600 = vst.msk [vmem:[#allocation3 + $0x370] sm:$0xff] %vm2039, %v5527
    %5601 = vst.msk [vmem:[#allocation3 + $0x398] sm:$0xff] %vm2039, %v5529
    %5602 = vst.msk [vmem:[#allocation3 + $0x3c0] sm:$0xff] %vm2039, %v5531
    %5603 = vst.msk [vmem:[#allocation3 + $0x3e8] sm:$0xff] %vm2039, %v5533
    %5604 = vst.msk [vmem:[#allocation3 + $0x410] sm:$0xff] %vm2039, %v5535
    %5605 = vst.msk [vmem:[#allocation3 + $0x438] sm:$0xff] %vm2039, %v5537
    %5606 = vst.msk [vmem:[#allocation3 + $0x460] sm:$0xff] %vm2039, %v5539
    %5607 = vst.msk [vmem:[#allocation3 + $0x488] sm:$0xff] %vm2039, %v5541
    %5608 = vst.msk [vmem:[#allocation3 + $0x4b0] sm:$0xff] %vm2039, %v5543
    %5609 = vst.msk [vmem:[#allocation3 + $0x4d8] sm:$0xff] %vm2039, %v5545
    %v5610 = vrot.slane %v4926, 2
    %v5611 = vrot.slane %v4927, 2
    %v5612 = vsel %vm2072, %v5610, %v5611
    %v5613 = vrot.slane %v4928, 2
    %v5614 = vsel %vm2072, %v5611, %v5613
    %v5615 = vrot.slane %v4929, 2
    %v5616 = vrot.slane %v4930, 2
    %v5617 = vsel %vm2072, %v5615, %v5616
    %v5618 = vrot.slane %v4931, 2
    %v5619 = vsel %vm2072, %v5616, %v5618
    %v5620 = vrot.slane %v4932, 2
    %v5621 = vrot.slane %v4933, 2
    %v5622 = vsel %vm2072, %v5620, %v5621
    %v5623 = vrot.slane %v4934, 2
    %v5624 = vsel %vm2072, %v5621, %v5623
    %v5625 = vrot.slane %v4935, 2
    %v5626 = vrot.slane %v4936, 2
    %v5627 = vsel %vm2072, %v5625, %v5626
    %v5628 = vrot.slane %v4937, 2
    %v5629 = vsel %vm2072, %v5626, %v5628
    %v5630 = vrot.slane %v4938, 2
    %v5631 = vrot.slane %v4939, 2
    %v5632 = vsel %vm2072, %v5630, %v5631
    %v5633 = vrot.slane %v4940, 2
    %v5634 = vsel %vm2072, %v5631, %v5633
    %v5635 = vrot.slane %v4941, 2
    %v5636 = vrot.slane %v4942, 2
    %v5637 = vsel %vm2072, %v5635, %v5636
    %v5638 = vrot.slane %v4943, 2
    %v5639 = vsel %vm2072, %v5636, %v5638
    %v5640 = vrot.slane %v4944, 2
    %v5641 = vrot.slane %v4945, 2
    %v5642 = vsel %vm2072, %v5640, %v5641
    %v5643 = vrot.slane %v4946, 2
    %v5644 = vsel %vm2072, %v5641, %v5643
    %v5645 = vrot.slane %v4947, 2
    %v5646 = vrot.slane %v4948, 2
    %v5647 = vsel %vm2072, %v5645, %v5646
    %v5648 = vrot.slane %v4949, 2
    %v5649 = vsel %vm2072, %v5646, %v5648
    %v5650 = vrot.slane %v4950, 2
    %v5651 = vrot.slane %v4951, 2
    %v5652 = vsel %vm2072, %v5650, %v5651
    %v5653 = vrot.slane %v4952, 2
    %v5654 = vsel %vm2072, %v5651, %v5653
    %v5655 = vrot.slane %v4953, 2
    %v5656 = vrot.slane %v4954, 2
    %v5657 = vsel %vm2072, %v5655, %v5656
    %v5658 = vrot.slane %v4955, 2
    %v5659 = vsel %vm2072, %v5656, %v5658
    %v5660 = vrot.slane %v4956, 2
    %v5661 = vrot.slane %v4957, 2
    %v5662 = vsel %vm2072, %v5660, %v5661
    %v5663 = vrot.slane %v4958, 2
    %v5664 = vsel %vm2072, %v5661, %v5663
    %v5665 = vrot.slane %v4959, 2
    %v5666 = vrot.slane %v4960, 2
    %v5667 = vsel %vm2072, %v5665, %v5666
    %v5668 = vrot.slane %v4961, 2
    %v5669 = vsel %vm2072, %v5666, %v5668
    %v5670 = vrot.slane %v4962, 2
    %v5671 = vrot.slane %v4963, 2
    %v5672 = vsel %vm2072, %v5670, %v5671
    %v5673 = vrot.slane %v4964, 2
    %v5674 = vsel %vm2072, %v5671, %v5673
    %v5675 = vrot.slane %v4965, 2
    %v5676 = vrot.slane %v4966, 2
    %v5677 = vsel %vm2072, %v5675, %v5676
    %v5678 = vrot.slane %v4967, 2
    %v5679 = vsel %vm2072, %v5676, %v5678
    %v5680 = vrot.slane %v4968, 2
    %v5681 = vrot.slane %v4969, 2
    %v5682 = vsel %vm2072, %v5680, %v5681
    %v5683 = vrot.slane %v4970, 2
    %v5684 = vsel %vm2072, %v5681, %v5683
    %v5685 = vrot.slane %v4971, 2
    %v5686 = vrot.slane %v4972, 2
    %v5687 = vsel %vm2072, %v5685, %v5686
    %v5688 = vrot.slane %v4973, 2
    %v5689 = vsel %vm2072, %v5686, %v5688
    %v5690 = vrot.slane %v4980, 2
    %v5691 = vrot.slane %v4981, 2
    %v5692 = vsel %vm2072, %v5690, %v5691
    %v5693 = vrot.slane %v4982, 2
    %v5694 = vsel %vm2072, %v5691, %v5693
    %v5695 = vrot.slane %v4983, 2
    %v5696 = vrot.slane %v4984, 2
    %v5697 = vsel %vm2072, %v5695, %v5696
    %v5698 = vrot.slane %v4985, 2
    %v5699 = vsel %vm2072, %v5696, %v5698
    %v5700 = vrot.slane %v4986, 2
    %v5701 = vrot.slane %v4987, 2
    %v5702 = vsel %vm2072, %v5700, %v5701
    %v5703 = vrot.slane %v4988, 2
    %v5704 = vsel %vm2072, %v5701, %v5703
    %v5705 = vrot.slane %v4989, 2
    %v5706 = vrot.slane %v4990, 2
    %v5707 = vsel %vm2072, %v5705, %v5706
    %v5708 = vrot.slane %v4991, 2
    %v5709 = vsel %vm2072, %v5706, %v5708
    %v5710 = vrot.slane %v4992, 2
    %v5711 = vrot.slane %v4993, 2
    %v5712 = vsel %vm2072, %v5710, %v5711
    %v5713 = vrot.slane %v4994, 2
    %v5714 = vsel %vm2072, %v5711, %v5713
    %v5715 = vrot.slane %v4995, 2
    %v5716 = vrot.slane %v4996, 2
    %v5717 = vsel %vm2072, %v5715, %v5716
    %v5718 = vrot.slane %v4997, 2
    %v5719 = vsel %vm2072, %v5716, %v5718
    %v5720 = vrot.slane %v4998, 2
    %v5721 = vrot.slane %v4999, 2
    %v5722 = vsel %vm2072, %v5720, %v5721
    %v5723 = vrot.slane %v5000, 2
    %v5724 = vsel %vm2072, %v5721, %v5723
    %v5725 = vrot.slane %v5001, 2
    %v5726 = vrot.slane %v5002, 2
    %v5727 = vsel %vm2072, %v5725, %v5726
    %v5728 = vrot.slane %v5003, 2
    %v5729 = vsel %vm2072, %v5726, %v5728
    %v5730 = vrot.slane %v5004, 2
    %v5731 = vrot.slane %v5005, 2
    %v5732 = vsel %vm2072, %v5730, %v5731
    %v5733 = vrot.slane %v5006, 2
    %v5734 = vsel %vm2072, %v5731, %v5733
    %v5735 = vrot.slane %v5007, 2
    %v5736 = vrot.slane %v5008, 2
    %v5737 = vsel %vm2072, %v5735, %v5736
    %v5738 = vrot.slane %v5009, 2
    %v5739 = vsel %vm2072, %v5736, %v5738
    %v5740 = vrot.slane %v5010, 2
    %v5741 = vrot.slane %v5011, 2
    %v5742 = vsel %vm2072, %v5740, %v5741
    %v5743 = vrot.slane %v5012, 2
    %v5744 = vsel %vm2072, %v5741, %v5743
    %v5745 = vrot.slane %v5013, 2
    %v5746 = vrot.slane %v5014, 2
    %v5747 = vsel %vm2072, %v5745, %v5746
    %v5748 = vrot.slane %v5015, 2
    %v5749 = vsel %vm2072, %v5746, %v5748
    %v5750 = vrot.slane %v5016, 2
    %v5751 = vrot.slane %v5017, 2
    %v5752 = vsel %vm2072, %v5750, %v5751
    %v5753 = vrot.slane %v5018, 2
    %v5754 = vsel %vm2072, %v5751, %v5753
    %v5755 = vrot.slane %v5019, 2
    %v5756 = vrot.slane %v5020, 2
    %v5757 = vsel %vm2072, %v5755, %v5756
    %v5758 = vrot.slane %v5021, 2
    %v5759 = vsel %vm2072, %v5756, %v5758
    %v5760 = vrot.slane %v5022, 2
    %v5761 = vrot.slane %v5023, 2
    %v5762 = vsel %vm2072, %v5760, %v5761
    %v5763 = vrot.slane %v5024, 2
    %v5764 = vsel %vm2072, %v5761, %v5763
    %v5765 = vrot.slane %v5025, 2
    %v5766 = vrot.slane %v5026, 2
    %v5767 = vsel %vm2072, %v5765, %v5766
    %v5768 = vrot.slane %v5027, 2
    %v5769 = vsel %vm2072, %v5766, %v5768
    %v5834 = vpack.c.bf16 %v5614, %v5612
    %v5835 = vpack.c.bf16 %v5619, %v5617
    %v5836 = vpack.c.bf16 %v5624, %v5622
    %v5837 = vpack.c.bf16 %v5629, %v5627
    %v5838 = vpack.c.bf16 %v5634, %v5632
    %v5839 = vpack.c.bf16 %v5639, %v5637
    %v5840 = vpack.c.bf16 %v5644, %v5642
    %v5841 = vpack.c.bf16 %v5649, %v5647
    %v5842 = vpack.c.bf16 %v5654, %v5652
    %v5843 = vpack.c.bf16 %v5659, %v5657
    %v5844 = vpack.c.bf16 %v5664, %v5662
    %v5845 = vpack.c.bf16 %v5669, %v5667
    %v5846 = vpack.c.bf16 %v5674, %v5672
    %v5847 = vpack.c.bf16 %v5679, %v5677
    %v5848 = vpack.c.bf16 %v5684, %v5682
    %v5849 = vpack.c.bf16 %v5689, %v5687
    %v5850 = vpack.c.bf16 %v5694, %v5692
    %v5851 = vpack.c.bf16 %v5699, %v5697
    %v5852 = vpack.c.bf16 %v5704, %v5702
    %v5853 = vpack.c.bf16 %v5709, %v5707
    %v5854 = vpack.c.bf16 %v5714, %v5712
    %v5855 = vpack.c.bf16 %v5719, %v5717
    %v5856 = vpack.c.bf16 %v5724, %v5722
    %v5857 = vpack.c.bf16 %v5729, %v5727
    %v5858 = vpack.c.bf16 %v5734, %v5732
    %v5859 = vpack.c.bf16 %v5739, %v5737
    %v5860 = vpack.c.bf16 %v5744, %v5742
    %v5861 = vpack.c.bf16 %v5749, %v5747
    %v5862 = vpack.c.bf16 %v5754, %v5752
    %v5863 = vpack.c.bf16 %v5759, %v5757
    %v5864 = vpack.c.bf16 %v5764, %v5762
    %v5865 = vpack.c.bf16 %v5769, %v5767
    %5866 = vst.msk [vmem:[#allocation3 + $0x8] sm:$0xff] %vm43, %v5834
    %5867 = vst.msk [vmem:[#allocation3 + $0x30] sm:$0xff] %vm43, %v5835
    %5868 = vst.msk [vmem:[#allocation3 + $0x58] sm:$0xff] %vm43, %v5836
    %5869 = vst.msk [vmem:[#allocation3 + $0x80] sm:$0xff] %vm43, %v5837
    %5870 = vst.msk [vmem:[#allocation3 + $0xa8] sm:$0xff] %vm43, %v5838
    %5871 = vst.msk [vmem:[#allocation3 + $0xd0] sm:$0xff] %vm43, %v5839
    %5872 = vst.msk [vmem:[#allocation3 + $0xf8] sm:$0xff] %vm43, %v5840
    %5873 = vst.msk [vmem:[#allocation3 + $0x120] sm:$0xff] %vm43, %v5841
    %5874 = vst.msk [vmem:[#allocation3 + $0x148] sm:$0xff] %vm43, %v5842
    %5875 = vst.msk [vmem:[#allocation3 + $0x170] sm:$0xff] %vm43, %v5843
    %5876 = vst.msk [vmem:[#allocation3 + $0x198] sm:$0xff] %vm43, %v5844
    %5877 = vst.msk [vmem:[#allocation3 + $0x1c0] sm:$0xff] %vm43, %v5845
    %5878 = vst.msk [vmem:[#allocation3 + $0x1e8] sm:$0xff] %vm43, %v5846
    %5879 = vst.msk [vmem:[#allocation3 + $0x210] sm:$0xff] %vm43, %v5847
    %5880 = vst.msk [vmem:[#allocation3 + $0x238] sm:$0xff] %vm43, %v5848
    %5881 = vst.msk [vmem:[#allocation3 + $0x260] sm:$0xff] %vm43, %v5849
    %5882 = vst.msk [vmem:[#allocation3 + $0x288] sm:$0xff] %vm43, %v5850
    %5883 = vst.msk [vmem:[#allocation3 + $0x2b0] sm:$0xff] %vm43, %v5851
    %5884 = vst.msk [vmem:[#allocation3 + $0x2d8] sm:$0xff] %vm43, %v5852
    %5885 = vst.msk [vmem:[#allocation3 + $0x300] sm:$0xff] %vm43, %v5853
    %5886 = vst.msk [vmem:[#allocation3 + $0x328] sm:$0xff] %vm43, %v5854
    %5887 = vst.msk [vmem:[#allocation3 + $0x350] sm:$0xff] %vm43, %v5855
    %5888 = vst.msk [vmem:[#allocation3 + $0x378] sm:$0xff] %vm43, %v5856
    %5889 = vst.msk [vmem:[#allocation3 + $0x3a0] sm:$0xff] %vm43, %v5857
    %5890 = vst.msk [vmem:[#allocation3 + $0x3c8] sm:$0xff] %vm43, %v5858
    %5891 = vst.msk [vmem:[#allocation3 + $0x3f0] sm:$0xff] %vm43, %v5859
    %5892 = vst.msk [vmem:[#allocation3 + $0x418] sm:$0xff] %vm43, %v5860
    %5893 = vst.msk [vmem:[#allocation3 + $0x440] sm:$0xff] %vm43, %v5861
    %5894 = vst.msk [vmem:[#allocation3 + $0x468] sm:$0xff] %vm43, %v5862
    %5895 = vst.msk [vmem:[#allocation3 + $0x490] sm:$0xff] %vm43, %v5863
    %5896 = vst.msk [vmem:[#allocation3 + $0x4b8] sm:$0xff] %vm43, %v5864
    %5897 = vst.msk [vmem:[#allocation3 + $0x4e0] sm:$0xff] %vm43, %v5865
    %v5898 = vpack.c.bf16 %v4975, %v4974
    %v5899 = vpack.c.bf16 %v5029, %v5028
    %5932 = vrot.lane.b32.xlu0 %v5035, 64
    %v5933 = vpop.permute.xlu0 %5932
    %5934 = vrot.lane.b32.xlu0 %v5036, 64
    %v5935 = vpop.permute.xlu0 %5934
    %5936 = vrot.lane.b32.xlu0 %v5037, 64
    %v5937 = vpop.permute.xlu0 %5936
    %5938 = vrot.lane.b32.xlu0 %v5038, 64
    %v5939 = vpop.permute.xlu0 %5938
    %5940 = vrot.lane.b32.xlu0 %v5039, 64
    %v5941 = vpop.permute.xlu0 %5940
    %5942 = vrot.lane.b32.xlu0 %v5040, 64
    %v5943 = vpop.permute.xlu0 %5942
    %5944 = vrot.lane.b32.xlu0 %v5041, 64
    %v5945 = vpop.permute.xlu0 %5944
    %5946 = vrot.lane.b32.xlu0 %v5042, 64
    %v5947 = vpop.permute.xlu0 %5946
    %5948 = vrot.lane.b32.xlu0 %v5043, 64
    %v5949 = vpop.permute.xlu0 %5948
    %5950 = vrot.lane.b32.xlu0 %v5044, 64
    %v5951 = vpop.permute.xlu0 %5950
    %5952 = vrot.lane.b32.xlu0 %v5045, 64
    %v5953 = vpop.permute.xlu0 %5952
    %5954 = vrot.lane.b32.xlu0 %v5046, 64
    %v5955 = vpop.permute.xlu0 %5954
    %5956 = vrot.lane.b32.xlu0 %v5047, 64
    %v5957 = vpop.permute.xlu0 %5956
    %5958 = vrot.lane.b32.xlu0 %v5048, 64
    %v5959 = vpop.permute.xlu0 %5958
    %5960 = vrot.lane.b32.xlu0 %v5049, 64
    %v5961 = vpop.permute.xlu0 %5960
    %5962 = vrot.lane.b32.xlu0 %v5898, 64
    %v5963 = vpop.permute.xlu0 %5962
    %5964 = vrot.lane.b32.xlu0 %v5051, 64
    %v5965 = vpop.permute.xlu0 %5964
    %5966 = vrot.lane.b32.xlu0 %v5052, 64
    %v5967 = vpop.permute.xlu0 %5966
    %5968 = vrot.lane.b32.xlu0 %v5053, 64
    %v5969 = vpop.permute.xlu0 %5968
    %5970 = vrot.lane.b32.xlu0 %v5054, 64
    %v5971 = vpop.permute.xlu0 %5970
    %5972 = vrot.lane.b32.xlu0 %v5055, 64
    %v5973 = vpop.permute.xlu0 %5972
    %5974 = vrot.lane.b32.xlu0 %v5056, 64
    %v5975 = vpop.permute.xlu0 %5974
    %5976 = vrot.lane.b32.xlu0 %v5057, 64
    %v5977 = vpop.permute.xlu0 %5976
    %5978 = vrot.lane.b32.xlu0 %v5058, 64
    %v5979 = vpop.permute.xlu0 %5978
    %5980 = vrot.lane.b32.xlu0 %v5059, 64
    %v5981 = vpop.permute.xlu0 %5980
    %5982 = vrot.lane.b32.xlu0 %v5060, 64
    %v5983 = vpop.permute.xlu0 %5982
    %5984 = vrot.lane.b32.xlu0 %v5061, 64
    %v5985 = vpop.permute.xlu0 %5984
    %5986 = vrot.lane.b32.xlu0 %v5062, 64
    %v5987 = vpop.permute.xlu0 %5986
    %5988 = vrot.lane.b32.xlu0 %v5063, 64
    %v5989 = vpop.permute.xlu0 %5988
    %5990 = vrot.lane.b32.xlu0 %v5064, 64
    %v5991 = vpop.permute.xlu0 %5990
    %5992 = vrot.lane.b32.xlu0 %v5065, 64
    %v5993 = vpop.permute.xlu0 %5992
    %5994 = vrot.lane.b32.xlu0 %v5899, 64
    %v5995 = vpop.permute.xlu0 %5994
    %6028 = vst.msk [vmem:[#allocation3 + $0x8] sm:$0xff] %vm2039, %v5933
    %6029 = vst.msk [vmem:[#allocation3 + $0x30] sm:$0xff] %vm2039, %v5935
    %6030 = vst.msk [vmem:[#allocation3 + $0x58] sm:$0xff] %vm2039, %v5937
    %6031 = vst.msk [vmem:[#allocation3 + $0x80] sm:$0xff] %vm2039, %v5939
    %6032 = vst.msk [vmem:[#allocation3 + $0xa8] sm:$0xff] %vm2039, %v5941
    %6033 = vst.msk [vmem:[#allocation3 + $0xd0] sm:$0xff] %vm2039, %v5943
    %6034 = vst.msk [vmem:[#allocation3 + $0xf8] sm:$0xff] %vm2039, %v5945
    %6035 = vst.msk [vmem:[#allocation3 + $0x120] sm:$0xff] %vm2039, %v5947
    %6036 = vst.msk [vmem:[#allocation3 + $0x148] sm:$0xff] %vm2039, %v5949
    %6037 = vst.msk [vmem:[#allocation3 + $0x170] sm:$0xff] %vm2039, %v5951
    %6038 = vst.msk [vmem:[#allocation3 + $0x198] sm:$0xff] %vm2039, %v5953
    %6039 = vst.msk [vmem:[#allocation3 + $0x1c0] sm:$0xff] %vm2039, %v5955
    %6040 = vst.msk [vmem:[#allocation3 + $0x1e8] sm:$0xff] %vm2039, %v5957
    %6041 = vst.msk [vmem:[#allocation3 + $0x210] sm:$0xff] %vm2039, %v5959
    %6042 = vst.msk [vmem:[#allocation3 + $0x238] sm:$0xff] %vm2039, %v5961
    %6043 = vst.msk [vmem:[#allocation3 + $0x260] sm:$0xff] %vm2039, %v5963
    %6044 = vst.msk [vmem:[#allocation3 + $0x288] sm:$0xff] %vm2039, %v5965
    %6045 = vst.msk [vmem:[#allocation3 + $0x2b0] sm:$0xff] %vm2039, %v5967
    %6046 = vst.msk [vmem:[#allocation3 + $0x2d8] sm:$0xff] %vm2039, %v5969
    %6047 = vst.msk [vmem:[#allocation3 + $0x300] sm:$0xff] %vm2039, %v5971
    %6048 = vst.msk [vmem:[#allocation3 + $0x328] sm:$0xff] %vm2039, %v5973
    %6049 = vst.msk [vmem:[#allocation3 + $0x350] sm:$0xff] %vm2039, %v5975
    %6050 = vst.msk [vmem:[#allocation3 + $0x378] sm:$0xff] %vm2039, %v5977
    %6051 = vst.msk [vmem:[#allocation3 + $0x3a0] sm:$0xff] %vm2039, %v5979
    %6052 = vst.msk [vmem:[#allocation3 + $0x3c8] sm:$0xff] %vm2039, %v5981
    %6053 = vst.msk [vmem:[#allocation3 + $0x3f0] sm:$0xff] %vm2039, %v5983
    %6054 = vst.msk [vmem:[#allocation3 + $0x418] sm:$0xff] %vm2039, %v5985
    %6055 = vst.msk [vmem:[#allocation3 + $0x440] sm:$0xff] %vm2039, %v5987
    %6056 = vst.msk [vmem:[#allocation3 + $0x468] sm:$0xff] %vm2039, %v5989
    %6057 = vst.msk [vmem:[#allocation3 + $0x490] sm:$0xff] %vm2039, %v5991
    %6058 = vst.msk [vmem:[#allocation3 + $0x4b8] sm:$0xff] %vm2039, %v5993
    %6059 = vst.msk [vmem:[#allocation3 + $0x4e0] sm:$0xff] %vm2039, %v5995
    %v6066 = vrot.slane %v4974, 1
    %v6067 = vrot.slane %v4975, 1
    %v6068 = vsel %vm1654, %v6066, %v6067
    %v6069 = vrot.slane %v4976, 1
    %v6070 = vsel %vm1654, %v6067, %v6069
    %v6071 = vrot.slane %v5028, 1
    %v6072 = vrot.slane %v5029, 1
    %v6073 = vsel %vm1654, %v6071, %v6072
    %v6074 = vrot.slane %v5030, 1
    %v6075 = vsel %vm1654, %v6072, %v6074
    %v6080 = vpack.c.bf16 %v6070, %v6068
    %v6081 = vpack.c.bf16 %v6075, %v6073
    %6082 = vst.msk [vmem:[#allocation3 + $0x10] sm:$0xff] %vm43, %v5419
    %6083 = vst.msk [vmem:[#allocation3 + $0x38] sm:$0xff] %vm43, %v5420
    %6084 = vst.msk [vmem:[#allocation3 + $0x60] sm:$0xff] %vm43, %v5421
    %6085 = vst.msk [vmem:[#allocation3 + $0x88] sm:$0xff] %vm43, %v5422
    %6086 = vst.msk [vmem:[#allocation3 + $0xb0] sm:$0xff] %vm43, %v5423
    %6087 = vst.msk [vmem:[#allocation3 + $0xd8] sm:$0xff] %vm43, %v5424
    %6088 = vst.msk [vmem:[#allocation3 + $0x100] sm:$0xff] %vm43, %v5425
    %6089 = vst.msk [vmem:[#allocation3 + $0x128] sm:$0xff] %vm43, %v5426
    %6090 = vst.msk [vmem:[#allocation3 + $0x150] sm:$0xff] %vm43, %v5427
    %6091 = vst.msk [vmem:[#allocation3 + $0x178] sm:$0xff] %vm43, %v5428
    %6092 = vst.msk [vmem:[#allocation3 + $0x1a0] sm:$0xff] %vm43, %v5429
    %6093 = vst.msk [vmem:[#allocation3 + $0x1c8] sm:$0xff] %vm43, %v5430
    %6094 = vst.msk [vmem:[#allocation3 + $0x1f0] sm:$0xff] %vm43, %v5431
    %6095 = vst.msk [vmem:[#allocation3 + $0x218] sm:$0xff] %vm43, %v5432
    %6096 = vst.msk [vmem:[#allocation3 + $0x240] sm:$0xff] %vm43, %v5433
    %6097 = vst.msk [vmem:[#allocation3 + $0x268] sm:$0xff] %vm43, %v6080
    %6098 = vst.msk [vmem:[#allocation3 + $0x290] sm:$0xff] %vm43, %v5435
    %6099 = vst.msk [vmem:[#allocation3 + $0x2b8] sm:$0xff] %vm43, %v5436
    %6100 = vst.msk [vmem:[#allocation3 + $0x2e0] sm:$0xff] %vm43, %v5437
    %6101 = vst.msk [vmem:[#allocation3 + $0x308] sm:$0xff] %vm43, %v5438
    %6102 = vst.msk [vmem:[#allocation3 + $0x330] sm:$0xff] %vm43, %v5439
    %6103 = vst.msk [vmem:[#allocation3 + $0x358] sm:$0xff] %vm43, %v5440
    %6104 = vst.msk [vmem:[#allocation3 + $0x380] sm:$0xff] %vm43, %v5441
    %6105 = vst.msk [vmem:[#allocation3 + $0x3a8] sm:$0xff] %vm43, %v5442
    %6106 = vst.msk [vmem:[#allocation3 + $0x3d0] sm:$0xff] %vm43, %v5443
    %6107 = vst.msk [vmem:[#allocation3 + $0x3f8] sm:$0xff] %vm43, %v5444
    %6108 = vst.msk [vmem:[#allocation3 + $0x420] sm:$0xff] %vm43, %v5445
    %6109 = vst.msk [vmem:[#allocation3 + $0x448] sm:$0xff] %vm43, %v5446
    %6110 = vst.msk [vmem:[#allocation3 + $0x470] sm:$0xff] %vm43, %v5447
    %6111 = vst.msk [vmem:[#allocation3 + $0x498] sm:$0xff] %vm43, %v5448
    %6112 = vst.msk [vmem:[#allocation3 + $0x4c0] sm:$0xff] %vm43, %v5449
    %6113 = vst.msk [vmem:[#allocation3 + $0x4e8] sm:$0xff] %vm43, %v6081
    %v6114 = vrot.slane %v4974, 2
    %v6115 = vrot.slane %v4975, 2
    %v6116 = vsel %vm2072, %v6114, %v6115
    %v6117 = vrot.slane %v4976, 2
    %v6118 = vsel %vm2072, %v6115, %v6117
    %v6119 = vrot.slane %v5028, 2
    %v6120 = vrot.slane %v5029, 2
    %v6121 = vsel %vm2072, %v6119, %v6120
    %v6122 = vrot.slane %v5030, 2
    %v6123 = vsel %vm2072, %v6120, %v6122
    %v6128 = vpack.c.bf16 %v6118, %v6116
    %v6129 = vpack.c.bf16 %v6123, %v6121
    %6162 = vrot.lane.b32.xlu0 %v5835, 64
    %v6163 = vpop.permute.xlu0 %6162
    %6164 = vrot.lane.b32.xlu0 %v5836, 64
    %v6165 = vpop.permute.xlu0 %6164
    %6166 = vrot.lane.b32.xlu0 %v5837, 64
    %v6167 = vpop.permute.xlu0 %6166
    %6168 = vrot.lane.b32.xlu0 %v5838, 64
    %v6169 = vpop.permute.xlu0 %6168
    %6170 = vrot.lane.b32.xlu0 %v5839, 64
    %v6171 = vpop.permute.xlu0 %6170
    %6172 = vrot.lane.b32.xlu0 %v5840, 64
    %v6173 = vpop.permute.xlu0 %6172
    %6174 = vrot.lane.b32.xlu0 %v5841, 64
    %v6175 = vpop.permute.xlu0 %6174
    %6176 = vrot.lane.b32.xlu0 %v5842, 64
    %v6177 = vpop.permute.xlu0 %6176
    %6178 = vrot.lane.b32.xlu0 %v5843, 64
    %v6179 = vpop.permute.xlu0 %6178
    %6180 = vrot.lane.b32.xlu0 %v5844, 64
    %v6181 = vpop.permute.xlu0 %6180
    %6182 = vrot.lane.b32.xlu0 %v5845, 64
    %v6183 = vpop.permute.xlu0 %6182
    %6184 = vrot.lane.b32.xlu0 %v5846, 64
    %v6185 = vpop.permute.xlu0 %6184
    %6186 = vrot.lane.b32.xlu0 %v5847, 64
    %v6187 = vpop.permute.xlu0 %6186
    %6188 = vrot.lane.b32.xlu0 %v5848, 64
    %v6189 = vpop.permute.xlu0 %6188
    %6190 = vrot.lane.b32.xlu0 %v5849, 64
    %v6191 = vpop.permute.xlu0 %6190
    %6192 = vrot.lane.b32.xlu0 %v6128, 64
    %v6193 = vpop.permute.xlu0 %6192
    %6194 = vrot.lane.b32.xlu0 %v5851, 64
    %v6195 = vpop.permute.xlu0 %6194
    %6196 = vrot.lane.b32.xlu0 %v5852, 64
    %v6197 = vpop.permute.xlu0 %6196
    %6198 = vrot.lane.b32.xlu0 %v5853, 64
    %v6199 = vpop.permute.xlu0 %6198
    %6200 = vrot.lane.b32.xlu0 %v5854, 64
    %v6201 = vpop.permute.xlu0 %6200
    %6202 = vrot.lane.b32.xlu0 %v5855, 64
    %v6203 = vpop.permute.xlu0 %6202
    %6204 = vrot.lane.b32.xlu0 %v5856, 64
    %v6205 = vpop.permute.xlu0 %6204
    %6206 = vrot.lane.b32.xlu0 %v5857, 64
    %v6207 = vpop.permute.xlu0 %6206
    %6208 = vrot.lane.b32.xlu0 %v5858, 64
    %v6209 = vpop.permute.xlu0 %6208
    %6210 = vrot.lane.b32.xlu0 %v5859, 64
    %v6211 = vpop.permute.xlu0 %6210
    %6212 = vrot.lane.b32.xlu0 %v5860, 64
    %v6213 = vpop.permute.xlu0 %6212
    %6214 = vrot.lane.b32.xlu0 %v5861, 64
    %v6215 = vpop.permute.xlu0 %6214
    %6216 = vrot.lane.b32.xlu0 %v5862, 64
    %v6217 = vpop.permute.xlu0 %6216
    %6218 = vrot.lane.b32.xlu0 %v5863, 64
    %v6219 = vpop.permute.xlu0 %6218
    %6220 = vrot.lane.b32.xlu0 %v5864, 64
    %v6221 = vpop.permute.xlu0 %6220
    %6222 = vrot.lane.b32.xlu0 %v5865, 64
    %v6223 = vpop.permute.xlu0 %6222
    %6224 = vrot.lane.b32.xlu0 %v6129, 64
    %v6225 = vpop.permute.xlu0 %6224
    %6258 = vst.msk [vmem:[#allocation3 + $0x10] sm:$0xff] %vm2039, %v6163
    %6259 = vst.msk [vmem:[#allocation3 + $0x38] sm:$0xff] %vm2039, %v6165
    %6260 = vst.msk [vmem:[#allocation3 + $0x60] sm:$0xff] %vm2039, %v6167
    %6261 = vst.msk [vmem:[#allocation3 + $0x88] sm:$0xff] %vm2039, %v6169
    %6262 = vst.msk [vmem:[#allocation3 + $0xb0] sm:$0xff] %vm2039, %v6171
    %6263 = vst.msk [vmem:[#allocation3 + $0xd8] sm:$0xff] %vm2039, %v6173
    %6264 = vst.msk [vmem:[#allocation3 + $0x100] sm:$0xff] %vm2039, %v6175
    %6265 = vst.msk [vmem:[#allocation3 + $0x128] sm:$0xff] %vm2039, %v6177
    %6266 = vst.msk [vmem:[#allocation3 + $0x150] sm:$0xff] %vm2039, %v6179
    %6267 = vst.msk [vmem:[#allocation3 + $0x178] sm:$0xff] %vm2039, %v6181
    %6268 = vst.msk [vmem:[#allocation3 + $0x1a0] sm:$0xff] %vm2039, %v6183
    %6269 = vst.msk [vmem:[#allocation3 + $0x1c8] sm:$0xff] %vm2039, %v6185
    %6270 = vst.msk [vmem:[#allocation3 + $0x1f0] sm:$0xff] %vm2039, %v6187
    %6271 = vst.msk [vmem:[#allocation3 + $0x218] sm:$0xff] %vm2039, %v6189
    %6272 = vst.msk [vmem:[#allocation3 + $0x240] sm:$0xff] %vm2039, %v6191
    %6273 = vst.msk [vmem:[#allocation3 + $0x268] sm:$0xff] %vm2039, %v6193
    %6274 = vst.msk [vmem:[#allocation3 + $0x290] sm:$0xff] %vm2039, %v6195
    %6275 = vst.msk [vmem:[#allocation3 + $0x2b8] sm:$0xff] %vm2039, %v6197
    %6276 = vst.msk [vmem:[#allocation3 + $0x2e0] sm:$0xff] %vm2039, %v6199
    %6277 = vst.msk [vmem:[#allocation3 + $0x308] sm:$0xff] %vm2039, %v6201
    %6278 = vst.msk [vmem:[#allocation3 + $0x330] sm:$0xff] %vm2039, %v6203
    %6279 = vst.msk [vmem:[#allocation3 + $0x358] sm:$0xff] %vm2039, %v6205
    %6280 = vst.msk [vmem:[#allocation3 + $0x380] sm:$0xff] %vm2039, %v6207
    %6281 = vst.msk [vmem:[#allocation3 + $0x3a8] sm:$0xff] %vm2039, %v6209
    %6282 = vst.msk [vmem:[#allocation3 + $0x3d0] sm:$0xff] %vm2039, %v6211
    %6283 = vst.msk [vmem:[#allocation3 + $0x3f8] sm:$0xff] %vm2039, %v6213
    %6284 = vst.msk [vmem:[#allocation3 + $0x420] sm:$0xff] %vm2039, %v6215
    %6285 = vst.msk [vmem:[#allocation3 + $0x448] sm:$0xff] %vm2039, %v6217
    %6286 = vst.msk [vmem:[#allocation3 + $0x470] sm:$0xff] %vm2039, %v6219
    %6287 = vst.msk [vmem:[#allocation3 + $0x498] sm:$0xff] %vm2039, %v6221
    %6288 = vst.msk [vmem:[#allocation3 + $0x4c0] sm:$0xff] %vm2039, %v6223
    %6289 = vst.msk [vmem:[#allocation3 + $0x4e8] sm:$0xff] %vm2039, %v6225
    %v6290 = vpack.c.bf16 %v4978, %v4977
    %v6291 = vpack.c.bf16 %v5032, %v5031
    %6292 = vst.msk [vmem:[#allocation3 + $0x18] sm:$0xff] %vm43, %v5036
    %6293 = vst.msk [vmem:[#allocation3 + $0x40] sm:$0xff] %vm43, %v5037
    %6294 = vst.msk [vmem:[#allocation3 + $0x68] sm:$0xff] %vm43, %v5038
    %6295 = vst.msk [vmem:[#allocation3 + $0x90] sm:$0xff] %vm43, %v5039
    %6296 = vst.msk [vmem:[#allocation3 + $0xb8] sm:$0xff] %vm43, %v5040
    %6297 = vst.msk [vmem:[#allocation3 + $0xe0] sm:$0xff] %vm43, %v5041
    %6298 = vst.msk [vmem:[#allocation3 + $0x108] sm:$0xff] %vm43, %v5042
    %6299 = vst.msk [vmem:[#allocation3 + $0x130] sm:$0xff] %vm43, %v5043
    %6300 = vst.msk [vmem:[#allocation3 + $0x158] sm:$0xff] %vm43, %v5044
    %6301 = vst.msk [vmem:[#allocation3 + $0x180] sm:$0xff] %vm43, %v5045
    %6302 = vst.msk [vmem:[#allocation3 + $0x1a8] sm:$0xff] %vm43, %v5046
    %6303 = vst.msk [vmem:[#allocation3 + $0x1d0] sm:$0xff] %vm43, %v5047
    %6304 = vst.msk [vmem:[#allocation3 + $0x1f8] sm:$0xff] %vm43, %v5048
    %6305 = vst.msk [vmem:[#allocation3 + $0x220] sm:$0xff] %vm43, %v5049
    %6306 = vst.msk [vmem:[#allocation3 + $0x248] sm:$0xff] %vm43, %v5898
    %6307 = vst.msk [vmem:[#allocation3 + $0x270] sm:$0xff] %vm43, %v6290
    %6308 = vst.msk [vmem:[#allocation3 + $0x298] sm:$0xff] %vm43, %v5052
    %6309 = vst.msk [vmem:[#allocation3 + $0x2c0] sm:$0xff] %vm43, %v5053
    %6310 = vst.msk [vmem:[#allocation3 + $0x2e8] sm:$0xff] %vm43, %v5054
    %6311 = vst.msk [vmem:[#allocation3 + $0x310] sm:$0xff] %vm43, %v5055
    %6312 = vst.msk [vmem:[#allocation3 + $0x338] sm:$0xff] %vm43, %v5056
    %6313 = vst.msk [vmem:[#allocation3 + $0x360] sm:$0xff] %vm43, %v5057
    %6314 = vst.msk [vmem:[#allocation3 + $0x388] sm:$0xff] %vm43, %v5058
    %6315 = vst.msk [vmem:[#allocation3 + $0x3b0] sm:$0xff] %vm43, %v5059
    %6316 = vst.msk [vmem:[#allocation3 + $0x3d8] sm:$0xff] %vm43, %v5060
    %6317 = vst.msk [vmem:[#allocation3 + $0x400] sm:$0xff] %vm43, %v5061
    %6318 = vst.msk [vmem:[#allocation3 + $0x428] sm:$0xff] %vm43, %v5062
    %6319 = vst.msk [vmem:[#allocation3 + $0x450] sm:$0xff] %vm43, %v5063
    %6320 = vst.msk [vmem:[#allocation3 + $0x478] sm:$0xff] %vm43, %v5064
    %6321 = vst.msk [vmem:[#allocation3 + $0x4a0] sm:$0xff] %vm43, %v5065
    %6322 = vst.msk [vmem:[#allocation3 + $0x4c8] sm:$0xff] %vm43, %v5899
    %6323 = vst.msk [vmem:[#allocation3 + $0x4f0] sm:$0xff] %vm43, %v6291
    %v6330 = vrot.slane %v4977, 1
    %v6331 = vrot.slane %v4978, 1
    %v6332 = vsel %vm1654, %v6330, %v6331
    %v6333 = vrot.slane %v4979, 1
    %v6334 = vsel %vm1654, %v6331, %v6333
    %v6335 = vrot.slane %v5031, 1
    %v6336 = vrot.slane %v5032, 1
    %v6337 = vsel %vm1654, %v6335, %v6336
    %v6338 = vrot.slane %v5033, 1
    %v6339 = vsel %vm1654, %v6336, %v6338
    %v6344 = vpack.c.bf16 %v6334, %v6332
    %v6345 = vpack.c.bf16 %v6339, %v6337
    %6350 = vrot.lane.b32.xlu0 %v6080, 64
    %v6351 = vpop.permute.xlu0 %6350
    %6352 = vrot.lane.b32.xlu0 %v6344, 64
    %v6353 = vpop.permute.xlu0 %6352
    %6354 = vrot.lane.b32.xlu0 %v6081, 64
    %v6355 = vpop.permute.xlu0 %6354
    %6356 = vrot.lane.b32.xlu0 %v6345, 64
    %v6357 = vpop.permute.xlu0 %6356
    %6362 = vst.msk [vmem:[#allocation3 + $0x18] sm:$0xff] %vm2039, %v5487
    %6363 = vst.msk [vmem:[#allocation3 + $0x40] sm:$0xff] %vm2039, %v5489
    %6364 = vst.msk [vmem:[#allocation3 + $0x68] sm:$0xff] %vm2039, %v5491
    %6365 = vst.msk [vmem:[#allocation3 + $0x90] sm:$0xff] %vm2039, %v5493
    %6366 = vst.msk [vmem:[#allocation3 + $0xb8] sm:$0xff] %vm2039, %v5495
    %6367 = vst.msk [vmem:[#allocation3 + $0xe0] sm:$0xff] %vm2039, %v5497
    %6368 = vst.msk [vmem:[#allocation3 + $0x108] sm:$0xff] %vm2039, %v5499
    %6369 = vst.msk [vmem:[#allocation3 + $0x130] sm:$0xff] %vm2039, %v5501
    %6370 = vst.msk [vmem:[#allocation3 + $0x158] sm:$0xff] %vm2039, %v5503
    %6371 = vst.msk [vmem:[#allocation3 + $0x180] sm:$0xff] %vm2039, %v5505
    %6372 = vst.msk [vmem:[#allocation3 + $0x1a8] sm:$0xff] %vm2039, %v5507
    %6373 = vst.msk [vmem:[#allocation3 + $0x1d0] sm:$0xff] %vm2039, %v5509
    %6374 = vst.msk [vmem:[#allocation3 + $0x1f8] sm:$0xff] %vm2039, %v5511
    %6375 = vst.msk [vmem:[#allocation3 + $0x220] sm:$0xff] %vm2039, %v5513
    %6376 = vst.msk [vmem:[#allocation3 + $0x248] sm:$0xff] %vm2039, %v6351
    %6377 = vst.msk [vmem:[#allocation3 + $0x270] sm:$0xff] %vm2039, %v6353
    %6378 = vst.msk [vmem:[#allocation3 + $0x298] sm:$0xff] %vm2039, %v5519
    %6379 = vst.msk [vmem:[#allocation3 + $0x2c0] sm:$0xff] %vm2039, %v5521
    %6380 = vst.msk [vmem:[#allocation3 + $0x2e8] sm:$0xff] %vm2039, %v5523
    %6381 = vst.msk [vmem:[#allocation3 + $0x310] sm:$0xff] %vm2039, %v5525
    %6382 = vst.msk [vmem:[#allocation3 + $0x338] sm:$0xff] %vm2039, %v5527
    %6383 = vst.msk [vmem:[#allocation3 + $0x360] sm:$0xff] %vm2039, %v5529
    %6384 = vst.msk [vmem:[#allocation3 + $0x388] sm:$0xff] %vm2039, %v5531
    %6385 = vst.msk [vmem:[#allocation3 + $0x3b0] sm:$0xff] %vm2039, %v5533
    %6386 = vst.msk [vmem:[#allocation3 + $0x3d8] sm:$0xff] %vm2039, %v5535
    %6387 = vst.msk [vmem:[#allocation3 + $0x400] sm:$0xff] %vm2039, %v5537
    %6388 = vst.msk [vmem:[#allocation3 + $0x428] sm:$0xff] %vm2039, %v5539
    %6389 = vst.msk [vmem:[#allocation3 + $0x450] sm:$0xff] %vm2039, %v5541
    %6390 = vst.msk [vmem:[#allocation3 + $0x478] sm:$0xff] %vm2039, %v5543
    %6391 = vst.msk [vmem:[#allocation3 + $0x4a0] sm:$0xff] %vm2039, %v5545
    %6392 = vst.msk [vmem:[#allocation3 + $0x4c8] sm:$0xff] %vm2039, %v6355
    %6393 = vst.msk [vmem:[#allocation3 + $0x4f0] sm:$0xff] %vm2039, %v6357
    %v6394 = vrot.slane %v4977, 2
    %v6395 = vrot.slane %v4978, 2
    %v6396 = vsel %vm2072, %v6394, %v6395
    %v6397 = vrot.slane %v4979, 2
    %v6398 = vsel %vm2072, %v6395, %v6397
    %v6399 = vrot.slane %v5031, 2
    %v6400 = vrot.slane %v5032, 2
    %v6401 = vsel %vm2072, %v6399, %v6400
    %v6402 = vrot.slane %v5033, 2
    %v6403 = vsel %vm2072, %v6400, %v6402
    %v6408 = vpack.c.bf16 %v6398, %v6396
    %v6409 = vpack.c.bf16 %v6403, %v6401
    %6410 = vst.msk [vmem:[#allocation3 + $0x20] sm:$0xff] %vm43, %v5836
    %6411 = vst.msk [vmem:[#allocation3 + $0x48] sm:$0xff] %vm43, %v5837
    %6412 = vst.msk [vmem:[#allocation3 + $0x70] sm:$0xff] %vm43, %v5838
    %6413 = vst.msk [vmem:[#allocation3 + $0x98] sm:$0xff] %vm43, %v5839
    %6414 = vst.msk [vmem:[#allocation3 + $0xc0] sm:$0xff] %vm43, %v5840
    %6415 = vst.msk [vmem:[#allocation3 + $0xe8] sm:$0xff] %vm43, %v5841
    %6416 = vst.msk [vmem:[#allocation3 + $0x110] sm:$0xff] %vm43, %v5842
    %6417 = vst.msk [vmem:[#allocation3 + $0x138] sm:$0xff] %vm43, %v5843
    %6418 = vst.msk [vmem:[#allocation3 + $0x160] sm:$0xff] %vm43, %v5844
    %6419 = vst.msk [vmem:[#allocation3 + $0x188] sm:$0xff] %vm43, %v5845
    %6420 = vst.msk [vmem:[#allocation3 + $0x1b0] sm:$0xff] %vm43, %v5846
    %6421 = vst.msk [vmem:[#allocation3 + $0x1d8] sm:$0xff] %vm43, %v5847
    %6422 = vst.msk [vmem:[#allocation3 + $0x200] sm:$0xff] %vm43, %v5848
    %6423 = vst.msk [vmem:[#allocation3 + $0x228] sm:$0xff] %vm43, %v5849
    %6424 = vst.msk [vmem:[#allocation3 + $0x250] sm:$0xff] %vm43, %v6128
    %6425 = vst.msk [vmem:[#allocation3 + $0x278] sm:$0xff] %vm43, %v6408
    %6426 = vst.msk [vmem:[#allocation3 + $0x2a0] sm:$0xff] %vm43, %v5852
    %6427 = vst.msk [vmem:[#allocation3 + $0x2c8] sm:$0xff] %vm43, %v5853
    %6428 = vst.msk [vmem:[#allocation3 + $0x2f0] sm:$0xff] %vm43, %v5854
    %6429 = vst.msk [vmem:[#allocation3 + $0x318] sm:$0xff] %vm43, %v5855
    %6430 = vst.msk [vmem:[#allocation3 + $0x340] sm:$0xff] %vm43, %v5856
    %6431 = vst.msk [vmem:[#allocation3 + $0x368] sm:$0xff] %vm43, %v5857
    %6432 = vst.msk [vmem:[#allocation3 + $0x390] sm:$0xff] %vm43, %v5858
    %6433 = vst.msk [vmem:[#allocation3 + $0x3b8] sm:$0xff] %vm43, %v5859
    %6434 = vst.msk [vmem:[#allocation3 + $0x3e0] sm:$0xff] %vm43, %v5860
    %6435 = vst.msk [vmem:[#allocation3 + $0x408] sm:$0xff] %vm43, %v5861
    %6436 = vst.msk [vmem:[#allocation3 + $0x430] sm:$0xff] %vm43, %v5862
    %6437 = vst.msk [vmem:[#allocation3 + $0x458] sm:$0xff] %vm43, %v5863
    %6438 = vst.msk [vmem:[#allocation3 + $0x480] sm:$0xff] %vm43, %v5864
    %6439 = vst.msk [vmem:[#allocation3 + $0x4a8] sm:$0xff] %vm43, %v5865
    %6440 = vst.msk [vmem:[#allocation3 + $0x4d0] sm:$0xff] %vm43, %v6129
    %6441 = vst.msk [vmem:[#allocation3 + $0x4f8] sm:$0xff] %vm43, %v6409
    %v6442 = vld [vmem:[#allocation3] sm:$0xff]
    %v6443 = vld [vmem:[#allocation3 + $0x8] sm:$0xff]
    %v6444 = vld [vmem:[#allocation3 + $0x10] sm:$0xff]
    %v6445 = vld [vmem:[#allocation3 + $0x18] sm:$0xff]
    %v6446 = vld [vmem:[#allocation3 + $0x20] sm:$0xff]
    %v6447 = vld [vmem:[#allocation3 + $0x28] sm:$0xff]
    %v6448 = vld [vmem:[#allocation3 + $0x30] sm:$0xff]
    %v6449 = vld [vmem:[#allocation3 + $0x38] sm:$0xff]
    %v6450 = vld [vmem:[#allocation3 + $0x40] sm:$0xff]
    %v6451 = vld [vmem:[#allocation3 + $0x48] sm:$0xff]
    %v6452 = vld [vmem:[#allocation3 + $0x50] sm:$0xff]
    %v6453 = vld [vmem:[#allocation3 + $0x58] sm:$0xff]
    %v6454 = vld [vmem:[#allocation3 + $0x60] sm:$0xff]
    %v6455 = vld [vmem:[#allocation3 + $0x68] sm:$0xff]
    %v6456 = vld [vmem:[#allocation3 + $0x70] sm:$0xff]
    %v6457 = vld [vmem:[#allocation3 + $0x78] sm:$0xff]
    %v6458 = vld [vmem:[#allocation3 + $0x80] sm:$0xff]
    %v6459 = vld [vmem:[#allocation3 + $0x88] sm:$0xff]
    %v6460 = vld [vmem:[#allocation3 + $0x90] sm:$0xff]
    %v6461 = vld [vmem:[#allocation3 + $0x98] sm:$0xff]
    %v6462 = vld [vmem:[#allocation3 + $0xa0] sm:$0xff]
    %v6463 = vld [vmem:[#allocation3 + $0xa8] sm:$0xff]
    %v6464 = vld [vmem:[#allocation3 + $0xb0] sm:$0xff]
    %v6465 = vld [vmem:[#allocation3 + $0xb8] sm:$0xff]
    %v6466 = vld [vmem:[#allocation3 + $0xc0] sm:$0xff]
    %v6467 = vld [vmem:[#allocation3 + $0xc8] sm:$0xff]
    %v6468 = vld [vmem:[#allocation3 + $0xd0] sm:$0xff]
    %v6469 = vld [vmem:[#allocation3 + $0xd8] sm:$0xff]
    %v6470 = vld [vmem:[#allocation3 + $0xe0] sm:$0xff]
    %v6471 = vld [vmem:[#allocation3 + $0xe8] sm:$0xff]
    %v6472 = vld [vmem:[#allocation3 + $0xf0] sm:$0xff]
    %v6473 = vld [vmem:[#allocation3 + $0xf8] sm:$0xff]
    %v6474 = vld [vmem:[#allocation3 + $0x100] sm:$0xff]
    %v6475 = vld [vmem:[#allocation3 + $0x108] sm:$0xff]
    %v6476 = vld [vmem:[#allocation3 + $0x110] sm:$0xff]
    %v6477 = vld [vmem:[#allocation3 + $0x118] sm:$0xff]
    %v6478 = vld [vmem:[#allocation3 + $0x120] sm:$0xff]
    %v6479 = vld [vmem:[#allocation3 + $0x128] sm:$0xff]
    %v6480 = vld [vmem:[#allocation3 + $0x130] sm:$0xff]
    %v6481 = vld [vmem:[#allocation3 + $0x138] sm:$0xff]
    %v6482 = vld [vmem:[#allocation3 + $0x140] sm:$0xff]
    %v6483 = vld [vmem:[#allocation3 + $0x148] sm:$0xff]
    %v6484 = vld [vmem:[#allocation3 + $0x150] sm:$0xff]
    %v6485 = vld [vmem:[#allocation3 + $0x158] sm:$0xff]
    %v6486 = vld [vmem:[#allocation3 + $0x160] sm:$0xff]
    %v6487 = vld [vmem:[#allocation3 + $0x168] sm:$0xff]
    %v6488 = vld [vmem:[#allocation3 + $0x170] sm:$0xff]
    %v6489 = vld [vmem:[#allocation3 + $0x178] sm:$0xff]
    %v6490 = vld [vmem:[#allocation3 + $0x180] sm:$0xff]
    %v6491 = vld [vmem:[#allocation3 + $0x188] sm:$0xff]
    %v6492 = vld [vmem:[#allocation3 + $0x190] sm:$0xff]
    %v6493 = vld [vmem:[#allocation3 + $0x198] sm:$0xff]
    %v6494 = vld [vmem:[#allocation3 + $0x1a0] sm:$0xff]
    %v6495 = vld [vmem:[#allocation3 + $0x1a8] sm:$0xff]
    %v6496 = vld [vmem:[#allocation3 + $0x1b0] sm:$0xff]
    %v6497 = vld [vmem:[#allocation3 + $0x1b8] sm:$0xff]
    %v6498 = vld [vmem:[#allocation3 + $0x1c0] sm:$0xff]
    %v6499 = vld [vmem:[#allocation3 + $0x1c8] sm:$0xff]
    %v6500 = vld [vmem:[#allocation3 + $0x1d0] sm:$0xff]
    %v6501 = vld [vmem:[#allocation3 + $0x1d8] sm:$0xff]
    %v6502 = vld [vmem:[#allocation3 + $0x1e0] sm:$0xff]
    %v6503 = vld [vmem:[#allocation3 + $0x1e8] sm:$0xff]
    %v6504 = vld [vmem:[#allocation3 + $0x1f0] sm:$0xff]
    %v6505 = vld [vmem:[#allocation3 + $0x1f8] sm:$0xff]
    %v6506 = vld [vmem:[#allocation3 + $0x200] sm:$0xff]
    %v6507 = vld [vmem:[#allocation3 + $0x208] sm:$0xff]
    %v6508 = vld [vmem:[#allocation3 + $0x210] sm:$0xff]
    %v6509 = vld [vmem:[#allocation3 + $0x218] sm:$0xff]
    %v6510 = vld [vmem:[#allocation3 + $0x220] sm:$0xff]
    %v6511 = vld [vmem:[#allocation3 + $0x228] sm:$0xff]
    %v6512 = vld [vmem:[#allocation3 + $0x230] sm:$0xff]
    %v6513 = vld [vmem:[#allocation3 + $0x238] sm:$0xff]
    %v6514 = vld [vmem:[#allocation3 + $0x240] sm:$0xff]
    %v6515 = vld [vmem:[#allocation3 + $0x248] sm:$0xff]
    %v6516 = vld [vmem:[#allocation3 + $0x250] sm:$0xff]
    %v6517 = vld [vmem:[#allocation3 + $0x258] sm:$0xff]
    %v6518 = vld [vmem:[#allocation3 + $0x260] sm:$0xff]
    %v6519 = vld [vmem:[#allocation3 + $0x268] sm:$0xff]
    %v6520 = vld [vmem:[#allocation3 + $0x270] sm:$0xff]
    %v6521 = vld [vmem:[#allocation3 + $0x278] sm:$0xff]
    %v6522 = vld [vmem:[#allocation3 + $0x280] sm:$0xff]
    %v6523 = vld [vmem:[#allocation3 + $0x288] sm:$0xff]
    %v6524 = vld [vmem:[#allocation3 + $0x290] sm:$0xff]
    %v6525 = vld [vmem:[#allocation3 + $0x298] sm:$0xff]
    %v6526 = vld [vmem:[#allocation3 + $0x2a0] sm:$0xff]
    %v6527 = vld [vmem:[#allocation3 + $0x2a8] sm:$0xff]
    %v6528 = vld [vmem:[#allocation3 + $0x2b0] sm:$0xff]
    %v6529 = vld [vmem:[#allocation3 + $0x2b8] sm:$0xff]
    %v6530 = vld [vmem:[#allocation3 + $0x2c0] sm:$0xff]
    %v6531 = vld [vmem:[#allocation3 + $0x2c8] sm:$0xff]
    %v6532 = vld [vmem:[#allocation3 + $0x2d0] sm:$0xff]
    %v6533 = vld [vmem:[#allocation3 + $0x2d8] sm:$0xff]
    %v6534 = vld [vmem:[#allocation3 + $0x2e0] sm:$0xff]
    %v6535 = vld [vmem:[#allocation3 + $0x2e8] sm:$0xff]
    %v6536 = vld [vmem:[#allocation3 + $0x2f0] sm:$0xff]
    %v6537 = vld [vmem:[#allocation3 + $0x2f8] sm:$0xff]
    %v6538 = vld [vmem:[#allocation3 + $0x300] sm:$0xff]
    %v6539 = vld [vmem:[#allocation3 + $0x308] sm:$0xff]
    %v6540 = vld [vmem:[#allocation3 + $0x310] sm:$0xff]
    %v6541 = vld [vmem:[#allocation3 + $0x318] sm:$0xff]
    %v6542 = vld [vmem:[#allocation3 + $0x320] sm:$0xff]
    %v6543 = vld [vmem:[#allocation3 + $0x328] sm:$0xff]
    %v6544 = vld [vmem:[#allocation3 + $0x330] sm:$0xff]
    %v6545 = vld [vmem:[#allocation3 + $0x338] sm:$0xff]
    %v6546 = vld [vmem:[#allocation3 + $0x340] sm:$0xff]
    %v6547 = vld [vmem:[#allocation3 + $0x348] sm:$0xff]
    %v6548 = vld [vmem:[#allocation3 + $0x350] sm:$0xff]
    %v6549 = vld [vmem:[#allocation3 + $0x358] sm:$0xff]
    %v6550 = vld [vmem:[#allocation3 + $0x360] sm:$0xff]
    %v6551 = vld [vmem:[#allocation3 + $0x368] sm:$0xff]
    %v6552 = vld [vmem:[#allocation3 + $0x370] sm:$0xff]
    %v6553 = vld [vmem:[#allocation3 + $0x378] sm:$0xff]
    %v6554 = vld [vmem:[#allocation3 + $0x380] sm:$0xff]
    %v6555 = vld [vmem:[#allocation3 + $0x388] sm:$0xff]
    %v6556 = vld [vmem:[#allocation3 + $0x390] sm:$0xff]
    %v6557 = vld [vmem:[#allocation3 + $0x398] sm:$0xff]
    %v6558 = vld [vmem:[#allocation3 + $0x3a0] sm:$0xff]
    %v6559 = vld [vmem:[#allocation3 + $0x3a8] sm:$0xff]
    %v6560 = vld [vmem:[#allocation3 + $0x3b0] sm:$0xff]
    %v6561 = vld [vmem:[#allocation3 + $0x3b8] sm:$0xff]
    %v6562 = vld [vmem:[#allocation3 + $0x3c0] sm:$0xff]
    %v6563 = vld [vmem:[#allocation3 + $0x3c8] sm:$0xff]
    %v6564 = vld [vmem:[#allocation3 + $0x3d0] sm:$0xff]
    %v6565 = vld [vmem:[#allocation3 + $0x3d8] sm:$0xff]
    %v6566 = vld [vmem:[#allocation3 + $0x3e0] sm:$0xff]
    %v6567 = vld [vmem:[#allocation3 + $0x3e8] sm:$0xff]
    %v6568 = vld [vmem:[#allocation3 + $0x3f0] sm:$0xff]
    %v6569 = vld [vmem:[#allocation3 + $0x3f8] sm:$0xff]
    %v6570 = vld [vmem:[#allocation3 + $0x400] sm:$0xff]
    %v6571 = vld [vmem:[#allocation3 + $0x408] sm:$0xff]
    %v6572 = vld [vmem:[#allocation3 + $0x410] sm:$0xff]
    %v6573 = vld [vmem:[#allocation3 + $0x418] sm:$0xff]
    %v6574 = vld [vmem:[#allocation3 + $0x420] sm:$0xff]
    %v6575 = vld [vmem:[#allocation3 + $0x428] sm:$0xff]
    %v6576 = vld [vmem:[#allocation3 + $0x430] sm:$0xff]
    %v6577 = vld [vmem:[#allocation3 + $0x438] sm:$0xff]
    %v6578 = vld [vmem:[#allocation3 + $0x440] sm:$0xff]
    %v6579 = vld [vmem:[#allocation3 + $0x448] sm:$0xff]
    %v6580 = vld [vmem:[#allocation3 + $0x450] sm:$0xff]
    %v6581 = vld [vmem:[#allocation3 + $0x458] sm:$0xff]
    %v6582 = vld [vmem:[#allocation3 + $0x460] sm:$0xff]
    %v6583 = vld [vmem:[#allocation3 + $0x468] sm:$0xff]
    %v6584 = vld [vmem:[#allocation3 + $0x470] sm:$0xff]
    %v6585 = vld [vmem:[#allocation3 + $0x478] sm:$0xff]
    %v6586 = vld [vmem:[#allocation3 + $0x480] sm:$0xff]
    %v6587 = vld [vmem:[#allocation3 + $0x488] sm:$0xff]
    %v6588 = vld [vmem:[#allocation3 + $0x490] sm:$0xff]
    %v6589 = vld [vmem:[#allocation3 + $0x498] sm:$0xff]
    %v6590 = vld [vmem:[#allocation3 + $0x4a0] sm:$0xff]
    %v6591 = vld [vmem:[#allocation3 + $0x4a8] sm:$0xff]
    %v6592 = vld [vmem:[#allocation3 + $0x4b0] sm:$0xff]
    %v6593 = vld [vmem:[#allocation3 + $0x4b8] sm:$0xff]
    %v6594 = vld [vmem:[#allocation3 + $0x4c0] sm:$0xff]
    %v6595 = vld [vmem:[#allocation3 + $0x4c8] sm:$0xff]
    %v6596 = vld [vmem:[#allocation3 + $0x4d0] sm:$0xff]
    %v6597 = vld [vmem:[#allocation3 + $0x4d8] sm:$0xff]
    %v6598 = vld [vmem:[#allocation3 + $0x4e0] sm:$0xff]
    %v6599 = vld [vmem:[#allocation3 + $0x4e8] sm:$0xff]
    %v6600 = vld [vmem:[#allocation3 + $0x4f0] sm:$0xff]
    %v6601 = vld [vmem:[#allocation3 + $0x4f8] sm:$0xff]
    %v6602 = vld [vmem:[%s7] sm:$0xf]
    %v6603 = vld [vmem:[%s7 + $0x4] sm:$0xf]
    %v6604 = vld [vmem:[%s7 + $0x8] sm:$0xf]
    %v6605 = vld [vmem:[%s7 + $0xc] sm:$0xf]
    %v6606 = vld [vmem:[%s7 + $0x10] sm:$0xf]
    %v6607 = vld [vmem:[%s7 + $0x14] sm:$0xf]
    %v6608 = vld [vmem:[%s7 + $0x18] sm:$0xf]
    %v6609 = vld [vmem:[%s7 + $0x1c] sm:$0xf]
    %v6610 = vld [vmem:[%s7 + $0x20] sm:$0xf]
    %v6611 = vld [vmem:[%s7 + $0x24] sm:$0xf]
    %v6612 = vld [vmem:[%s7 + $0x28] sm:$0xf]
    %v6613 = vld [vmem:[%s7 + $0x2c] sm:$0xf]
    %v6614 = vld [vmem:[%s7 + $0x30] sm:$0xf]
    %v6615 = vld [vmem:[%s7 + $0x34] sm:$0xf]
    %v6616 = vld [vmem:[%s7 + $0x38] sm:$0xf]
    %v6617 = vld [vmem:[%s7 + $0x3c] sm:$0xf]
    %v6618 = vld [vmem:[%s7 + $0x40] sm:$0xf]
    %v6619 = vld [vmem:[%s7 + $0x44] sm:$0xf]
    %v6620 = vld [vmem:[%s7 + $0x48] sm:$0xf]
    %v6621 = vld [vmem:[%s7 + $0x4c] sm:$0xf]
    %v6622 = vld [vmem:[%s7 + $0x50] sm:$0xf]
    %v6623 = vld [vmem:[%s7 + $0x54] sm:$0xf]
    %v6624 = vld [vmem:[%s7 + $0x58] sm:$0xf]
    %v6625 = vld [vmem:[%s7 + $0x5c] sm:$0xf]
    %v6626 = vld [vmem:[%s7 + $0x60] sm:$0xf]
    %v6627 = vld [vmem:[%s7 + $0x64] sm:$0xf]
    %v6628 = vld [vmem:[%s7 + $0x68] sm:$0xf]
    %v6629 = vld [vmem:[%s7 + $0x6c] sm:$0xf]
    %v6630 = vld [vmem:[%s7 + $0x70] sm:$0xf]
    %v6631 = vld [vmem:[%s7 + $0x74] sm:$0xf]
    %v6632 = vld [vmem:[%s7 + $0x78] sm:$0xf]
    %v6633 = vld [vmem:[%s7 + $0x7c] sm:$0xf]
    %v6634 = vld [vmem:[%s7 + $0x80] sm:$0xf]
    %v6635 = vld [vmem:[%s7 + $0x84] sm:$0xf]
    %v6636 = vld [vmem:[%s7 + $0x88] sm:$0xf]
    %v6637 = vld [vmem:[%s7 + $0x8c] sm:$0xf]
    %v6638 = vld [vmem:[%s7 + $0x90] sm:$0xf]
    %v6639 = vld [vmem:[%s7 + $0x94] sm:$0xf]
    %v6640 = vld [vmem:[%s7 + $0x98] sm:$0xf]
    %v6641 = vld [vmem:[%s7 + $0x9c] sm:$0xf]
    %v6642 = vld [vmem:[%s7 + $0xa0] sm:$0xf]
    %v6643 = vld [vmem:[%s7 + $0xa4] sm:$0xf]
    %v6644 = vld [vmem:[%s7 + $0xa8] sm:$0xf]
    %v6645 = vld [vmem:[%s7 + $0xac] sm:$0xf]
    %v6646 = vld [vmem:[%s7 + $0xb0] sm:$0xf]
    %v6647 = vld [vmem:[%s7 + $0xb4] sm:$0xf]
    %v6648 = vld [vmem:[%s7 + $0xb8] sm:$0xf]
    %v6649 = vld [vmem:[%s7 + $0xbc] sm:$0xf]
    %v6650 = vld [vmem:[%s7 + $0xc0] sm:$0xf]
    %v6651 = vld [vmem:[%s7 + $0xc4] sm:$0xf]
    %v6652 = vld [vmem:[%s7 + $0xc8] sm:$0xf]
    %v6653 = vld [vmem:[%s7 + $0xcc] sm:$0xf]
    %v6654 = vld [vmem:[%s7 + $0xd0] sm:$0xf]
    %v6655 = vld [vmem:[%s7 + $0xd4] sm:$0xf]
    %v6656 = vld [vmem:[%s7 + $0xd8] sm:$0xf]
    %v6657 = vld [vmem:[%s7 + $0xdc] sm:$0xf]
    %v6658 = vld [vmem:[%s7 + $0xe0] sm:$0xf]
    %v6659 = vld [vmem:[%s7 + $0xe4] sm:$0xf]
    %v6660 = vld [vmem:[%s7 + $0xe8] sm:$0xf]
    %v6661 = vld [vmem:[%s7 + $0xec] sm:$0xf]
    %v6662 = vld [vmem:[%s7 + $0xf0] sm:$0xf]
    %v6663 = vld [vmem:[%s7 + $0xf4] sm:$0xf]
    %v6664 = vld [vmem:[%s7 + $0xf8] sm:$0xf]
    %v6665 = vld [vmem:[%s7 + $0xfc] sm:$0xf]
    %v6666 = vld [vmem:[%s7 + $0x100] sm:$0xf]
    %v6667 = vld [vmem:[%s7 + $0x104] sm:$0xf]
    %v6668 = vld [vmem:[%s7 + $0x108] sm:$0xf]
    %v6669 = vld [vmem:[%s7 + $0x10c] sm:$0xf]
    %v6670 = vld [vmem:[%s7 + $0x110] sm:$0xf]
    %v6671 = vld [vmem:[%s7 + $0x114] sm:$0xf]
    %v6672 = vld [vmem:[%s7 + $0x118] sm:$0xf]
    %v6673 = vld [vmem:[%s7 + $0x11c] sm:$0xf]
    %v6746 = vunpack.c.l.b16 %v6602
    %v6747 = vunpack.c.l.b16 %v6603
    %v6748 = vunpack.c.l.b16 %v6604
    %v6749 = vunpack.c.l.b16 %v6605
    %v6750 = vunpack.c.l.b16 %v6606
    %v6751 = vunpack.c.l.b16 %v6607
    %v6752 = vunpack.c.l.b16 %v6608
    %v6753 = vunpack.c.l.b16 %v6609
    %v6754 = vunpack.c.l.b16 %v6610
    %v6755 = vunpack.c.l.b16 %v6611
    %v6756 = vunpack.c.l.b16 %v6612
    %v6757 = vunpack.c.l.b16 %v6613
    %v6758 = vunpack.c.l.b16 %v6614
    %v6759 = vunpack.c.l.b16 %v6615
    %v6760 = vunpack.c.l.b16 %v6616
    %v6761 = vunpack.c.l.b16 %v6617
    %v6762 = vunpack.c.l.b16 %v6618
    %v6763 = vunpack.c.l.b16 %v6619
    %v6764 = vunpack.c.l.b16 %v6620
    %v6765 = vunpack.c.l.b16 %v6621
    %v6766 = vunpack.c.l.b16 %v6622
    %v6767 = vunpack.c.l.b16 %v6623
    %v6768 = vunpack.c.l.b16 %v6624
    %v6769 = vunpack.c.l.b16 %v6625
    %v6770 = vunpack.c.l.b16 %v6626
    %v6771 = vunpack.c.l.b16 %v6627
    %v6772 = vunpack.c.l.b16 %v6628
    %v6773 = vunpack.c.l.b16 %v6629
    %v6774 = vunpack.c.l.b16 %v6630
    %v6775 = vunpack.c.l.b16 %v6631
    %v6776 = vunpack.c.l.b16 %v6632
    %v6777 = vunpack.c.l.b16 %v6633
    %v6778 = vunpack.c.l.b16 %v6634
    %v6779 = vunpack.c.l.b16 %v6635
    %v6780 = vunpack.c.l.b16 %v6636
    %v6781 = vunpack.c.l.b16 %v6637
    %v6782 = vunpack.c.l.b16 %v6638
    %v6783 = vunpack.c.l.b16 %v6639
    %v6784 = vunpack.c.l.b16 %v6640
    %v6785 = vunpack.c.l.b16 %v6641
    %v6786 = vunpack.c.l.b16 %v6642
    %v6787 = vunpack.c.l.b16 %v6643
    %v6788 = vunpack.c.l.b16 %v6644
    %v6789 = vunpack.c.l.b16 %v6645
    %v6790 = vunpack.c.l.b16 %v6646
    %v6791 = vunpack.c.l.b16 %v6647
    %v6792 = vunpack.c.l.b16 %v6648
    %v6793 = vunpack.c.l.b16 %v6649
    %v6794 = vunpack.c.l.b16 %v6650
    %v6795 = vunpack.c.l.b16 %v6651
    %v6796 = vunpack.c.l.b16 %v6652
    %v6797 = vunpack.c.l.b16 %v6653
    %v6798 = vunpack.c.l.b16 %v6654
    %v6799 = vunpack.c.l.b16 %v6655
    %v6800 = vunpack.c.l.b16 %v6656
    %v6801 = vunpack.c.l.b16 %v6657
    %v6802 = vunpack.c.l.b16 %v6658
    %v6803 = vunpack.c.l.b16 %v6659
    %v6804 = vunpack.c.l.b16 %v6660
    %v6805 = vunpack.c.l.b16 %v6661
    %v6806 = vunpack.c.l.b16 %v6662
    %v6807 = vunpack.c.l.b16 %v6663
    %v6808 = vunpack.c.l.b16 %v6664
    %v6809 = vunpack.c.l.b16 %v6665
    %v6810 = vunpack.c.l.b16 %v6666
    %v6811 = vunpack.c.l.b16 %v6667
    %v6812 = vunpack.c.l.b16 %v6668
    %v6813 = vunpack.c.l.b16 %v6669
    %v6814 = vunpack.c.l.b16 %v6670
    %v6815 = vunpack.c.l.b16 %v6671
    %v6816 = vunpack.c.l.b16 %v6672
    %v6817 = vunpack.c.l.b16 %v6673
    %v6818 = vpack.c.b16 %v6747, %v6746
    %v6819 = vpack.c.b16 %v6749, %v6748
    %v6820 = vpack.c.b16 %v6751, %v6750
    %v6821 = vpack.c.b16 %v6753, %v6752
    %v6822 = vpack.c.b16 %v6755, %v6754
    %v6823 = vpack.c.b16 %v6757, %v6756
    %v6824 = vpack.c.b16 %v6759, %v6758
    %v6825 = vpack.c.b16 %v6761, %v6760
    %v6826 = vpack.c.b16 %v6763, %v6762
    %v6827 = vpack.c.b16 %v6765, %v6764
    %v6828 = vpack.c.b16 %v6767, %v6766
    %v6829 = vpack.c.b16 %v6769, %v6768
    %v6830 = vpack.c.b16 %v6771, %v6770
    %v6831 = vpack.c.b16 %v6773, %v6772
    %v6832 = vpack.c.b16 %v6775, %v6774
    %v6833 = vpack.c.b16 %v6777, %v6776
    %v6834 = vpack.c.b16 %v6779, %v6778
    %v6835 = vpack.c.b16 %v6781, %v6780
    %v6836 = vpack.c.b16 %v6783, %v6782
    %v6837 = vpack.c.b16 %v6785, %v6784
    %v6838 = vpack.c.b16 %v6787, %v6786
    %v6839 = vpack.c.b16 %v6789, %v6788
    %v6840 = vpack.c.b16 %v6791, %v6790
    %v6841 = vpack.c.b16 %v6793, %v6792
    %v6842 = vpack.c.b16 %v6795, %v6794
    %v6843 = vpack.c.b16 %v6797, %v6796
    %v6844 = vpack.c.b16 %v6799, %v6798
    %v6845 = vpack.c.b16 %v6801, %v6800
    %v6846 = vpack.c.b16 %v6803, %v6802
    %v6847 = vpack.c.b16 %v6805, %v6804
    %v6848 = vpack.c.b16 %v6807, %v6806
    %v6849 = vpack.c.b16 %v6809, %v6808
    %v6850 = vpack.c.b16 %v6811, %v6810
    %v6851 = vpack.c.b16 %v6813, %v6812
    %v6852 = vpack.c.b16 %v6815, %v6814
    %v6853 = vpack.c.b16 %v6817, %v6816
    %v6891 = vsel %vm43, %v6446, 0
    %v6894 = vsel %vm43, %v6451, 0
    %v6897 = vsel %vm43, %v6456, 0
    %v6900 = vsel %vm43, %v6461, 0
    %v6903 = vsel %vm43, %v6466, 0
    %v6906 = vsel %vm43, %v6471, 0
    %v6909 = vsel %vm43, %v6476, 0
    %v6912 = vsel %vm43, %v6481, 0
    %v6915 = vsel %vm43, %v6486, 0
    %v6918 = vsel %vm43, %v6491, 0
    %v6921 = vsel %vm43, %v6496, 0
    %v6924 = vsel %vm43, %v6501, 0
    %v6927 = vsel %vm43, %v6506, 0
    %v6930 = vsel %vm43, %v6511, 0
    %v6933 = vsel %vm43, %v6516, 0
    %v6936 = vsel %vm43, %v6521, 0
    %v6939 = vsel %vm43, %v6526, 0
    %v6942 = vsel %vm43, %v6531, 0
    %v6945 = vsel %vm43, %v6536, 0
    %v6948 = vsel %vm43, %v6541, 0
    %v6951 = vsel %vm43, %v6546, 0
    %v6954 = vsel %vm43, %v6551, 0
    %v6957 = vsel %vm43, %v6556, 0
    %v6960 = vsel %vm43, %v6561, 0
    %v6963 = vsel %vm43, %v6566, 0
    %v6966 = vsel %vm43, %v6571, 0
    %v6969 = vsel %vm43, %v6576, 0
    %v6972 = vsel %vm43, %v6581, 0
    %v6975 = vsel %vm43, %v6586, 0
    %v6978 = vsel %vm43, %v6591, 0
    %v6981 = vsel %vm43, %v6596, 0
    %v6984 = vsel %vm43, %v6601, 0
    %6986 = vmatprep.subr.bf16.mxu0 0
    %6987 = vmatpush1.bf16.msra.mxu0 %v6818
    %6988 = vmatprep.subr.bf16.mxu0 0
    %6989 = vmatpush1.bf16.msra.mxu0 %v6819
    %6990 = vmatprep.subr.bf16.mxu0 0
    %6991 = vmatpush1.bf16.msra.mxu0 %v6820
    %6992 = vmatprep.subr.bf16.mxu0 0
    %6993 = vmatpush1.bf16.msra.mxu0 %v6821
    %6994 = vmatprep.subr.bf16.mxu0 0
    %6995 = vmatpush1.bf16.msra.mxu0 %v6822
    %6996 = vmatprep.subr.bf16.mxu0 0
    %6997 = vmatpush1.bf16.msra.mxu0 %v6823
    %6998 = vmatprep.subr.bf16.mxu0 0
    %6999 = vmatpush1.bf16.msra.mxu0 %v6824
    %7000 = vmatprep.subr.bf16.mxu0 0
    %7001 = vmatpush1.bf16.msra.mxu0 %v6825
    %7002 = vmatprep.subr.bf16.mxu0 0
    %7003 = vmatpush1.bf16.msra.mxu0 %v6826
    %7004 = vmatprep.subr.bf16.mxu0 0
    %7005 = vmatpush1.bf16.msra.mxu0 %v6827
    %7006 = vmatprep.subr.bf16.mxu0 0
    %7007 = vmatpush1.bf16.msra.mxu0 %v6828
    %7008 = vmatprep.subr.bf16.mxu0 0
    %7009 = vmatpush1.bf16.msra.mxu0 %v6829
    %7010 = vmatprep.subr.bf16.mxu0 0
    %7011 = vmatpush1.bf16.msra.mxu0 %v6830
    %7012 = vmatprep.subr.bf16.mxu0 0
    %7013 = vmatpush1.bf16.msra.mxu0 %v6831
    %7014 = vmatprep.subr.bf16.mxu0 0
    %7015 = vmatpush1.bf16.msra.mxu0 %v6832
    %7016 = vmatprep.subr.bf16.mxu0 0
    %7017 = vmatpush1.bf16.msra.mxu0 %v6833
    %7018 = vmatprep.mubr.bf16.mxu0 %v6443
    %7019 = vmatmul.mubr.bf16.gmra.mrb[0].mxu0 %v6442
    %v7020 = vpop.f32.mrb[0].mxu0
    %v7021 = vadd.f32 0.0, %v7020
    %v7022 = vpop.f32.mrb[0].mxu0
    %v7023 = vpop.f32.mrb[0].mxu0
    %v7024 = vadd.f32 0.0, %v7023
    %v7025 = vpop.f32.mrb[0].mxu0
    %7026 = vmatprep.mubr.bf16.mxu0 %v6448
    %7027 = vmatmul.mubr.bf16.gmra.mrb[0].mxu0 %v6447
    %v7028 = vpop.f32.mrb[0].mxu0
    %v7029 = vadd.f32 0.0, %v7028
    %v7030 = vpop.f32.mrb[0].mxu0
    %v7031 = vpop.f32.mrb[0].mxu0
    %v7032 = vadd.f32 0.0, %v7031
    %v7033 = vpop.f32.mrb[0].mxu0
    %7034 = vmatprep.mubr.bf16.mxu0 %v6453
    %7035 = vmatmul.mubr.bf16.gmra.mrb[0].mxu0 %v6452
    %v7036 = vpop.f32.mrb[0].mxu0
    %v7037 = vadd.f32 0.0, %v7036
    %v7038 = vpop.f32.mrb[0].mxu0
    %v7039 = vpop.f32.mrb[0].mxu0
    %v7040 = vadd.f32 0.0, %v7039
    %v7041 = vpop.f32.mrb[0].mxu0
    %7042 = vmatprep.mubr.bf16.mxu0 %v6458
    %7043 = vmatmul.mubr.bf16.gmra.mrb[0].mxu0 %v6457
    %v7044 = vpop.f32.mrb[0].mxu0
    %v7045 = vadd.f32 0.0, %v7044
    %v7046 = vpop.f32.mrb[0].mxu0
    %v7047 = vpop.f32.mrb[0].mxu0
    %v7048 = vadd.f32 0.0, %v7047
    %v7049 = vpop.f32.mrb[0].mxu0
    %7050 = vmatprep.mubr.bf16.mxu0 %v6463
    %7051 = vmatmul.mubr.bf16.gmra.mrb[0].mxu0 %v6462
    %v7052 = vpop.f32.mrb[0].mxu0
    %v7053 = vadd.f32 0.0, %v7052
    %v7054 = vpop.f32.mrb[0].mxu0
    %v7055 = vpop.f32.mrb[0].mxu0
    %v7056 = vadd.f32 0.0, %v7055
    %v7057 = vpop.f32.mrb[0].mxu0
    %7058 = vmatprep.mubr.bf16.mxu0 %v6468
    %7059 = vmatmul.mubr.bf16.gmra.mrb[0].mxu0 %v6467
    %v7060 = vpop.f32.mrb[0].mxu0
    %v7061 = vadd.f32 0.0, %v7060
    %v7062 = vpop.f32.mrb[0].mxu0
    %v7063 = vpop.f32.mrb[0].mxu0
    %v7064 = vadd.f32 0.0, %v7063
    %v7065 = vpop.f32.mrb[0].mxu0
    %7066 = vmatprep.mubr.bf16.mxu0 %v6473
    %7067 = vmatmul.mubr.bf16.gmra.mrb[0].mxu0 %v6472
    %v7068 = vpop.f32.mrb[0].mxu0
    %v7069 = vadd.f32 0.0, %v7068
    %v7070 = vpop.f32.mrb[0].mxu0
    %v7071 = vpop.f32.mrb[0].mxu0
    %v7072 = vadd.f32 0.0, %v7071
    %v7073 = vpop.f32.mrb[0].mxu0
    %7074 = vmatprep.mubr.bf16.mxu0 %v6478
    %7075 = vmatmul.mubr.bf16.gmra.mrb[0].mxu0 %v6477
    %v7076 = vpop.f32.mrb[0].mxu0
    %v7077 = vadd.f32 0.0, %v7076
    %v7078 = vpop.f32.mrb[0].mxu0
    %v7079 = vpop.f32.mrb[0].mxu0
    %v7080 = vadd.f32 0.0, %v7079
    %v7081 = vpop.f32.mrb[0].mxu0
    %7082 = vmatprep.mubr.bf16.mxu0 %v6483
    %7083 = vmatmul.mubr.bf16.gmra.mrb[0].mxu0 %v6482
    %v7084 = vpop.f32.mrb[0].mxu0
    %v7085 = vadd.f32 0.0, %v7084
    %v7086 = vpop.f32.mrb[0].mxu0
    %v7087 = vpop.f32.mrb[0].mxu0
    %v7088 = vadd.f32 0.0, %v7087
    %v7089 = vpop.f32.mrb[0].mxu0
    %7090 = vmatprep.mubr.bf16.mxu0 %v6488
    %7091 = vmatmul.mubr.bf16.gmra.mrb[0].mxu0 %v6487
    %v7092 = vpop.f32.mrb[0].mxu0
    %v7093 = vadd.f32 0.0, %v7092
    %v7094 = vpop.f32.mrb[0].mxu0
    %v7095 = vpop.f32.mrb[0].mxu0
    %v7096 = vadd.f32 0.0, %v7095
    %v7097 = vpop.f32.mrb[0].mxu0
    %7098 = vmatprep.mubr.bf16.mxu0 %v6493
    %7099 = vmatmul.mubr.bf16.gmra.mrb[0].mxu0 %v6492
    %v7100 = vpop.f32.mrb[0].mxu0
    %v7101 = vadd.f32 0.0, %v7100
    %v7102 = vpop.f32.mrb[0].mxu0
    %v7103 = vpop.f32.mrb[0].mxu0
    %v7104 = vadd.f32 0.0, %v7103
    %v7105 = vpop.f32.mrb[0].mxu0
    %7106 = vmatprep.mubr.bf16.mxu0 %v6498
    %7107 = vmatmul.mubr.bf16.gmra.mrb[0].mxu0 %v6497
    %v7108 = vpop.f32.mrb[0].mxu0
    %v7109 = vadd.f32 0.0, %v7108
    %v7110 = vpop.f32.mrb[0].mxu0
    %v7111 = vpop.f32.mrb[0].mxu0
    %v7112 = vadd.f32 0.0, %v7111
    %v7113 = vpop.f32.mrb[0].mxu0
    %7114 = vmatprep.mubr.bf16.mxu0 %v6503
    %7115 = vmatmul.mubr.bf16.gmra.mrb[0].mxu0 %v6502
    %v7116 = vpop.f32.mrb[0].mxu0
    %v7117 = vadd.f32 0.0, %v7116
    %v7118 = vpop.f32.mrb[0].mxu0
    %v7119 = vpop.f32.mrb[0].mxu0
    %v7120 = vadd.f32 0.0, %v7119
    %v7121 = vpop.f32.mrb[0].mxu0
    %7122 = vmatprep.mubr.bf16.mxu0 %v6508
    %7123 = vmatmul.mubr.bf16.gmra.mrb[0].mxu0 %v6507
    %v7124 = vpop.f32.mrb[0].mxu0
    %v7125 = vadd.f32 0.0, %v7124
    %v7126 = vpop.f32.mrb[0].mxu0
    %v7127 = vpop.f32.mrb[0].mxu0
    %v7128 = vadd.f32 0.0, %v7127
    %v7129 = vpop.f32.mrb[0].mxu0
    %7130 = vmatprep.mubr.bf16.mxu0 %v6513
    %7131 = vmatmul.mubr.bf16.gmra.mrb[0].mxu0 %v6512
    %v7132 = vpop.f32.mrb[0].mxu0
    %v7133 = vadd.f32 0.0, %v7132
    %v7134 = vpop.f32.mrb[0].mxu0
    %v7135 = vpop.f32.mrb[0].mxu0
    %v7136 = vadd.f32 0.0, %v7135
    %v7137 = vpop.f32.mrb[0].mxu0
    %7138 = vmatprep.mubr.bf16.mxu0 %v6518
    %7139 = vmatmul.mubr.bf16.gmra.mrb[0].mxu0 %v6517
    %v7140 = vpop.f32.mrb[0].mxu0
    %v7141 = vadd.f32 0.0, %v7140
    %v7142 = vpop.f32.mrb[0].mxu0
    %v7143 = vpop.f32.mrb[0].mxu0
    %v7144 = vadd.f32 0.0, %v7143
    %v7145 = vpop.f32.mrb[0].mxu0
    %7146 = vmatprep.mubr.bf16.mxu0 %v6523
    %7147 = vmatmul.mubr.bf16.gmra.mrb[0].mxu0 %v6522
    %v7148 = vpop.f32.mrb[0].mxu0
    %v7149 = vadd.f32 0.0, %v7148
    %v7150 = vpop.f32.mrb[0].mxu0
    %v7151 = vpop.f32.mrb[0].mxu0
    %v7152 = vadd.f32 0.0, %v7151
    %v7153 = vpop.f32.mrb[0].mxu0
    %7154 = vmatprep.mubr.bf16.mxu0 %v6528
    %7155 = vmatmul.mubr.bf16.gmra.mrb[0].mxu0 %v6527
    %v7156 = vpop.f32.mrb[0].mxu0
    %v7157 = vadd.f32 0.0, %v7156
    %v7158 = vpop.f32.mrb[0].mxu0
    %v7159 = vpop.f32.mrb[0].mxu0
    %v7160 = vadd.f32 0.0, %v7159
    %v7161 = vpop.f32.mrb[0].mxu0
    %7162 = vmatprep.mubr.bf16.mxu0 %v6533
    %7163 = vmatmul.mubr.bf16.gmra.mrb[0].mxu0 %v6532
    %v7164 = vpop.f32.mrb[0].mxu0
    %v7165 = vadd.f32 0.0, %v7164
    %v7166 = vpop.f32.mrb[0].mxu0
    %v7167 = vpop.f32.mrb[0].mxu0
    %v7168 = vadd.f32 0.0, %v7167
    %v7169 = vpop.f32.mrb[0].mxu0
    %7170 = vmatprep.mubr.bf16.mxu0 %v6538
    %7171 = vmatmul.mubr.bf16.gmra.mrb[0].mxu0 %v6537
    %v7172 = vpop.f32.mrb[0].mxu0
    %v7173 = vadd.f32 0.0, %v7172
    %v7174 = vpop.f32.mrb[0].mxu0
    %v7175 = vpop.f32.mrb[0].mxu0
    %v7176 = vadd.f32 0.0, %v7175
    %v7177 = vpop.f32.mrb[0].mxu0
    %7178 = vmatprep.mubr.bf16.mxu0 %v6543
    %7179 = vmatmul.mubr.bf16.gmra.mrb[0].mxu0 %v6542
    %v7180 = vpop.f32.mrb[0].mxu0
    %v7181 = vadd.f32 0.0, %v7180
    %v7182 = vpop.f32.mrb[0].mxu0
    %v7183 = vpop.f32.mrb[0].mxu0
    %v7184 = vadd.f32 0.0, %v7183
    %v7185 = vpop.f32.mrb[0].mxu0
    %7186 = vmatprep.mubr.bf16.mxu0 %v6548
    %7187 = vmatmul.mubr.bf16.gmra.mrb[0].mxu0 %v6547
    %v7188 = vpop.f32.mrb[0].mxu0
    %v7189 = vadd.f32 0.0, %v7188
    %v7190 = vpop.f32.mrb[0].mxu0
    %v7191 = vpop.f32.mrb[0].mxu0
    %v7192 = vadd.f32 0.0, %v7191
    %v7193 = vpop.f32.mrb[0].mxu0
    %7194 = vmatprep.mubr.bf16.mxu0 %v6553
    %7195 = vmatmul.mubr.bf16.gmra.mrb[0].mxu0 %v6552
    %v7196 = vpop.f32.mrb[0].mxu0
    %v7197 = vadd.f32 0.0, %v7196
    %v7198 = vpop.f32.mrb[0].mxu0
    %v7199 = vpop.f32.mrb[0].mxu0
    %v7200 = vadd.f32 0.0, %v7199
    %v7201 = vpop.f32.mrb[0].mxu0
    %7202 = vmatprep.mubr.bf16.mxu0 %v6558
    %7203 = vmatmul.mubr.bf16.gmra.mrb[0].mxu0 %v6557
    %v7204 = vpop.f32.mrb[0].mxu0
    %v7205 = vadd.f32 0.0, %v7204
    %v7206 = vpop.f32.mrb[0].mxu0
    %v7207 = vpop.f32.mrb[0].mxu0
    %v7208 = vadd.f32 0.0, %v7207
    %v7209 = vpop.f32.mrb[0].mxu0
    %7210 = vmatprep.mubr.bf16.mxu0 %v6563
    %7211 = vmatmul.mubr.bf16.gmra.mrb[0].mxu0 %v6562
    %v7212 = vpop.f32.mrb[0].mxu0
    %v7213 = vadd.f32 0.0, %v7212
    %v7214 = vpop.f32.mrb[0].mxu0
    %v7215 = vpop.f32.mrb[0].mxu0
    %v7216 = vadd.f32 0.0, %v7215
    %v7217 = vpop.f32.mrb[0].mxu0
    %7218 = vmatprep.mubr.bf16.mxu0 %v6568
    %7219 = vmatmul.mubr.bf16.gmra.mrb[0].mxu0 %v6567
    %v7220 = vpop.f32.mrb[0].mxu0
    %v7221 = vadd.f32 0.0, %v7220
    %v7222 = vpop.f32.mrb[0].mxu0
    %v7223 = vpop.f32.mrb[0].mxu0
    %v7224 = vadd.f32 0.0, %v7223
    %v7225 = vpop.f32.mrb[0].mxu0
    %7226 = vmatprep.mubr.bf16.mxu0 %v6573
    %7227 = vmatmul.mubr.bf16.gmra.mrb[0].mxu0 %v6572
    %v7228 = vpop.f32.mrb[0].mxu0
    %v7229 = vadd.f32 0.0, %v7228
    %v7230 = vpop.f32.mrb[0].mxu0
    %v7231 = vpop.f32.mrb[0].mxu0
    %v7232 = vadd.f32 0.0, %v7231
    %v7233 = vpop.f32.mrb[0].mxu0
    %7234 = vmatprep.mubr.bf16.mxu0 %v6578
    %7235 = vmatmul.mubr.bf16.gmra.mrb[0].mxu0 %v6577
    %v7236 = vpop.f32.mrb[0].mxu0
    %v7237 = vadd.f32 0.0, %v7236
    %v7238 = vpop.f32.mrb[0].mxu0
    %v7239 = vpop.f32.mrb[0].mxu0
    %v7240 = vadd.f32 0.0, %v7239
    %v7241 = vpop.f32.mrb[0].mxu0
    %7242 = vmatprep.mubr.bf16.mxu0 %v6583
    %7243 = vmatmul.mubr.bf16.gmra.mrb[0].mxu0 %v6582
    %v7244 = vpop.f32.mrb[0].mxu0
    %v7245 = vadd.f32 0.0, %v7244
    %v7246 = vpop.f32.mrb[0].mxu0
    %v7247 = vpop.f32.mrb[0].mxu0
    %v7248 = vadd.f32 0.0, %v7247
    %v7249 = vpop.f32.mrb[0].mxu0
    %7250 = vmatprep.mubr.bf16.mxu0 %v6588
    %7251 = vmatmul.mubr.bf16.gmra.mrb[0].mxu0 %v6587
    %v7252 = vpop.f32.mrb[0].mxu0
    %v7253 = vadd.f32 0.0, %v7252
    %v7254 = vpop.f32.mrb[0].mxu0
    %v7255 = vpop.f32.mrb[0].mxu0
    %v7256 = vadd.f32 0.0, %v7255
    %v7257 = vpop.f32.mrb[0].mxu0
    %7258 = vmatprep.mubr.bf16.mxu0 %v6593
    %7259 = vmatmul.mubr.bf16.gmra.mrb[0].mxu0 %v6592
    %v7260 = vpop.f32.mrb[0].mxu0
    %v7261 = vadd.f32 0.0, %v7260
    %v7262 = vpop.f32.mrb[0].mxu0
    %v7263 = vpop.f32.mrb[0].mxu0
    %v7264 = vadd.f32 0.0, %v7263
    %v7265 = vpop.f32.mrb[0].mxu0
    %7266 = vmatprep.mubr.bf16.mxu0 %v6598
    %7267 = vmatmul.mubr.bf16.gmra.mrb[0].mxu0 %v6597
    %v7268 = vpop.f32.mrb[0].mxu0
    %v7269 = vadd.f32 0.0, %v7268
    %v7270 = vpop.f32.mrb[0].mxu0
    %v7271 = vpop.f32.mrb[0].mxu0
    %v7272 = vadd.f32 0.0, %v7271
    %v7273 = vpop.f32.mrb[0].mxu0
    %7274 = vdwg.mxu0
    %7275 = vmatprep.subr.bf16.mxu0 0
    %7276 = vmatpush1.bf16.msra.mxu0 %v6834
    %7277 = vmatprep.subr.bf16.mxu0 0
    %7278 = vmatpush1.bf16.msra.mxu0 %v6835
    %7279 = vmatprep.subr.bf16.mxu0 0
    %7280 = vmatpush1.bf16.msra.mxu0 %v6836
    %7281 = vmatprep.subr.bf16.mxu0 0
    %7282 = vmatpush1.bf16.msra.mxu0 %v6837
    %7283 = vmatprep.subr.bf16.mxu0 0
    %7284 = vmatpush1.bf16.msra.mxu0 %v6838
    %7285 = vmatprep.subr.bf16.mxu0 0
    %7286 = vmatpush1.bf16.msra.mxu0 %v6839
    %7287 = vmatprep.subr.bf16.mxu0 0
    %7288 = vmatpush1.bf16.msra.mxu0 %v6840
    %7289 = vmatprep.subr.bf16.mxu0 0
    %7290 = vmatpush1.bf16.msra.mxu0 %v6841
    %7291 = vmatprep.subr.bf16.mxu0 0
    %7292 = vmatpush1.bf16.msra.mxu0 %v6842
    %7293 = vmatprep.subr.bf16.mxu0 0
    %7294 = vmatpush1.bf16.msra.mxu0 %v6843
    %7295 = vmatprep.subr.bf16.mxu0 0
    %7296 = vmatpush1.bf16.msra.mxu0 %v6844
    %7297 = vmatprep.subr.bf16.mxu0 0
    %7298 = vmatpush1.bf16.msra.mxu0 %v6845
    %7299 = vmatprep.subr.bf16.mxu0 0
    %7300 = vmatpush1.bf16.msra.mxu0 %v6846
    %7301 = vmatprep.subr.bf16.mxu0 0
    %7302 = vmatpush1.bf16.msra.mxu0 %v6847
    %7303 = vmatprep.subr.bf16.mxu0 0
    %7304 = vmatpush1.bf16.msra.mxu0 %v6848
    %7305 = vmatprep.subr.bf16.mxu0 0
    %7306 = vmatpush1.bf16.msra.mxu0 %v6849
    %7307 = vmatprep.mubr.bf16.mxu0 %v6445
    %7308 = vmatmul.mubr.bf16.gmra.mrb[0].mxu0 %v6444
    %v7309 = vpop.f32.mrb[0].mxu0
    %v7310 = vadd.f32 %v7021, %v7309
    %v7311 = vpop.f32.mrb[0].mxu0
    %v7312 = vpop.f32.mrb[0].mxu0
    %v7313 = vadd.f32 %v7024, %v7312
    %v7314 = vpop.f32.mrb[0].mxu0
    %7315 = vmatprep.mubr.bf16.mxu0 %v6450
    %7316 = vmatmul.mubr.bf16.gmra.mrb[0].mxu0 %v6449
    %v7317 = vpop.f32.mrb[0].mxu0
    %v7318 = vadd.f32 %v7029, %v7317
    %v7319 = vpop.f32.mrb[0].mxu0
    %v7320 = vpop.f32.mrb[0].mxu0
    %v7321 = vadd.f32 %v7032, %v7320
    %v7322 = vpop.f32.mrb[0].mxu0
    %7323 = vmatprep.mubr.bf16.mxu0 %v6455
    %7324 = vmatmul.mubr.bf16.gmra.mrb[0].mxu0 %v6454
    %v7325 = vpop.f32.mrb[0].mxu0
    %v7326 = vadd.f32 %v7037, %v7325
    %v7327 = vpop.f32.mrb[0].mxu0
    %v7328 = vpop.f32.mrb[0].mxu0
    %v7329 = vadd.f32 %v7040, %v7328
    %v7330 = vpop.f32.mrb[0].mxu0
    %7331 = vmatprep.mubr.bf16.mxu0 %v6460
    %7332 = vmatmul.mubr.bf16.gmra.mrb[0].mxu0 %v6459
    %v7333 = vpop.f32.mrb[0].mxu0
    %v7334 = vadd.f32 %v7045, %v7333
    %v7335 = vpop.f32.mrb[0].mxu0
    %v7336 = vpop.f32.mrb[0].mxu0
    %v7337 = vadd.f32 %v7048, %v7336
    %v7338 = vpop.f32.mrb[0].mxu0
    %7339 = vmatprep.mubr.bf16.mxu0 %v6465
    %7340 = vmatmul.mubr.bf16.gmra.mrb[0].mxu0 %v6464
    %v7341 = vpop.f32.mrb[0].mxu0
    %v7342 = vadd.f32 %v7053, %v7341
    %v7343 = vpop.f32.mrb[0].mxu0
    %v7344 = vpop.f32.mrb[0].mxu0
    %v7345 = vadd.f32 %v7056, %v7344
    %v7346 = vpop.f32.mrb[0].mxu0
    %7347 = vmatprep.mubr.bf16.mxu0 %v6470
    %7348 = vmatmul.mubr.bf16.gmra.mrb[0].mxu0 %v6469
    %v7349 = vpop.f32.mrb[0].mxu0
    %v7350 = vadd.f32 %v7061, %v7349
    %v7351 = vpop.f32.mrb[0].mxu0
    %v7352 = vpop.f32.mrb[0].mxu0
    %v7353 = vadd.f32 %v7064, %v7352
    %v7354 = vpop.f32.mrb[0].mxu0
    %7355 = vmatprep.mubr.bf16.mxu0 %v6475
    %7356 = vmatmul.mubr.bf16.gmra.mrb[0].mxu0 %v6474
    %v7357 = vpop.f32.mrb[0].mxu0
    %v7358 = vadd.f32 %v7069, %v7357
    %v7359 = vpop.f32.mrb[0].mxu0
    %v7360 = vpop.f32.mrb[0].mxu0
    %v7361 = vadd.f32 %v7072, %v7360
    %v7362 = vpop.f32.mrb[0].mxu0
    %7363 = vmatprep.mubr.bf16.mxu0 %v6480
    %7364 = vmatmul.mubr.bf16.gmra.mrb[0].mxu0 %v6479
    %v7365 = vpop.f32.mrb[0].mxu0
    %v7366 = vadd.f32 %v7077, %v7365
    %v7367 = vpop.f32.mrb[0].mxu0
    %v7368 = vpop.f32.mrb[0].mxu0
    %v7369 = vadd.f32 %v7080, %v7368
    %v7370 = vpop.f32.mrb[0].mxu0
    %7371 = vmatprep.mubr.bf16.mxu0 %v6485
    %7372 = vmatmul.mubr.bf16.gmra.mrb[0].mxu0 %v6484
    %v7373 = vpop.f32.mrb[0].mxu0
    %v7374 = vadd.f32 %v7085, %v7373
    %v7375 = vpop.f32.mrb[0].mxu0
    %v7376 = vpop.f32.mrb[0].mxu0
    %v7377 = vadd.f32 %v7088, %v7376
    %v7378 = vpop.f32.mrb[0].mxu0
    %7379 = vmatprep.mubr.bf16.mxu0 %v6490
    %7380 = vmatmul.mubr.bf16.gmra.mrb[0].mxu0 %v6489
    %v7381 = vpop.f32.mrb[0].mxu0
    %v7382 = vadd.f32 %v7093, %v7381
    %v7383 = vpop.f32.mrb[0].mxu0
    %v7384 = vpop.f32.mrb[0].mxu0
    %v7385 = vadd.f32 %v7096, %v7384
    %v7386 = vpop.f32.mrb[0].mxu0
    %7387 = vmatprep.mubr.bf16.mxu0 %v6495
    %7388 = vmatmul.mubr.bf16.gmra.mrb[0].mxu0 %v6494
    %v7389 = vpop.f32.mrb[0].mxu0
    %v7390 = vadd.f32 %v7101, %v7389
    %v7391 = vpop.f32.mrb[0].mxu0
    %v7392 = vpop.f32.mrb[0].mxu0
    %v7393 = vadd.f32 %v7104, %v7392
    %v7394 = vpop.f32.mrb[0].mxu0
    %7395 = vmatprep.mubr.bf16.mxu0 %v6500
    %7396 = vmatmul.mubr.bf16.gmra.mrb[0].mxu0 %v6499
    %v7397 = vpop.f32.mrb[0].mxu0
    %v7398 = vadd.f32 %v7109, %v7397
    %v7399 = vpop.f32.mrb[0].mxu0
    %v7400 = vpop.f32.mrb[0].mxu0
    %v7401 = vadd.f32 %v7112, %v7400
    %v7402 = vpop.f32.mrb[0].mxu0
    %7403 = vmatprep.mubr.bf16.mxu0 %v6505
    %7404 = vmatmul.mubr.bf16.gmra.mrb[0].mxu0 %v6504
    %v7405 = vpop.f32.mrb[0].mxu0
    %v7406 = vadd.f32 %v7117, %v7405
    %v7407 = vpop.f32.mrb[0].mxu0
    %v7408 = vpop.f32.mrb[0].mxu0
    %v7409 = vadd.f32 %v7120, %v7408
    %v7410 = vpop.f32.mrb[0].mxu0
    %7411 = vmatprep.mubr.bf16.mxu0 %v6510
    %7412 = vmatmul.mubr.bf16.gmra.mrb[0].mxu0 %v6509
    %v7413 = vpop.f32.mrb[0].mxu0
    %v7414 = vadd.f32 %v7125, %v7413
    %v7415 = vpop.f32.mrb[0].mxu0
    %v7416 = vpop.f32.mrb[0].mxu0
    %v7417 = vadd.f32 %v7128, %v7416
    %v7418 = vpop.f32.mrb[0].mxu0
    %7419 = vmatprep.mubr.bf16.mxu0 %v6515
    %7420 = vmatmul.mubr.bf16.gmra.mrb[0].mxu0 %v6514
    %v7421 = vpop.f32.mrb[0].mxu0
    %v7422 = vadd.f32 %v7133, %v7421
    %v7423 = vpop.f32.mrb[0].mxu0
    %v7424 = vpop.f32.mrb[0].mxu0
    %v7425 = vadd.f32 %v7136, %v7424
    %v7426 = vpop.f32.mrb[0].mxu0
    %7427 = vmatprep.mubr.bf16.mxu0 %v6520
    %7428 = vmatmul.mubr.bf16.gmra.mrb[0].mxu0 %v6519
    %v7429 = vpop.f32.mrb[0].mxu0
    %v7430 = vadd.f32 %v7141, %v7429
    %v7431 = vpop.f32.mrb[0].mxu0
    %v7432 = vpop.f32.mrb[0].mxu0
    %v7433 = vadd.f32 %v7144, %v7432
    %v7434 = vpop.f32.mrb[0].mxu0
    %7435 = vmatprep.mubr.bf16.mxu0 %v6525
    %7436 = vmatmul.mubr.bf16.gmra.mrb[0].mxu0 %v6524
    %v7437 = vpop.f32.mrb[0].mxu0
    %v7438 = vadd.f32 %v7149, %v7437
    %v7439 = vpop.f32.mrb[0].mxu0
    %v7440 = vpop.f32.mrb[0].mxu0
    %v7441 = vadd.f32 %v7152, %v7440
    %v7442 = vpop.f32.mrb[0].mxu0
    %7443 = vmatprep.mubr.bf16.mxu0 %v6530
    %7444 = vmatmul.mubr.bf16.gmra.mrb[0].mxu0 %v6529
    %v7445 = vpop.f32.mrb[0].mxu0
    %v7446 = vadd.f32 %v7157, %v7445
    %v7447 = vpop.f32.mrb[0].mxu0
    %v7448 = vpop.f32.mrb[0].mxu0
    %v7449 = vadd.f32 %v7160, %v7448
    %v7450 = vpop.f32.mrb[0].mxu0
    %7451 = vmatprep.mubr.bf16.mxu0 %v6535
    %7452 = vmatmul.mubr.bf16.gmra.mrb[0].mxu0 %v6534
    %v7453 = vpop.f32.mrb[0].mxu0
    %v7454 = vadd.f32 %v7165, %v7453
    %v7455 = vpop.f32.mrb[0].mxu0
    %v7456 = vpop.f32.mrb[0].mxu0
    %v7457 = vadd.f32 %v7168, %v7456
    %v7458 = vpop.f32.mrb[0].mxu0
    %7459 = vmatprep.mubr.bf16.mxu0 %v6540
    %7460 = vmatmul.mubr.bf16.gmra.mrb[0].mxu0 %v6539
    %v7461 = vpop.f32.mrb[0].mxu0
    %v7462 = vadd.f32 %v7173, %v7461
    %v7463 = vpop.f32.mrb[0].mxu0
    %v7464 = vpop.f32.mrb[0].mxu0
    %v7465 = vadd.f32 %v7176, %v7464
    %v7466 = vpop.f32.mrb[0].mxu0
    %7467 = vmatprep.mubr.bf16.mxu0 %v6545
    %7468 = vmatmul.mubr.bf16.gmra.mrb[0].mxu0 %v6544
    %v7469 = vpop.f32.mrb[0].mxu0
    %v7470 = vadd.f32 %v7181, %v7469
    %v7471 = vpop.f32.mrb[0].mxu0
    %v7472 = vpop.f32.mrb[0].mxu0
    %v7473 = vadd.f32 %v7184, %v7472
    %v7474 = vpop.f32.mrb[0].mxu0
    %7475 = vmatprep.mubr.bf16.mxu0 %v6550
    %7476 = vmatmul.mubr.bf16.gmra.mrb[0].mxu0 %v6549
    %v7477 = vpop.f32.mrb[0].mxu0
    %v7478 = vadd.f32 %v7189, %v7477
    %v7479 = vpop.f32.mrb[0].mxu0
    %v7480 = vpop.f32.mrb[0].mxu0
    %v7481 = vadd.f32 %v7192, %v7480
    %v7482 = vpop.f32.mrb[0].mxu0
    %7483 = vmatprep.mubr.bf16.mxu0 %v6555
    %7484 = vmatmul.mubr.bf16.gmra.mrb[0].mxu0 %v6554
    %v7485 = vpop.f32.mrb[0].mxu0
    %v7486 = vadd.f32 %v7197, %v7485
    %v7487 = vpop.f32.mrb[0].mxu0
    %v7488 = vpop.f32.mrb[0].mxu0
    %v7489 = vadd.f32 %v7200, %v7488
    %v7490 = vpop.f32.mrb[0].mxu0
    %7491 = vmatprep.mubr.bf16.mxu0 %v6560
    %7492 = vmatmul.mubr.bf16.gmra.mrb[0].mxu0 %v6559
    %v7493 = vpop.f32.mrb[0].mxu0
    %v7494 = vadd.f32 %v7205, %v7493
    %v7495 = vpop.f32.mrb[0].mxu0
    %v7496 = vpop.f32.mrb[0].mxu0
    %v7497 = vadd.f32 %v7208, %v7496
    %v7498 = vpop.f32.mrb[0].mxu0
    %7499 = vmatprep.mubr.bf16.mxu0 %v6565
    %7500 = vmatmul.mubr.bf16.gmra.mrb[0].mxu0 %v6564
    %v7501 = vpop.f32.mrb[0].mxu0
    %v7502 = vadd.f32 %v7213, %v7501
    %v7503 = vpop.f32.mrb[0].mxu0
    %v7504 = vpop.f32.mrb[0].mxu0
    %v7505 = vadd.f32 %v7216, %v7504
    %v7506 = vpop.f32.mrb[0].mxu0
    %7507 = vmatprep.mubr.bf16.mxu0 %v6570
    %7508 = vmatmul.mubr.bf16.gmra.mrb[0].mxu0 %v6569
    %v7509 = vpop.f32.mrb[0].mxu0
    %v7510 = vadd.f32 %v7221, %v7509
    %v7511 = vpop.f32.mrb[0].mxu0
    %v7512 = vpop.f32.mrb[0].mxu0
    %v7513 = vadd.f32 %v7224, %v7512
    %v7514 = vpop.f32.mrb[0].mxu0
    %7515 = vmatprep.mubr.bf16.mxu0 %v6575
    %7516 = vmatmul.mubr.bf16.gmra.mrb[0].mxu0 %v6574
    %v7517 = vpop.f32.mrb[0].mxu0
    %v7518 = vadd.f32 %v7229, %v7517
    %v7519 = vpop.f32.mrb[0].mxu0
    %v7520 = vpop.f32.mrb[0].mxu0
    %v7521 = vadd.f32 %v7232, %v7520
    %v7522 = vpop.f32.mrb[0].mxu0
    %7523 = vmatprep.mubr.bf16.mxu0 %v6580
    %7524 = vmatmul.mubr.bf16.gmra.mrb[0].mxu0 %v6579
    %v7525 = vpop.f32.mrb[0].mxu0
    %v7526 = vadd.f32 %v7237, %v7525
    %v7527 = vpop.f32.mrb[0].mxu0
    %v7528 = vpop.f32.mrb[0].mxu0
    %v7529 = vadd.f32 %v7240, %v7528
    %v7530 = vpop.f32.mrb[0].mxu0
    %7531 = vmatprep.mubr.bf16.mxu0 %v6585
    %7532 = vmatmul.mubr.bf16.gmra.mrb[0].mxu0 %v6584
    %v7533 = vpop.f32.mrb[0].mxu0
    %v7534 = vadd.f32 %v7245, %v7533
    %v7535 = vpop.f32.mrb[0].mxu0
    %v7536 = vpop.f32.mrb[0].mxu0
    %v7537 = vadd.f32 %v7248, %v7536
    %v7538 = vpop.f32.mrb[0].mxu0
    %7539 = vmatprep.mubr.bf16.mxu0 %v6590
    %7540 = vmatmul.mubr.bf16.gmra.mrb[0].mxu0 %v6589
    %v7541 = vpop.f32.mrb[0].mxu0
    %v7542 = vadd.f32 %v7253, %v7541
    %v7543 = vpop.f32.mrb[0].mxu0
    %v7544 = vpop.f32.mrb[0].mxu0
    %v7545 = vadd.f32 %v7256, %v7544
    %v7546 = vpop.f32.mrb[0].mxu0
    %7547 = vmatprep.mubr.bf16.mxu0 %v6595
    %7548 = vmatmul.mubr.bf16.gmra.mrb[0].mxu0 %v6594
    %v7549 = vpop.f32.mrb[0].mxu0
    %v7550 = vadd.f32 %v7261, %v7549
    %v7551 = vpop.f32.mrb[0].mxu0
    %v7552 = vpop.f32.mrb[0].mxu0
    %v7553 = vadd.f32 %v7264, %v7552
    %v7554 = vpop.f32.mrb[0].mxu0
    %7555 = vmatprep.mubr.bf16.mxu0 %v6600
    %7556 = vmatmul.mubr.bf16.gmra.mrb[0].mxu0 %v6599
    %v7557 = vpop.f32.mrb[0].mxu0
    %v7558 = vadd.f32 %v7269, %v7557
    %v7559 = vpop.f32.mrb[0].mxu0
    %v7560 = vpop.f32.mrb[0].mxu0
    %v7561 = vadd.f32 %v7272, %v7560
    %v7562 = vpop.f32.mrb[0].mxu0
    %7563 = vdwg.mxu0
    %7564 = vmatprep.subr.bf16.mxu0 0
    %7565 = vmatpush1.bf16.msra.mxu0 %v6850
    %7566 = vmatprep.subr.bf16.mxu0 0
    %7567 = vmatpush1.bf16.msra.mxu0 %v6851
    %7568 = vmatprep.subr.bf16.mxu0 0
    %7569 = vmatpush1.bf16.msra.mxu0 %v6852
    %7570 = vmatprep.subr.bf16.mxu0 0
    %7571 = vmatpush1.bf16.msra.mxu0 %v6853
    %7572 = vmatprep.subr.bf16.mxu0 0
    %7573 = vmatpush1.bf16.msra.mxu0 0
    %7574 = vmatprep.subr.bf16.mxu0 0
    %7575 = vmatpush1.bf16.msra.mxu0 0
    %7576 = vmatprep.subr.bf16.mxu0 0
    %7577 = vmatpush1.bf16.msra.mxu0 0
    %7578 = vmatprep.subr.bf16.mxu0 0
    %7579 = vmatpush1.bf16.msra.mxu0 0
    %7580 = vmatprep.subr.bf16.mxu0 0
    %7581 = vmatpush1.bf16.msra.mxu0 0
    %7582 = vmatprep.subr.bf16.mxu0 0
    %7583 = vmatpush1.bf16.msra.mxu0 0
    %7584 = vmatprep.subr.bf16.mxu0 0
    %7585 = vmatpush1.bf16.msra.mxu0 0
    %7586 = vmatprep.subr.bf16.mxu0 0
    %7587 = vmatpush1.bf16.msra.mxu0 0
    %7588 = vmatprep.subr.bf16.mxu0 0
    %7589 = vmatpush1.bf16.msra.mxu0 0
    %7590 = vmatprep.subr.bf16.mxu0 0
    %7591 = vmatpush1.bf16.msra.mxu0 0
    %7592 = vmatprep.subr.bf16.mxu0 0
    %7593 = vmatpush1.bf16.msra.mxu0 0
    %7594 = vmatprep.subr.bf16.mxu0 0
    %7595 = vmatpush1.bf16.msra.mxu0 0
    %7596 = vmatprep.mubr.bf16.mxu0 0
    %7597 = vmatmul.mubr.bf16.gmra.mrb[0].mxu0 %v6891
    %v7598 = vpop.f32.mrb[0].mxu0
    %v7599 = vadd.f32 %v7310, %v7598
    %v7600 = vpop.f32.mrb[0].mxu0
    %v7601 = vpop.f32.mrb[0].mxu0
    %v7602 = vadd.f32 %v7313, %v7601
    %v7603 = vpop.f32.mrb[0].mxu0
    %7604 = vmatprep.mubr.bf16.mxu0 0
    %7605 = vmatmul.mubr.bf16.gmra.mrb[0].mxu0 %v6894
    %v7606 = vpop.f32.mrb[0].mxu0
    %v7607 = vadd.f32 %v7318, %v7606
    %v7608 = vpop.f32.mrb[0].mxu0
    %v7609 = vpop.f32.mrb[0].mxu0
    %v7610 = vadd.f32 %v7321, %v7609
    %v7611 = vpop.f32.mrb[0].mxu0
    %7612 = vmatprep.mubr.bf16.mxu0 0
    %7613 = vmatmul.mubr.bf16.gmra.mrb[0].mxu0 %v6897
    %v7614 = vpop.f32.mrb[0].mxu0
    %v7615 = vadd.f32 %v7326, %v7614
    %v7616 = vpop.f32.mrb[0].mxu0
    %v7617 = vpop.f32.mrb[0].mxu0
    %v7618 = vadd.f32 %v7329, %v7617
    %v7619 = vpop.f32.mrb[0].mxu0
    %7620 = vmatprep.mubr.bf16.mxu0 0
    %7621 = vmatmul.mubr.bf16.gmra.mrb[0].mxu0 %v6900
    %v7622 = vpop.f32.mrb[0].mxu0
    %v7623 = vadd.f32 %v7334, %v7622
    %v7624 = vpop.f32.mrb[0].mxu0
    %v7625 = vpop.f32.mrb[0].mxu0
    %v7626 = vadd.f32 %v7337, %v7625
    %v7627 = vpop.f32.mrb[0].mxu0
    %7628 = vmatprep.mubr.bf16.mxu0 0
    %7629 = vmatmul.mubr.bf16.gmra.mrb[0].mxu0 %v6903
    %v7630 = vpop.f32.mrb[0].mxu0
    %v7631 = vadd.f32 %v7342, %v7630
    %v7632 = vpop.f32.mrb[0].mxu0
    %v7633 = vpop.f32.mrb[0].mxu0
    %v7634 = vadd.f32 %v7345, %v7633
    %v7635 = vpop.f32.mrb[0].mxu0
    %7636 = vmatprep.mubr.bf16.mxu0 0
    %7637 = vmatmul.mubr.bf16.gmra.mrb[0].mxu0 %v6906
    %v7638 = vpop.f32.mrb[0].mxu0
    %v7639 = vadd.f32 %v7350, %v7638
    %v7640 = vpop.f32.mrb[0].mxu0
    %v7641 = vpop.f32.mrb[0].mxu0
    %v7642 = vadd.f32 %v7353, %v7641
    %v7643 = vpop.f32.mrb[0].mxu0
    %7644 = vmatprep.mubr.bf16.mxu0 0
    %7645 = vmatmul.mubr.bf16.gmra.mrb[0].mxu0 %v6909
    %v7646 = vpop.f32.mrb[0].mxu0
    %v7647 = vadd.f32 %v7358, %v7646
    %v7648 = vpop.f32.mrb[0].mxu0
    %v7649 = vpop.f32.mrb[0].mxu0
    %v7650 = vadd.f32 %v7361, %v7649
    %v7651 = vpop.f32.mrb[0].mxu0
    %7652 = vmatprep.mubr.bf16.mxu0 0
    %7653 = vmatmul.mubr.bf16.gmra.mrb[0].mxu0 %v6912
    %v7654 = vpop.f32.mrb[0].mxu0
    %v7655 = vadd.f32 %v7366, %v7654
    %v7656 = vpop.f32.mrb[0].mxu0
    %v7657 = vpop.f32.mrb[0].mxu0
    %v7658 = vadd.f32 %v7369, %v7657
    %v7659 = vpop.f32.mrb[0].mxu0
    %7660 = vmatprep.mubr.bf16.mxu0 0
    %7661 = vmatmul.mubr.bf16.gmra.mrb[0].mxu0 %v6915
    %v7662 = vpop.f32.mrb[0].mxu0
    %v7663 = vadd.f32 %v7374, %v7662
    %v7664 = vpop.f32.mrb[0].mxu0
    %v7665 = vpop.f32.mrb[0].mxu0
    %v7666 = vadd.f32 %v7377, %v7665
    %v7667 = vpop.f32.mrb[0].mxu0
    %7668 = vmatprep.mubr.bf16.mxu0 0
    %7669 = vmatmul.mubr.bf16.gmra.mrb[0].mxu0 %v6918
    %v7670 = vpop.f32.mrb[0].mxu0
    %v7671 = vadd.f32 %v7382, %v7670
    %v7672 = vpop.f32.mrb[0].mxu0
    %v7673 = vpop.f32.mrb[0].mxu0
    %v7674 = vadd.f32 %v7385, %v7673
    %v7675 = vpop.f32.mrb[0].mxu0
    %7676 = vmatprep.mubr.bf16.mxu0 0
    %7677 = vmatmul.mubr.bf16.gmra.mrb[0].mxu0 %v6921
    %v7678 = vpop.f32.mrb[0].mxu0
    %v7679 = vadd.f32 %v7390, %v7678
    %v7680 = vpop.f32.mrb[0].mxu0
    %v7681 = vpop.f32.mrb[0].mxu0
    %v7682 = vadd.f32 %v7393, %v7681
    %v7683 = vpop.f32.mrb[0].mxu0
    %7684 = vmatprep.mubr.bf16.mxu0 0
    %7685 = vmatmul.mubr.bf16.gmra.mrb[0].mxu0 %v6924
    %v7686 = vpop.f32.mrb[0].mxu0
    %v7687 = vadd.f32 %v7398, %v7686
    %v7688 = vpop.f32.mrb[0].mxu0
    %v7689 = vpop.f32.mrb[0].mxu0
    %v7690 = vadd.f32 %v7401, %v7689
    %v7691 = vpop.f32.mrb[0].mxu0
    %7692 = vmatprep.mubr.bf16.mxu0 0
    %7693 = vmatmul.mubr.bf16.gmra.mrb[0].mxu0 %v6927
    %v7694 = vpop.f32.mrb[0].mxu0
    %v7695 = vadd.f32 %v7406, %v7694
    %v7696 = vpop.f32.mrb[0].mxu0
    %v7697 = vpop.f32.mrb[0].mxu0
    %v7698 = vadd.f32 %v7409, %v7697
    %v7699 = vpop.f32.mrb[0].mxu0
    %7700 = vmatprep.mubr.bf16.mxu0 0
    %7701 = vmatmul.mubr.bf16.gmra.mrb[0].mxu0 %v6930
    %v7702 = vpop.f32.mrb[0].mxu0
    %v7703 = vadd.f32 %v7414, %v7702
    %v7704 = vpop.f32.mrb[0].mxu0
    %v7705 = vpop.f32.mrb[0].mxu0
    %v7706 = vadd.f32 %v7417, %v7705
    %v7707 = vpop.f32.mrb[0].mxu0
    %7708 = vmatprep.mubr.bf16.mxu0 0
    %7709 = vmatmul.mubr.bf16.gmra.mrb[0].mxu0 %v6933
    %v7710 = vpop.f32.mrb[0].mxu0
    %v7711 = vadd.f32 %v7422, %v7710
    %v7712 = vpop.f32.mrb[0].mxu0
    %v7713 = vpop.f32.mrb[0].mxu0
    %v7714 = vadd.f32 %v7425, %v7713
    %v7715 = vpop.f32.mrb[0].mxu0
    %7716 = vmatprep.mubr.bf16.mxu0 0
    %7717 = vmatmul.mubr.bf16.gmra.mrb[0].mxu0 %v6936
    %v7718 = vpop.f32.mrb[0].mxu0
    %v7719 = vadd.f32 %v7430, %v7718
    %v7720 = vpop.f32.mrb[0].mxu0
    %v7721 = vpop.f32.mrb[0].mxu0
    %v7722 = vadd.f32 %v7433, %v7721
    %v7723 = vpop.f32.mrb[0].mxu0
    %7724 = vmatprep.mubr.bf16.mxu0 0
    %7725 = vmatmul.mubr.bf16.gmra.mrb[0].mxu0 %v6939
    %v7726 = vpop.f32.mrb[0].mxu0
    %v7727 = vadd.f32 %v7438, %v7726
    %v7728 = vpop.f32.mrb[0].mxu0
    %v7729 = vpop.f32.mrb[0].mxu0
    %v7730 = vadd.f32 %v7441, %v7729
    %v7731 = vpop.f32.mrb[0].mxu0
    %7732 = vmatprep.mubr.bf16.mxu0 0
    %7733 = vmatmul.mubr.bf16.gmra.mrb[0].mxu0 %v6942
    %v7734 = vpop.f32.mrb[0].mxu0
    %v7735 = vadd.f32 %v7446, %v7734
    %v7736 = vpop.f32.mrb[0].mxu0
    %v7737 = vpop.f32.mrb[0].mxu0
    %v7738 = vadd.f32 %v7449, %v7737
    %v7739 = vpop.f32.mrb[0].mxu0
    %7740 = vmatprep.mubr.bf16.mxu0 0
    %7741 = vmatmul.mubr.bf16.gmra.mrb[0].mxu0 %v6945
    %v7742 = vpop.f32.mrb[0].mxu0
    %v7743 = vadd.f32 %v7454, %v7742
    %v7744 = vpop.f32.mrb[0].mxu0
    %v7745 = vpop.f32.mrb[0].mxu0
    %v7746 = vadd.f32 %v7457, %v7745
    %v7747 = vpop.f32.mrb[0].mxu0
    %7748 = vmatprep.mubr.bf16.mxu0 0
    %7749 = vmatmul.mubr.bf16.gmra.mrb[0].mxu0 %v6948
    %v7750 = vpop.f32.mrb[0].mxu0
    %v7751 = vadd.f32 %v7462, %v7750
    %v7752 = vpop.f32.mrb[0].mxu0
    %v7753 = vpop.f32.mrb[0].mxu0
    %v7754 = vadd.f32 %v7465, %v7753
    %v7755 = vpop.f32.mrb[0].mxu0
    %7756 = vmatprep.mubr.bf16.mxu0 0
    %7757 = vmatmul.mubr.bf16.gmra.mrb[0].mxu0 %v6951
    %v7758 = vpop.f32.mrb[0].mxu0
    %v7759 = vadd.f32 %v7470, %v7758
    %v7760 = vpop.f32.mrb[0].mxu0
    %v7761 = vpop.f32.mrb[0].mxu0
    %v7762 = vadd.f32 %v7473, %v7761
    %v7763 = vpop.f32.mrb[0].mxu0
    %7764 = vmatprep.mubr.bf16.mxu0 0
    %7765 = vmatmul.mubr.bf16.gmra.mrb[0].mxu0 %v6954
    %v7766 = vpop.f32.mrb[0].mxu0
    %v7767 = vadd.f32 %v7478, %v7766
    %v7768 = vpop.f32.mrb[0].mxu0
    %v7769 = vpop.f32.mrb[0].mxu0
    %v7770 = vadd.f32 %v7481, %v7769
    %v7771 = vpop.f32.mrb[0].mxu0
    %7772 = vmatprep.mubr.bf16.mxu0 0
    %7773 = vmatmul.mubr.bf16.gmra.mrb[0].mxu0 %v6957
    %v7774 = vpop.f32.mrb[0].mxu0
    %v7775 = vadd.f32 %v7486, %v7774
    %v7776 = vpop.f32.mrb[0].mxu0
    %v7777 = vpop.f32.mrb[0].mxu0
    %v7778 = vadd.f32 %v7489, %v7777
    %v7779 = vpop.f32.mrb[0].mxu0
    %7780 = vmatprep.mubr.bf16.mxu0 0
    %7781 = vmatmul.mubr.bf16.gmra.mrb[0].mxu0 %v6960
    %v7782 = vpop.f32.mrb[0].mxu0
    %v7783 = vadd.f32 %v7494, %v7782
    %v7784 = vpop.f32.mrb[0].mxu0
    %v7785 = vpop.f32.mrb[0].mxu0
    %v7786 = vadd.f32 %v7497, %v7785
    %v7787 = vpop.f32.mrb[0].mxu0
    %7788 = vmatprep.mubr.bf16.mxu0 0
    %7789 = vmatmul.mubr.bf16.gmra.mrb[0].mxu0 %v6963
    %v7790 = vpop.f32.mrb[0].mxu0
    %v7791 = vadd.f32 %v7502, %v7790
    %v7792 = vpop.f32.mrb[0].mxu0
    %v7793 = vpop.f32.mrb[0].mxu0
    %v7794 = vadd.f32 %v7505, %v7793
    %v7795 = vpop.f32.mrb[0].mxu0
    %7796 = vmatprep.mubr.bf16.mxu0 0
    %7797 = vmatmul.mubr.bf16.gmra.mrb[0].mxu0 %v6966
    %v7798 = vpop.f32.mrb[0].mxu0
    %v7799 = vadd.f32 %v7510, %v7798
    %v7800 = vpop.f32.mrb[0].mxu0
    %v7801 = vpop.f32.mrb[0].mxu0
    %v7802 = vadd.f32 %v7513, %v7801
    %v7803 = vpop.f32.mrb[0].mxu0
    %7804 = vmatprep.mubr.bf16.mxu0 0
    %7805 = vmatmul.mubr.bf16.gmra.mrb[0].mxu0 %v6969
    %v7806 = vpop.f32.mrb[0].mxu0
    %v7807 = vadd.f32 %v7518, %v7806
    %v7808 = vpop.f32.mrb[0].mxu0
    %v7809 = vpop.f32.mrb[0].mxu0
    %v7810 = vadd.f32 %v7521, %v7809
    %v7811 = vpop.f32.mrb[0].mxu0
    %7812 = vmatprep.mubr.bf16.mxu0 0
    %7813 = vmatmul.mubr.bf16.gmra.mrb[0].mxu0 %v6972
    %v7814 = vpop.f32.mrb[0].mxu0
    %v7815 = vadd.f32 %v7526, %v7814
    %v7816 = vpop.f32.mrb[0].mxu0
    %v7817 = vpop.f32.mrb[0].mxu0
    %v7818 = vadd.f32 %v7529, %v7817
    %v7819 = vpop.f32.mrb[0].mxu0
    %7820 = vmatprep.mubr.bf16.mxu0 0
    %7821 = vmatmul.mubr.bf16.gmra.mrb[0].mxu0 %v6975
    %v7822 = vpop.f32.mrb[0].mxu0
    %v7823 = vadd.f32 %v7534, %v7822
    %v7824 = vpop.f32.mrb[0].mxu0
    %v7825 = vpop.f32.mrb[0].mxu0
    %v7826 = vadd.f32 %v7537, %v7825
    %v7827 = vpop.f32.mrb[0].mxu0
    %7828 = vmatprep.mubr.bf16.mxu0 0
    %7829 = vmatmul.mubr.bf16.gmra.mrb[0].mxu0 %v6978
    %v7830 = vpop.f32.mrb[0].mxu0
    %v7831 = vadd.f32 %v7542, %v7830
    %v7832 = vpop.f32.mrb[0].mxu0
    %v7833 = vpop.f32.mrb[0].mxu0
    %v7834 = vadd.f32 %v7545, %v7833
    %v7835 = vpop.f32.mrb[0].mxu0
    %7836 = vmatprep.mubr.bf16.mxu0 0
    %7837 = vmatmul.mubr.bf16.gmra.mrb[0].mxu0 %v6981
    %v7838 = vpop.f32.mrb[0].mxu0
    %v7839 = vadd.f32 %v7550, %v7838
    %v7840 = vpop.f32.mrb[0].mxu0
    %v7841 = vpop.f32.mrb[0].mxu0
    %v7842 = vadd.f32 %v7553, %v7841
    %v7843 = vpop.f32.mrb[0].mxu0
    %7844 = vmatprep.mubr.bf16.mxu0 0
    %7845 = vmatmul.mubr.bf16.gmra.mrb[0].mxu0 %v6984
    %v7846 = vpop.f32.mrb[0].mxu0
    %v7847 = vadd.f32 %v7558, %v7846
    %v7848 = vpop.f32.mrb[0].mxu0
    %v7849 = vpop.f32.mrb[0].mxu0
    %v7850 = vadd.f32 %v7561, %v7849
    %v7851 = vpop.f32.mrb[0].mxu0
    %7852 = vdwg.mxu0
    %v7853 = vsel %vm43, %v7599, 0.0
    %v7854 = vsel %vm43, %v7602, 0.0
    %v7855 = vadd.f32 %v7853, %v7854
    %v7856 = vsel %vm43, %v7607, 0.0
    %v7857 = vadd.f32 %v7855, %v7856
    %v7858 = vsel %vm43, %v7610, 0.0
    %v7859 = vadd.f32 %v7857, %v7858
    %v7860 = vsel %vm43, %v7615, 0.0
    %v7861 = vadd.f32 %v7859, %v7860
    %v7862 = vsel %vm43, %v7618, 0.0
    %v7863 = vadd.f32 %v7861, %v7862
    %v7864 = vsel %vm43, %v7623, 0.0
    %v7865 = vadd.f32 %v7863, %v7864
    %v7866 = vsel %vm43, %v7626, 0.0
    %v7867 = vadd.f32 %v7865, %v7866
    %v7868 = vsel %vm43, %v7631, 0.0
    %v7869 = vadd.f32 %v7867, %v7868
    %v7870 = vsel %vm43, %v7634, 0.0
    %v7871 = vadd.f32 %v7869, %v7870
    %v7872 = vsel %vm43, %v7639, 0.0
    %v7873 = vadd.f32 %v7871, %v7872
    %v7874 = vsel %vm43, %v7642, 0.0
    %v7875 = vadd.f32 %v7873, %v7874
    %v7876 = vsel %vm43, %v7647, 0.0
    %v7877 = vadd.f32 %v7875, %v7876
    %v7878 = vsel %vm43, %v7650, 0.0
    %v7879 = vadd.f32 %v7877, %v7878
    %v7880 = vsel %vm43, %v7655, 0.0
    %v7881 = vadd.f32 %v7879, %v7880
    %v7882 = vsel %vm43, %v7658, 0.0
    %v7883 = vadd.f32 %v7881, %v7882
    %v7884 = vsel %vm43, %v7663, 0.0
    %v7885 = vadd.f32 %v7883, %v7884
    %v7886 = vsel %vm43, %v7666, 0.0
    %v7887 = vadd.f32 %v7885, %v7886
    %v7888 = vsel %vm43, %v7671, 0.0
    %v7889 = vadd.f32 %v7887, %v7888
    %v7890 = vsel %vm43, %v7674, 0.0
    %v7891 = vadd.f32 %v7889, %v7890
    %v7892 = vsel %vm43, %v7679, 0.0
    %v7893 = vadd.f32 %v7891, %v7892
    %v7894 = vsel %vm43, %v7682, 0.0
    %v7895 = vadd.f32 %v7893, %v7894
    %v7896 = vsel %vm43, %v7687, 0.0
    %v7897 = vadd.f32 %v7895, %v7896
    %v7898 = vsel %vm43, %v7690, 0.0
    %v7899 = vadd.f32 %v7897, %v7898
    %v7900 = vsel %vm43, %v7695, 0.0
    %v7901 = vadd.f32 %v7899, %v7900
    %v7902 = vsel %vm43, %v7698, 0.0
    %v7903 = vadd.f32 %v7901, %v7902
    %v7904 = vsel %vm43, %v7703, 0.0
    %v7905 = vadd.f32 %v7903, %v7904
    %v7906 = vsel %vm43, %v7706, 0.0
    %v7907 = vadd.f32 %v7905, %v7906
    %v7908 = vsel %vm43, %v7711, 0.0
    %v7909 = vadd.f32 %v7907, %v7908
    %v7910 = vsel %vm43, %v7714, 0.0
    %v7911 = vadd.f32 %v7909, %v7910
    %v7912 = vsel %vm43, %v7719, 0.0
    %v7913 = vadd.f32 %v7911, %v7912
    %v7914 = vsel %vm43, %v7722, 0.0
    %v7915 = vadd.f32 %v7913, %v7914
    %v7916 = vsel %vm43, %v7727, 0.0
    %v7917 = vadd.f32 %v7915, %v7916
    %v7918 = vsel %vm43, %v7730, 0.0
    %v7919 = vadd.f32 %v7917, %v7918
    %v7920 = vsel %vm43, %v7735, 0.0
    %v7921 = vadd.f32 %v7919, %v7920
    %v7922 = vsel %vm43, %v7738, 0.0
    %v7923 = vadd.f32 %v7921, %v7922
    %v7924 = vsel %vm43, %v7743, 0.0
    %v7925 = vadd.f32 %v7923, %v7924
    %v7926 = vsel %vm43, %v7746, 0.0
    %v7927 = vadd.f32 %v7925, %v7926
    %v7928 = vsel %vm43, %v7751, 0.0
    %v7929 = vadd.f32 %v7927, %v7928
    %v7930 = vsel %vm43, %v7754, 0.0
    %v7931 = vadd.f32 %v7929, %v7930
    %v7932 = vsel %vm43, %v7759, 0.0
    %v7933 = vadd.f32 %v7931, %v7932
    %v7934 = vsel %vm43, %v7762, 0.0
    %v7935 = vadd.f32 %v7933, %v7934
    %v7936 = vsel %vm43, %v7767, 0.0
    %v7937 = vadd.f32 %v7935, %v7936
    %v7938 = vsel %vm43, %v7770, 0.0
    %v7939 = vadd.f32 %v7937, %v7938
    %v7940 = vsel %vm43, %v7775, 0.0
    %v7941 = vadd.f32 %v7939, %v7940
    %v7942 = vsel %vm43, %v7778, 0.0
    %v7943 = vadd.f32 %v7941, %v7942
    %v7944 = vsel %vm43, %v7783, 0.0
    %v7945 = vadd.f32 %v7943, %v7944
    %v7946 = vsel %vm43, %v7786, 0.0
    %v7947 = vadd.f32 %v7945, %v7946
    %v7948 = vsel %vm43, %v7791, 0.0
    %v7949 = vadd.f32 %v7947, %v7948
    %v7950 = vsel %vm43, %v7794, 0.0
    %v7951 = vadd.f32 %v7949, %v7950
    %v7952 = vsel %vm43, %v7799, 0.0
    %v7953 = vadd.f32 %v7951, %v7952
    %v7954 = vsel %vm43, %v7802, 0.0
    %v7955 = vadd.f32 %v7953, %v7954
    %v7956 = vsel %vm43, %v7807, 0.0
    %v7957 = vadd.f32 %v7955, %v7956
    %v7958 = vsel %vm43, %v7810, 0.0
    %v7959 = vadd.f32 %v7957, %v7958
    %v7960 = vsel %vm43, %v7815, 0.0
    %v7961 = vadd.f32 %v7959, %v7960
    %v7962 = vsel %vm43, %v7818, 0.0
    %v7963 = vadd.f32 %v7961, %v7962
    %v7964 = vsel %vm43, %v7823, 0.0
    %v7965 = vadd.f32 %v7963, %v7964
    %v7966 = vsel %vm43, %v7826, 0.0
    %v7967 = vadd.f32 %v7965, %v7966
    %v7968 = vsel %vm43, %v7831, 0.0
    %v7969 = vadd.f32 %v7967, %v7968
    %v7970 = vsel %vm43, %v7834, 0.0
    %v7971 = vadd.f32 %v7969, %v7970
    %v7972 = vsel %vm43, %v7839, 0.0
    %v7973 = vadd.f32 %v7971, %v7972
    %v7974 = vsel %vm43, %v7842, 0.0
    %v7975 = vadd.f32 %v7973, %v7974
    %v7976 = vsel %vm43, %v7847, 0.0
    %v7977 = vadd.f32 %v7975, %v7976
    %v7978 = vsel %vm43, %v7850, 0.0
    %v7979 = vadd.f32 %v7977, %v7978
    %v7980 = vrot.slane %v7979, 4
    %v7981 = vadd.f32 %v7979, %v7980
    %v7982 = vrot.slane %v7981, 2
    %v7983 = vadd.f32 %v7981, %v7982
    %v7984 = vrot.slane %v7983, 1
    %v7985 = vadd.f32 %v7983, %v7984
    %v7986 = vmul.f32 %v7599, %v7599
    %v7987 = vmul.f32 %v7602, %v7602
    %v7988 = vmul.f32 %v7607, %v7607
    %v7989 = vmul.f32 %v7610, %v7610
    %v7990 = vmul.f32 %v7615, %v7615
    %v7991 = vmul.f32 %v7618, %v7618
    %v7992 = vmul.f32 %v7623, %v7623
    %v7993 = vmul.f32 %v7626, %v7626
    %v7994 = vmul.f32 %v7631, %v7631
    %v7995 = vmul.f32 %v7634, %v7634
    %v7996 = vmul.f32 %v7639, %v7639
    %v7997 = vmul.f32 %v7642, %v7642
    %v7998 = vmul.f32 %v7647, %v7647
    %v7999 = vmul.f32 %v7650, %v7650
    %v8000 = vmul.f32 %v7655, %v7655
    %v8001 = vmul.f32 %v7658, %v7658
    %v8002 = vmul.f32 %v7663, %v7663
    %v8003 = vmul.f32 %v7666, %v7666
    %v8004 = vmul.f32 %v7671, %v7671
    %v8005 = vmul.f32 %v7674, %v7674
    %v8006 = vmul.f32 %v7679, %v7679
    %v8007 = vmul.f32 %v7682, %v7682
    %v8008 = vmul.f32 %v7687, %v7687
    %v8009 = vmul.f32 %v7690, %v7690
    %v8010 = vmul.f32 %v7695, %v7695
    %v8011 = vmul.f32 %v7698, %v7698
    %v8012 = vmul.f32 %v7703, %v7703
    %v8013 = vmul.f32 %v7706, %v7706
    %v8014 = vmul.f32 %v7711, %v7711
    %v8015 = vmul.f32 %v7714, %v7714
    %v8016 = vmul.f32 %v7719, %v7719
    %v8017 = vmul.f32 %v7722, %v7722
    %v8018 = vmul.f32 %v7727, %v7727
    %v8019 = vmul.f32 %v7730, %v7730
    %v8020 = vmul.f32 %v7735, %v7735
    %v8021 = vmul.f32 %v7738, %v7738
    %v8022 = vmul.f32 %v7743, %v7743
    %v8023 = vmul.f32 %v7746, %v7746
    %v8024 = vmul.f32 %v7751, %v7751
    %v8025 = vmul.f32 %v7754, %v7754
    %v8026 = vmul.f32 %v7759, %v7759
    %v8027 = vmul.f32 %v7762, %v7762
    %v8028 = vmul.f32 %v7767, %v7767
    %v8029 = vmul.f32 %v7770, %v7770
    %v8030 = vmul.f32 %v7775, %v7775
    %v8031 = vmul.f32 %v7778, %v7778
    %v8032 = vmul.f32 %v7783, %v7783
    %v8033 = vmul.f32 %v7786, %v7786
    %v8034 = vmul.f32 %v7791, %v7791
    %v8035 = vmul.f32 %v7794, %v7794
    %v8036 = vmul.f32 %v7799, %v7799
    %v8037 = vmul.f32 %v7802, %v7802
    %v8038 = vmul.f32 %v7807, %v7807
    %v8039 = vmul.f32 %v7810, %v7810
    %v8040 = vmul.f32 %v7815, %v7815
    %v8041 = vmul.f32 %v7818, %v7818
    %v8042 = vmul.f32 %v7823, %v7823
    %v8043 = vmul.f32 %v7826, %v7826
    %v8044 = vmul.f32 %v7831, %v7831
    %v8045 = vmul.f32 %v7834, %v7834
    %v8046 = vmul.f32 %v7839, %v7839
    %v8047 = vmul.f32 %v7842, %v7842
    %v8048 = vmul.f32 %v7847, %v7847
    %v8049 = vmul.f32 %v7850, %v7850
    %v8050 = vsel %vm43, %v7986, 0.0
    %v8051 = vsel %vm43, %v7987, 0.0
    %v8052 = vadd.f32 %v8050, %v8051
    %v8053 = vsel %vm43, %v7988, 0.0
    %v8054 = vadd.f32 %v8052, %v8053
    %v8055 = vsel %vm43, %v7989, 0.0
    %v8056 = vadd.f32 %v8054, %v8055
    %v8057 = vsel %vm43, %v7990, 0.0
    %v8058 = vadd.f32 %v8056, %v8057
    %v8059 = vsel %vm43, %v7991, 0.0
    %v8060 = vadd.f32 %v8058, %v8059
    %v8061 = vsel %vm43, %v7992, 0.0
    %v8062 = vadd.f32 %v8060, %v8061
    %v8063 = vsel %vm43, %v7993, 0.0
    %v8064 = vadd.f32 %v8062, %v8063
    %v8065 = vsel %vm43, %v7994, 0.0
    %v8066 = vadd.f32 %v8064, %v8065
    %v8067 = vsel %vm43, %v7995, 0.0
    %v8068 = vadd.f32 %v8066, %v8067
    %v8069 = vsel %vm43, %v7996, 0.0
    %v8070 = vadd.f32 %v8068, %v8069
    %v8071 = vsel %vm43, %v7997, 0.0
    %v8072 = vadd.f32 %v8070, %v8071
    %v8073 = vsel %vm43, %v7998, 0.0
    %v8074 = vadd.f32 %v8072, %v8073
    %v8075 = vsel %vm43, %v7999, 0.0
    %v8076 = vadd.f32 %v8074, %v8075
    %v8077 = vsel %vm43, %v8000, 0.0
    %v8078 = vadd.f32 %v8076, %v8077
    %v8079 = vsel %vm43, %v8001, 0.0
    %v8080 = vadd.f32 %v8078, %v8079
    %v8081 = vsel %vm43, %v8002, 0.0
    %v8082 = vadd.f32 %v8080, %v8081
    %v8083 = vsel %vm43, %v8003, 0.0
    %v8084 = vadd.f32 %v8082, %v8083
    %v8085 = vsel %vm43, %v8004, 0.0
    %v8086 = vadd.f32 %v8084, %v8085
    %v8087 = vsel %vm43, %v8005, 0.0
    %v8088 = vadd.f32 %v8086, %v8087
    %v8089 = vsel %vm43, %v8006, 0.0
    %v8090 = vadd.f32 %v8088, %v8089
    %v8091 = vsel %vm43, %v8007, 0.0
    %v8092 = vadd.f32 %v8090, %v8091
    %v8093 = vsel %vm43, %v8008, 0.0
    %v8094 = vadd.f32 %v8092, %v8093
    %v8095 = vsel %vm43, %v8009, 0.0
    %v8096 = vadd.f32 %v8094, %v8095
    %v8097 = vsel %vm43, %v8010, 0.0
    %v8098 = vadd.f32 %v8096, %v8097
    %v8099 = vsel %vm43, %v8011, 0.0
    %v8100 = vadd.f32 %v8098, %v8099
    %v8101 = vsel %vm43, %v8012, 0.0
    %v8102 = vadd.f32 %v8100, %v8101
    %v8103 = vsel %vm43, %v8013, 0.0
    %v8104 = vadd.f32 %v8102, %v8103
    %v8105 = vsel %vm43, %v8014, 0.0
    %v8106 = vadd.f32 %v8104, %v8105
    %v8107 = vsel %vm43, %v8015, 0.0
    %v8108 = vadd.f32 %v8106, %v8107
    %v8109 = vsel %vm43, %v8016, 0.0
    %v8110 = vadd.f32 %v8108, %v8109
    %v8111 = vsel %vm43, %v8017, 0.0
    %v8112 = vadd.f32 %v8110, %v8111
    %v8113 = vsel %vm43, %v8018, 0.0
    %v8114 = vadd.f32 %v8112, %v8113
    %v8115 = vsel %vm43, %v8019, 0.0
    %v8116 = vadd.f32 %v8114, %v8115
    %v8117 = vsel %vm43, %v8020, 0.0
    %v8118 = vadd.f32 %v8116, %v8117
    %v8119 = vsel %vm43, %v8021, 0.0
    %v8120 = vadd.f32 %v8118, %v8119
    %v8121 = vsel %vm43, %v8022, 0.0
    %v8122 = vadd.f32 %v8120, %v8121
    %v8123 = vsel %vm43, %v8023, 0.0
    %v8124 = vadd.f32 %v8122, %v8123
    %v8125 = vsel %vm43, %v8024, 0.0
    %v8126 = vadd.f32 %v8124, %v8125
    %v8127 = vsel %vm43, %v8025, 0.0
    %v8128 = vadd.f32 %v8126, %v8127
    %v8129 = vsel %vm43, %v8026, 0.0
    %v8130 = vadd.f32 %v8128, %v8129
    %v8131 = vsel %vm43, %v8027, 0.0
    %v8132 = vadd.f32 %v8130, %v8131
    %v8133 = vsel %vm43, %v8028, 0.0
    %v8134 = vadd.f32 %v8132, %v8133
    %v8135 = vsel %vm43, %v8029, 0.0
    %v8136 = vadd.f32 %v8134, %v8135
    %v8137 = vsel %vm43, %v8030, 0.0
    %v8138 = vadd.f32 %v8136, %v8137
    %v8139 = vsel %vm43, %v8031, 0.0
    %v8140 = vadd.f32 %v8138, %v8139
    %v8141 = vsel %vm43, %v8032, 0.0
    %v8142 = vadd.f32 %v8140, %v8141
    %v8143 = vsel %vm43, %v8033, 0.0
    %v8144 = vadd.f32 %v8142, %v8143
    %v8145 = vsel %vm43, %v8034, 0.0
    %v8146 = vadd.f32 %v8144, %v8145
    %v8147 = vsel %vm43, %v8035, 0.0
    %v8148 = vadd.f32 %v8146, %v8147
    %v8149 = vsel %vm43, %v8036, 0.0
    %v8150 = vadd.f32 %v8148, %v8149
    %v8151 = vsel %vm43, %v8037, 0.0
    %v8152 = vadd.f32 %v8150, %v8151
    %v8153 = vsel %vm43, %v8038, 0.0
    %v8154 = vadd.f32 %v8152, %v8153
    %v8155 = vsel %vm43, %v8039, 0.0
    %v8156 = vadd.f32 %v8154, %v8155
    %v8157 = vsel %vm43, %v8040, 0.0
    %v8158 = vadd.f32 %v8156, %v8157
    %v8159 = vsel %vm43, %v8041, 0.0
    %v8160 = vadd.f32 %v8158, %v8159
    %v8161 = vsel %vm43, %v8042, 0.0
    %v8162 = vadd.f32 %v8160, %v8161
    %v8163 = vsel %vm43, %v8043, 0.0
    %v8164 = vadd.f32 %v8162, %v8163
    %v8165 = vsel %vm43, %v8044, 0.0
    %v8166 = vadd.f32 %v8164, %v8165
    %v8167 = vsel %vm43, %v8045, 0.0
    %v8168 = vadd.f32 %v8166, %v8167
    %v8169 = vsel %vm43, %v8046, 0.0
    %v8170 = vadd.f32 %v8168, %v8169
    %v8171 = vsel %vm43, %v8047, 0.0
    %v8172 = vadd.f32 %v8170, %v8171
    %v8173 = vsel %vm43, %v8048, 0.0
    %v8174 = vadd.f32 %v8172, %v8173
    %v8175 = vsel %vm43, %v8049, 0.0
    %v8176 = vadd.f32 %v8174, %v8175
    %v8177 = vrot.slane %v8176, 4
    %v8178 = vadd.f32 %v8176, %v8177
    %v8179 = vrot.slane %v8178, 2
    %v8180 = vadd.f32 %v8178, %v8179
    %v8181 = vrot.slane %v8180, 1
    %v8182 = vadd.f32 %v8180, %v8181
    %v8183 = vmul.f32 %v7985, 0.001953125
    %v8184 = vmul.f32 %v8182, 0.001953125
    %v8185 = vmul.f32 %v8183, %v8183
    %v8186 = vsub.f32 %v8184, %v8185
    %v8187 = vmax.f32 %v8186, 0.0
    %v8188 = vld [vmem:[%s8] sm:$0x1]
    %v8189 = vadd.f32 %v8187, 1e-05
    %v8190 = vrsqrt.pop %v8189
    %v8191 = vmul.f32 %v8188, %v8190
    %v8192 = vld [vmem:[%s9] sm:$0x1]
    %v8193 = vmul.f32 %v8183, %v8191
    %v8194 = vsub.f32 %v8192, %v8193
    %v8196 = vlaneseq
    %v8197 = vshrl.u32 %v8196, 7
    %v8198 = vsub.s32 0, %v8197
    %v8199 = vrot.slane %v8191, %v8198
    %v8201 = vmul.f32 %v7599, %v8199
    %v8202 = vmul.f32 %v7602, %v8199
    %v8203 = vmul.f32 %v7607, %v8199
    %v8204 = vmul.f32 %v7610, %v8199
    %v8205 = vmul.f32 %v7615, %v8199
    %v8206 = vmul.f32 %v7618, %v8199
    %v8207 = vmul.f32 %v7623, %v8199
    %v8208 = vmul.f32 %v7626, %v8199
    %v8209 = vmul.f32 %v7631, %v8199
    %v8210 = vmul.f32 %v7634, %v8199
    %v8211 = vmul.f32 %v7639, %v8199
    %v8212 = vmul.f32 %v7642, %v8199
    %v8213 = vmul.f32 %v7647, %v8199
    %v8214 = vmul.f32 %v7650, %v8199
    %v8215 = vmul.f32 %v7655, %v8199
    %v8216 = vmul.f32 %v7658, %v8199
    %v8217 = vmul.f32 %v7663, %v8199
    %v8218 = vmul.f32 %v7666, %v8199
    %v8219 = vmul.f32 %v7671, %v8199
    %v8220 = vmul.f32 %v7674, %v8199
    %v8221 = vmul.f32 %v7679, %v8199
    %v8222 = vmul.f32 %v7682, %v8199
    %v8223 = vmul.f32 %v7687, %v8199
    %v8224 = vmul.f32 %v7690, %v8199
    %v8225 = vmul.f32 %v7695, %v8199
    %v8226 = vmul.f32 %v7698, %v8199
    %v8227 = vmul.f32 %v7703, %v8199
    %v8228 = vmul.f32 %v7706, %v8199
    %v8229 = vmul.f32 %v7711, %v8199
    %v8230 = vmul.f32 %v7714, %v8199
    %v8231 = vmul.f32 %v7719, %v8199
    %v8232 = vmul.f32 %v7722, %v8199
    %v8233 = vmul.f32 %v7727, %v8199
    %v8234 = vmul.f32 %v7730, %v8199
    %v8235 = vmul.f32 %v7735, %v8199
    %v8236 = vmul.f32 %v7738, %v8199
    %v8237 = vmul.f32 %v7743, %v8199
    %v8238 = vmul.f32 %v7746, %v8199
    %v8239 = vmul.f32 %v7751, %v8199
    %v8240 = vmul.f32 %v7754, %v8199
    %v8241 = vmul.f32 %v7759, %v8199
    %v8242 = vmul.f32 %v7762, %v8199
    %v8243 = vmul.f32 %v7767, %v8199
    %v8244 = vmul.f32 %v7770, %v8199
    %v8245 = vmul.f32 %v7775, %v8199
    %v8246 = vmul.f32 %v7778, %v8199
    %v8247 = vmul.f32 %v7783, %v8199
    %v8248 = vmul.f32 %v7786, %v8199
    %v8249 = vmul.f32 %v7791, %v8199
    %v8250 = vmul.f32 %v7794, %v8199
    %v8251 = vmul.f32 %v7799, %v8199
    %v8252 = vmul.f32 %v7802, %v8199
    %v8253 = vmul.f32 %v7807, %v8199
    %v8254 = vmul.f32 %v7810, %v8199
    %v8255 = vmul.f32 %v7815, %v8199
    %v8256 = vmul.f32 %v7818, %v8199
    %v8257 = vmul.f32 %v7823, %v8199
    %v8258 = vmul.f32 %v7826, %v8199
    %v8259 = vmul.f32 %v7831, %v8199
    %v8260 = vmul.f32 %v7834, %v8199
    %v8261 = vmul.f32 %v7839, %v8199
    %v8262 = vmul.f32 %v7842, %v8199
    %v8263 = vmul.f32 %v7847, %v8199
    %v8264 = vmul.f32 %v7850, %v8199
    %v8266 = vlaneseq
    %v8267 = vshrl.u32 %v8266, 7
    %v8268 = vsub.s32 0, %v8267
    %v8269 = vrot.slane %v8194, %v8268
    %v8271 = vadd.f32 %v8201, %v8269
    %v8272 = vadd.f32 %v8202, %v8269
    %v8273 = vadd.f32 %v8203, %v8269
    %v8274 = vadd.f32 %v8204, %v8269
    %v8275 = vadd.f32 %v8205, %v8269
    %v8276 = vadd.f32 %v8206, %v8269
    %v8277 = vadd.f32 %v8207, %v8269
    %v8278 = vadd.f32 %v8208, %v8269
    %v8279 = vadd.f32 %v8209, %v8269
    %v8280 = vadd.f32 %v8210, %v8269
    %v8281 = vadd.f32 %v8211, %v8269
    %v8282 = vadd.f32 %v8212, %v8269
    %v8283 = vadd.f32 %v8213, %v8269
    %v8284 = vadd.f32 %v8214, %v8269
    %v8285 = vadd.f32 %v8215, %v8269
    %v8286 = vadd.f32 %v8216, %v8269
    %v8287 = vadd.f32 %v8217, %v8269
    %v8288 = vadd.f32 %v8218, %v8269
    %v8289 = vadd.f32 %v8219, %v8269
    %v8290 = vadd.f32 %v8220, %v8269
    %v8291 = vadd.f32 %v8221, %v8269
    %v8292 = vadd.f32 %v8222, %v8269
    %v8293 = vadd.f32 %v8223, %v8269
    %v8294 = vadd.f32 %v8224, %v8269
    %v8295 = vadd.f32 %v8225, %v8269
    %v8296 = vadd.f32 %v8226, %v8269
    %v8297 = vadd.f32 %v8227, %v8269
    %v8298 = vadd.f32 %v8228, %v8269
    %v8299 = vadd.f32 %v8229, %v8269
    %v8300 = vadd.f32 %v8230, %v8269
    %v8301 = vadd.f32 %v8231, %v8269
    %v8302 = vadd.f32 %v8232, %v8269
    %v8303 = vadd.f32 %v8233, %v8269
    %v8304 = vadd.f32 %v8234, %v8269
    %v8305 = vadd.f32 %v8235, %v8269
    %v8306 = vadd.f32 %v8236, %v8269
    %v8307 = vadd.f32 %v8237, %v8269
    %v8308 = vadd.f32 %v8238, %v8269
    %v8309 = vadd.f32 %v8239, %v8269
    %v8310 = vadd.f32 %v8240, %v8269
    %v8311 = vadd.f32 %v8241, %v8269
    %v8312 = vadd.f32 %v8242, %v8269
    %v8313 = vadd.f32 %v8243, %v8269
    %v8314 = vadd.f32 %v8244, %v8269
    %v8315 = vadd.f32 %v8245, %v8269
    %v8316 = vadd.f32 %v8246, %v8269
    %v8317 = vadd.f32 %v8247, %v8269
    %v8318 = vadd.f32 %v8248, %v8269
    %v8319 = vadd.f32 %v8249, %v8269
    %v8320 = vadd.f32 %v8250, %v8269
    %v8321 = vadd.f32 %v8251, %v8269
    %v8322 = vadd.f32 %v8252, %v8269
    %v8323 = vadd.f32 %v8253, %v8269
    %v8324 = vadd.f32 %v8254, %v8269
    %v8325 = vadd.f32 %v8255, %v8269
    %v8326 = vadd.f32 %v8256, %v8269
    %v8327 = vadd.f32 %v8257, %v8269
    %v8328 = vadd.f32 %v8258, %v8269
    %v8329 = vadd.f32 %v8259, %v8269
    %v8330 = vadd.f32 %v8260, %v8269
    %v8331 = vadd.f32 %v8261, %v8269
    %v8332 = vadd.f32 %v8262, %v8269
    %v8333 = vadd.f32 %v8263, %v8269
    %v8334 = vadd.f32 %v8264, %v8269
    %v8335 = vadd.f32 %v8271, %v1257
    %v8336 = vadd.f32 %v8272, %v1258
    %v8337 = vadd.f32 %v8273, %v1259
    %v8338 = vadd.f32 %v8274, %v1260
    %v8339 = vadd.f32 %v8275, %v1261
    %v8340 = vadd.f32 %v8276, %v1262
    %v8341 = vadd.f32 %v8277, %v1263
    %v8342 = vadd.f32 %v8278, %v1264
    %v8343 = vadd.f32 %v8279, %v1265
    %v8344 = vadd.f32 %v8280, %v1266
    %v8345 = vadd.f32 %v8281, %v1267
    %v8346 = vadd.f32 %v8282, %v1268
    %v8347 = vadd.f32 %v8283, %v1269
    %v8348 = vadd.f32 %v8284, %v1270
    %v8349 = vadd.f32 %v8285, %v1271
    %v8350 = vadd.f32 %v8286, %v1272
    %v8351 = vadd.f32 %v8287, %v1273
    %v8352 = vadd.f32 %v8288, %v1274
    %v8353 = vadd.f32 %v8289, %v1275
    %v8354 = vadd.f32 %v8290, %v1276
    %v8355 = vadd.f32 %v8291, %v1277
    %v8356 = vadd.f32 %v8292, %v1278
    %v8357 = vadd.f32 %v8293, %v1279
    %v8358 = vadd.f32 %v8294, %v1280
    %v8359 = vadd.f32 %v8295, %v1281
    %v8360 = vadd.f32 %v8296, %v1282
    %v8361 = vadd.f32 %v8297, %v1283
    %v8362 = vadd.f32 %v8298, %v1284
    %v8363 = vadd.f32 %v8299, %v1285
    %v8364 = vadd.f32 %v8300, %v1286
    %v8365 = vadd.f32 %v8301, %v1287
    %v8366 = vadd.f32 %v8302, %v1288
    %v8367 = vadd.f32 %v8303, %v1289
    %v8368 = vadd.f32 %v8304, %v1290
    %v8369 = vadd.f32 %v8305, %v1291
    %v8370 = vadd.f32 %v8306, %v1292
    %v8371 = vadd.f32 %v8307, %v1293
    %v8372 = vadd.f32 %v8308, %v1294
    %v8373 = vadd.f32 %v8309, %v1295
    %v8374 = vadd.f32 %v8310, %v1296
    %v8375 = vadd.f32 %v8311, %v1297
    %v8376 = vadd.f32 %v8312, %v1298
    %v8377 = vadd.f32 %v8313, %v1299
    %v8378 = vadd.f32 %v8314, %v1300
    %v8379 = vadd.f32 %v8315, %v1301
    %v8380 = vadd.f32 %v8316, %v1302
    %v8381 = vadd.f32 %v8317, %v1303
    %v8382 = vadd.f32 %v8318, %v1304
    %v8383 = vadd.f32 %v8319, %v1305
    %v8384 = vadd.f32 %v8320, %v1306
    %v8385 = vadd.f32 %v8321, %v1307
    %v8386 = vadd.f32 %v8322, %v1308
    %v8387 = vadd.f32 %v8323, %v1309
    %v8388 = vadd.f32 %v8324, %v1310
    %v8389 = vadd.f32 %v8325, %v1311
    %v8390 = vadd.f32 %v8326, %v1312
    %v8391 = vadd.f32 %v8327, %v1313
    %v8392 = vadd.f32 %v8328, %v1314
    %v8393 = vadd.f32 %v8329, %v1315
    %v8394 = vadd.f32 %v8330, %v1316
    %v8395 = vadd.f32 %v8331, %v1317
    %v8396 = vadd.f32 %v8332, %v1318
    %v8397 = vadd.f32 %v8333, %v1319
    %v8398 = vadd.f32 %v8334, %v1320
    %v8399 = vmax.f32 %v8335, 0.0
    %v8400 = vmax.f32 %v8336, 0.0
    %v8401 = vmax.f32 %v8337, 0.0
    %v8402 = vmax.f32 %v8338, 0.0
    %v8403 = vmax.f32 %v8339, 0.0
    %v8404 = vmax.f32 %v8340, 0.0
    %v8405 = vmax.f32 %v8341, 0.0
    %v8406 = vmax.f32 %v8342, 0.0
    %v8407 = vmax.f32 %v8343, 0.0
    %v8408 = vmax.f32 %v8344, 0.0
    %v8409 = vmax.f32 %v8345, 0.0
    %v8410 = vmax.f32 %v8346, 0.0
    %v8411 = vmax.f32 %v8347, 0.0
    %v8412 = vmax.f32 %v8348, 0.0
    %v8413 = vmax.f32 %v8349, 0.0
    %v8414 = vmax.f32 %v8350, 0.0
    %v8415 = vmax.f32 %v8351, 0.0
    %v8416 = vmax.f32 %v8352, 0.0
    %v8417 = vmax.f32 %v8353, 0.0
    %v8418 = vmax.f32 %v8354, 0.0
    %v8419 = vmax.f32 %v8355, 0.0
    %v8420 = vmax.f32 %v8356, 0.0
    %v8421 = vmax.f32 %v8357, 0.0
    %v8422 = vmax.f32 %v8358, 0.0
    %v8423 = vmax.f32 %v8359, 0.0
    %v8424 = vmax.f32 %v8360, 0.0
    %v8425 = vmax.f32 %v8361, 0.0
    %v8426 = vmax.f32 %v8362, 0.0
    %v8427 = vmax.f32 %v8363, 0.0
    %v8428 = vmax.f32 %v8364, 0.0
    %v8429 = vmax.f32 %v8365, 0.0
    %v8430 = vmax.f32 %v8366, 0.0
    %v8431 = vmax.f32 %v8367, 0.0
    %v8432 = vmax.f32 %v8368, 0.0
    %v8433 = vmax.f32 %v8369, 0.0
    %v8434 = vmax.f32 %v8370, 0.0
    %v8435 = vmax.f32 %v8371, 0.0
    %v8436 = vmax.f32 %v8372, 0.0
    %v8437 = vmax.f32 %v8373, 0.0
    %v8438 = vmax.f32 %v8374, 0.0
    %v8439 = vmax.f32 %v8375, 0.0
    %v8440 = vmax.f32 %v8376, 0.0
    %v8441 = vmax.f32 %v8377, 0.0
    %v8442 = vmax.f32 %v8378, 0.0
    %v8443 = vmax.f32 %v8379, 0.0
    %v8444 = vmax.f32 %v8380, 0.0
    %v8445 = vmax.f32 %v8381, 0.0
    %v8446 = vmax.f32 %v8382, 0.0
    %v8447 = vmax.f32 %v8383, 0.0
    %v8448 = vmax.f32 %v8384, 0.0
    %v8449 = vmax.f32 %v8385, 0.0
    %v8450 = vmax.f32 %v8386, 0.0
    %v8451 = vmax.f32 %v8387, 0.0
    %v8452 = vmax.f32 %v8388, 0.0
    %v8453 = vmax.f32 %v8389, 0.0
    %v8454 = vmax.f32 %v8390, 0.0
    %v8455 = vmax.f32 %v8391, 0.0
    %v8456 = vmax.f32 %v8392, 0.0
    %v8457 = vmax.f32 %v8393, 0.0
    %v8458 = vmax.f32 %v8394, 0.0
    %v8459 = vmax.f32 %v8395, 0.0
    %v8460 = vmax.f32 %v8396, 0.0
    %v8461 = vmax.f32 %v8397, 0.0
    %v8462 = vmax.f32 %v8398, 0.0
    %v8463 = vsel %vm43, %v8399, 0.0
    %v8464 = vsel %vm43, %v8400, 0.0
    %v8465 = vadd.f32 %v8463, %v8464
    %v8466 = vsel %vm43, %v8401, 0.0
    %v8467 = vadd.f32 %v8465, %v8466
    %v8468 = vsel %vm43, %v8402, 0.0
    %v8469 = vadd.f32 %v8467, %v8468
    %v8470 = vsel %vm43, %v8403, 0.0
    %v8471 = vadd.f32 %v8469, %v8470
    %v8472 = vsel %vm43, %v8404, 0.0
    %v8473 = vadd.f32 %v8471, %v8472
    %v8474 = vsel %vm43, %v8405, 0.0
    %v8475 = vadd.f32 %v8473, %v8474
    %v8476 = vsel %vm43, %v8406, 0.0
    %v8477 = vadd.f32 %v8475, %v8476
    %v8478 = vsel %vm43, %v8407, 0.0
    %v8479 = vadd.f32 %v8477, %v8478
    %v8480 = vsel %vm43, %v8408, 0.0
    %v8481 = vadd.f32 %v8479, %v8480
    %v8482 = vsel %vm43, %v8409, 0.0
    %v8483 = vadd.f32 %v8481, %v8482
    %v8484 = vsel %vm43, %v8410, 0.0
    %v8485 = vadd.f32 %v8483, %v8484
    %v8486 = vsel %vm43, %v8411, 0.0
    %v8487 = vadd.f32 %v8485, %v8486
    %v8488 = vsel %vm43, %v8412, 0.0
    %v8489 = vadd.f32 %v8487, %v8488
    %v8490 = vsel %vm43, %v8413, 0.0
    %v8491 = vadd.f32 %v8489, %v8490
    %v8492 = vsel %vm43, %v8414, 0.0
    %v8493 = vadd.f32 %v8491, %v8492
    %v8494 = vsel %vm43, %v8415, 0.0
    %v8495 = vadd.f32 %v8493, %v8494
    %v8496 = vsel %vm43, %v8416, 0.0
    %v8497 = vadd.f32 %v8495, %v8496
    %v8498 = vsel %vm43, %v8417, 0.0
    %v8499 = vadd.f32 %v8497, %v8498
    %v8500 = vsel %vm43, %v8418, 0.0
    %v8501 = vadd.f32 %v8499, %v8500
    %v8502 = vsel %vm43, %v8419, 0.0
    %v8503 = vadd.f32 %v8501, %v8502
    %v8504 = vsel %vm43, %v8420, 0.0
    %v8505 = vadd.f32 %v8503, %v8504
    %v8506 = vsel %vm43, %v8421, 0.0
    %v8507 = vadd.f32 %v8505, %v8506
    %v8508 = vsel %vm43, %v8422, 0.0
    %v8509 = vadd.f32 %v8507, %v8508
    %v8510 = vsel %vm43, %v8423, 0.0
    %v8511 = vadd.f32 %v8509, %v8510
    %v8512 = vsel %vm43, %v8424, 0.0
    %v8513 = vadd.f32 %v8511, %v8512
    %v8514 = vsel %vm43, %v8425, 0.0
    %v8515 = vadd.f32 %v8513, %v8514
    %v8516 = vsel %vm43, %v8426, 0.0
    %v8517 = vadd.f32 %v8515, %v8516
    %v8518 = vsel %vm43, %v8427, 0.0
    %v8519 = vadd.f32 %v8517, %v8518
    %v8520 = vsel %vm43, %v8428, 0.0
    %v8521 = vadd.f32 %v8519, %v8520
    %v8522 = vsel %vm43, %v8429, 0.0
    %v8523 = vadd.f32 %v8521, %v8522
    %v8524 = vsel %vm43, %v8430, 0.0
    %v8525 = vadd.f32 %v8523, %v8524
    %v8526 = vrot.slane %v8525, 4
    %v8527 = vadd.f32 %v8525, %v8526
    %v8528 = vrot.slane %v8527, 2
    %v8529 = vadd.f32 %v8527, %v8528
    %v8530 = vrot.slane %v8529, 1
    %v8531 = vadd.f32 %v8529, %v8530
    %v8532 = vsel %vm43, %v8431, 0.0
    %v8533 = vsel %vm43, %v8432, 0.0
    %v8534 = vadd.f32 %v8532, %v8533
    %v8535 = vsel %vm43, %v8433, 0.0
    %v8536 = vadd.f32 %v8534, %v8535
    %v8537 = vsel %vm43, %v8434, 0.0
    %v8538 = vadd.f32 %v8536, %v8537
    %v8539 = vsel %vm43, %v8435, 0.0
    %v8540 = vadd.f32 %v8538, %v8539
    %v8541 = vsel %vm43, %v8436, 0.0
    %v8542 = vadd.f32 %v8540, %v8541
    %v8543 = vsel %vm43, %v8437, 0.0
    %v8544 = vadd.f32 %v8542, %v8543
    %v8545 = vsel %vm43, %v8438, 0.0
    %v8546 = vadd.f32 %v8544, %v8545
    %v8547 = vsel %vm43, %v8439, 0.0
    %v8548 = vadd.f32 %v8546, %v8547
    %v8549 = vsel %vm43, %v8440, 0.0
    %v8550 = vadd.f32 %v8548, %v8549
    %v8551 = vsel %vm43, %v8441, 0.0
    %v8552 = vadd.f32 %v8550, %v8551
    %v8553 = vsel %vm43, %v8442, 0.0
    %v8554 = vadd.f32 %v8552, %v8553
    %v8555 = vsel %vm43, %v8443, 0.0
    %v8556 = vadd.f32 %v8554, %v8555
    %v8557 = vsel %vm43, %v8444, 0.0
    %v8558 = vadd.f32 %v8556, %v8557
    %v8559 = vsel %vm43, %v8445, 0.0
    %v8560 = vadd.f32 %v8558, %v8559
    %v8561 = vsel %vm43, %v8446, 0.0
    %v8562 = vadd.f32 %v8560, %v8561
    %v8563 = vsel %vm43, %v8447, 0.0
    %v8564 = vadd.f32 %v8562, %v8563
    %v8565 = vsel %vm43, %v8448, 0.0
    %v8566 = vadd.f32 %v8564, %v8565
    %v8567 = vsel %vm43, %v8449, 0.0
    %v8568 = vadd.f32 %v8566, %v8567
    %v8569 = vsel %vm43, %v8450, 0.0
    %v8570 = vadd.f32 %v8568, %v8569
    %v8571 = vsel %vm43, %v8451, 0.0
    %v8572 = vadd.f32 %v8570, %v8571
    %v8573 = vsel %vm43, %v8452, 0.0
    %v8574 = vadd.f32 %v8572, %v8573
    %v8575 = vsel %vm43, %v8453, 0.0
    %v8576 = vadd.f32 %v8574, %v8575
    %v8577 = vsel %vm43, %v8454, 0.0
    %v8578 = vadd.f32 %v8576, %v8577
    %v8579 = vsel %vm43, %v8455, 0.0
    %v8580 = vadd.f32 %v8578, %v8579
    %v8581 = vsel %vm43, %v8456, 0.0
    %v8582 = vadd.f32 %v8580, %v8581
    %v8583 = vsel %vm43, %v8457, 0.0
    %v8584 = vadd.f32 %v8582, %v8583
    %v8585 = vsel %vm43, %v8458, 0.0
    %v8586 = vadd.f32 %v8584, %v8585
    %v8587 = vsel %vm43, %v8459, 0.0
    %v8588 = vadd.f32 %v8586, %v8587
    %v8589 = vsel %vm43, %v8460, 0.0
    %v8590 = vadd.f32 %v8588, %v8589
    %v8591 = vsel %vm43, %v8461, 0.0
    %v8592 = vadd.f32 %v8590, %v8591
    %v8593 = vsel %vm43, %v8462, 0.0
    %v8594 = vadd.f32 %v8592, %v8593
    %v8595 = vrot.slane %v8594, 4
    %v8596 = vadd.f32 %v8594, %v8595
    %v8597 = vrot.slane %v8596, 2
    %v8598 = vadd.f32 %v8596, %v8597
    %v8599 = vrot.slane %v8598, 1
    %v8600 = vadd.f32 %v8598, %v8599
    %v8601 = vrcp.pop 256.0
    %v8602 = vmul.f32 %v8531, %v8601
    %v8603 = vmul.f32 %v8600, %v8601
    %v8604 = vpack.c.bf16 %v8602, %v8602
    %v8605 = vpack.c.bf16 %v8603, %v8603
    %v8606 = vld [vmem:[%s10] sm:$0xf]
    %v8607 = vld [vmem:[%s10 + $0x4] sm:$0xf]
    %v8608 = vld [vmem:[%s10 + $0x8] sm:$0xf]
    %v8609 = vld [vmem:[%s10 + $0xc] sm:$0xf]
    %v8610 = vld [vmem:[%s10 + $0x10] sm:$0xf]
    %v8611 = vld [vmem:[%s10 + $0x14] sm:$0xf]
    %v8612 = vld [vmem:[%s10 + $0x18] sm:$0xf]
    %v8613 = vld [vmem:[%s10 + $0x1c] sm:$0xf]
    %v8614 = vld [vmem:[%s11] sm:$0x1]
    %v8616 = vlaneseq
    %v8617 = vshrl.u32 %v8616, 7
    %v8618 = vsub.s32 0, %v8617
    %v8619 = vrot.slane %v8614, %v8618
    %v8623 = vunpack.c.l.b16 %v8604
    %v8624 = vunpack.c.l.b16 %v8605
    %vm8625 = vcmask 1041409
    %v8626 = vsel %vm8625, %v8624, %v8623
    %v8627 = vpack.c.b16 %v8626, %v8626
    %v8636 = vunpack.c.l.b16 %v8606
    %v8637 = vunpack.c.l.b16 %v8607
    %v8638 = vunpack.c.l.b16 %v8608
    %v8639 = vunpack.c.l.b16 %v8609
    %v8640 = vunpack.c.l.b16 %v8610
    %v8641 = vunpack.c.l.b16 %v8611
    %v8642 = vunpack.c.l.b16 %v8612
    %v8643 = vunpack.c.l.b16 %v8613
    %v8644 = vpack.c.b16 %v8637, %v8636
    %v8645 = vpack.c.b16 %v8639, %v8638
    %v8646 = vpack.c.b16 %v8641, %v8640
    %v8647 = vpack.c.b16 %v8643, %v8642
    %v8653 = vsel %vm43, %v8627, 0
    %8655 = vmatprep.subr.bf16.mxu0 0
    %8656 = vmatpush1.bf16.msra.mxu0 %v8644
    %8657 = vmatprep.subr.bf16.mxu0 0
    %8658 = vmatpush1.bf16.msra.mxu0 %v8645
    %8659 = vmatprep.subr.bf16.mxu0 0
    %8660 = vmatpush1.bf16.msra.mxu0 %v8646
    %8661 = vmatprep.subr.bf16.mxu0 0
    %8662 = vmatpush1.bf16.msra.mxu0 %v8647
    %8663 = vmatprep.subr.bf16.mxu0 0
    %8664 = vmatpush1.bf16.msra.mxu0 0
    %8665 = vmatprep.subr.bf16.mxu0 0
    %8666 = vmatpush1.bf16.msra.mxu0 0
    %8667 = vmatprep.subr.bf16.mxu0 0
    %8668 = vmatpush1.bf16.msra.mxu0 0
    %8669 = vmatprep.subr.bf16.mxu0 0
    %8670 = vmatpush1.bf16.msra.mxu0 0
    %8671 = vmatprep.subr.bf16.mxu0 0
    %8672 = vmatpush1.bf16.msra.mxu0 0
    %8673 = vmatprep.subr.bf16.mxu0 0
    %8674 = vmatpush1.bf16.msra.mxu0 0
    %8675 = vmatprep.subr.bf16.mxu0 0
    %8676 = vmatpush1.bf16.msra.mxu0 0
    %8677 = vmatprep.subr.bf16.mxu0 0
    %8678 = vmatpush1.bf16.msra.mxu0 0
    %8679 = vmatprep.subr.bf16.mxu0 0
    %8680 = vmatpush1.bf16.msra.mxu0 0
    %8681 = vmatprep.subr.bf16.mxu0 0
    %8682 = vmatpush1.bf16.msra.mxu0 0
    %8683 = vmatprep.subr.bf16.mxu0 0
    %8684 = vmatpush1.bf16.msra.mxu0 0
    %8685 = vmatprep.subr.bf16.mxu0 0
    %8686 = vmatpush1.bf16.msra.mxu0 0
    %8687 = vmatprep.mubr.bf16.mxu0 0
    %8688 = vmatmul.mubr.bf16.gmra.mrb[0].mxu0 %v8653
    %v8689 = vpop.f32.mrb[0].mxu0
    %v8690 = vadd.f32 %v8619, %v8689
    %v8691 = vpop.f32.mrb[0].mxu0
    %v8692 = vpop.f32.mrb[0].mxu0
    %v8693 = vpop.f32.mrb[0].mxu0
    %8694 = vdwg.mxu0
    %8695 = vst [vmem:[#allocation4] sm:$0x3] %v8690
    // Predicated region
    $region50: #{my_resnet_forward.1} parent=1 // pred_check
      _
    $region51: #{my_resnet_forward.1} parent=1 // pred_check_branch
      %8697 = sbr.rel (0) target = $region53
    $region52: #{my_resnet_forward.1} parent=1 // pred_region
      %s8699 = ssub.s32 32, 32
      %8700 = vsyncadd [#allocation5], %s8699
      %s8702 = sshll.u32 [#allocation4], 4
      %s8703 = int_to_ptr.vmem [resolvable:$true] %s8702
      %8705 = dma.vmem_to_hbm [thread:$0]  %s8703, 32, %s12, [#allocation5]
    $region53: #{my_resnet_forward.1} parent=1 // pred_fallthru
      _
    // Predicated region
    $region54: #{my_resnet_forward.1} parent=1 // pred_check
      _
    $region55: #{my_resnet_forward.1} parent=1 // pred_check_branch
      %8707 = sbr.rel (0) target = $region57
    $region56: #{my_resnet_forward.1} parent=1 // pred_region
      %8708 = dma.done [#allocation5], 32
    $region57: #{my_resnet_forward.1} parent=1 // pred_fallthru
      _
    %8709 = vsyncpa [#allocation5], 1

</llo_original>
